<compile_context>
chip_gen: v7x
topology: tpu7x:2x2x1
jax: 0.10.0
libtpu: 0.0.40
codegen_flags: <defaults>
</compile_context>

<pallas_src>
import math

import jax
import jax.numpy as jnp
from jax.experimental import pallas as pl
from jax.experimental.pallas import tpu as pltpu

PAD_ID = 0
LANE = 128
COMPUTE_DTYPE = jnp.bfloat16      # MXU input dtype; accumulation stays f32

WKEYS = ("wqkv", "bqkv", "wo", "bo", "w1", "b1", "w2", "b2",
         "g1", "be1", "g2", "be2")


def _round_up(x, m):
    return (x + m - 1) // m * m


def _pad_to(a, shape):
    return jnp.pad(a, [(0, s - d) for d, s in zip(a.shape, shape)])


# ------------------------------ Pallas kernel -------------------------------

def _layernorm(x, gamma, beta, e_real, eps=1e-5):
    """LayerNorm over the real (unpadded) width e_real.

    x: (R, Ep) f32 whose columns >= e_real are guaranteed zero; gamma/beta are
    zero-padded, so padded columns stay exactly zero after normalization."""
    ep = x.shape[-1]
    col_valid = jax.lax.broadcasted_iota(jnp.int32, (1, ep), 1) < e_real
    mu = jnp.sum(x, axis=-1, keepdims=True) * (1.0 / e_real)
    xc = jnp.where(col_valid, x - mu, 0.0)
    var = jnp.sum(xc * xc, axis=-1, keepdims=True) * (1.0 / e_real)
    return xc * jax.lax.rsqrt(var + eps) * gamma + beta


def _make_stage_kernel(*, nlayers, nhead, dh, dhp, e_real, with_decoder):
    """Fused transformer stage kernel.

    Runs `nlayers` post-norm TransformerEncoderLayers (ReLU FFN, eval mode) on a
    tile of TB independent sequences of length L, then masked-mean pools over
    the sequence axis; the main stage additionally applies the linear decoder
    and softmax in the epilogue."""
    scale = 1.0 / math.sqrt(dh)
    hdp = nhead * dhp

    def kernel(tok_ref, x_ref,
               wqkv_ref, bqkv_ref, wo_ref, bo_ref,
               w1_ref, b1_ref, w2_ref, b2_ref,
               g1_ref, be1_ref, g2_ref, be2_ref, *rest):
        if with_decoder:
            dec_w_ref, dec_b_ref, out_ref = rest
        else:
            (out_ref,) = rest

        tok = tok_ref[...]                                    # (TB, L) int32
        valid = tok != PAD_ID                                 # (TB, L)
        mask_add = jnp.where(valid, 0.0, -1e9).astype(jnp.float32)

        x = x_ref[...]                                        # (TB, L, Ep) f32
        tb, seq, ep = x.shape
        r = tb * seq
        x2 = x.reshape(r, ep)

        # additive key-padding mask replicated per head (head-major batch axis)
        mask_b = jnp.concatenate([mask_add[:, None, :]] * nhead, axis=0)  # (H*TB,1,L)

        for l in range(nlayers):
            wqkv = wqkv_ref[l]
            wo = wo_ref[l]
            w1 = w1_ref[l]
            w2 = w2_ref[l]

            # ---- fused Q/K/V projection: one MXU matmul ----
            qkv = jnp.dot(x2.astype(wqkv.dtype), wqkv,
                          preferred_element_type=jnp.float32) + bqkv_ref[l]
            qkv3 = qkv.reshape(tb, seq, 3 * hdp)

            def split_heads(off):
                # lane-aligned per-head slices stacked on the batch axis
                return jnp.concatenate(
                    [qkv3[:, :, off + h * dhp: off + (h + 1) * dhp]
                     for h in range(nhead)], axis=0)          # (H*TB, L, dhp)

            q = split_heads(0)
            k = split_heads(hdp)
            v = split_heads(2 * hdp)

            # ---- batched attention over (rows x heads) ----
            s = jnp.einsum('bqd,bkd->bqk',
                           q.astype(COMPUTE_DTYPE), k.astype(COMPUTE_DTYPE),
                           preferred_element_type=jnp.float32)
            s = s * scale + mask_b
            s = s - jnp.max(s, axis=-1, keepdims=True)
            p = jnp.exp(s)
            p = p * pl.reciprocal(jnp.sum(p, axis=-1, keepdims=True), approx=True)
            ctx = jnp.einsum('bqk,bkd->bqd',
                             p.astype(COMPUTE_DTYPE), v.astype(COMPUTE_DTYPE),
                             preferred_element_type=jnp.float32)   # (H*TB, L, dhp)

            # merge heads: (H*TB, L, dhp) -> (R, H*dhp)
            ctx = jnp.concatenate(
                [ctx[h * tb:(h + 1) * tb] for h in range(nhead)],
                axis=2).reshape(r, hdp)
            attn = jnp.dot(ctx.astype(wo.dtype), wo,
                           preferred_element_type=jnp.float32) + bo_ref[l]

            # ---- post-norm residual + ReLU FFN ----
            x1 = _layernorm(x2 + attn, g1_ref[l], be1_ref[l], e_real)
            h1 = jnp.maximum(
                jnp.dot(x1.astype(w1.dtype), w1,
                        preferred_element_type=jnp.float32) + b1_ref[l], 0.0)
            ff = jnp.dot(h1.astype(w2.dtype), w2,
                         preferred_element_type=jnp.float32) + b2_ref[l]
            x2 = _layernorm(x1 + ff, g2_ref[l], be2_ref[l], e_real)

        # ---- fused epilogue: masked mean over the sequence axis ----
        y = x2.reshape(tb, seq, ep)
        vf = valid.astype(jnp.float32)[:, :, None]            # (TB, L, 1)
        num = jnp.sum(y * vf, axis=1)                         # (TB, Ep)
        den = jnp.maximum(jnp.sum(vf, axis=1), 1.0)           # guard all-pad rows
        pooled = num / den

        if with_decoder:
            dec_w = dec_w_ref[...]
            logits = jnp.dot(pooled.astype(dec_w.dtype), dec_w,
                             preferred_element_type=jnp.float32) + dec_b_ref[...]
            logits = logits - jnp.max(logits, axis=-1, keepdims=True)
            e = jnp.exp(logits)
            out_ref[...] = e / jnp.sum(e, axis=-1, keepdims=True)
        else:
            out_ref[...] = pooled

    return kernel


def run_stage(x, tokens, stage, decoder=None, max_rows_per_step=256):
    """x: (ROWS, L, Ep) f32 with zero-padded feature columns; tokens: (ROWS, L)
    int32 (mask source).  Returns (ROWS, Ep) pooled features, or (ROWS, ncls)
    class probabilities when `decoder` is given."""
    rows, seq, ep = x.shape
    if rows <= max_rows_per_step:
        tb, rows_p = rows, rows
    else:
        tb = max_rows_per_step                   # multiple of 8
        rows_p = _round_up(rows, tb)
    if rows_p != rows:
        x = jnp.pad(x, ((0, rows_p - rows), (0, 0), (0, 0)))
        tokens = jnp.pad(tokens, ((0, rows_p - rows), (0, 0)))   # pads with PAD_ID

    kernel = _make_stage_kernel(
        nlayers=stage["nlayers"], nhead=stage["nhead"], dh=stage["dh"],
        dhp=stage["dhp"], e_real=stage["E"], with_decoder=decoder is not None)

    in_specs = [
        pl.BlockSpec((tb, seq), lambda r: (r, 0)),           # token ids
        pl.BlockSpec((tb, seq, ep), lambda r: (r, 0, 0)),    # activations
    ]
    args = [tokens, x]
    for key in WKEYS:                                        # grid-invariant weights
        in_specs.append(pl.BlockSpec(stage[key].shape, lambda r: (0, 0, 0)))
        args.append(stage[key])

    if decoder is not None:
        in_specs += [pl.BlockSpec(decoder["w"].shape, lambda r: (0, 0)),
                     pl.BlockSpec(decoder["b"].shape, lambda r: (0, 0))]
        args += [decoder["w"], decoder["b"]]
        ncls = decoder["w"].shape[1]
        out_shape = jax.ShapeDtypeStruct((rows_p, ncls), jnp.float32)
        out_spec = pl.BlockSpec((tb, ncls), lambda r: (r, 0))
    else:
        out_shape = jax.ShapeDtypeStruct((rows_p, ep), jnp.float32)
        out_spec = pl.BlockSpec((tb, ep), lambda r: (r, 0))

    out = pl.pallas_call(
        kernel,
        out_shape=out_shape,
        grid=(rows_p // tb,),
        in_specs=in_specs,
        out_specs=out_spec,
        compiler_params=pltpu.CompilerParams(
            dimension_semantics=("parallel",),
            vmem_limit_bytes=48 * 1024 * 1024),
    )(*args)
    return out[:rows]


# --------------------------- parameters / prep ------------------------------

def sinusoidal_pe(max_len, d):
    pos = jnp.arange(max_len, dtype=jnp.float32)[:, None]
    div = jnp.exp(jnp.arange(0, d, 2, dtype=jnp.float32) *
                  (-math.log(10000.0) / d))
    ang = pos * div
    return jnp.stack([jnp.sin(ang), jnp.cos(ang)], axis=-1).reshape(max_len, d)


def _init_layer(key, E, nhid):
    ks = jax.random.split(key, 6)

    def lin(k, fin, fout):
        return jax.random.normal(k, (fin, fout), jnp.float32) / math.sqrt(fin)

    z = lambda n: jnp.zeros((1, n), jnp.float32)
    o = lambda n: jnp.ones((1, n), jnp.float32)
    return dict(
        wq=lin(ks[0], E, E), bq=z(E), wk=lin(ks[1], E, E), bk=z(E),
        wv=lin(ks[2], E, E), bv=z(E), wo=lin(ks[3], E, E), bo=z(E),
        w1=lin(ks[4], E, nhid), b1=z(nhid), w2=lin(ks[5], nhid, E), b2=z(E),
        g1=o(E), be1=z(E), g2=o(E), be2=z(E))


def prepare_stage(raw_layers, E, nhead, nhid):
    """Fuse Q/K/V, zero-pad E/dh/nhid to 128 multiples (per-head padded layout
    for the attention projections), stack layers, and cast big matrices to bf16."""
    dh = E // nhead
    ep = _round_up(E, LANE)
    dhp = _round_up(dh, LANE)
    hdp = nhead * dhp
    nhidp = _round_up(nhid, LANE)

    def pad_head_out(w, b):
        wp = jnp.zeros((ep, hdp), jnp.float32)
        bp = jnp.zeros((1, hdp), jnp.float32)
        for h in range(nhead):
            wp = wp.at[:E, h * dhp:h * dhp + dh].set(w[:, h * dh:(h + 1) * dh])
            bp = bp.at[:, h * dhp:h * dhp + dh].set(b[:, h * dh:(h + 1) * dh])
        return wp, bp

    def pad_head_in(w):
        wp = jnp.zeros((hdp, ep), jnp.float32)
        for h in range(nhead):
            wp = wp.at[h * dhp:h * dhp + dh, :E].set(w[h * dh:(h + 1) * dh, :])
        return wp

    acc = {k: [] for k in WKEYS}
    for lp in raw_layers:
        wqp, bqp = pad_head_out(lp["wq"], lp["bq"])
        wkp, bkp = pad_head_out(lp["wk"], lp["bk"])
        wvp, bvp = pad_head_out(lp["wv"], lp["bv"])
        acc["wqkv"].append(jnp.concatenate([wqp, wkp, wvp], axis=1))
        acc["bqkv"].append(jnp.concatenate([bqp, bkp, bvp], axis=1))
        acc["wo"].append(pad_head_in(lp["wo"]))
        acc["bo"].append(_pad_to(lp["bo"], (1, ep)))
        acc["w1"].append(_pad_to(lp["w1"], (ep, nhidp)))
        acc["b1"].append(_pad_to(lp["b1"], (1, nhidp)))
        acc["w2"].append(_pad_to(lp["w2"], (nhidp, ep)))
        acc["b2"].append(_pad_to(lp["b2"], (1, ep)))
        acc["g1"].append(_pad_to(lp["g1"], (1, ep)))   # zero-padded gamma/beta keep
        acc["be1"].append(_pad_to(lp["be1"], (1, ep)))  # padded lanes at exactly 0
        acc["g2"].append(_pad_to(lp["g2"], (1, ep)))
        acc["be2"].append(_pad_to(lp["be2"], (1, ep)))

    bf16_keys = {"wqkv", "wo", "w1", "w2"}
    stage = {k: jnp.stack(v, axis=0) for k, v in acc.items()}
    stage = {k: (v.astype(COMPUTE_DTYPE) if k in bf16_keys else v)
             for k, v in stage.items()}
    stage.update(nhead=nhead, dh=dh, dhp=dhp, E=E, Ep=ep,
                 nlayers=len(raw_layers))
    return stage


def init_hit_clf_params(key, ntokens, ncls, emsizes, nhead, nhid, nlayers,
                        path_nlayers=2, max_len=512):
    emsize = sum(emsizes)
    keys = jax.random.split(key, 3 + nlayers + path_nlayers)

    main_raw = [_init_layer(keys[3 + i], emsize, nhid) for i in range(nlayers)]
    path_raw = [_init_layer(keys[3 + nlayers + i], emsizes[1], nhid)
                for i in range(path_nlayers)]
    main_stage = prepare_stage(main_raw, emsize, nhead, nhid)
    path_stage = prepare_stage(path_raw, emsizes[1], nhead, nhid)

    dec_w = jax.random.normal(keys[2], (emsize, ncls), jnp.float32) / math.sqrt(emsize)
    decoder = dict(
        w=_pad_to(dec_w, (main_stage["Ep"], ncls)).astype(COMPUTE_DTYPE),
        b=jnp.zeros((1, ncls), jnp.float32))

    emb0 = jax.random.normal(keys[0], (ntokens[0], emsizes[0]), jnp.float32) * 0.02
    emb1 = jax.random.normal(keys[1], (ntokens[1], emsizes[1]), jnp.float32) * 0.02
    return dict(
        emsizes=emsizes,
        emb0=emb0,
        pe0=sinusoidal_pe(max_len, emsizes[0]),
        # path embedding table and PE pre-padded to the lane-dense width e1p
        emb1_p=_pad_to(emb1, (ntokens[1], path_stage["Ep"])),
        pe1_p=_pad_to(sinusoidal_pe(max_len, emsizes[1]), (max_len, path_stage["Ep"])),
        path_stage=path_stage, main_stage=main_stage, decoder=decoder)


# --------------------------------- forward ----------------------------------

def hit_clf_forward(params, code_inp, path_inp):
    """code_inp: (B, S) int32 tokens; path_inp: (B, S, P) int32 tokens."""
    B, S = code_inp.shape
    P = path_inp.shape[-1]
    e0, e1 = params["emsizes"]
    path_stage = params["path_stage"]
    main_stage = params["main_stage"]
    E = e0 + e1

    # Encoder 0 (code tokens): emb * sqrt(e0) + PE (eval mode: no dropout).
    # TODO(synk): embedding gathers stay in plain JAX (no in-kernel DMA gather).
    code_enc = (jnp.take(params["emb0"], code_inp, axis=0) * math.sqrt(e0)
                + params["pe0"][:S][None])                      # (B, S, e0)

    # Encoder 1 + path transformer + masked mean: ONE fused Pallas kernel.
    path_tok = path_inp.reshape(B * S, P)
    path_x = (jnp.take(params["emb1_p"], path_tok, axis=0) * math.sqrt(e1)
              + params["pe1_p"][:P][None])                      # (B*S, P, e1p)
    path_pooled = run_stage(path_x, path_tok, path_stage)       # (B*S, e1p)
    path_enc = path_pooled[:, :e1].reshape(B, S, e1)

    # Fuse code + path features, pad to lane width, then main transformer block
    # + masked mean + decoder + softmax in a SECOND fused Pallas kernel.
    src = jnp.concatenate([code_enc, path_enc], axis=-1)        # (B, S, E)
    src = jnp.pad(src, ((0, 0), (0, 0), (0, main_stage["Ep"] - E)))
    prob = run_stage(src, code_inp, main_stage, decoder=params["decoder"])
    return prob                                                  # (B, ncls)


# ----------------------------------- main ------------------------------------

if __name__ == "__main__":
    # small HiTClf config
    ntokens = (50, 30)
    ncls = 4
    emsizes = (16, 16)     # emsize = 32
    nhead = 2
    nhid = 64
    nlayers = 2
    path_nlayers = 2

    B, S, P = 2, 8, 4

    key = jax.random.PRNGKey(0)
    kp, kc, kpath = jax.random.split(key, 3)
    params = init_hit_clf_params(kp, ntokens, ncls, emsizes, nhead, nhid,
                                 nlayers, path_nlayers)

    code_inp = jax.random.randint(kc, (B, S), 0, ntokens[0], dtype=jnp.int32)
    path_inp = jax.random.randint(kpath, (B, S, P), 0, ntokens[1], dtype=jnp.int32)
    # guarantee at least one non-PAD token per code row and per path
    code_inp = code_inp.at[:, 0].set(jnp.maximum(code_inp[:, 0], 1))
    path_inp = path_inp.at[:, :, 0].set(jnp.maximum(path_inp[:, :, 0], 1))

    prob = hit_clf_forward(params, code_inp, path_inp)
    prob = jax.block_until_ready(prob)

    assert prob.shape == (B, ncls)
    assert bool(jnp.all(jnp.isfinite(prob)))
    assert bool(jnp.allclose(jnp.sum(prob, axis=1), 1.0, atol=1e-4))
    print("KERNEL_OK")
</pallas_src>

<mosaic_0001>
module attributes {stable_mosaic.version = 11 : i64} {
  func.func @kernel(%arg0: i32, %arg1: memref<16x4xi32, #tpu.memory_space<vmem>>, %arg2: memref<16x4x128xf32, #tpu.memory_space<vmem>>, %arg3: memref<2x128x768xbf16, #tpu.memory_space<vmem>>, %arg4: memref<2x1x768xf32, #tpu.memory_space<vmem>>, %arg5: memref<2x256x128xbf16, #tpu.memory_space<vmem>>, %arg6: memref<2x1x128xf32, #tpu.memory_space<vmem>>, %arg7: memref<2x128x128xbf16, #tpu.memory_space<vmem>>, %arg8: memref<2x1x128xf32, #tpu.memory_space<vmem>>, %arg9: memref<2x128x128xbf16, #tpu.memory_space<vmem>>, %arg10: memref<2x1x128xf32, #tpu.memory_space<vmem>>, %arg11: memref<2x1x128xf32, #tpu.memory_space<vmem>>, %arg12: memref<2x1x128xf32, #tpu.memory_space<vmem>>, %arg13: memref<2x1x128xf32, #tpu.memory_space<vmem>>, %arg14: memref<2x1x128xf32, #tpu.memory_space<vmem>>, %arg15: memref<16x128xf32, #tpu.memory_space<vmem>>) attributes {dimension_semantics = [#tpu.dimension_semantics<parallel>], iteration_bounds = array<i64: 1>, scalar_prefetch = 0 : i64, scratch_operands = 0 : i64, tpu.core_type = #tpu.core_type<tc>, window_params = [{transform_indices = @transform_0, window_bounds = array<i64: 16, 4>}, {transform_indices = @transform_1, window_bounds = array<i64: 16, 4, 128>}, {pipeline_mode = #tpu.pipeline_mode<synchronous>, transform_indices = @transform_2, window_bounds = array<i64: 2, 128, 768>}, {pipeline_mode = #tpu.pipeline_mode<synchronous>, transform_indices = @transform_3, window_bounds = array<i64: 2, 1, 768>}, {pipeline_mode = #tpu.pipeline_mode<synchronous>, transform_indices = @transform_4, window_bounds = array<i64: 2, 256, 128>}, {pipeline_mode = #tpu.pipeline_mode<synchronous>, transform_indices = @transform_5, window_bounds = array<i64: 2, 1, 128>}, {pipeline_mode = #tpu.pipeline_mode<synchronous>, transform_indices = @transform_6, window_bounds = array<i64: 2, 128, 128>}, {pipeline_mode = #tpu.pipeline_mode<synchronous>, transform_indices = @transform_7, window_bounds = array<i64: 2, 1, 128>}, {pipeline_mode = #tpu.pipeline_mode<synchronous>, transform_indices = @transform_8, window_bounds = array<i64: 2, 128, 128>}, {pipeline_mode = #tpu.pipeline_mode<synchronous>, transform_indices = @transform_9, window_bounds = array<i64: 2, 1, 128>}, {pipeline_mode = #tpu.pipeline_mode<synchronous>, transform_indices = @transform_10, window_bounds = array<i64: 2, 1, 128>}, {pipeline_mode = #tpu.pipeline_mode<synchronous>, transform_indices = @transform_11, window_bounds = array<i64: 2, 1, 128>}, {pipeline_mode = #tpu.pipeline_mode<synchronous>, transform_indices = @transform_12, window_bounds = array<i64: 2, 1, 128>}, {pipeline_mode = #tpu.pipeline_mode<synchronous>, transform_indices = @transform_13, window_bounds = array<i64: 2, 1, 128>}, {transform_indices = @transform_14, window_bounds = array<i64: 16, 128>}]} {
    %c0 = arith.constant 0 : index
    %c0_0 = arith.constant 0 : index
    %0 = vector.load %arg1[%c0, %c0_0] : memref<16x4xi32, #tpu.memory_space<vmem>>, vector<16x4xi32>
    %c0_i32 = arith.constant 0 : i32
    %1 = vector.broadcast %c0_i32 : i32 to vector<16x4xi32>
    %2 = arith.cmpi ne, %0, %1 : vector<16x4xi32>
    %cst = arith.constant 0.000000e+00 : f32
    %cst_1 = arith.constant -1.000000e+09 : f32
    %3 = vector.broadcast %cst : f32 to vector<16x4xf32>
    %4 = vector.broadcast %cst_1 : f32 to vector<16x4xf32>
    %5 = arith.select %2, %3, %4 : vector<16x4xi1>, vector<16x4xf32>
    %c0_2 = arith.constant 0 : index
    %c0_3 = arith.constant 0 : index
    %c0_4 = arith.constant 0 : index
    %6 = vector.load %arg2[%c0_2, %c0_3, %c0_4] : memref<16x4x128xf32, #tpu.memory_space<vmem>>, vector<16x4x128xf32>
    %7 = vector.shape_cast %6 : vector<16x4x128xf32> to vector<64x128xf32>
    %8 = vector.shape_cast %5 : vector<16x4xf32> to vector<16x1x4xf32>
    %9 = tpu.concatenate %8, %8 in 0 : vector<16x1x4xf32>, vector<16x1x4xf32> -> vector<32x1x4xf32>
    %c0_5 = arith.constant 0 : index
    %c0_6 = arith.constant 0 : index
    %c0_7 = arith.constant 0 : index
    %10 = vector.load %arg3[%c0_5, %c0_6, %c0_7] : memref<2x128x768xbf16, #tpu.memory_space<vmem>>, vector<1x128x768xbf16>
    %11 = vector.shape_cast %10 : vector<1x128x768xbf16> to vector<128x768xbf16>
    %c0_8 = arith.constant 0 : index
    %c0_9 = arith.constant 0 : index
    %c0_10 = arith.constant 0 : index
    %12 = vector.load %arg5[%c0_8, %c0_9, %c0_10] : memref<2x256x128xbf16, #tpu.memory_space<vmem>>, vector<1x256x128xbf16>
    %13 = vector.shape_cast %12 : vector<1x256x128xbf16> to vector<256x128xbf16>
    %c0_11 = arith.constant 0 : index
    %c0_12 = arith.constant 0 : index
    %c0_13 = arith.constant 0 : index
    %14 = vector.load %arg7[%c0_11, %c0_12, %c0_13] : memref<2x128x128xbf16, #tpu.memory_space<vmem>>, vector<1x128x128xbf16>
    %15 = vector.shape_cast %14 : vector<1x128x128xbf16> to vector<128x128xbf16>
    %c0_14 = arith.constant 0 : index
    %c0_15 = arith.constant 0 : index
    %c0_16 = arith.constant 0 : index
    %16 = vector.load %arg9[%c0_14, %c0_15, %c0_16] : memref<2x128x128xbf16, #tpu.memory_space<vmem>>, vector<1x128x128xbf16>
    %17 = vector.shape_cast %16 : vector<1x128x128xbf16> to vector<128x128xbf16>
    %18 = arith.truncf %7 : vector<64x128xf32> to vector<64x128xbf16>
    %cst_17 = arith.constant dense<0.000000e+00> : vector<64x768xf32>
    %19 = tpu.matmul %18, %11, %cst_17 {dimension_numbers = #tpu.dot_dimension_numbers<[1], [0], [0], [1], [0, 0, 1, 1], [], []>} : vector<64x128xbf16>, vector<128x768xbf16>, vector<64x768xf32> -> vector<64x768xf32>
    %c0_18 = arith.constant 0 : index
    %c0_19 = arith.constant 0 : index
    %c0_20 = arith.constant 0 : index
    %20 = vector.load %arg4[%c0_18, %c0_19, %c0_20] : memref<2x1x768xf32, #tpu.memory_space<vmem>>, vector<1x1x768xf32>
    %21 = vector.shape_cast %20 : vector<1x1x768xf32> to vector<1x768xf32>
    %22 = vector.broadcast %21 : vector<1x768xf32> to vector<64x768xf32>
    %23 = arith.addf %19, %22 : vector<64x768xf32>
    %24 = vector.shape_cast %23 : vector<64x768xf32> to vector<16x4x768xf32>
    %25 = vector.extract_strided_slice %24 {offsets = [0, 0, 0], sizes = [16, 4, 128], strides = [1, 1, 1]} : vector<16x4x768xf32> to vector<16x4x128xf32>
    %26 = vector.extract_strided_slice %24 {offsets = [0, 0, 128], sizes = [16, 4, 128], strides = [1, 1, 1]} : vector<16x4x768xf32> to vector<16x4x128xf32>
    %27 = tpu.concatenate %25, %26 in 0 : vector<16x4x128xf32>, vector<16x4x128xf32> -> vector<32x4x128xf32>
    %28 = vector.extract_strided_slice %24 {offsets = [0, 0, 256], sizes = [16, 4, 128], strides = [1, 1, 1]} : vector<16x4x768xf32> to vector<16x4x128xf32>
    %29 = vector.extract_strided_slice %24 {offsets = [0, 0, 384], sizes = [16, 4, 128], strides = [1, 1, 1]} : vector<16x4x768xf32> to vector<16x4x128xf32>
    %30 = tpu.concatenate %28, %29 in 0 : vector<16x4x128xf32>, vector<16x4x128xf32> -> vector<32x4x128xf32>
    %31 = vector.extract_strided_slice %24 {offsets = [0, 0, 512], sizes = [16, 4, 128], strides = [1, 1, 1]} : vector<16x4x768xf32> to vector<16x4x128xf32>
    %32 = vector.extract_strided_slice %24 {offsets = [0, 0, 640], sizes = [16, 4, 128], strides = [1, 1, 1]} : vector<16x4x768xf32> to vector<16x4x128xf32>
    %33 = tpu.concatenate %31, %32 in 0 : vector<16x4x128xf32>, vector<16x4x128xf32> -> vector<32x4x128xf32>
    %34 = arith.truncf %27 : vector<32x4x128xf32> to vector<32x4x128xbf16>
    %35 = arith.truncf %30 : vector<32x4x128xf32> to vector<32x4x128xbf16>
    "tpu.trace_start"() <{level = 10 : i32, message = "bqd,bkd->bqk"}> : () -> ()
    %cst_21 = arith.constant dense<0.000000e+00> : vector<32x4x4xf32>
    %36 = tpu.matmul %34, %35, %cst_21 {dimension_numbers = #tpu.dot_dimension_numbers<[2], [2], [1], [1], [0, 0, 0, 1, 1, 1], [0], [0]>} : vector<32x4x128xbf16>, vector<32x4x128xbf16>, vector<32x4x4xf32> -> vector<32x4x4xf32>
    "tpu.trace_stop"() : () -> ()
    %cst_22 = arith.constant 0.353553385 : f32
    %37 = vector.broadcast %cst_22 : f32 to vector<32x4x4xf32>
    %38 = arith.mulf %36, %37 : vector<32x4x4xf32>
    %39 = vector.broadcast %9 : vector<32x1x4xf32> to vector<32x4x4xf32>
    %40 = arith.addf %38, %39 : vector<32x4x4xf32>
    %cst_23 = arith.constant dense<0xFF800000> : vector<32x4xf32>
    %41 = vector.multi_reduction <maximumf>, %40, %cst_23 [2] : vector<32x4x4xf32> to vector<32x4xf32>
    %42 = vector.shape_cast %41 : vector<32x4xf32> to vector<32x4x1xf32>
    %43 = vector.broadcast %42 : vector<32x4x1xf32> to vector<32x4x4xf32>
    %44 = arith.subf %40, %43 : vector<32x4x4xf32>
    %45 = math.exp %44 : vector<32x4x4xf32>
    %cst_24 = arith.constant dense<0.000000e+00> : vector<32x4xf32>
    %46 = vector.multi_reduction <add>, %45, %cst_24 [2] : vector<32x4x4xf32> to vector<32x4xf32>
    %47 = vector.shape_cast %46 : vector<32x4xf32> to vector<32x4x1xf32>
    %48 = tpu.reciprocal %47 {approx = true} : vector<32x4x1xf32> -> vector<32x4x1xf32>
    %49 = vector.broadcast %48 : vector<32x4x1xf32> to vector<32x4x4xf32>
    %50 = arith.mulf %45, %49 : vector<32x4x4xf32>
    %51 = arith.truncf %50 : vector<32x4x4xf32> to vector<32x4x4xbf16>
    %52 = arith.truncf %33 : vector<32x4x128xf32> to vector<32x4x128xbf16>
    "tpu.trace_start"() <{level = 10 : i32, message = "bqk,bkd->bqd"}> : () -> ()
    %cst_25 = arith.constant dense<0.000000e+00> : vector<32x4x128xf32>
    %53 = tpu.matmul %51, %52, %cst_25 {dimension_numbers = #tpu.dot_dimension_numbers<[2], [1], [1], [2], [0, 0, 0, 1, 1, 2], [0], [0]>} : vector<32x4x4xbf16>, vector<32x4x128xbf16>, vector<32x4x128xf32> -> vector<32x4x128xf32>
    "tpu.trace_stop"() : () -> ()
    %54 = vector.extract_strided_slice %53 {offsets = [0, 0, 0], sizes = [16, 4, 128], strides = [1, 1, 1]} : vector<32x4x128xf32> to vector<16x4x128xf32>
    %55 = vector.extract_strided_slice %53 {offsets = [16, 0, 0], sizes = [16, 4, 128], strides = [1, 1, 1]} : vector<32x4x128xf32> to vector<16x4x128xf32>
    %56 = tpu.concatenate %54, %55 in 2 : vector<16x4x128xf32>, vector<16x4x128xf32> -> vector<16x4x256xf32>
    %57 = vector.shape_cast %56 : vector<16x4x256xf32> to vector<64x256xf32>
    %58 = arith.truncf %57 : vector<64x256xf32> to vector<64x256xbf16>
    %cst_26 = arith.constant dense<0.000000e+00> : vector<64x128xf32>
    %59 = tpu.matmul %58, %13, %cst_26 {dimension_numbers = #tpu.dot_dimension_numbers<[1], [0], [0], [1], [0, 0, 1, 1], [], []>} : vector<64x256xbf16>, vector<256x128xbf16>, vector<64x128xf32> -> vector<64x128xf32>
    %c0_27 = arith.constant 0 : index
    %c0_28 = arith.constant 0 : index
    %c0_29 = arith.constant 0 : index
    %60 = vector.load %arg6[%c0_27, %c0_28, %c0_29] : memref<2x1x128xf32, #tpu.memory_space<vmem>>, vector<1x1x128xf32>
    %61 = vector.shape_cast %60 : vector<1x1x128xf32> to vector<1x128xf32>
    %62 = vector.broadcast %61 : vector<1x128xf32> to vector<64x128xf32>
    %63 = arith.addf %59, %62 : vector<64x128xf32>
    %64 = arith.addf %7, %63 : vector<64x128xf32>
    %c0_30 = arith.constant 0 : index
    %c0_31 = arith.constant 0 : index
    %c0_32 = arith.constant 0 : index
    %65 = vector.load %arg11[%c0_30, %c0_31, %c0_32] : memref<2x1x128xf32, #tpu.memory_space<vmem>>, vector<1x1x128xf32>
    %66 = vector.shape_cast %65 : vector<1x1x128xf32> to vector<1x128xf32>
    %c0_33 = arith.constant 0 : index
    %c0_34 = arith.constant 0 : index
    %c0_35 = arith.constant 0 : index
    %67 = vector.load %arg12[%c0_33, %c0_34, %c0_35] : memref<2x1x128xf32, #tpu.memory_space<vmem>>, vector<1x1x128xf32>
    %68 = vector.shape_cast %67 : vector<1x1x128xf32> to vector<1x128xf32>
    %69 = tpu.iota {dimensions = array<i32: 1>} : vector<1x128xi32>
    %c16_i32 = arith.constant 16 : i32
    %70 = vector.broadcast %c16_i32 : i32 to vector<1x128xi32>
    %71 = arith.cmpi slt, %69, %70 : vector<1x128xi32>
    %cst_36 = arith.constant dense<0.000000e+00> : vector<64xf32>
    %72 = vector.multi_reduction <add>, %64, %cst_36 [1] : vector<64x128xf32> to vector<64xf32>
    %73 = vector.shape_cast %72 : vector<64xf32> to vector<64x1xf32>
    %cst_37 = arith.constant 6.250000e-02 : f32
    %74 = vector.broadcast %cst_37 : f32 to vector<64x1xf32>
    %75 = arith.mulf %73, %74 : vector<64x1xf32>
    %76 = vector.broadcast %75 : vector<64x1xf32> to vector<64x128xf32>
    %77 = arith.subf %64, %76 : vector<64x128xf32>
    %cst_38 = arith.constant 0.000000e+00 : f32
    %78 = vector.shape_cast %71 : vector<1x128xi1> to vector<1x128xi1>
    %79 = vector.broadcast %78 : vector<1x128xi1> to vector<64x128xi1>
    %80 = vector.broadcast %cst_38 : f32 to vector<64x128xf32>
    %81 = arith.select %79, %77, %80 : vector<64x128xi1>, vector<64x128xf32>
    %82 = arith.mulf %81, %81 : vector<64x128xf32>
    %cst_39 = arith.constant dense<0.000000e+00> : vector<64xf32>
    %83 = vector.multi_reduction <add>, %82, %cst_39 [1] : vector<64x128xf32> to vector<64xf32>
    %84 = vector.shape_cast %83 : vector<64xf32> to vector<64x1xf32>
    %cst_40 = arith.constant 6.250000e-02 : f32
    %85 = vector.broadcast %cst_40 : f32 to vector<64x1xf32>
    %86 = arith.mulf %84, %85 : vector<64x1xf32>
    %cst_41 = arith.constant 9.99999974E-6 : f32
    %87 = vector.broadcast %cst_41 : f32 to vector<64x1xf32>
    %88 = arith.addf %86, %87 : vector<64x1xf32>
    %89 = math.rsqrt %88 : vector<64x1xf32>
    %90 = vector.broadcast %89 : vector<64x1xf32> to vector<64x128xf32>
    %91 = arith.mulf %81, %90 : vector<64x128xf32>
    %92 = vector.broadcast %66 : vector<1x128xf32> to vector<64x128xf32>
    %93 = arith.mulf %91, %92 : vector<64x128xf32>
    %94 = vector.broadcast %68 : vector<1x128xf32> to vector<64x128xf32>
    %95 = arith.addf %93, %94 : vector<64x128xf32>
    %96 = arith.truncf %95 : vector<64x128xf32> to vector<64x128xbf16>
    %cst_42 = arith.constant dense<0.000000e+00> : vector<64x128xf32>
    %97 = tpu.matmul %96, %15, %cst_42 {dimension_numbers = #tpu.dot_dimension_numbers<[1], [0], [0], [1], [0, 0, 1, 1], [], []>} : vector<64x128xbf16>, vector<128x128xbf16>, vector<64x128xf32> -> vector<64x128xf32>
    %c0_43 = arith.constant 0 : index
    %c0_44 = arith.constant 0 : index
    %c0_45 = arith.constant 0 : index
    %98 = vector.load %arg8[%c0_43, %c0_44, %c0_45] : memref<2x1x128xf32, #tpu.memory_space<vmem>>, vector<1x1x128xf32>
    %99 = vector.shape_cast %98 : vector<1x1x128xf32> to vector<1x128xf32>
    %100 = vector.broadcast %99 : vector<1x128xf32> to vector<64x128xf32>
    %101 = arith.addf %97, %100 : vector<64x128xf32>
    %cst_46 = arith.constant 0.000000e+00 : f32
    %102 = vector.broadcast %cst_46 : f32 to vector<64x128xf32>
    %103 = arith.maximumf %101, %102 : vector<64x128xf32>
    %104 = arith.truncf %103 : vector<64x128xf32> to vector<64x128xbf16>
    %cst_47 = arith.constant dense<0.000000e+00> : vector<64x128xf32>
    %105 = tpu.matmul %104, %17, %cst_47 {dimension_numbers = #tpu.dot_dimension_numbers<[1], [0], [0], [1], [0, 0, 1, 1], [], []>} : vector<64x128xbf16>, vector<128x128xbf16>, vector<64x128xf32> -> vector<64x128xf32>
    %c0_48 = arith.constant 0 : index
    %c0_49 = arith.constant 0 : index
    %c0_50 = arith.constant 0 : index
    %106 = vector.load %arg10[%c0_48, %c0_49, %c0_50] : memref<2x1x128xf32, #tpu.memory_space<vmem>>, vector<1x1x128xf32>
    %107 = vector.shape_cast %106 : vector<1x1x128xf32> to vector<1x128xf32>
    %108 = vector.broadcast %107 : vector<1x128xf32> to vector<64x128xf32>
    %109 = arith.addf %105, %108 : vector<64x128xf32>
    %110 = arith.addf %95, %109 : vector<64x128xf32>
    %c0_51 = arith.constant 0 : index
    %c0_52 = arith.constant 0 : index
    %c0_53 = arith.constant 0 : index
    %111 = vector.load %arg13[%c0_51, %c0_52, %c0_53] : memref<2x1x128xf32, #tpu.memory_space<vmem>>, vector<1x1x128xf32>
    %112 = vector.shape_cast %111 : vector<1x1x128xf32> to vector<1x128xf32>
    %c0_54 = arith.constant 0 : index
    %c0_55 = arith.constant 0 : index
    %c0_56 = arith.constant 0 : index
    %113 = vector.load %arg14[%c0_54, %c0_55, %c0_56] : memref<2x1x128xf32, #tpu.memory_space<vmem>>, vector<1x1x128xf32>
    %114 = vector.shape_cast %113 : vector<1x1x128xf32> to vector<1x128xf32>
    %115 = tpu.iota {dimensions = array<i32: 1>} : vector<1x128xi32>
    %c16_i32_57 = arith.constant 16 : i32
    %116 = vector.broadcast %c16_i32_57 : i32 to vector<1x128xi32>
    %117 = arith.cmpi slt, %115, %116 : vector<1x128xi32>
    %cst_58 = arith.constant dense<0.000000e+00> : vector<64xf32>
    %118 = vector.multi_reduction <add>, %110, %cst_58 [1] : vector<64x128xf32> to vector<64xf32>
    %119 = vector.shape_cast %118 : vector<64xf32> to vector<64x1xf32>
    %cst_59 = arith.constant 6.250000e-02 : f32
    %120 = vector.broadcast %cst_59 : f32 to vector<64x1xf32>
    %121 = arith.mulf %119, %120 : vector<64x1xf32>
    %122 = vector.broadcast %121 : vector<64x1xf32> to vector<64x128xf32>
    %123 = arith.subf %110, %122 : vector<64x128xf32>
    %cst_60 = arith.constant 0.000000e+00 : f32
    %124 = vector.shape_cast %117 : vector<1x128xi1> to vector<1x128xi1>
    %125 = vector.broadcast %124 : vector<1x128xi1> to vector<64x128xi1>
    %126 = vector.broadcast %cst_60 : f32 to vector<64x128xf32>
    %127 = arith.select %125, %123, %126 : vector<64x128xi1>, vector<64x128xf32>
    %128 = arith.mulf %127, %127 : vector<64x128xf32>
    %cst_61 = arith.constant dense<0.000000e+00> : vector<64xf32>
    %129 = vector.multi_reduction <add>, %128, %cst_61 [1] : vector<64x128xf32> to vector<64xf32>
    %130 = vector.shape_cast %129 : vector<64xf32> to vector<64x1xf32>
    %cst_62 = arith.constant 6.250000e-02 : f32
    %131 = vector.broadcast %cst_62 : f32 to vector<64x1xf32>
    %132 = arith.mulf %130, %131 : vector<64x1xf32>
    %cst_63 = arith.constant 9.99999974E-6 : f32
    %133 = vector.broadcast %cst_63 : f32 to vector<64x1xf32>
    %134 = arith.addf %132, %133 : vector<64x1xf32>
    %135 = math.rsqrt %134 : vector<64x1xf32>
    %136 = vector.broadcast %135 : vector<64x1xf32> to vector<64x128xf32>
    %137 = arith.mulf %127, %136 : vector<64x128xf32>
    %138 = vector.broadcast %112 : vector<1x128xf32> to vector<64x128xf32>
    %139 = arith.mulf %137, %138 : vector<64x128xf32>
    %140 = vector.broadcast %114 : vector<1x128xf32> to vector<64x128xf32>
    %141 = arith.addf %139, %140 : vector<64x128xf32>
    %c1 = arith.constant 1 : index
    %c0_64 = arith.constant 0 : index
    %c0_65 = arith.constant 0 : index
    %142 = vector.load %arg3[%c1, %c0_64, %c0_65] : memref<2x128x768xbf16, #tpu.memory_space<vmem>>, vector<1x128x768xbf16>
    %143 = vector.shape_cast %142 : vector<1x128x768xbf16> to vector<128x768xbf16>
    %c1_66 = arith.constant 1 : index
    %c0_67 = arith.constant 0 : index
    %c0_68 = arith.constant 0 : index
    %144 = vector.load %arg5[%c1_66, %c0_67, %c0_68] : memref<2x256x128xbf16, #tpu.memory_space<vmem>>, vector<1x256x128xbf16>
    %145 = vector.shape_cast %144 : vector<1x256x128xbf16> to vector<256x128xbf16>
    %c1_69 = arith.constant 1 : index
    %c0_70 = arith.constant 0 : index
    %c0_71 = arith.constant 0 : index
    %146 = vector.load %arg7[%c1_69, %c0_70, %c0_71] : memref<2x128x128xbf16, #tpu.memory_space<vmem>>, vector<1x128x128xbf16>
    %147 = vector.shape_cast %146 : vector<1x128x128xbf16> to vector<128x128xbf16>
    %c1_72 = arith.constant 1 : index
    %c0_73 = arith.constant 0 : index
    %c0_74 = arith.constant 0 : index
    %148 = vector.load %arg9[%c1_72, %c0_73, %c0_74] : memref<2x128x128xbf16, #tpu.memory_space<vmem>>, vector<1x128x128xbf16>
    %149 = vector.shape_cast %148 : vector<1x128x128xbf16> to vector<128x128xbf16>
    %150 = arith.truncf %141 : vector<64x128xf32> to vector<64x128xbf16>
    %cst_75 = arith.constant dense<0.000000e+00> : vector<64x768xf32>
    %151 = tpu.matmul %150, %143, %cst_75 {dimension_numbers = #tpu.dot_dimension_numbers<[1], [0], [0], [1], [0, 0, 1, 1], [], []>} : vector<64x128xbf16>, vector<128x768xbf16>, vector<64x768xf32> -> vector<64x768xf32>
    %c1_76 = arith.constant 1 : index
    %c0_77 = arith.constant 0 : index
    %c0_78 = arith.constant 0 : index
    %152 = vector.load %arg4[%c1_76, %c0_77, %c0_78] : memref<2x1x768xf32, #tpu.memory_space<vmem>>, vector<1x1x768xf32>
    %153 = vector.shape_cast %152 : vector<1x1x768xf32> to vector<1x768xf32>
    %154 = vector.broadcast %153 : vector<1x768xf32> to vector<64x768xf32>
    %155 = arith.addf %151, %154 : vector<64x768xf32>
    %156 = vector.shape_cast %155 : vector<64x768xf32> to vector<16x4x768xf32>
    %157 = vector.extract_strided_slice %156 {offsets = [0, 0, 0], sizes = [16, 4, 128], strides = [1, 1, 1]} : vector<16x4x768xf32> to vector<16x4x128xf32>
    %158 = vector.extract_strided_slice %156 {offsets = [0, 0, 128], sizes = [16, 4, 128], strides = [1, 1, 1]} : vector<16x4x768xf32> to vector<16x4x128xf32>
    %159 = tpu.concatenate %157, %158 in 0 : vector<16x4x128xf32>, vector<16x4x128xf32> -> vector<32x4x128xf32>
    %160 = vector.extract_strided_slice %156 {offsets = [0, 0, 256], sizes = [16, 4, 128], strides = [1, 1, 1]} : vector<16x4x768xf32> to vector<16x4x128xf32>
    %161 = vector.extract_strided_slice %156 {offsets = [0, 0, 384], sizes = [16, 4, 128], strides = [1, 1, 1]} : vector<16x4x768xf32> to vector<16x4x128xf32>
    %162 = tpu.concatenate %160, %161 in 0 : vector<16x4x128xf32>, vector<16x4x128xf32> -> vector<32x4x128xf32>
    %163 = vector.extract_strided_slice %156 {offsets = [0, 0, 512], sizes = [16, 4, 128], strides = [1, 1, 1]} : vector<16x4x768xf32> to vector<16x4x128xf32>
    %164 = vector.extract_strided_slice %156 {offsets = [0, 0, 640], sizes = [16, 4, 128], strides = [1, 1, 1]} : vector<16x4x768xf32> to vector<16x4x128xf32>
    %165 = tpu.concatenate %163, %164 in 0 : vector<16x4x128xf32>, vector<16x4x128xf32> -> vector<32x4x128xf32>
    %166 = arith.truncf %159 : vector<32x4x128xf32> to vector<32x4x128xbf16>
    %167 = arith.truncf %162 : vector<32x4x128xf32> to vector<32x4x128xbf16>
    "tpu.trace_start"() <{level = 10 : i32, message = "bqd,bkd->bqk"}> : () -> ()
    %cst_79 = arith.constant dense<0.000000e+00> : vector<32x4x4xf32>
    %168 = tpu.matmul %166, %167, %cst_79 {dimension_numbers = #tpu.dot_dimension_numbers<[2], [2], [1], [1], [0, 0, 0, 1, 1, 1], [0], [0]>} : vector<32x4x128xbf16>, vector<32x4x128xbf16>, vector<32x4x4xf32> -> vector<32x4x4xf32>
    "tpu.trace_stop"() : () -> ()
    %cst_80 = arith.constant 0.353553385 : f32
    %169 = vector.broadcast %cst_80 : f32 to vector<32x4x4xf32>
    %170 = arith.mulf %168, %169 : vector<32x4x4xf32>
    %171 = vector.broadcast %9 : vector<32x1x4xf32> to vector<32x4x4xf32>
    %172 = arith.addf %170, %171 : vector<32x4x4xf32>
    %cst_81 = arith.constant dense<0xFF800000> : vector<32x4xf32>
    %173 = vector.multi_reduction <maximumf>, %172, %cst_81 [2] : vector<32x4x4xf32> to vector<32x4xf32>
    %174 = vector.shape_cast %173 : vector<32x4xf32> to vector<32x4x1xf32>
    %175 = vector.broadcast %174 : vector<32x4x1xf32> to vector<32x4x4xf32>
    %176 = arith.subf %172, %175 : vector<32x4x4xf32>
    %177 = math.exp %176 : vector<32x4x4xf32>
    %cst_82 = arith.constant dense<0.000000e+00> : vector<32x4xf32>
    %178 = vector.multi_reduction <add>, %177, %cst_82 [2] : vector<32x4x4xf32> to vector<32x4xf32>
    %179 = vector.shape_cast %178 : vector<32x4xf32> to vector<32x4x1xf32>
    %180 = tpu.reciprocal %179 {approx = true} : vector<32x4x1xf32> -> vector<32x4x1xf32>
    %181 = vector.broadcast %180 : vector<32x4x1xf32> to vector<32x4x4xf32>
    %182 = arith.mulf %177, %181 : vector<32x4x4xf32>
    %183 = arith.truncf %182 : vector<32x4x4xf32> to vector<32x4x4xbf16>
    %184 = arith.truncf %165 : vector<32x4x128xf32> to vector<32x4x128xbf16>
    "tpu.trace_start"() <{level = 10 : i32, message = "bqk,bkd->bqd"}> : () -> ()
    %cst_83 = arith.constant dense<0.000000e+00> : vector<32x4x128xf32>
    %185 = tpu.matmul %183, %184, %cst_83 {dimension_numbers = #tpu.dot_dimension_numbers<[2], [1], [1], [2], [0, 0, 0, 1, 1, 2], [0], [0]>} : vector<32x4x4xbf16>, vector<32x4x128xbf16>, vector<32x4x128xf32> -> vector<32x4x128xf32>
    "tpu.trace_stop"() : () -> ()
    %186 = vector.extract_strided_slice %185 {offsets = [0, 0, 0], sizes = [16, 4, 128], strides = [1, 1, 1]} : vector<32x4x128xf32> to vector<16x4x128xf32>
    %187 = vector.extract_strided_slice %185 {offsets = [16, 0, 0], sizes = [16, 4, 128], strides = [1, 1, 1]} : vector<32x4x128xf32> to vector<16x4x128xf32>
    %188 = tpu.concatenate %186, %187 in 2 : vector<16x4x128xf32>, vector<16x4x128xf32> -> vector<16x4x256xf32>
    %189 = vector.shape_cast %188 : vector<16x4x256xf32> to vector<64x256xf32>
    %190 = arith.truncf %189 : vector<64x256xf32> to vector<64x256xbf16>
    %cst_84 = arith.constant dense<0.000000e+00> : vector<64x128xf32>
    %191 = tpu.matmul %190, %145, %cst_84 {dimension_numbers = #tpu.dot_dimension_numbers<[1], [0], [0], [1], [0, 0, 1, 1], [], []>} : vector<64x256xbf16>, vector<256x128xbf16>, vector<64x128xf32> -> vector<64x128xf32>
    %c1_85 = arith.constant 1 : index
    %c0_86 = arith.constant 0 : index
    %c0_87 = arith.constant 0 : index
    %192 = vector.load %arg6[%c1_85, %c0_86, %c0_87] : memref<2x1x128xf32, #tpu.memory_space<vmem>>, vector<1x1x128xf32>
    %193 = vector.shape_cast %192 : vector<1x1x128xf32> to vector<1x128xf32>
    %194 = vector.broadcast %193 : vector<1x128xf32> to vector<64x128xf32>
    %195 = arith.addf %191, %194 : vector<64x128xf32>
    %196 = arith.addf %141, %195 : vector<64x128xf32>
    %c1_88 = arith.constant 1 : index
    %c0_89 = arith.constant 0 : index
    %c0_90 = arith.constant 0 : index
    %197 = vector.load %arg11[%c1_88, %c0_89, %c0_90] : memref<2x1x128xf32, #tpu.memory_space<vmem>>, vector<1x1x128xf32>
    %198 = vector.shape_cast %197 : vector<1x1x128xf32> to vector<1x128xf32>
    %c1_91 = arith.constant 1 : index
    %c0_92 = arith.constant 0 : index
    %c0_93 = arith.constant 0 : index
    %199 = vector.load %arg12[%c1_91, %c0_92, %c0_93] : memref<2x1x128xf32, #tpu.memory_space<vmem>>, vector<1x1x128xf32>
    %200 = vector.shape_cast %199 : vector<1x1x128xf32> to vector<1x128xf32>
    %201 = tpu.iota {dimensions = array<i32: 1>} : vector<1x128xi32>
    %c16_i32_94 = arith.constant 16 : i32
    %202 = vector.broadcast %c16_i32_94 : i32 to vector<1x128xi32>
    %203 = arith.cmpi slt, %201, %202 : vector<1x128xi32>
    %cst_95 = arith.constant dense<0.000000e+00> : vector<64xf32>
    %204 = vector.multi_reduction <add>, %196, %cst_95 [1] : vector<64x128xf32> to vector<64xf32>
    %205 = vector.shape_cast %204 : vector<64xf32> to vector<64x1xf32>
    %cst_96 = arith.constant 6.250000e-02 : f32
    %206 = vector.broadcast %cst_96 : f32 to vector<64x1xf32>
    %207 = arith.mulf %205, %206 : vector<64x1xf32>
    %208 = vector.broadcast %207 : vector<64x1xf32> to vector<64x128xf32>
    %209 = arith.subf %196, %208 : vector<64x128xf32>
    %cst_97 = arith.constant 0.000000e+00 : f32
    %210 = vector.shape_cast %203 : vector<1x128xi1> to vector<1x128xi1>
    %211 = vector.broadcast %210 : vector<1x128xi1> to vector<64x128xi1>
    %212 = vector.broadcast %cst_97 : f32 to vector<64x128xf32>
    %213 = arith.select %211, %209, %212 : vector<64x128xi1>, vector<64x128xf32>
    %214 = arith.mulf %213, %213 : vector<64x128xf32>
    %cst_98 = arith.constant dense<0.000000e+00> : vector<64xf32>
    %215 = vector.multi_reduction <add>, %214, %cst_98 [1] : vector<64x128xf32> to vector<64xf32>
    %216 = vector.shape_cast %215 : vector<64xf32> to vector<64x1xf32>
    %cst_99 = arith.constant 6.250000e-02 : f32
    %217 = vector.broadcast %cst_99 : f32 to vector<64x1xf32>
    %218 = arith.mulf %216, %217 : vector<64x1xf32>
    %cst_100 = arith.constant 9.99999974E-6 : f32
    %219 = vector.broadcast %cst_100 : f32 to vector<64x1xf32>
    %220 = arith.addf %218, %219 : vector<64x1xf32>
    %221 = math.rsqrt %220 : vector<64x1xf32>
    %222 = vector.broadcast %221 : vector<64x1xf32> to vector<64x128xf32>
    %223 = arith.mulf %213, %222 : vector<64x128xf32>
    %224 = vector.broadcast %198 : vector<1x128xf32> to vector<64x128xf32>
    %225 = arith.mulf %223, %224 : vector<64x128xf32>
    %226 = vector.broadcast %200 : vector<1x128xf32> to vector<64x128xf32>
    %227 = arith.addf %225, %226 : vector<64x128xf32>
    %228 = arith.truncf %227 : vector<64x128xf32> to vector<64x128xbf16>
    %cst_101 = arith.constant dense<0.000000e+00> : vector<64x128xf32>
    %229 = tpu.matmul %228, %147, %cst_101 {dimension_numbers = #tpu.dot_dimension_numbers<[1], [0], [0], [1], [0, 0, 1, 1], [], []>} : vector<64x128xbf16>, vector<128x128xbf16>, vector<64x128xf32> -> vector<64x128xf32>
    %c1_102 = arith.constant 1 : index
    %c0_103 = arith.constant 0 : index
    %c0_104 = arith.constant 0 : index
    %230 = vector.load %arg8[%c1_102, %c0_103, %c0_104] : memref<2x1x128xf32, #tpu.memory_space<vmem>>, vector<1x1x128xf32>
    %231 = vector.shape_cast %230 : vector<1x1x128xf32> to vector<1x128xf32>
    %232 = vector.broadcast %231 : vector<1x128xf32> to vector<64x128xf32>
    %233 = arith.addf %229, %232 : vector<64x128xf32>
    %cst_105 = arith.constant 0.000000e+00 : f32
    %234 = vector.broadcast %cst_105 : f32 to vector<64x128xf32>
    %235 = arith.maximumf %233, %234 : vector<64x128xf32>
    %236 = arith.truncf %235 : vector<64x128xf32> to vector<64x128xbf16>
    %cst_106 = arith.constant dense<0.000000e+00> : vector<64x128xf32>
    %237 = tpu.matmul %236, %149, %cst_106 {dimension_numbers = #tpu.dot_dimension_numbers<[1], [0], [0], [1], [0, 0, 1, 1], [], []>} : vector<64x128xbf16>, vector<128x128xbf16>, vector<64x128xf32> -> vector<64x128xf32>
    %c1_107 = arith.constant 1 : index
    %c0_108 = arith.constant 0 : index
    %c0_109 = arith.constant 0 : index
    %238 = vector.load %arg10[%c1_107, %c0_108, %c0_109] : memref<2x1x128xf32, #tpu.memory_space<vmem>>, vector<1x1x128xf32>
    %239 = vector.shape_cast %238 : vector<1x1x128xf32> to vector<1x128xf32>
    %240 = vector.broadcast %239 : vector<1x128xf32> to vector<64x128xf32>
    %241 = arith.addf %237, %240 : vector<64x128xf32>
    %242 = arith.addf %227, %241 : vector<64x128xf32>
    %c1_110 = arith.constant 1 : index
    %c0_111 = arith.constant 0 : index
    %c0_112 = arith.constant 0 : index
    %243 = vector.load %arg13[%c1_110, %c0_111, %c0_112] : memref<2x1x128xf32, #tpu.memory_space<vmem>>, vector<1x1x128xf32>
    %244 = vector.shape_cast %243 : vector<1x1x128xf32> to vector<1x128xf32>
    %c1_113 = arith.constant 1 : index
    %c0_114 = arith.constant 0 : index
    %c0_115 = arith.constant 0 : index
    %245 = vector.load %arg14[%c1_113, %c0_114, %c0_115] : memref<2x1x128xf32, #tpu.memory_space<vmem>>, vector<1x1x128xf32>
    %246 = vector.shape_cast %245 : vector<1x1x128xf32> to vector<1x128xf32>
    %247 = tpu.iota {dimensions = array<i32: 1>} : vector<1x128xi32>
    %c16_i32_116 = arith.constant 16 : i32
    %248 = vector.broadcast %c16_i32_116 : i32 to vector<1x128xi32>
    %249 = arith.cmpi slt, %247, %248 : vector<1x128xi32>
    %cst_117 = arith.constant dense<0.000000e+00> : vector<64xf32>
    %250 = vector.multi_reduction <add>, %242, %cst_117 [1] : vector<64x128xf32> to vector<64xf32>
    %251 = vector.shape_cast %250 : vector<64xf32> to vector<64x1xf32>
    %cst_118 = arith.constant 6.250000e-02 : f32
    %252 = vector.broadcast %cst_118 : f32 to vector<64x1xf32>
    %253 = arith.mulf %251, %252 : vector<64x1xf32>
    %254 = vector.broadcast %253 : vector<64x1xf32> to vector<64x128xf32>
    %255 = arith.subf %242, %254 : vector<64x128xf32>
    %cst_119 = arith.constant 0.000000e+00 : f32
    %256 = vector.shape_cast %249 : vector<1x128xi1> to vector<1x128xi1>
    %257 = vector.broadcast %256 : vector<1x128xi1> to vector<64x128xi1>
    %258 = vector.broadcast %cst_119 : f32 to vector<64x128xf32>
    %259 = arith.select %257, %255, %258 : vector<64x128xi1>, vector<64x128xf32>
    %260 = arith.mulf %259, %259 : vector<64x128xf32>
    %cst_120 = arith.constant dense<0.000000e+00> : vector<64xf32>
    %261 = vector.multi_reduction <add>, %260, %cst_120 [1] : vector<64x128xf32> to vector<64xf32>
    %262 = vector.shape_cast %261 : vector<64xf32> to vector<64x1xf32>
    %cst_121 = arith.constant 6.250000e-02 : f32
    %263 = vector.broadcast %cst_121 : f32 to vector<64x1xf32>
    %264 = arith.mulf %262, %263 : vector<64x1xf32>
    %cst_122 = arith.constant 9.99999974E-6 : f32
    %265 = vector.broadcast %cst_122 : f32 to vector<64x1xf32>
    %266 = arith.addf %264, %265 : vector<64x1xf32>
    %267 = math.rsqrt %266 : vector<64x1xf32>
    %268 = vector.broadcast %267 : vector<64x1xf32> to vector<64x128xf32>
    %269 = arith.mulf %259, %268 : vector<64x128xf32>
    %270 = vector.broadcast %244 : vector<1x128xf32> to vector<64x128xf32>
    %271 = arith.mulf %269, %270 : vector<64x128xf32>
    %272 = vector.broadcast %246 : vector<1x128xf32> to vector<64x128xf32>
    %273 = arith.addf %271, %272 : vector<64x128xf32>
    %274 = vector.shape_cast %273 : vector<64x128xf32> to vector<16x4x128xf32>
    %275 = arith.extui %2 : vector<16x4xi1> to vector<16x4xi32>
    %276 = arith.sitofp %275 : vector<16x4xi32> to vector<16x4xf32>
    %277 = vector.shape_cast %276 : vector<16x4xf32> to vector<16x4x1xf32>
    %278 = vector.broadcast %277 : vector<16x4x1xf32> to vector<16x4x128xf32>
    %279 = arith.mulf %274, %278 : vector<16x4x128xf32>
    %cst_123 = arith.constant dense<0.000000e+00> : vector<16x128xf32>
    %280 = vector.multi_reduction <add>, %279, %cst_123 [1] : vector<16x4x128xf32> to vector<16x128xf32>
    %cst_124 = arith.constant dense<0.000000e+00> : vector<16x1xf32>
    %281 = vector.multi_reduction <add>, %277, %cst_124 [1] : vector<16x4x1xf32> to vector<16x1xf32>
    %cst_125 = arith.constant 1.000000e+00 : f32
    %282 = vector.broadcast %cst_125 : f32 to vector<16x1xf32>
    %283 = arith.maximumf %281, %282 : vector<16x1xf32>
    %284 = vector.broadcast %283 : vector<16x1xf32> to vector<16x128xf32>
    %285 = arith.divf %280, %284 : vector<16x128xf32>
    %c0_126 = arith.constant 0 : index
    %c0_127 = arith.constant 0 : index
    %286 = vector.load %arg15[%c0_126, %c0_127] : memref<16x128xf32, #tpu.memory_space<vmem>>, vector<16x128xf32>
    tpu.vector_store %arg15[%c0_126, %c0_127], %285 {strides = array<i32>} : memref<16x128xf32, #tpu.memory_space<vmem>>, vector<16x128xf32>,
    return
  }
  func.func @transform_0(%arg0: i32) -> (i32, i32) {
    %c0_i32 = arith.constant 0 : i32
    %c0_i32_0 = arith.constant 0 : i32
    return %arg0, %c0_i32 : i32, i32
  }
  func.func @transform_1(%arg0: i32) -> (i32, i32, i32) {
    %c0_i32 = arith.constant 0 : i32
    %c0_i32_0 = arith.constant 0 : i32
    %c0_i32_1 = arith.constant 0 : i32
    return %arg0, %c0_i32, %c0_i32_0 : i32, i32, i32
  }
  func.func @transform_2(%arg0: i32) -> (i32, i32, i32) {
    %c0_i32 = arith.constant 0 : i32
    %c0_i32_0 = arith.constant 0 : i32
    %c0_i32_1 = arith.constant 0 : i32
    %c0_i32_2 = arith.constant 0 : i32
    return %c0_i32, %c0_i32_0, %c0_i32_1 : i32, i32, i32
  }
  func.func @transform_3(%arg0: i32) -> (i32, i32, i32) {
    %c0_i32 = arith.constant 0 : i32
    %c0_i32_0 = arith.constant 0 : i32
    %c0_i32_1 = arith.constant 0 : i32
    %c0_i32_2 = arith.constant 0 : i32
    return %c0_i32, %c0_i32_0, %c0_i32_1 : i32, i32, i32
  }
  func.func @transform_4(%arg0: i32) -> (i32, i32, i32) {
    %c0_i32 = arith.constant 0 : i32
    %c0_i32_0 = arith.constant 0 : i32
    %c0_i32_1 = arith.constant 0 : i32
    %c0_i32_2 = arith.constant 0 : i32
    return %c0_i32, %c0_i32_0, %c0_i32_1 : i32, i32, i32
  }
  func.func @transform_5(%arg0: i32) -> (i32, i32, i32) {
    %c0_i32 = arith.constant 0 : i32
    %c0_i32_0 = arith.constant 0 : i32
    %c0_i32_1 = arith.constant 0 : i32
    %c0_i32_2 = arith.constant 0 : i32
    return %c0_i32, %c0_i32_0, %c0_i32_1 : i32, i32, i32
  }
  func.func @transform_6(%arg0: i32) -> (i32, i32, i32) {
    %c0_i32 = arith.constant 0 : i32
    %c0_i32_0 = arith.constant 0 : i32
    %c0_i32_1 = arith.constant 0 : i32
    %c0_i32_2 = arith.constant 0 : i32
    return %c0_i32, %c0_i32_0, %c0_i32_1 : i32, i32, i32
  }
  func.func @transform_7(%arg0: i32) -> (i32, i32, i32) {
    %c0_i32 = arith.constant 0 : i32
    %c0_i32_0 = arith.constant 0 : i32
    %c0_i32_1 = arith.constant 0 : i32
    %c0_i32_2 = arith.constant 0 : i32
    return %c0_i32, %c0_i32_0, %c0_i32_1 : i32, i32, i32
  }
  func.func @transform_8(%arg0: i32) -> (i32, i32, i32) {
    %c0_i32 = arith.constant 0 : i32
    %c0_i32_0 = arith.constant 0 : i32
    %c0_i32_1 = arith.constant 0 : i32
    %c0_i32_2 = arith.constant 0 : i32
    return %c0_i32, %c0_i32_0, %c0_i32_1 : i32, i32, i32
  }
  func.func @transform_9(%arg0: i32) -> (i32, i32, i32) {
    %c0_i32 = arith.constant 0 : i32
    %c0_i32_0 = arith.constant 0 : i32
    %c0_i32_1 = arith.constant 0 : i32
    %c0_i32_2 = arith.constant 0 : i32
    return %c0_i32, %c0_i32_0, %c0_i32_1 : i32, i32, i32
  }
  func.func @transform_10(%arg0: i32) -> (i32, i32, i32) {
    %c0_i32 = arith.constant 0 : i32
    %c0_i32_0 = arith.constant 0 : i32
    %c0_i32_1 = arith.constant 0 : i32
    %c0_i32_2 = arith.constant 0 : i32
    return %c0_i32, %c0_i32_0, %c0_i32_1 : i32, i32, i32
  }
  func.func @transform_11(%arg0: i32) -> (i32, i32, i32) {
    %c0_i32 = arith.constant 0 : i32
    %c0_i32_0 = arith.constant 0 : i32
    %c0_i32_1 = arith.constant 0 : i32
    %c0_i32_2 = arith.constant 0 : i32
    return %c0_i32, %c0_i32_0, %c0_i32_1 : i32, i32, i32
  }
  func.func @transform_12(%arg0: i32) -> (i32, i32, i32) {
    %c0_i32 = arith.constant 0 : i32
    %c0_i32_0 = arith.constant 0 : i32
    %c0_i32_1 = arith.constant 0 : i32
    %c0_i32_2 = arith.constant 0 : i32
    return %c0_i32, %c0_i32_0, %c0_i32_1 : i32, i32, i32
  }
  func.func @transform_13(%arg0: i32) -> (i32, i32, i32) {
    %c0_i32 = arith.constant 0 : i32
    %c0_i32_0 = arith.constant 0 : i32
    %c0_i32_1 = arith.constant 0 : i32
    %c0_i32_2 = arith.constant 0 : i32
    return %c0_i32, %c0_i32_0, %c0_i32_1 : i32, i32, i32
  }
  func.func @transform_14(%arg0: i32) -> (i32, i32) {
    %c0_i32 = arith.constant 0 : i32
    %c0_i32_0 = arith.constant 0 : i32
    return %arg0, %c0_i32 : i32, i32
  }
}

</mosaic_0001>

<llo_original>
// kernel: tpu_custom_call.1
$region0: #{tpu_custom_call.1}
  #allocation0 [shape = 'u32[]', space=smem, size = 0x4, offset = 0x4, fixed_abs, tag = 'smem constant byte address 0x4 - core index']
  #allocation1 [shape = 'u32[144,128]{1,0:T(1,128)}', space=vmem, size = 0x12000, scoped, tag = 'internal scratch']
  %s0 = inlined_call_operand.vmem [shape: s32[16,4], index: 0, kind: input, shape index: {}]
  %s1 = inlined_call_operand.hbm [shape: f32[16,4,128], index: 1, kind: input, shape index: {}]
  %s2 = inlined_call_operand.hbm [shape: bf16[2,128,768], index: 2, kind: input, shape index: {}]
  %s3 = inlined_call_operand.vmem [shape: f32[2,1,768], index: 3, kind: input, shape index: {}]
  %s4 = inlined_call_operand.hbm [shape: bf16[2,256,128], index: 4, kind: input, shape index: {}]
  %s5 = inlined_call_operand.vmem [shape: f32[2,1,128], index: 5, kind: input, shape index: {}]
  %s6 = inlined_call_operand.hbm [shape: bf16[2,128,128], index: 6, kind: input, shape index: {}]
  %s7 = inlined_call_operand.vmem [shape: f32[2,1,128], index: 7, kind: input, shape index: {}]
  %s8 = inlined_call_operand.hbm [shape: bf16[2,128,128], index: 8, kind: input, shape index: {}]
  %s9 = inlined_call_operand.vmem [shape: f32[2,1,128], index: 9, kind: input, shape index: {}]
  %s10 = inlined_call_operand.vmem [shape: f32[2,1,128], index: 10, kind: input, shape index: {}]
  %s11 = inlined_call_operand.vmem [shape: f32[2,1,128], index: 11, kind: input, shape index: {}]
  %s12 = inlined_call_operand.vmem [shape: f32[2,1,128], index: 12, kind: input, shape index: {}]
  %s13 = inlined_call_operand.vmem [shape: f32[2,1,128], index: 13, kind: input, shape index: {}]
  %s14 = inlined_call_operand.hbm [shape: f32[16,128], index: 14, kind: output, shape index: {}]
  %s15 = sld [smem:[#allocation0]]
  $region86: #{tpu_custom_call.1} parent=0
    _
  %s17 = ssub.s32 1, %s15
  %s18 = scalar_select 0, %s17, %s15
  $region1: #{tpu_custom_call.1} parent=0
    #allocation2 [shape = 'u8[32768]{0}', space=vmem, size = 0x8000, scoped, tag = 'input window, operand 1, single buffered']
    #allocation3 [shape = 's32[1]{0}', space=sflag, size = 0x4, scoped, tag = 'scoped memory for tpu_custom_call.1']
    #allocation4 [shape = 's32[1]{0}', space=sflag, size = 0x4, scoped, tag = 'scoped memory for tpu_custom_call.1']
    #allocation5 [shape = 'u8[393216]{0}', space=vmem, size = 0x60000, scoped, tag = 'input window, operand 2, single buffered']
    #allocation6 [shape = 's32[1]{0}', space=sflag, size = 0x4, scoped, tag = 'scoped memory for tpu_custom_call.1']
    #allocation7 [shape = 'u8[131072]{0}', space=vmem, size = 0x20000, scoped, tag = 'input window, operand 4, single buffered']
    #allocation8 [shape = 'u8[65536]{0}', space=vmem, size = 0x10000, scoped, tag = 'input window, operand 6, single buffered']
    #allocation9 [shape = 's32[1]{0}', space=sflag, size = 0x4, scoped, tag = 'scoped memory for tpu_custom_call.1']
    #allocation10 [shape = 'u8[65536]{0}', space=vmem, size = 0x10000, scoped, tag = 'input window, operand 8, single buffered']
    #allocation11 [shape = 'u8[8192]{0}', space=vmem, size = 0x2000, scoped, tag = 'output window, operand 0, single buffered']
    %19 = vsyncpa [#allocation3], 0
    %20 = vsyncpa [#allocation6], 0
    %21 = vsyncpa [#allocation9], 0
    %22 = vsyncpa [#allocation4], 0
    // Predicated region
    $region2: #{tpu_custom_call.1} parent=1 // pred_check
      _
    $region3: #{tpu_custom_call.1} parent=1 // pred_check_branch
      %24 = sbr.rel (0) target = $region5
    $region4: #{tpu_custom_call.1} parent=1 // pred_region
      _
    $region5: #{tpu_custom_call.1} parent=1 // pred_fallthru
      _
    // Predicated region
    $region6: #{tpu_custom_call.1} parent=1 // pred_check
      _
    $region7: #{tpu_custom_call.1} parent=1 // pred_check_branch
      %26 = sbr.rel (0) target = $region9
    $region8: #{tpu_custom_call.1} parent=1 // pred_region
      %s28 = ssub.s32 1024, 1024
      %29 = vsyncadd [#allocation3], %s28
      %s30 = sshll.u32 [#allocation2], 4
      %s31 = int_to_ptr.vmem [resolvable:$true] %s30
      %36 = dma.hbm_to_vmem [thread:$0]  %s1, 1024, %s31, [#allocation3], 64, 64, 4
    $region9: #{tpu_custom_call.1} parent=1 // pred_fallthru
      _
    // Predicated region
    $region10: #{tpu_custom_call.1} parent=1 // pred_check
      _
    $region11: #{tpu_custom_call.1} parent=1 // pred_check_branch
      %38 = sbr.rel (0) target = $region13
    $region12: #{tpu_custom_call.1} parent=1 // pred_region
      %s40 = ssub.s32 12288, 12288
      %41 = vsyncadd [#allocation6], %s40
      %s42 = sshll.u32 [#allocation5], 4
      %s43 = int_to_ptr.vmem [resolvable:$true] %s42
      %48 = dma.hbm_to_vmem [thread:$0]  %s2, 12288, %s43, [#allocation6], 384, 384, 24
    $region13: #{tpu_custom_call.1} parent=1 // pred_fallthru
      _
    // Predicated region
    $region14: #{tpu_custom_call.1} parent=1 // pred_check
      _
    $region15: #{tpu_custom_call.1} parent=1 // pred_check_branch
      %50 = sbr.rel (0) target = $region17
    $region16: #{tpu_custom_call.1} parent=1 // pred_region
      _
    $region17: #{tpu_custom_call.1} parent=1 // pred_fallthru
      _
    // Predicated region
    $region18: #{tpu_custom_call.1} parent=1 // pred_check
      _
    $region19: #{tpu_custom_call.1} parent=1 // pred_check_branch
      %52 = sbr.rel (0) target = $region21
    $region20: #{tpu_custom_call.1} parent=1 // pred_region
      %s54 = ssub.s32 4096, 4096
      %55 = vsyncadd [#allocation6], %s54
      %s56 = sshll.u32 [#allocation7], 4
      %s57 = int_to_ptr.vmem [resolvable:$true] %s56
      %62 = dma.hbm_to_vmem [thread:$0]  %s4, 4096, %s57, [#allocation6], 64, 64, 4
    $region21: #{tpu_custom_call.1} parent=1 // pred_fallthru
      _
    // Predicated region
    $region22: #{tpu_custom_call.1} parent=1 // pred_check
      _
    $region23: #{tpu_custom_call.1} parent=1 // pred_check_branch
      %64 = sbr.rel (0) target = $region25
    $region24: #{tpu_custom_call.1} parent=1 // pred_region
      _
    $region25: #{tpu_custom_call.1} parent=1 // pred_fallthru
      _
    // Predicated region
    $region26: #{tpu_custom_call.1} parent=1 // pred_check
      _
    $region27: #{tpu_custom_call.1} parent=1 // pred_check_branch
      %66 = sbr.rel (0) target = $region29
    $region28: #{tpu_custom_call.1} parent=1 // pred_region
      %s68 = ssub.s32 2048, 2048
      %69 = vsyncadd [#allocation9], %s68
      %s70 = sshll.u32 [#allocation8], 4
      %s71 = int_to_ptr.vmem [resolvable:$true] %s70
      %76 = dma.hbm_to_vmem [thread:$0]  %s6, 2048, %s71, [#allocation9], 64, 64, 4
    $region29: #{tpu_custom_call.1} parent=1 // pred_fallthru
      _
    // Predicated region
    $region30: #{tpu_custom_call.1} parent=1 // pred_check
      _
    $region31: #{tpu_custom_call.1} parent=1 // pred_check_branch
      %78 = sbr.rel (0) target = $region33
    $region32: #{tpu_custom_call.1} parent=1 // pred_region
      _
    $region33: #{tpu_custom_call.1} parent=1 // pred_fallthru
      _
    // Predicated region
    $region34: #{tpu_custom_call.1} parent=1 // pred_check
      _
    $region35: #{tpu_custom_call.1} parent=1 // pred_check_branch
      %80 = sbr.rel (0) target = $region37
    $region36: #{tpu_custom_call.1} parent=1 // pred_region
      %s82 = ssub.s32 2048, 2048
      %83 = vsyncadd [#allocation9], %s82
      %s84 = sshll.u32 [#allocation10], 4
      %s85 = int_to_ptr.vmem [resolvable:$true] %s84
      %90 = dma.hbm_to_vmem [thread:$0]  %s8, 2048, %s85, [#allocation9], 64, 64, 4
    $region37: #{tpu_custom_call.1} parent=1 // pred_fallthru
      _
    // Predicated region
    $region38: #{tpu_custom_call.1} parent=1 // pred_check
      _
    $region39: #{tpu_custom_call.1} parent=1 // pred_check_branch
      %92 = sbr.rel (0) target = $region41
    $region40: #{tpu_custom_call.1} parent=1 // pred_region
      _
    $region41: #{tpu_custom_call.1} parent=1 // pred_fallthru
      _
    // Predicated region
    $region42: #{tpu_custom_call.1} parent=1 // pred_check
      _
    $region43: #{tpu_custom_call.1} parent=1 // pred_check_branch
      %94 = sbr.rel (0) target = $region45
    $region44: #{tpu_custom_call.1} parent=1 // pred_region
      _
    $region45: #{tpu_custom_call.1} parent=1 // pred_fallthru
      _
    // Predicated region
    $region46: #{tpu_custom_call.1} parent=1 // pred_check
      _
    $region47: #{tpu_custom_call.1} parent=1 // pred_check_branch
      %96 = sbr.rel (0) target = $region49
    $region48: #{tpu_custom_call.1} parent=1 // pred_region
      _
    $region49: #{tpu_custom_call.1} parent=1 // pred_fallthru
      _
    // Predicated region
    $region50: #{tpu_custom_call.1} parent=1 // pred_check
      _
    $region51: #{tpu_custom_call.1} parent=1 // pred_check_branch
      %98 = sbr.rel (0) target = $region53
    $region52: #{tpu_custom_call.1} parent=1 // pred_region
      _
    $region53: #{tpu_custom_call.1} parent=1 // pred_fallthru
      _
    // Predicated region
    $region54: #{tpu_custom_call.1} parent=1 // pred_check
      _
    $region55: #{tpu_custom_call.1} parent=1 // pred_check_branch
      %100 = sbr.rel (0) target = $region57
    $region56: #{tpu_custom_call.1} parent=1 // pred_region
      _
    $region57: #{tpu_custom_call.1} parent=1 // pred_fallthru
      _
    // Predicated region
    $region58: #{tpu_custom_call.1} parent=1 // pred_check
      _
    $region59: #{tpu_custom_call.1} parent=1 // pred_check_branch
      %102 = sbr.rel (0) target = $region61
    $region60: #{tpu_custom_call.1} parent=1 // pred_region
      %103 = dma.done [#allocation3], 1024
    $region61: #{tpu_custom_call.1} parent=1 // pred_fallthru
      _
    // Predicated region
    $region62: #{tpu_custom_call.1} parent=1 // pred_check
      _
    $region63: #{tpu_custom_call.1} parent=1 // pred_check_branch
      %105 = sbr.rel (0) target = $region65
    $region64: #{tpu_custom_call.1} parent=1 // pred_region
      %106 = dma.done [#allocation6], 12288
    $region65: #{tpu_custom_call.1} parent=1 // pred_fallthru
      _
    // Predicated region
    $region66: #{tpu_custom_call.1} parent=1 // pred_check
      _
    $region67: #{tpu_custom_call.1} parent=1 // pred_check_branch
      %108 = sbr.rel (0) target = $region69
    $region68: #{tpu_custom_call.1} parent=1 // pred_region
      %109 = dma.done [#allocation6], 4096
    $region69: #{tpu_custom_call.1} parent=1 // pred_fallthru
      _
    // Predicated region
    $region70: #{tpu_custom_call.1} parent=1 // pred_check
      _
    $region71: #{tpu_custom_call.1} parent=1 // pred_check_branch
      %111 = sbr.rel (0) target = $region73
    $region72: #{tpu_custom_call.1} parent=1 // pred_region
      %112 = dma.done [#allocation9], 2048
    $region73: #{tpu_custom_call.1} parent=1 // pred_fallthru
      _
    // Predicated region
    $region74: #{tpu_custom_call.1} parent=1 // pred_check
      _
    $region75: #{tpu_custom_call.1} parent=1 // pred_check_branch
      %114 = sbr.rel (0) target = $region77
    $region76: #{tpu_custom_call.1} parent=1 // pred_region
      %115 = dma.done [#allocation9], 2048
    $region77: #{tpu_custom_call.1} parent=1 // pred_fallthru
      _
    %v117 = vld [vmem:[%s0] sm:$0xff]
    %v118 = vld [vmem:[%s0 + $0x8] sm:$0xff]
    %vm119 = vcmp.ne.s32.totalorder %v117, 0
    %vm120 = vcmp.ne.s32.totalorder %v118, 0
    %v121 = vsel %vm119, 0.0, -1e+09
    %v122 = vsel %vm120, 0.0, -1e+09
    %v123 = vld [vmem:[#allocation2] sm:$0xf]
    %v124 = vld [vmem:[#allocation2 + $0x4] sm:$0xf]
    %v125 = vld [vmem:[#allocation2 + $0x8] sm:$0xf]
    %v126 = vld [vmem:[#allocation2 + $0xc] sm:$0xf]
    %v127 = vld [vmem:[#allocation2 + $0x10] sm:$0xf]
    %v128 = vld [vmem:[#allocation2 + $0x14] sm:$0xf]
    %v129 = vld [vmem:[#allocation2 + $0x18] sm:$0xf]
    %v130 = vld [vmem:[#allocation2 + $0x1c] sm:$0xf]
    %v131 = vld [vmem:[#allocation2 + $0x20] sm:$0xf]
    %v132 = vld [vmem:[#allocation2 + $0x24] sm:$0xf]
    %v133 = vld [vmem:[#allocation2 + $0x28] sm:$0xf]
    %v134 = vld [vmem:[#allocation2 + $0x2c] sm:$0xf]
    %v135 = vld [vmem:[#allocation2 + $0x30] sm:$0xf]
    %v136 = vld [vmem:[#allocation2 + $0x34] sm:$0xf]
    %v137 = vld [vmem:[#allocation2 + $0x38] sm:$0xf]
    %v138 = vld [vmem:[#allocation2 + $0x3c] sm:$0xf]
    %v141 = vcombine.high %v121, %v121
    %v143 = vunpack.c.l.s4 1966171168
    %v144 = vunpack.c.0.s8 %v143
    %v145 = vlaneseq
    %v146 = vshrl.u32 %v145, 7
    %v147 = vsub.s32 %v144, %v146
    %v148 = vrot.slane %v121, %v147
    %v150 = vunpack.c.l.s4 1966171168
    %v151 = vunpack.c.0.s8 %v150
    %v152 = vlaneseq
    %v153 = vshrl.u32 %v152, 7
    %v154 = vsub.s32 %v151, %v153
    %v155 = vrot.slane %v141, %v154
    %v156 = vcombine.high %v148, %v148
    %v157 = vcombine.high %v155, %v155
    %v159 = vunpack.c.l.s4 1966171168
    %v160 = vunpack.c.0.s8 %v159
    %v161 = vlaneseq
    %v162 = vshrl.u32 %v161, 7
    %v163 = vsub.s32 %v160, %v162
    %v164 = vrot.slane %v148, %v163
    %v166 = vunpack.c.l.s4 1966171168
    %v167 = vunpack.c.0.s8 %v166
    %v168 = vlaneseq
    %v169 = vshrl.u32 %v168, 7
    %v170 = vsub.s32 %v167, %v169
    %v171 = vrot.slane %v155, %v170
    %v173 = vunpack.c.l.s4 1966171168
    %v174 = vunpack.c.0.s8 %v173
    %v175 = vlaneseq
    %v176 = vshrl.u32 %v175, 7
    %v177 = vsub.s32 %v174, %v176
    %v178 = vrot.slane %v156, %v177
    %v180 = vunpack.c.l.s4 1966171168
    %v181 = vunpack.c.0.s8 %v180
    %v182 = vlaneseq
    %v183 = vshrl.u32 %v182, 7
    %v184 = vsub.s32 %v181, %v183
    %v185 = vrot.slane %v157, %v184
    %v186 = vcombine.high %v164, %v164
    %v187 = vcombine.high %v171, %v171
    %v188 = vcombine.high %v178, %v178
    %v189 = vcombine.high %v185, %v185
    %v190 = vcombine.high %v122, %v122
    %v192 = vunpack.c.l.s4 1966171168
    %v193 = vunpack.c.0.s8 %v192
    %v194 = vlaneseq
    %v195 = vshrl.u32 %v194, 7
    %v196 = vsub.s32 %v193, %v195
    %v197 = vrot.slane %v122, %v196
    %v199 = vunpack.c.l.s4 1966171168
    %v200 = vunpack.c.0.s8 %v199
    %v201 = vlaneseq
    %v202 = vshrl.u32 %v201, 7
    %v203 = vsub.s32 %v200, %v202
    %v204 = vrot.slane %v190, %v203
    %v205 = vcombine.high %v197, %v197
    %v206 = vcombine.high %v204, %v204
    %v208 = vunpack.c.l.s4 1966171168
    %v209 = vunpack.c.0.s8 %v208
    %v210 = vlaneseq
    %v211 = vshrl.u32 %v210, 7
    %v212 = vsub.s32 %v209, %v211
    %v213 = vrot.slane %v197, %v212
    %v215 = vunpack.c.l.s4 1966171168
    %v216 = vunpack.c.0.s8 %v215
    %v217 = vlaneseq
    %v218 = vshrl.u32 %v217, 7
    %v219 = vsub.s32 %v216, %v218
    %v220 = vrot.slane %v204, %v219
    %v222 = vunpack.c.l.s4 1966171168
    %v223 = vunpack.c.0.s8 %v222
    %v224 = vlaneseq
    %v225 = vshrl.u32 %v224, 7
    %v226 = vsub.s32 %v223, %v225
    %v227 = vrot.slane %v205, %v226
    %v229 = vunpack.c.l.s4 1966171168
    %v230 = vunpack.c.0.s8 %v229
    %v231 = vlaneseq
    %v232 = vshrl.u32 %v231, 7
    %v233 = vsub.s32 %v230, %v232
    %v234 = vrot.slane %v206, %v233
    %v235 = vcombine.high %v213, %v213
    %v236 = vcombine.high %v220, %v220
    %v237 = vcombine.high %v227, %v227
    %v238 = vcombine.high %v234, %v234
    %v239 = vld [vmem:[#allocation5] sm:$0xff]
    %v240 = vld [vmem:[#allocation5 + $0x8] sm:$0xff]
    %v241 = vld [vmem:[#allocation5 + $0x10] sm:$0xff]
    %v242 = vld [vmem:[#allocation5 + $0x18] sm:$0xff]
    %v243 = vld [vmem:[#allocation5 + $0x20] sm:$0xff]
    %v244 = vld [vmem:[#allocation5 + $0x28] sm:$0xff]
    %v245 = vld [vmem:[#allocation5 + $0x30] sm:$0xff]
    %v246 = vld [vmem:[#allocation5 + $0x38] sm:$0xff]
    %v247 = vld [vmem:[#allocation5 + $0x40] sm:$0xff]
    %v248 = vld [vmem:[#allocation5 + $0x48] sm:$0xff]
    %v249 = vld [vmem:[#allocation5 + $0x50] sm:$0xff]
    %v250 = vld [vmem:[#allocation5 + $0x58] sm:$0xff]
    %v251 = vld [vmem:[#allocation5 + $0x60] sm:$0xff]
    %v252 = vld [vmem:[#allocation5 + $0x68] sm:$0xff]
    %v253 = vld [vmem:[#allocation5 + $0x70] sm:$0xff]
    %v254 = vld [vmem:[#allocation5 + $0x78] sm:$0xff]
    %v255 = vld [vmem:[#allocation5 + $0x80] sm:$0xff]
    %v256 = vld [vmem:[#allocation5 + $0x88] sm:$0xff]
    %v257 = vld [vmem:[#allocation5 + $0x90] sm:$0xff]
    %v258 = vld [vmem:[#allocation5 + $0x98] sm:$0xff]
    %v259 = vld [vmem:[#allocation5 + $0xa0] sm:$0xff]
    %v260 = vld [vmem:[#allocation5 + $0xa8] sm:$0xff]
    %v261 = vld [vmem:[#allocation5 + $0xb0] sm:$0xff]
    %v262 = vld [vmem:[#allocation5 + $0xb8] sm:$0xff]
    %v263 = vld [vmem:[#allocation5 + $0xc0] sm:$0xff]
    %v264 = vld [vmem:[#allocation5 + $0xc8] sm:$0xff]
    %v265 = vld [vmem:[#allocation5 + $0xd0] sm:$0xff]
    %v266 = vld [vmem:[#allocation5 + $0xd8] sm:$0xff]
    %v267 = vld [vmem:[#allocation5 + $0xe0] sm:$0xff]
    %v268 = vld [vmem:[#allocation5 + $0xe8] sm:$0xff]
    %v269 = vld [vmem:[#allocation5 + $0xf0] sm:$0xff]
    %v270 = vld [vmem:[#allocation5 + $0xf8] sm:$0xff]
    %v271 = vld [vmem:[#allocation5 + $0x100] sm:$0xff]
    %v272 = vld [vmem:[#allocation5 + $0x108] sm:$0xff]
    %v273 = vld [vmem:[#allocation5 + $0x110] sm:$0xff]
    %v274 = vld [vmem:[#allocation5 + $0x118] sm:$0xff]
    %v275 = vld [vmem:[#allocation5 + $0x120] sm:$0xff]
    %v276 = vld [vmem:[#allocation5 + $0x128] sm:$0xff]
    %v277 = vld [vmem:[#allocation5 + $0x130] sm:$0xff]
    %v278 = vld [vmem:[#allocation5 + $0x138] sm:$0xff]
    %v279 = vld [vmem:[#allocation5 + $0x140] sm:$0xff]
    %v280 = vld [vmem:[#allocation5 + $0x148] sm:$0xff]
    %v281 = vld [vmem:[#allocation5 + $0x150] sm:$0xff]
    %v282 = vld [vmem:[#allocation5 + $0x158] sm:$0xff]
    %v283 = vld [vmem:[#allocation5 + $0x160] sm:$0xff]
    %v284 = vld [vmem:[#allocation5 + $0x168] sm:$0xff]
    %v285 = vld [vmem:[#allocation5 + $0x170] sm:$0xff]
    %v286 = vld [vmem:[#allocation5 + $0x178] sm:$0xff]
    %v287 = vld [vmem:[#allocation7] sm:$0xf]
    %v288 = vld [vmem:[#allocation7 + $0x4] sm:$0xf]
    %v289 = vld [vmem:[#allocation7 + $0x8] sm:$0xf]
    %v290 = vld [vmem:[#allocation7 + $0xc] sm:$0xf]
    %v291 = vld [vmem:[#allocation7 + $0x10] sm:$0xf]
    %v292 = vld [vmem:[#allocation7 + $0x14] sm:$0xf]
    %v293 = vld [vmem:[#allocation7 + $0x18] sm:$0xf]
    %v294 = vld [vmem:[#allocation7 + $0x1c] sm:$0xf]
    %v295 = vld [vmem:[#allocation7 + $0x20] sm:$0xf]
    %v296 = vld [vmem:[#allocation7 + $0x24] sm:$0xf]
    %v297 = vld [vmem:[#allocation7 + $0x28] sm:$0xf]
    %v298 = vld [vmem:[#allocation7 + $0x2c] sm:$0xf]
    %v299 = vld [vmem:[#allocation7 + $0x30] sm:$0xf]
    %v300 = vld [vmem:[#allocation7 + $0x34] sm:$0xf]
    %v301 = vld [vmem:[#allocation7 + $0x38] sm:$0xf]
    %v302 = vld [vmem:[#allocation7 + $0x3c] sm:$0xf]
    %v303 = vld [vmem:[#allocation7 + $0x40] sm:$0xf]
    %v304 = vld [vmem:[#allocation7 + $0x44] sm:$0xf]
    %v305 = vld [vmem:[#allocation7 + $0x48] sm:$0xf]
    %v306 = vld [vmem:[#allocation7 + $0x4c] sm:$0xf]
    %v307 = vld [vmem:[#allocation7 + $0x50] sm:$0xf]
    %v308 = vld [vmem:[#allocation7 + $0x54] sm:$0xf]
    %v309 = vld [vmem:[#allocation7 + $0x58] sm:$0xf]
    %v310 = vld [vmem:[#allocation7 + $0x5c] sm:$0xf]
    %v311 = vld [vmem:[#allocation7 + $0x60] sm:$0xf]
    %v312 = vld [vmem:[#allocation7 + $0x64] sm:$0xf]
    %v313 = vld [vmem:[#allocation7 + $0x68] sm:$0xf]
    %v314 = vld [vmem:[#allocation7 + $0x6c] sm:$0xf]
    %v315 = vld [vmem:[#allocation7 + $0x70] sm:$0xf]
    %v316 = vld [vmem:[#allocation7 + $0x74] sm:$0xf]
    %v317 = vld [vmem:[#allocation7 + $0x78] sm:$0xf]
    %v318 = vld [vmem:[#allocation7 + $0x7c] sm:$0xf]
    %v319 = vld [vmem:[#allocation8] sm:$0xf]
    %v320 = vld [vmem:[#allocation8 + $0x4] sm:$0xf]
    %v321 = vld [vmem:[#allocation8 + $0x8] sm:$0xf]
    %v322 = vld [vmem:[#allocation8 + $0xc] sm:$0xf]
    %v323 = vld [vmem:[#allocation8 + $0x10] sm:$0xf]
    %v324 = vld [vmem:[#allocation8 + $0x14] sm:$0xf]
    %v325 = vld [vmem:[#allocation8 + $0x18] sm:$0xf]
    %v326 = vld [vmem:[#allocation8 + $0x1c] sm:$0xf]
    %v327 = vld [vmem:[#allocation8 + $0x20] sm:$0xf]
    %v328 = vld [vmem:[#allocation8 + $0x24] sm:$0xf]
    %v329 = vld [vmem:[#allocation8 + $0x28] sm:$0xf]
    %v330 = vld [vmem:[#allocation8 + $0x2c] sm:$0xf]
    %v331 = vld [vmem:[#allocation8 + $0x30] sm:$0xf]
    %v332 = vld [vmem:[#allocation8 + $0x34] sm:$0xf]
    %v333 = vld [vmem:[#allocation8 + $0x38] sm:$0xf]
    %v334 = vld [vmem:[#allocation8 + $0x3c] sm:$0xf]
    %v335 = vld [vmem:[#allocation10] sm:$0xf]
    %v336 = vld [vmem:[#allocation10 + $0x4] sm:$0xf]
    %v337 = vld [vmem:[#allocation10 + $0x8] sm:$0xf]
    %v338 = vld [vmem:[#allocation10 + $0xc] sm:$0xf]
    %v339 = vld [vmem:[#allocation10 + $0x10] sm:$0xf]
    %v340 = vld [vmem:[#allocation10 + $0x14] sm:$0xf]
    %v341 = vld [vmem:[#allocation10 + $0x18] sm:$0xf]
    %v342 = vld [vmem:[#allocation10 + $0x1c] sm:$0xf]
    %v343 = vld [vmem:[#allocation10 + $0x20] sm:$0xf]
    %v344 = vld [vmem:[#allocation10 + $0x24] sm:$0xf]
    %v345 = vld [vmem:[#allocation10 + $0x28] sm:$0xf]
    %v346 = vld [vmem:[#allocation10 + $0x2c] sm:$0xf]
    %v347 = vld [vmem:[#allocation10 + $0x30] sm:$0xf]
    %v348 = vld [vmem:[#allocation10 + $0x34] sm:$0xf]
    %v349 = vld [vmem:[#allocation10 + $0x38] sm:$0xf]
    %v350 = vld [vmem:[#allocation10 + $0x3c] sm:$0xf]
    %v367 = vcombine.low %v123, %v124
    %v368 = vcombine.low %v125, %v126
    %v369 = vcombine.low %v127, %v128
    %v370 = vcombine.low %v129, %v130
    %v371 = vcombine.low %v131, %v132
    %v372 = vcombine.low %v133, %v134
    %v373 = vcombine.low %v135, %v136
    %v374 = vcombine.low %v137, %v138
    %v383 = vpack.c.bf16 %v368, %v367
    %v384 = vpack.c.bf16 %v370, %v369
    %v385 = vpack.c.bf16 %v372, %v371
    %v386 = vpack.c.bf16 %v374, %v373
    %v387 = vld [vmem:[%s3] sm:$0x3f]
    %v389 = vlaneseq
    %v390 = vshrl.u32 %v389, 7
    %v391 = vsub.s32 0, %v390
    %v392 = vrot.slane %v387, %v391
    %v393 = vlaneseq
    %v394 = vshrl.u32 %v393, 7
    %v395 = vsub.s32 1, %v394
    %v396 = vrot.slane %v387, %v395
    %v397 = vlaneseq
    %v398 = vshrl.u32 %v397, 7
    %v399 = vsub.s32 2, %v398
    %v400 = vrot.slane %v387, %v399
    %v401 = vlaneseq
    %v402 = vshrl.u32 %v401, 7
    %v403 = vsub.s32 3, %v402
    %v404 = vrot.slane %v387, %v403
    %v405 = vlaneseq
    %v406 = vshrl.u32 %v405, 7
    %v407 = vsub.s32 4, %v406
    %v408 = vrot.slane %v387, %v407
    %v409 = vlaneseq
    %v410 = vshrl.u32 %v409, 7
    %v411 = vsub.s32 5, %v410
    %v412 = vrot.slane %v387, %v411
    %v467 = vunpack.c.l.b16 %v239
    %v468 = vunpack.c.h.b16 %v239
    %v469 = vunpack.c.l.b16 %v240
    %v470 = vunpack.c.h.b16 %v240
    %v471 = vunpack.c.l.b16 %v241
    %v472 = vunpack.c.h.b16 %v241
    %v473 = vunpack.c.l.b16 %v242
    %v474 = vunpack.c.h.b16 %v242
    %v475 = vunpack.c.l.b16 %v243
    %v476 = vunpack.c.h.b16 %v243
    %v477 = vunpack.c.l.b16 %v244
    %v478 = vunpack.c.h.b16 %v244
    %v479 = vunpack.c.l.b16 %v245
    %v480 = vunpack.c.h.b16 %v245
    %v481 = vunpack.c.l.b16 %v246
    %v482 = vunpack.c.h.b16 %v246
    %v483 = vunpack.c.l.b16 %v247
    %v484 = vunpack.c.h.b16 %v247
    %v485 = vunpack.c.l.b16 %v248
    %v486 = vunpack.c.h.b16 %v248
    %v487 = vunpack.c.l.b16 %v249
    %v488 = vunpack.c.h.b16 %v249
    %v489 = vunpack.c.l.b16 %v250
    %v490 = vunpack.c.h.b16 %v250
    %v491 = vunpack.c.l.b16 %v251
    %v492 = vunpack.c.h.b16 %v251
    %v493 = vunpack.c.l.b16 %v252
    %v494 = vunpack.c.h.b16 %v252
    %v495 = vunpack.c.l.b16 %v253
    %v496 = vunpack.c.h.b16 %v253
    %v497 = vunpack.c.l.b16 %v254
    %v498 = vunpack.c.h.b16 %v254
    %v499 = vunpack.c.l.b16 %v255
    %v500 = vunpack.c.h.b16 %v255
    %v501 = vunpack.c.l.b16 %v256
    %v502 = vunpack.c.h.b16 %v256
    %v503 = vunpack.c.l.b16 %v257
    %v504 = vunpack.c.h.b16 %v257
    %v505 = vunpack.c.l.b16 %v258
    %v506 = vunpack.c.h.b16 %v258
    %v507 = vunpack.c.l.b16 %v259
    %v508 = vunpack.c.h.b16 %v259
    %v509 = vunpack.c.l.b16 %v260
    %v510 = vunpack.c.h.b16 %v260
    %v511 = vunpack.c.l.b16 %v261
    %v512 = vunpack.c.h.b16 %v261
    %v513 = vunpack.c.l.b16 %v262
    %v514 = vunpack.c.h.b16 %v262
    %v515 = vunpack.c.l.b16 %v263
    %v516 = vunpack.c.h.b16 %v263
    %v517 = vunpack.c.l.b16 %v264
    %v518 = vunpack.c.h.b16 %v264
    %v519 = vunpack.c.l.b16 %v265
    %v520 = vunpack.c.h.b16 %v265
    %v521 = vunpack.c.l.b16 %v266
    %v522 = vunpack.c.h.b16 %v266
    %v523 = vunpack.c.l.b16 %v267
    %v524 = vunpack.c.h.b16 %v267
    %v525 = vunpack.c.l.b16 %v268
    %v526 = vunpack.c.h.b16 %v268
    %v527 = vunpack.c.l.b16 %v269
    %v528 = vunpack.c.h.b16 %v269
    %v529 = vunpack.c.l.b16 %v270
    %v530 = vunpack.c.h.b16 %v270
    %v531 = vunpack.c.l.b16 %v271
    %v532 = vunpack.c.h.b16 %v271
    %v533 = vunpack.c.l.b16 %v272
    %v534 = vunpack.c.h.b16 %v272
    %v535 = vunpack.c.l.b16 %v273
    %v536 = vunpack.c.h.b16 %v273
    %v537 = vunpack.c.l.b16 %v274
    %v538 = vunpack.c.h.b16 %v274
    %v539 = vunpack.c.l.b16 %v275
    %v540 = vunpack.c.h.b16 %v275
    %v541 = vunpack.c.l.b16 %v276
    %v542 = vunpack.c.h.b16 %v276
    %v543 = vunpack.c.l.b16 %v277
    %v544 = vunpack.c.h.b16 %v277
    %v545 = vunpack.c.l.b16 %v278
    %v546 = vunpack.c.h.b16 %v278
    %v547 = vunpack.c.l.b16 %v279
    %v548 = vunpack.c.h.b16 %v279
    %v549 = vunpack.c.l.b16 %v280
    %v550 = vunpack.c.h.b16 %v280
    %v551 = vunpack.c.l.b16 %v281
    %v552 = vunpack.c.h.b16 %v281
    %v553 = vunpack.c.l.b16 %v282
    %v554 = vunpack.c.h.b16 %v282
    %v555 = vunpack.c.l.b16 %v283
    %v556 = vunpack.c.h.b16 %v283
    %v557 = vunpack.c.l.b16 %v284
    %v558 = vunpack.c.h.b16 %v284
    %v559 = vunpack.c.l.b16 %v285
    %v560 = vunpack.c.h.b16 %v285
    %v561 = vunpack.c.l.b16 %v286
    %v562 = vunpack.c.h.b16 %v286
    %v563 = vpack.c.b16 %v473, %v467
    %v564 = vpack.c.b16 %v474, %v468
    %v565 = vpack.c.b16 %v475, %v469
    %v566 = vpack.c.b16 %v476, %v470
    %v567 = vpack.c.b16 %v477, %v471
    %v568 = vpack.c.b16 %v478, %v472
    %v569 = vpack.c.b16 %v485, %v479
    %v570 = vpack.c.b16 %v486, %v480
    %v571 = vpack.c.b16 %v487, %v481
    %v572 = vpack.c.b16 %v488, %v482
    %v573 = vpack.c.b16 %v489, %v483
    %v574 = vpack.c.b16 %v490, %v484
    %v575 = vpack.c.b16 %v497, %v491
    %v576 = vpack.c.b16 %v498, %v492
    %v577 = vpack.c.b16 %v499, %v493
    %v578 = vpack.c.b16 %v500, %v494
    %v579 = vpack.c.b16 %v501, %v495
    %v580 = vpack.c.b16 %v502, %v496
    %v581 = vpack.c.b16 %v509, %v503
    %v582 = vpack.c.b16 %v510, %v504
    %v583 = vpack.c.b16 %v511, %v505
    %v584 = vpack.c.b16 %v512, %v506
    %v585 = vpack.c.b16 %v513, %v507
    %v586 = vpack.c.b16 %v514, %v508
    %v587 = vpack.c.b16 %v521, %v515
    %v588 = vpack.c.b16 %v522, %v516
    %v589 = vpack.c.b16 %v523, %v517
    %v590 = vpack.c.b16 %v524, %v518
    %v591 = vpack.c.b16 %v525, %v519
    %v592 = vpack.c.b16 %v526, %v520
    %v593 = vpack.c.b16 %v533, %v527
    %v594 = vpack.c.b16 %v534, %v528
    %v595 = vpack.c.b16 %v535, %v529
    %v596 = vpack.c.b16 %v536, %v530
    %v597 = vpack.c.b16 %v537, %v531
    %v598 = vpack.c.b16 %v538, %v532
    %v599 = vpack.c.b16 %v545, %v539
    %v600 = vpack.c.b16 %v546, %v540
    %v601 = vpack.c.b16 %v547, %v541
    %v602 = vpack.c.b16 %v548, %v542
    %v603 = vpack.c.b16 %v549, %v543
    %v604 = vpack.c.b16 %v550, %v544
    %v605 = vpack.c.b16 %v557, %v551
    %v606 = vpack.c.b16 %v558, %v552
    %v607 = vpack.c.b16 %v559, %v553
    %v608 = vpack.c.b16 %v560, %v554
    %v609 = vpack.c.b16 %v561, %v555
    %v610 = vpack.c.b16 %v562, %v556
    %659 = vmatprep.subr.bf16.mxu0 %v564
    %660 = vmatpush1.bf16.msra.mxu0 %v563
    %661 = vmatprep.subr.bf16.mxu0 %v570
    %662 = vmatpush1.bf16.msra.mxu0 %v569
    %663 = vmatprep.subr.bf16.mxu0 %v576
    %664 = vmatpush1.bf16.msra.mxu0 %v575
    %665 = vmatprep.subr.bf16.mxu0 %v582
    %666 = vmatpush1.bf16.msra.mxu0 %v581
    %667 = vmatprep.subr.bf16.mxu0 %v588
    %668 = vmatpush1.bf16.msra.mxu0 %v587
    %669 = vmatprep.subr.bf16.mxu0 %v594
    %670 = vmatpush1.bf16.msra.mxu0 %v593
    %671 = vmatprep.subr.bf16.mxu0 %v600
    %672 = vmatpush1.bf16.msra.mxu0 %v599
    %673 = vmatprep.subr.bf16.mxu0 %v606
    %674 = vmatpush1.bf16.msra.mxu0 %v605
    %675 = vmatprep.subr.bf16.mxu0 0
    %676 = vmatpush1.bf16.msra.mxu0 0
    %677 = vmatprep.subr.bf16.mxu0 0
    %678 = vmatpush1.bf16.msra.mxu0 0
    %679 = vmatprep.subr.bf16.mxu0 0
    %680 = vmatpush1.bf16.msra.mxu0 0
    %681 = vmatprep.subr.bf16.mxu0 0
    %682 = vmatpush1.bf16.msra.mxu0 0
    %683 = vmatprep.subr.bf16.mxu0 0
    %684 = vmatpush1.bf16.msra.mxu0 0
    %685 = vmatprep.subr.bf16.mxu0 0
    %686 = vmatpush1.bf16.msra.mxu0 0
    %687 = vmatprep.subr.bf16.mxu0 0
    %688 = vmatpush1.bf16.msra.mxu0 0
    %689 = vmatprep.subr.bf16.mxu0 0
    %690 = vmatpush1.bf16.msra.mxu0 0
    %691 = vmatprep.mubr.bf16.mxu0 0
    %692 = vmatmul.mubr.bf16.gmra.mrb[0].mxu0 %v383
    %v693 = vpop.f32.mrb[0].mxu0
    %v694 = vadd.f32 %v392, %v693
    %v695 = vpop.f32.mrb[0].mxu0
    %v696 = vadd.f32 %v396, %v695
    %v697 = vpop.f32.mrb[0].mxu0
    %v698 = vadd.f32 %v392, %v697
    %v699 = vpop.f32.mrb[0].mxu0
    %v700 = vadd.f32 %v396, %v699
    %701 = vmatprep.mubr.bf16.mxu0 0
    %702 = vmatmul.mubr.bf16.gmra.mrb[0].mxu0 %v384
    %v703 = vpop.f32.mrb[0].mxu0
    %v704 = vadd.f32 %v392, %v703
    %v705 = vpop.f32.mrb[0].mxu0
    %v706 = vadd.f32 %v396, %v705
    %v707 = vpop.f32.mrb[0].mxu0
    %v708 = vadd.f32 %v392, %v707
    %v709 = vpop.f32.mrb[0].mxu0
    %v710 = vadd.f32 %v396, %v709
    %711 = vmatprep.mubr.bf16.mxu0 0
    %712 = vmatmul.mubr.bf16.gmra.mrb[0].mxu0 %v385
    %v713 = vpop.f32.mrb[0].mxu0
    %v714 = vadd.f32 %v392, %v713
    %v715 = vpop.f32.mrb[0].mxu0
    %v716 = vadd.f32 %v396, %v715
    %v717 = vpop.f32.mrb[0].mxu0
    %v718 = vadd.f32 %v392, %v717
    %v719 = vpop.f32.mrb[0].mxu0
    %v720 = vadd.f32 %v396, %v719
    %721 = vmatprep.mubr.bf16.mxu0 0
    %722 = vmatmul.mubr.bf16.gmra.mrb[0].mxu0 %v386
    %v723 = vpop.f32.mrb[0].mxu0
    %v724 = vadd.f32 %v392, %v723
    %v725 = vpop.f32.mrb[0].mxu0
    %v726 = vadd.f32 %v396, %v725
    %v727 = vpop.f32.mrb[0].mxu0
    %v728 = vadd.f32 %v392, %v727
    %v729 = vpop.f32.mrb[0].mxu0
    %v730 = vadd.f32 %v396, %v729
    %731 = vdwg.mxu0
    %732 = vmatprep.subr.bf16.mxu0 %v566
    %733 = vmatpush1.bf16.msra.mxu0 %v565
    %734 = vmatprep.subr.bf16.mxu0 %v572
    %735 = vmatpush1.bf16.msra.mxu0 %v571
    %736 = vmatprep.subr.bf16.mxu0 %v578
    %737 = vmatpush1.bf16.msra.mxu0 %v577
    %738 = vmatprep.subr.bf16.mxu0 %v584
    %739 = vmatpush1.bf16.msra.mxu0 %v583
    %740 = vmatprep.subr.bf16.mxu0 %v590
    %741 = vmatpush1.bf16.msra.mxu0 %v589
    %742 = vmatprep.subr.bf16.mxu0 %v596
    %743 = vmatpush1.bf16.msra.mxu0 %v595
    %744 = vmatprep.subr.bf16.mxu0 %v602
    %745 = vmatpush1.bf16.msra.mxu0 %v601
    %746 = vmatprep.subr.bf16.mxu0 %v608
    %747 = vmatpush1.bf16.msra.mxu0 %v607
    %748 = vmatprep.subr.bf16.mxu0 0
    %749 = vmatpush1.bf16.msra.mxu0 0
    %750 = vmatprep.subr.bf16.mxu0 0
    %751 = vmatpush1.bf16.msra.mxu0 0
    %752 = vmatprep.subr.bf16.mxu0 0
    %753 = vmatpush1.bf16.msra.mxu0 0
    %754 = vmatprep.subr.bf16.mxu0 0
    %755 = vmatpush1.bf16.msra.mxu0 0
    %756 = vmatprep.subr.bf16.mxu0 0
    %757 = vmatpush1.bf16.msra.mxu0 0
    %758 = vmatprep.subr.bf16.mxu0 0
    %759 = vmatpush1.bf16.msra.mxu0 0
    %760 = vmatprep.subr.bf16.mxu0 0
    %761 = vmatpush1.bf16.msra.mxu0 0
    %762 = vmatprep.subr.bf16.mxu0 0
    %763 = vmatpush1.bf16.msra.mxu0 0
    %764 = vmatprep.mubr.bf16.mxu0 0
    %765 = vmatmul.mubr.bf16.gmra.mrb[0].mxu0 %v383
    %v766 = vpop.f32.mrb[0].mxu0
    %v767 = vadd.f32 %v400, %v766
    %v768 = vpop.f32.mrb[0].mxu0
    %v769 = vadd.f32 %v404, %v768
    %v770 = vpop.f32.mrb[0].mxu0
    %v771 = vadd.f32 %v400, %v770
    %v772 = vpop.f32.mrb[0].mxu0
    %v773 = vadd.f32 %v404, %v772
    %774 = vmatprep.mubr.bf16.mxu0 0
    %775 = vmatmul.mubr.bf16.gmra.mrb[0].mxu0 %v384
    %v776 = vpop.f32.mrb[0].mxu0
    %v777 = vadd.f32 %v400, %v776
    %v778 = vpop.f32.mrb[0].mxu0
    %v779 = vadd.f32 %v404, %v778
    %v780 = vpop.f32.mrb[0].mxu0
    %v781 = vadd.f32 %v400, %v780
    %v782 = vpop.f32.mrb[0].mxu0
    %v783 = vadd.f32 %v404, %v782
    %784 = vmatprep.mubr.bf16.mxu0 0
    %785 = vmatmul.mubr.bf16.gmra.mrb[0].mxu0 %v385
    %v786 = vpop.f32.mrb[0].mxu0
    %v787 = vadd.f32 %v400, %v786
    %v788 = vpop.f32.mrb[0].mxu0
    %v789 = vadd.f32 %v404, %v788
    %v790 = vpop.f32.mrb[0].mxu0
    %v791 = vadd.f32 %v400, %v790
    %v792 = vpop.f32.mrb[0].mxu0
    %v793 = vadd.f32 %v404, %v792
    %794 = vmatprep.mubr.bf16.mxu0 0
    %795 = vmatmul.mubr.bf16.gmra.mrb[0].mxu0 %v386
    %v796 = vpop.f32.mrb[0].mxu0
    %v797 = vadd.f32 %v400, %v796
    %v798 = vpop.f32.mrb[0].mxu0
    %v799 = vadd.f32 %v404, %v798
    %v800 = vpop.f32.mrb[0].mxu0
    %v801 = vadd.f32 %v400, %v800
    %v802 = vpop.f32.mrb[0].mxu0
    %v803 = vadd.f32 %v404, %v802
    %804 = vdwg.mxu0
    %805 = vmatprep.subr.bf16.mxu0 %v568
    %806 = vmatpush1.bf16.msra.mxu0 %v567
    %807 = vmatprep.subr.bf16.mxu0 %v574
    %808 = vmatpush1.bf16.msra.mxu0 %v573
    %809 = vmatprep.subr.bf16.mxu0 %v580
    %810 = vmatpush1.bf16.msra.mxu0 %v579
    %811 = vmatprep.subr.bf16.mxu0 %v586
    %812 = vmatpush1.bf16.msra.mxu0 %v585
    %813 = vmatprep.subr.bf16.mxu0 %v592
    %814 = vmatpush1.bf16.msra.mxu0 %v591
    %815 = vmatprep.subr.bf16.mxu0 %v598
    %816 = vmatpush1.bf16.msra.mxu0 %v597
    %817 = vmatprep.subr.bf16.mxu0 %v604
    %818 = vmatpush1.bf16.msra.mxu0 %v603
    %819 = vmatprep.subr.bf16.mxu0 %v610
    %820 = vmatpush1.bf16.msra.mxu0 %v609
    %821 = vmatprep.subr.bf16.mxu0 0
    %822 = vmatpush1.bf16.msra.mxu0 0
    %823 = vmatprep.subr.bf16.mxu0 0
    %824 = vmatpush1.bf16.msra.mxu0 0
    %825 = vmatprep.subr.bf16.mxu0 0
    %826 = vmatpush1.bf16.msra.mxu0 0
    %827 = vmatprep.subr.bf16.mxu0 0
    %828 = vmatpush1.bf16.msra.mxu0 0
    %829 = vmatprep.subr.bf16.mxu0 0
    %830 = vmatpush1.bf16.msra.mxu0 0
    %831 = vmatprep.subr.bf16.mxu0 0
    %832 = vmatpush1.bf16.msra.mxu0 0
    %833 = vmatprep.subr.bf16.mxu0 0
    %834 = vmatpush1.bf16.msra.mxu0 0
    %835 = vmatprep.subr.bf16.mxu0 0
    %836 = vmatpush1.bf16.msra.mxu0 0
    %837 = vmatprep.mubr.bf16.mxu0 0
    %838 = vmatmul.mubr.bf16.gmra.mrb[0].mxu0 %v383
    %v839 = vpop.f32.mrb[0].mxu0
    %v840 = vadd.f32 %v408, %v839
    %v841 = vpop.f32.mrb[0].mxu0
    %v842 = vadd.f32 %v412, %v841
    %v843 = vpop.f32.mrb[0].mxu0
    %v844 = vadd.f32 %v408, %v843
    %v845 = vpop.f32.mrb[0].mxu0
    %v846 = vadd.f32 %v412, %v845
    %847 = vmatprep.mubr.bf16.mxu0 0
    %848 = vmatmul.mubr.bf16.gmra.mrb[0].mxu0 %v384
    %v849 = vpop.f32.mrb[0].mxu0
    %v850 = vadd.f32 %v408, %v849
    %v851 = vpop.f32.mrb[0].mxu0
    %v852 = vadd.f32 %v412, %v851
    %v853 = vpop.f32.mrb[0].mxu0
    %v854 = vadd.f32 %v408, %v853
    %v855 = vpop.f32.mrb[0].mxu0
    %v856 = vadd.f32 %v412, %v855
    %857 = vmatprep.mubr.bf16.mxu0 0
    %858 = vmatmul.mubr.bf16.gmra.mrb[0].mxu0 %v385
    %v859 = vpop.f32.mrb[0].mxu0
    %v860 = vadd.f32 %v408, %v859
    %v861 = vpop.f32.mrb[0].mxu0
    %v862 = vadd.f32 %v412, %v861
    %v863 = vpop.f32.mrb[0].mxu0
    %v864 = vadd.f32 %v408, %v863
    %v865 = vpop.f32.mrb[0].mxu0
    %v866 = vadd.f32 %v412, %v865
    %867 = vmatprep.mubr.bf16.mxu0 0
    %868 = vmatmul.mubr.bf16.gmra.mrb[0].mxu0 %v386
    %v869 = vpop.f32.mrb[0].mxu0
    %v870 = vadd.f32 %v408, %v869
    %v871 = vpop.f32.mrb[0].mxu0
    %v872 = vadd.f32 %v412, %v871
    %v873 = vpop.f32.mrb[0].mxu0
    %v874 = vadd.f32 %v408, %v873
    %v875 = vpop.f32.mrb[0].mxu0
    %v876 = vadd.f32 %v412, %v875
    %877 = vdwg.mxu0
    %v926 = vcombine.low %v694, %v696
    %v927 = vcombine.high %v694, %v696
    %v928 = vcombine.low %v767, %v769
    %v929 = vcombine.high %v767, %v769
    %v930 = vcombine.low %v840, %v842
    %v931 = vcombine.high %v840, %v842
    %v932 = vcombine.low %v698, %v700
    %v933 = vcombine.high %v698, %v700
    %v934 = vcombine.low %v771, %v773
    %v935 = vcombine.high %v771, %v773
    %v936 = vcombine.low %v844, %v846
    %v937 = vcombine.high %v844, %v846
    %v938 = vcombine.low %v704, %v706
    %v939 = vcombine.high %v704, %v706
    %v940 = vcombine.low %v777, %v779
    %v941 = vcombine.high %v777, %v779
    %v942 = vcombine.low %v850, %v852
    %v943 = vcombine.high %v850, %v852
    %v944 = vcombine.low %v708, %v710
    %v945 = vcombine.high %v708, %v710
    %v946 = vcombine.low %v781, %v783
    %v947 = vcombine.high %v781, %v783
    %v948 = vcombine.low %v854, %v856
    %v949 = vcombine.high %v854, %v856
    %v950 = vcombine.low %v714, %v716
    %v951 = vcombine.high %v714, %v716
    %v952 = vcombine.low %v787, %v789
    %v953 = vcombine.high %v787, %v789
    %v954 = vcombine.low %v860, %v862
    %v955 = vcombine.high %v860, %v862
    %v956 = vcombine.low %v718, %v720
    %v957 = vcombine.high %v718, %v720
    %v958 = vcombine.low %v791, %v793
    %v959 = vcombine.high %v791, %v793
    %v960 = vcombine.low %v864, %v866
    %v961 = vcombine.high %v864, %v866
    %v962 = vcombine.low %v724, %v726
    %v963 = vcombine.high %v724, %v726
    %v964 = vcombine.low %v797, %v799
    %v965 = vcombine.high %v797, %v799
    %v966 = vcombine.low %v870, %v872
    %v967 = vcombine.high %v870, %v872
    %v968 = vcombine.low %v728, %v730
    %v969 = vcombine.high %v728, %v730
    %v970 = vcombine.low %v801, %v803
    %v971 = vcombine.high %v801, %v803
    %v972 = vcombine.low %v874, %v876
    %v973 = vcombine.high %v874, %v876
    %v1022 = vrot.slane %v926, 4
    %v1023 = vrot.slane %v927, 4
    %v1024 = vrot.slane %v932, 4
    %v1025 = vrot.slane %v933, 4
    %v1026 = vrot.slane %v938, 4
    %v1027 = vrot.slane %v939, 4
    %v1028 = vrot.slane %v944, 4
    %v1029 = vrot.slane %v945, 4
    %v1030 = vrot.slane %v950, 4
    %v1031 = vrot.slane %v951, 4
    %v1032 = vrot.slane %v956, 4
    %v1033 = vrot.slane %v957, 4
    %v1034 = vrot.slane %v962, 4
    %v1035 = vrot.slane %v963, 4
    %v1036 = vrot.slane %v968, 4
    %v1037 = vrot.slane %v969, 4
    %v1054 = vrot.slane %v928, 4
    %v1055 = vrot.slane %v929, 4
    %v1056 = vrot.slane %v934, 4
    %v1057 = vrot.slane %v935, 4
    %v1058 = vrot.slane %v940, 4
    %v1059 = vrot.slane %v941, 4
    %v1060 = vrot.slane %v946, 4
    %v1061 = vrot.slane %v947, 4
    %v1062 = vrot.slane %v952, 4
    %v1063 = vrot.slane %v953, 4
    %v1064 = vrot.slane %v958, 4
    %v1065 = vrot.slane %v959, 4
    %v1066 = vrot.slane %v964, 4
    %v1067 = vrot.slane %v965, 4
    %v1068 = vrot.slane %v970, 4
    %v1069 = vrot.slane %v971, 4
    %v1086 = vrot.slane %v930, 4
    %v1087 = vrot.slane %v931, 4
    %v1088 = vrot.slane %v936, 4
    %v1089 = vrot.slane %v937, 4
    %v1090 = vrot.slane %v942, 4
    %v1091 = vrot.slane %v943, 4
    %v1092 = vrot.slane %v948, 4
    %v1093 = vrot.slane %v949, 4
    %v1094 = vrot.slane %v954, 4
    %v1095 = vrot.slane %v955, 4
    %v1096 = vrot.slane %v960, 4
    %v1097 = vrot.slane %v961, 4
    %v1098 = vrot.slane %v966, 4
    %v1099 = vrot.slane %v967, 4
    %v1100 = vrot.slane %v972, 4
    %v1101 = vrot.slane %v973, 4
    %v1118 = vpack.c.bf16 %v926, %v926
    %v1119 = vpack.c.bf16 %v927, %v927
    %v1120 = vpack.c.bf16 %v932, %v932
    %v1121 = vpack.c.bf16 %v933, %v933
    %v1122 = vpack.c.bf16 %v938, %v938
    %v1123 = vpack.c.bf16 %v939, %v939
    %v1124 = vpack.c.bf16 %v944, %v944
    %v1125 = vpack.c.bf16 %v945, %v945
    %v1126 = vpack.c.bf16 %v950, %v950
    %v1127 = vpack.c.bf16 %v951, %v951
    %v1128 = vpack.c.bf16 %v956, %v956
    %v1129 = vpack.c.bf16 %v957, %v957
    %v1130 = vpack.c.bf16 %v962, %v962
    %v1131 = vpack.c.bf16 %v963, %v963
    %v1132 = vpack.c.bf16 %v968, %v968
    %v1133 = vpack.c.bf16 %v969, %v969
    %v1134 = vpack.c.bf16 %v1022, %v1022
    %v1135 = vpack.c.bf16 %v1023, %v1023
    %v1136 = vpack.c.bf16 %v1024, %v1024
    %v1137 = vpack.c.bf16 %v1025, %v1025
    %v1138 = vpack.c.bf16 %v1026, %v1026
    %v1139 = vpack.c.bf16 %v1027, %v1027
    %v1140 = vpack.c.bf16 %v1028, %v1028
    %v1141 = vpack.c.bf16 %v1029, %v1029
    %v1142 = vpack.c.bf16 %v1030, %v1030
    %v1143 = vpack.c.bf16 %v1031, %v1031
    %v1144 = vpack.c.bf16 %v1032, %v1032
    %v1145 = vpack.c.bf16 %v1033, %v1033
    %v1146 = vpack.c.bf16 %v1034, %v1034
    %v1147 = vpack.c.bf16 %v1035, %v1035
    %v1148 = vpack.c.bf16 %v1036, %v1036
    %v1149 = vpack.c.bf16 %v1037, %v1037
    %v1150 = vpack.c.bf16 %v928, %v928
    %v1151 = vpack.c.bf16 %v929, %v929
    %v1152 = vpack.c.bf16 %v934, %v934
    %v1153 = vpack.c.bf16 %v935, %v935
    %v1154 = vpack.c.bf16 %v940, %v940
    %v1155 = vpack.c.bf16 %v941, %v941
    %v1156 = vpack.c.bf16 %v946, %v946
    %v1157 = vpack.c.bf16 %v947, %v947
    %v1158 = vpack.c.bf16 %v952, %v952
    %v1159 = vpack.c.bf16 %v953, %v953
    %v1160 = vpack.c.bf16 %v958, %v958
    %v1161 = vpack.c.bf16 %v959, %v959
    %v1162 = vpack.c.bf16 %v964, %v964
    %v1163 = vpack.c.bf16 %v965, %v965
    %v1164 = vpack.c.bf16 %v970, %v970
    %v1165 = vpack.c.bf16 %v971, %v971
    %v1166 = vpack.c.bf16 %v1054, %v1054
    %v1167 = vpack.c.bf16 %v1055, %v1055
    %v1168 = vpack.c.bf16 %v1056, %v1056
    %v1169 = vpack.c.bf16 %v1057, %v1057
    %v1170 = vpack.c.bf16 %v1058, %v1058
    %v1171 = vpack.c.bf16 %v1059, %v1059
    %v1172 = vpack.c.bf16 %v1060, %v1060
    %v1173 = vpack.c.bf16 %v1061, %v1061
    %v1174 = vpack.c.bf16 %v1062, %v1062
    %v1175 = vpack.c.bf16 %v1063, %v1063
    %v1176 = vpack.c.bf16 %v1064, %v1064
    %v1177 = vpack.c.bf16 %v1065, %v1065
    %v1178 = vpack.c.bf16 %v1066, %v1066
    %v1179 = vpack.c.bf16 %v1067, %v1067
    %v1180 = vpack.c.bf16 %v1068, %v1068
    %v1181 = vpack.c.bf16 %v1069, %v1069
    %1182 = vmatprep.subr.bf16.mxu0 0
    %1183 = vmatpush1.bf16.xpose.msra.mxu0 %v1150
    %1184 = vmatprep.subr.bf16.mxu0 0
    %1185 = vmatpush1.bf16.xpose.msra.mxu0 0
    %1186 = vmatprep.subr.bf16.mxu0 0
    %1187 = vmatpush1.bf16.xpose.msra.mxu0 0
    %1188 = vmatprep.subr.bf16.mxu0 0
    %1189 = vmatpush1.bf16.xpose.msra.mxu0 0
    %1190 = vmatprep.subr.bf16.mxu0 0
    %1191 = vmatpush1.bf16.xpose.msra.mxu0 0
    %1192 = vmatprep.subr.bf16.mxu0 0
    %1193 = vmatpush1.bf16.xpose.msra.mxu0 0
    %1194 = vmatprep.subr.bf16.mxu0 0
    %1195 = vmatpush1.bf16.xpose.msra.mxu0 0
    %1196 = vmatprep.subr.bf16.mxu0 0
    %1197 = vmatpush1.bf16.xpose.msra.mxu0 0
    %1198 = vmatprep.subr.bf16.mxu0 0
    %1199 = vmatpush1.bf16.xpose.msra.mxu0 0
    %1200 = vmatprep.subr.bf16.mxu0 0
    %1201 = vmatpush1.bf16.xpose.msra.mxu0 0
    %1202 = vmatprep.subr.bf16.mxu0 0
    %1203 = vmatpush1.bf16.xpose.msra.mxu0 0
    %1204 = vmatprep.subr.bf16.mxu0 0
    %1205 = vmatpush1.bf16.xpose.msra.mxu0 0
    %1206 = vmatprep.subr.bf16.mxu0 0
    %1207 = vmatpush1.bf16.xpose.msra.mxu0 0
    %1208 = vmatprep.subr.bf16.mxu0 0
    %1209 = vmatpush1.bf16.xpose.msra.mxu0 0
    %1210 = vmatprep.subr.bf16.mxu0 0
    %1211 = vmatpush1.bf16.xpose.msra.mxu0 0
    %1212 = vmatprep.subr.bf16.mxu0 0
    %1213 = vmatpush1.bf16.xpose.msra.mxu0 0
    %1214 = vmatprep.mubr.bf16.mxu0 0
    %1215 = vmatmul.mubr.bf16.gmra.mrb[0].mxu0 %v1118
    %v1216 = vpop.f32.mrb[0].mxu0
    %v1217 = vadd.f32 0.0, %v1216
    %v1218 = vpop.f32.mrb[0].mxu0
    %v1219 = vpop.f32.mrb[0].mxu0
    %v1220 = vpop.f32.mrb[0].mxu0
    %1221 = vdwg.mxu0
    %1222 = vmatprep.subr.bf16.mxu0 0
    %1223 = vmatpush1.bf16.xpose.msra.mxu0 %v1151
    %1224 = vmatprep.subr.bf16.mxu0 0
    %1225 = vmatpush1.bf16.xpose.msra.mxu0 0
    %1226 = vmatprep.subr.bf16.mxu0 0
    %1227 = vmatpush1.bf16.xpose.msra.mxu0 0
    %1228 = vmatprep.subr.bf16.mxu0 0
    %1229 = vmatpush1.bf16.xpose.msra.mxu0 0
    %1230 = vmatprep.subr.bf16.mxu0 0
    %1231 = vmatpush1.bf16.xpose.msra.mxu0 0
    %1232 = vmatprep.subr.bf16.mxu0 0
    %1233 = vmatpush1.bf16.xpose.msra.mxu0 0
    %1234 = vmatprep.subr.bf16.mxu0 0
    %1235 = vmatpush1.bf16.xpose.msra.mxu0 0
    %1236 = vmatprep.subr.bf16.mxu0 0
    %1237 = vmatpush1.bf16.xpose.msra.mxu0 0
    %1238 = vmatprep.subr.bf16.mxu0 0
    %1239 = vmatpush1.bf16.xpose.msra.mxu0 0
    %1240 = vmatprep.subr.bf16.mxu0 0
    %1241 = vmatpush1.bf16.xpose.msra.mxu0 0
    %1242 = vmatprep.subr.bf16.mxu0 0
    %1243 = vmatpush1.bf16.xpose.msra.mxu0 0
    %1244 = vmatprep.subr.bf16.mxu0 0
    %1245 = vmatpush1.bf16.xpose.msra.mxu0 0
    %1246 = vmatprep.subr.bf16.mxu0 0
    %1247 = vmatpush1.bf16.xpose.msra.mxu0 0
    %1248 = vmatprep.subr.bf16.mxu0 0
    %1249 = vmatpush1.bf16.xpose.msra.mxu0 0
    %1250 = vmatprep.subr.bf16.mxu0 0
    %1251 = vmatpush1.bf16.xpose.msra.mxu0 0
    %1252 = vmatprep.subr.bf16.mxu0 0
    %1253 = vmatpush1.bf16.xpose.msra.mxu0 0
    %1254 = vmatprep.mubr.bf16.mxu0 0
    %1255 = vmatmul.mubr.bf16.gmra.mrb[0].mxu0 %v1119
    %v1256 = vpop.f32.mrb[0].mxu0
    %v1257 = vadd.f32 0.0, %v1256
    %v1258 = vpop.f32.mrb[0].mxu0
    %v1259 = vpop.f32.mrb[0].mxu0
    %v1260 = vpop.f32.mrb[0].mxu0
    %1261 = vdwg.mxu0
    %1262 = vmatprep.subr.bf16.mxu0 0
    %1263 = vmatpush1.bf16.xpose.msra.mxu0 %v1152
    %1264 = vmatprep.subr.bf16.mxu0 0
    %1265 = vmatpush1.bf16.xpose.msra.mxu0 0
    %1266 = vmatprep.subr.bf16.mxu0 0
    %1267 = vmatpush1.bf16.xpose.msra.mxu0 0
    %1268 = vmatprep.subr.bf16.mxu0 0
    %1269 = vmatpush1.bf16.xpose.msra.mxu0 0
    %1270 = vmatprep.subr.bf16.mxu0 0
    %1271 = vmatpush1.bf16.xpose.msra.mxu0 0
    %1272 = vmatprep.subr.bf16.mxu0 0
    %1273 = vmatpush1.bf16.xpose.msra.mxu0 0
    %1274 = vmatprep.subr.bf16.mxu0 0
    %1275 = vmatpush1.bf16.xpose.msra.mxu0 0
    %1276 = vmatprep.subr.bf16.mxu0 0
    %1277 = vmatpush1.bf16.xpose.msra.mxu0 0
    %1278 = vmatprep.subr.bf16.mxu0 0
    %1279 = vmatpush1.bf16.xpose.msra.mxu0 0
    %1280 = vmatprep.subr.bf16.mxu0 0
    %1281 = vmatpush1.bf16.xpose.msra.mxu0 0
    %1282 = vmatprep.subr.bf16.mxu0 0
    %1283 = vmatpush1.bf16.xpose.msra.mxu0 0
    %1284 = vmatprep.subr.bf16.mxu0 0
    %1285 = vmatpush1.bf16.xpose.msra.mxu0 0
    %1286 = vmatprep.subr.bf16.mxu0 0
    %1287 = vmatpush1.bf16.xpose.msra.mxu0 0
    %1288 = vmatprep.subr.bf16.mxu0 0
    %1289 = vmatpush1.bf16.xpose.msra.mxu0 0
    %1290 = vmatprep.subr.bf16.mxu0 0
    %1291 = vmatpush1.bf16.xpose.msra.mxu0 0
    %1292 = vmatprep.subr.bf16.mxu0 0
    %1293 = vmatpush1.bf16.xpose.msra.mxu0 0
    %1294 = vmatprep.mubr.bf16.mxu0 0
    %1295 = vmatmul.mubr.bf16.gmra.mrb[0].mxu0 %v1120
    %v1296 = vpop.f32.mrb[0].mxu0
    %v1297 = vadd.f32 0.0, %v1296
    %v1298 = vpop.f32.mrb[0].mxu0
    %v1299 = vpop.f32.mrb[0].mxu0
    %v1300 = vpop.f32.mrb[0].mxu0
    %1301 = vdwg.mxu0
    %1302 = vmatprep.subr.bf16.mxu0 0
    %1303 = vmatpush1.bf16.xpose.msra.mxu0 %v1153
    %1304 = vmatprep.subr.bf16.mxu0 0
    %1305 = vmatpush1.bf16.xpose.msra.mxu0 0
    %1306 = vmatprep.subr.bf16.mxu0 0
    %1307 = vmatpush1.bf16.xpose.msra.mxu0 0
    %1308 = vmatprep.subr.bf16.mxu0 0
    %1309 = vmatpush1.bf16.xpose.msra.mxu0 0
    %1310 = vmatprep.subr.bf16.mxu0 0
    %1311 = vmatpush1.bf16.xpose.msra.mxu0 0
    %1312 = vmatprep.subr.bf16.mxu0 0
    %1313 = vmatpush1.bf16.xpose.msra.mxu0 0
    %1314 = vmatprep.subr.bf16.mxu0 0
    %1315 = vmatpush1.bf16.xpose.msra.mxu0 0
    %1316 = vmatprep.subr.bf16.mxu0 0
    %1317 = vmatpush1.bf16.xpose.msra.mxu0 0
    %1318 = vmatprep.subr.bf16.mxu0 0
    %1319 = vmatpush1.bf16.xpose.msra.mxu0 0
    %1320 = vmatprep.subr.bf16.mxu0 0
    %1321 = vmatpush1.bf16.xpose.msra.mxu0 0
    %1322 = vmatprep.subr.bf16.mxu0 0
    %1323 = vmatpush1.bf16.xpose.msra.mxu0 0
    %1324 = vmatprep.subr.bf16.mxu0 0
    %1325 = vmatpush1.bf16.xpose.msra.mxu0 0
    %1326 = vmatprep.subr.bf16.mxu0 0
    %1327 = vmatpush1.bf16.xpose.msra.mxu0 0
    %1328 = vmatprep.subr.bf16.mxu0 0
    %1329 = vmatpush1.bf16.xpose.msra.mxu0 0
    %1330 = vmatprep.subr.bf16.mxu0 0
    %1331 = vmatpush1.bf16.xpose.msra.mxu0 0
    %1332 = vmatprep.subr.bf16.mxu0 0
    %1333 = vmatpush1.bf16.xpose.msra.mxu0 0
    %1334 = vmatprep.mubr.bf16.mxu0 0
    %1335 = vmatmul.mubr.bf16.gmra.mrb[0].mxu0 %v1121
    %v1336 = vpop.f32.mrb[0].mxu0
    %v1337 = vadd.f32 0.0, %v1336
    %v1338 = vpop.f32.mrb[0].mxu0
    %v1339 = vpop.f32.mrb[0].mxu0
    %v1340 = vpop.f32.mrb[0].mxu0
    %1341 = vdwg.mxu0
    %1342 = vmatprep.subr.bf16.mxu0 0
    %1343 = vmatpush1.bf16.xpose.msra.mxu0 %v1154
    %1344 = vmatprep.subr.bf16.mxu0 0
    %1345 = vmatpush1.bf16.xpose.msra.mxu0 0
    %1346 = vmatprep.subr.bf16.mxu0 0
    %1347 = vmatpush1.bf16.xpose.msra.mxu0 0
    %1348 = vmatprep.subr.bf16.mxu0 0
    %1349 = vmatpush1.bf16.xpose.msra.mxu0 0
    %1350 = vmatprep.subr.bf16.mxu0 0
    %1351 = vmatpush1.bf16.xpose.msra.mxu0 0
    %1352 = vmatprep.subr.bf16.mxu0 0
    %1353 = vmatpush1.bf16.xpose.msra.mxu0 0
    %1354 = vmatprep.subr.bf16.mxu0 0
    %1355 = vmatpush1.bf16.xpose.msra.mxu0 0
    %1356 = vmatprep.subr.bf16.mxu0 0
    %1357 = vmatpush1.bf16.xpose.msra.mxu0 0
    %1358 = vmatprep.subr.bf16.mxu0 0
    %1359 = vmatpush1.bf16.xpose.msra.mxu0 0
    %1360 = vmatprep.subr.bf16.mxu0 0
    %1361 = vmatpush1.bf16.xpose.msra.mxu0 0
    %1362 = vmatprep.subr.bf16.mxu0 0
    %1363 = vmatpush1.bf16.xpose.msra.mxu0 0
    %1364 = vmatprep.subr.bf16.mxu0 0
    %1365 = vmatpush1.bf16.xpose.msra.mxu0 0
    %1366 = vmatprep.subr.bf16.mxu0 0
    %1367 = vmatpush1.bf16.xpose.msra.mxu0 0
    %1368 = vmatprep.subr.bf16.mxu0 0
    %1369 = vmatpush1.bf16.xpose.msra.mxu0 0
    %1370 = vmatprep.subr.bf16.mxu0 0
    %1371 = vmatpush1.bf16.xpose.msra.mxu0 0
    %1372 = vmatprep.subr.bf16.mxu0 0
    %1373 = vmatpush1.bf16.xpose.msra.mxu0 0
    %1374 = vmatprep.mubr.bf16.mxu0 0
    %1375 = vmatmul.mubr.bf16.gmra.mrb[0].mxu0 %v1122
    %v1376 = vpop.f32.mrb[0].mxu0
    %v1377 = vadd.f32 0.0, %v1376
    %v1378 = vpop.f32.mrb[0].mxu0
    %v1379 = vpop.f32.mrb[0].mxu0
    %v1380 = vpop.f32.mrb[0].mxu0
    %1381 = vdwg.mxu0
    %1382 = vmatprep.subr.bf16.mxu0 0
    %1383 = vmatpush1.bf16.xpose.msra.mxu0 %v1155
    %1384 = vmatprep.subr.bf16.mxu0 0
    %1385 = vmatpush1.bf16.xpose.msra.mxu0 0
    %1386 = vmatprep.subr.bf16.mxu0 0
    %1387 = vmatpush1.bf16.xpose.msra.mxu0 0
    %1388 = vmatprep.subr.bf16.mxu0 0
    %1389 = vmatpush1.bf16.xpose.msra.mxu0 0
    %1390 = vmatprep.subr.bf16.mxu0 0
    %1391 = vmatpush1.bf16.xpose.msra.mxu0 0
    %1392 = vmatprep.subr.bf16.mxu0 0
    %1393 = vmatpush1.bf16.xpose.msra.mxu0 0
    %1394 = vmatprep.subr.bf16.mxu0 0
    %1395 = vmatpush1.bf16.xpose.msra.mxu0 0
    %1396 = vmatprep.subr.bf16.mxu0 0
    %1397 = vmatpush1.bf16.xpose.msra.mxu0 0
    %1398 = vmatprep.subr.bf16.mxu0 0
    %1399 = vmatpush1.bf16.xpose.msra.mxu0 0
    %1400 = vmatprep.subr.bf16.mxu0 0
    %1401 = vmatpush1.bf16.xpose.msra.mxu0 0
    %1402 = vmatprep.subr.bf16.mxu0 0
    %1403 = vmatpush1.bf16.xpose.msra.mxu0 0
    %1404 = vmatprep.subr.bf16.mxu0 0
    %1405 = vmatpush1.bf16.xpose.msra.mxu0 0
    %1406 = vmatprep.subr.bf16.mxu0 0
    %1407 = vmatpush1.bf16.xpose.msra.mxu0 0
    %1408 = vmatprep.subr.bf16.mxu0 0
    %1409 = vmatpush1.bf16.xpose.msra.mxu0 0
    %1410 = vmatprep.subr.bf16.mxu0 0
    %1411 = vmatpush1.bf16.xpose.msra.mxu0 0
    %1412 = vmatprep.subr.bf16.mxu0 0
    %1413 = vmatpush1.bf16.xpose.msra.mxu0 0
    %1414 = vmatprep.mubr.bf16.mxu0 0
    %1415 = vmatmul.mubr.bf16.gmra.mrb[0].mxu0 %v1123
    %v1416 = vpop.f32.mrb[0].mxu0
    %v1417 = vadd.f32 0.0, %v1416
    %v1418 = vpop.f32.mrb[0].mxu0
    %v1419 = vpop.f32.mrb[0].mxu0
    %v1420 = vpop.f32.mrb[0].mxu0
    %1421 = vdwg.mxu0
    %1422 = vmatprep.subr.bf16.mxu0 0
    %1423 = vmatpush1.bf16.xpose.msra.mxu0 %v1156
    %1424 = vmatprep.subr.bf16.mxu0 0
    %1425 = vmatpush1.bf16.xpose.msra.mxu0 0
    %1426 = vmatprep.subr.bf16.mxu0 0
    %1427 = vmatpush1.bf16.xpose.msra.mxu0 0
    %1428 = vmatprep.subr.bf16.mxu0 0
    %1429 = vmatpush1.bf16.xpose.msra.mxu0 0
    %1430 = vmatprep.subr.bf16.mxu0 0
    %1431 = vmatpush1.bf16.xpose.msra.mxu0 0
    %1432 = vmatprep.subr.bf16.mxu0 0
    %1433 = vmatpush1.bf16.xpose.msra.mxu0 0
    %1434 = vmatprep.subr.bf16.mxu0 0
    %1435 = vmatpush1.bf16.xpose.msra.mxu0 0
    %1436 = vmatprep.subr.bf16.mxu0 0
    %1437 = vmatpush1.bf16.xpose.msra.mxu0 0
    %1438 = vmatprep.subr.bf16.mxu0 0
    %1439 = vmatpush1.bf16.xpose.msra.mxu0 0
    %1440 = vmatprep.subr.bf16.mxu0 0
    %1441 = vmatpush1.bf16.xpose.msra.mxu0 0
    %1442 = vmatprep.subr.bf16.mxu0 0
    %1443 = vmatpush1.bf16.xpose.msra.mxu0 0
    %1444 = vmatprep.subr.bf16.mxu0 0
    %1445 = vmatpush1.bf16.xpose.msra.mxu0 0
    %1446 = vmatprep.subr.bf16.mxu0 0
    %1447 = vmatpush1.bf16.xpose.msra.mxu0 0
    %1448 = vmatprep.subr.bf16.mxu0 0
    %1449 = vmatpush1.bf16.xpose.msra.mxu0 0
    %1450 = vmatprep.subr.bf16.mxu0 0
    %1451 = vmatpush1.bf16.xpose.msra.mxu0 0
    %1452 = vmatprep.subr.bf16.mxu0 0
    %1453 = vmatpush1.bf16.xpose.msra.mxu0 0
    %1454 = vmatprep.mubr.bf16.mxu0 0
    %1455 = vmatmul.mubr.bf16.gmra.mrb[0].mxu0 %v1124
    %v1456 = vpop.f32.mrb[0].mxu0
    %v1457 = vadd.f32 0.0, %v1456
    %v1458 = vpop.f32.mrb[0].mxu0
    %v1459 = vpop.f32.mrb[0].mxu0
    %v1460 = vpop.f32.mrb[0].mxu0
    %1461 = vdwg.mxu0
    %1462 = vmatprep.subr.bf16.mxu0 0
    %1463 = vmatpush1.bf16.xpose.msra.mxu0 %v1157
    %1464 = vmatprep.subr.bf16.mxu0 0
    %1465 = vmatpush1.bf16.xpose.msra.mxu0 0
    %1466 = vmatprep.subr.bf16.mxu0 0
    %1467 = vmatpush1.bf16.xpose.msra.mxu0 0
    %1468 = vmatprep.subr.bf16.mxu0 0
    %1469 = vmatpush1.bf16.xpose.msra.mxu0 0
    %1470 = vmatprep.subr.bf16.mxu0 0
    %1471 = vmatpush1.bf16.xpose.msra.mxu0 0
    %1472 = vmatprep.subr.bf16.mxu0 0
    %1473 = vmatpush1.bf16.xpose.msra.mxu0 0
    %1474 = vmatprep.subr.bf16.mxu0 0
    %1475 = vmatpush1.bf16.xpose.msra.mxu0 0
    %1476 = vmatprep.subr.bf16.mxu0 0
    %1477 = vmatpush1.bf16.xpose.msra.mxu0 0
    %1478 = vmatprep.subr.bf16.mxu0 0
    %1479 = vmatpush1.bf16.xpose.msra.mxu0 0
    %1480 = vmatprep.subr.bf16.mxu0 0
    %1481 = vmatpush1.bf16.xpose.msra.mxu0 0
    %1482 = vmatprep.subr.bf16.mxu0 0
    %1483 = vmatpush1.bf16.xpose.msra.mxu0 0
    %1484 = vmatprep.subr.bf16.mxu0 0
    %1485 = vmatpush1.bf16.xpose.msra.mxu0 0
    %1486 = vmatprep.subr.bf16.mxu0 0
    %1487 = vmatpush1.bf16.xpose.msra.mxu0 0
    %1488 = vmatprep.subr.bf16.mxu0 0
    %1489 = vmatpush1.bf16.xpose.msra.mxu0 0
    %1490 = vmatprep.subr.bf16.mxu0 0
    %1491 = vmatpush1.bf16.xpose.msra.mxu0 0
    %1492 = vmatprep.subr.bf16.mxu0 0
    %1493 = vmatpush1.bf16.xpose.msra.mxu0 0
    %1494 = vmatprep.mubr.bf16.mxu0 0
    %1495 = vmatmul.mubr.bf16.gmra.mrb[0].mxu0 %v1125
    %v1496 = vpop.f32.mrb[0].mxu0
    %v1497 = vadd.f32 0.0, %v1496
    %v1498 = vpop.f32.mrb[0].mxu0
    %v1499 = vpop.f32.mrb[0].mxu0
    %v1500 = vpop.f32.mrb[0].mxu0
    %1501 = vdwg.mxu0
    %1502 = vmatprep.subr.bf16.mxu0 0
    %1503 = vmatpush1.bf16.xpose.msra.mxu0 %v1158
    %1504 = vmatprep.subr.bf16.mxu0 0
    %1505 = vmatpush1.bf16.xpose.msra.mxu0 0
    %1506 = vmatprep.subr.bf16.mxu0 0
    %1507 = vmatpush1.bf16.xpose.msra.mxu0 0
    %1508 = vmatprep.subr.bf16.mxu0 0
    %1509 = vmatpush1.bf16.xpose.msra.mxu0 0
    %1510 = vmatprep.subr.bf16.mxu0 0
    %1511 = vmatpush1.bf16.xpose.msra.mxu0 0
    %1512 = vmatprep.subr.bf16.mxu0 0
    %1513 = vmatpush1.bf16.xpose.msra.mxu0 0
    %1514 = vmatprep.subr.bf16.mxu0 0
    %1515 = vmatpush1.bf16.xpose.msra.mxu0 0
    %1516 = vmatprep.subr.bf16.mxu0 0
    %1517 = vmatpush1.bf16.xpose.msra.mxu0 0
    %1518 = vmatprep.subr.bf16.mxu0 0
    %1519 = vmatpush1.bf16.xpose.msra.mxu0 0
    %1520 = vmatprep.subr.bf16.mxu0 0
    %1521 = vmatpush1.bf16.xpose.msra.mxu0 0
    %1522 = vmatprep.subr.bf16.mxu0 0
    %1523 = vmatpush1.bf16.xpose.msra.mxu0 0
    %1524 = vmatprep.subr.bf16.mxu0 0
    %1525 = vmatpush1.bf16.xpose.msra.mxu0 0
    %1526 = vmatprep.subr.bf16.mxu0 0
    %1527 = vmatpush1.bf16.xpose.msra.mxu0 0
    %1528 = vmatprep.subr.bf16.mxu0 0
    %1529 = vmatpush1.bf16.xpose.msra.mxu0 0
    %1530 = vmatprep.subr.bf16.mxu0 0
    %1531 = vmatpush1.bf16.xpose.msra.mxu0 0
    %1532 = vmatprep.subr.bf16.mxu0 0
    %1533 = vmatpush1.bf16.xpose.msra.mxu0 0
    %1534 = vmatprep.mubr.bf16.mxu0 0
    %1535 = vmatmul.mubr.bf16.gmra.mrb[0].mxu0 %v1126
    %v1536 = vpop.f32.mrb[0].mxu0
    %v1537 = vadd.f32 0.0, %v1536
    %v1538 = vpop.f32.mrb[0].mxu0
    %v1539 = vpop.f32.mrb[0].mxu0
    %v1540 = vpop.f32.mrb[0].mxu0
    %1541 = vdwg.mxu0
    %1542 = vmatprep.subr.bf16.mxu0 0
    %1543 = vmatpush1.bf16.xpose.msra.mxu0 %v1159
    %1544 = vmatprep.subr.bf16.mxu0 0
    %1545 = vmatpush1.bf16.xpose.msra.mxu0 0
    %1546 = vmatprep.subr.bf16.mxu0 0
    %1547 = vmatpush1.bf16.xpose.msra.mxu0 0
    %1548 = vmatprep.subr.bf16.mxu0 0
    %1549 = vmatpush1.bf16.xpose.msra.mxu0 0
    %1550 = vmatprep.subr.bf16.mxu0 0
    %1551 = vmatpush1.bf16.xpose.msra.mxu0 0
    %1552 = vmatprep.subr.bf16.mxu0 0
    %1553 = vmatpush1.bf16.xpose.msra.mxu0 0
    %1554 = vmatprep.subr.bf16.mxu0 0
    %1555 = vmatpush1.bf16.xpose.msra.mxu0 0
    %1556 = vmatprep.subr.bf16.mxu0 0
    %1557 = vmatpush1.bf16.xpose.msra.mxu0 0
    %1558 = vmatprep.subr.bf16.mxu0 0
    %1559 = vmatpush1.bf16.xpose.msra.mxu0 0
    %1560 = vmatprep.subr.bf16.mxu0 0
    %1561 = vmatpush1.bf16.xpose.msra.mxu0 0
    %1562 = vmatprep.subr.bf16.mxu0 0
    %1563 = vmatpush1.bf16.xpose.msra.mxu0 0
    %1564 = vmatprep.subr.bf16.mxu0 0
    %1565 = vmatpush1.bf16.xpose.msra.mxu0 0
    %1566 = vmatprep.subr.bf16.mxu0 0
    %1567 = vmatpush1.bf16.xpose.msra.mxu0 0
    %1568 = vmatprep.subr.bf16.mxu0 0
    %1569 = vmatpush1.bf16.xpose.msra.mxu0 0
    %1570 = vmatprep.subr.bf16.mxu0 0
    %1571 = vmatpush1.bf16.xpose.msra.mxu0 0
    %1572 = vmatprep.subr.bf16.mxu0 0
    %1573 = vmatpush1.bf16.xpose.msra.mxu0 0
    %1574 = vmatprep.mubr.bf16.mxu0 0
    %1575 = vmatmul.mubr.bf16.gmra.mrb[0].mxu0 %v1127
    %v1576 = vpop.f32.mrb[0].mxu0
    %v1577 = vadd.f32 0.0, %v1576
    %v1578 = vpop.f32.mrb[0].mxu0
    %v1579 = vpop.f32.mrb[0].mxu0
    %v1580 = vpop.f32.mrb[0].mxu0
    %1581 = vdwg.mxu0
    %1582 = vmatprep.subr.bf16.mxu0 0
    %1583 = vmatpush1.bf16.xpose.msra.mxu0 %v1160
    %1584 = vmatprep.subr.bf16.mxu0 0
    %1585 = vmatpush1.bf16.xpose.msra.mxu0 0
    %1586 = vmatprep.subr.bf16.mxu0 0
    %1587 = vmatpush1.bf16.xpose.msra.mxu0 0
    %1588 = vmatprep.subr.bf16.mxu0 0
    %1589 = vmatpush1.bf16.xpose.msra.mxu0 0
    %1590 = vmatprep.subr.bf16.mxu0 0
    %1591 = vmatpush1.bf16.xpose.msra.mxu0 0
    %1592 = vmatprep.subr.bf16.mxu0 0
    %1593 = vmatpush1.bf16.xpose.msra.mxu0 0
    %1594 = vmatprep.subr.bf16.mxu0 0
    %1595 = vmatpush1.bf16.xpose.msra.mxu0 0
    %1596 = vmatprep.subr.bf16.mxu0 0
    %1597 = vmatpush1.bf16.xpose.msra.mxu0 0
    %1598 = vmatprep.subr.bf16.mxu0 0
    %1599 = vmatpush1.bf16.xpose.msra.mxu0 0
    %1600 = vmatprep.subr.bf16.mxu0 0
    %1601 = vmatpush1.bf16.xpose.msra.mxu0 0
    %1602 = vmatprep.subr.bf16.mxu0 0
    %1603 = vmatpush1.bf16.xpose.msra.mxu0 0
    %1604 = vmatprep.subr.bf16.mxu0 0
    %1605 = vmatpush1.bf16.xpose.msra.mxu0 0
    %1606 = vmatprep.subr.bf16.mxu0 0
    %1607 = vmatpush1.bf16.xpose.msra.mxu0 0
    %1608 = vmatprep.subr.bf16.mxu0 0
    %1609 = vmatpush1.bf16.xpose.msra.mxu0 0
    %1610 = vmatprep.subr.bf16.mxu0 0
    %1611 = vmatpush1.bf16.xpose.msra.mxu0 0
    %1612 = vmatprep.subr.bf16.mxu0 0
    %1613 = vmatpush1.bf16.xpose.msra.mxu0 0
    %1614 = vmatprep.mubr.bf16.mxu0 0
    %1615 = vmatmul.mubr.bf16.gmra.mrb[0].mxu0 %v1128
    %v1616 = vpop.f32.mrb[0].mxu0
    %v1617 = vadd.f32 0.0, %v1616
    %v1618 = vpop.f32.mrb[0].mxu0
    %v1619 = vpop.f32.mrb[0].mxu0
    %v1620 = vpop.f32.mrb[0].mxu0
    %1621 = vdwg.mxu0
    %1622 = vmatprep.subr.bf16.mxu0 0
    %1623 = vmatpush1.bf16.xpose.msra.mxu0 %v1161
    %1624 = vmatprep.subr.bf16.mxu0 0
    %1625 = vmatpush1.bf16.xpose.msra.mxu0 0
    %1626 = vmatprep.subr.bf16.mxu0 0
    %1627 = vmatpush1.bf16.xpose.msra.mxu0 0
    %1628 = vmatprep.subr.bf16.mxu0 0
    %1629 = vmatpush1.bf16.xpose.msra.mxu0 0
    %1630 = vmatprep.subr.bf16.mxu0 0
    %1631 = vmatpush1.bf16.xpose.msra.mxu0 0
    %1632 = vmatprep.subr.bf16.mxu0 0
    %1633 = vmatpush1.bf16.xpose.msra.mxu0 0
    %1634 = vmatprep.subr.bf16.mxu0 0
    %1635 = vmatpush1.bf16.xpose.msra.mxu0 0
    %1636 = vmatprep.subr.bf16.mxu0 0
    %1637 = vmatpush1.bf16.xpose.msra.mxu0 0
    %1638 = vmatprep.subr.bf16.mxu0 0
    %1639 = vmatpush1.bf16.xpose.msra.mxu0 0
    %1640 = vmatprep.subr.bf16.mxu0 0
    %1641 = vmatpush1.bf16.xpose.msra.mxu0 0
    %1642 = vmatprep.subr.bf16.mxu0 0
    %1643 = vmatpush1.bf16.xpose.msra.mxu0 0
    %1644 = vmatprep.subr.bf16.mxu0 0
    %1645 = vmatpush1.bf16.xpose.msra.mxu0 0
    %1646 = vmatprep.subr.bf16.mxu0 0
    %1647 = vmatpush1.bf16.xpose.msra.mxu0 0
    %1648 = vmatprep.subr.bf16.mxu0 0
    %1649 = vmatpush1.bf16.xpose.msra.mxu0 0
    %1650 = vmatprep.subr.bf16.mxu0 0
    %1651 = vmatpush1.bf16.xpose.msra.mxu0 0
    %1652 = vmatprep.subr.bf16.mxu0 0
    %1653 = vmatpush1.bf16.xpose.msra.mxu0 0
    %1654 = vmatprep.mubr.bf16.mxu0 0
    %1655 = vmatmul.mubr.bf16.gmra.mrb[0].mxu0 %v1129
    %v1656 = vpop.f32.mrb[0].mxu0
    %v1657 = vadd.f32 0.0, %v1656
    %v1658 = vpop.f32.mrb[0].mxu0
    %v1659 = vpop.f32.mrb[0].mxu0
    %v1660 = vpop.f32.mrb[0].mxu0
    %1661 = vdwg.mxu0
    %1662 = vmatprep.subr.bf16.mxu0 0
    %1663 = vmatpush1.bf16.xpose.msra.mxu0 %v1162
    %1664 = vmatprep.subr.bf16.mxu0 0
    %1665 = vmatpush1.bf16.xpose.msra.mxu0 0
    %1666 = vmatprep.subr.bf16.mxu0 0
    %1667 = vmatpush1.bf16.xpose.msra.mxu0 0
    %1668 = vmatprep.subr.bf16.mxu0 0
    %1669 = vmatpush1.bf16.xpose.msra.mxu0 0
    %1670 = vmatprep.subr.bf16.mxu0 0
    %1671 = vmatpush1.bf16.xpose.msra.mxu0 0
    %1672 = vmatprep.subr.bf16.mxu0 0
    %1673 = vmatpush1.bf16.xpose.msra.mxu0 0
    %1674 = vmatprep.subr.bf16.mxu0 0
    %1675 = vmatpush1.bf16.xpose.msra.mxu0 0
    %1676 = vmatprep.subr.bf16.mxu0 0
    %1677 = vmatpush1.bf16.xpose.msra.mxu0 0
    %1678 = vmatprep.subr.bf16.mxu0 0
    %1679 = vmatpush1.bf16.xpose.msra.mxu0 0
    %1680 = vmatprep.subr.bf16.mxu0 0
    %1681 = vmatpush1.bf16.xpose.msra.mxu0 0
    %1682 = vmatprep.subr.bf16.mxu0 0
    %1683 = vmatpush1.bf16.xpose.msra.mxu0 0
    %1684 = vmatprep.subr.bf16.mxu0 0
    %1685 = vmatpush1.bf16.xpose.msra.mxu0 0
    %1686 = vmatprep.subr.bf16.mxu0 0
    %1687 = vmatpush1.bf16.xpose.msra.mxu0 0
    %1688 = vmatprep.subr.bf16.mxu0 0
    %1689 = vmatpush1.bf16.xpose.msra.mxu0 0
    %1690 = vmatprep.subr.bf16.mxu0 0
    %1691 = vmatpush1.bf16.xpose.msra.mxu0 0
    %1692 = vmatprep.subr.bf16.mxu0 0
    %1693 = vmatpush1.bf16.xpose.msra.mxu0 0
    %1694 = vmatprep.mubr.bf16.mxu0 0
    %1695 = vmatmul.mubr.bf16.gmra.mrb[0].mxu0 %v1130
    %v1696 = vpop.f32.mrb[0].mxu0
    %v1697 = vadd.f32 0.0, %v1696
    %v1698 = vpop.f32.mrb[0].mxu0
    %v1699 = vpop.f32.mrb[0].mxu0
    %v1700 = vpop.f32.mrb[0].mxu0
    %1701 = vdwg.mxu0
    %1702 = vmatprep.subr.bf16.mxu0 0
    %1703 = vmatpush1.bf16.xpose.msra.mxu0 %v1163
    %1704 = vmatprep.subr.bf16.mxu0 0
    %1705 = vmatpush1.bf16.xpose.msra.mxu0 0
    %1706 = vmatprep.subr.bf16.mxu0 0
    %1707 = vmatpush1.bf16.xpose.msra.mxu0 0
    %1708 = vmatprep.subr.bf16.mxu0 0
    %1709 = vmatpush1.bf16.xpose.msra.mxu0 0
    %1710 = vmatprep.subr.bf16.mxu0 0
    %1711 = vmatpush1.bf16.xpose.msra.mxu0 0
    %1712 = vmatprep.subr.bf16.mxu0 0
    %1713 = vmatpush1.bf16.xpose.msra.mxu0 0
    %1714 = vmatprep.subr.bf16.mxu0 0
    %1715 = vmatpush1.bf16.xpose.msra.mxu0 0
    %1716 = vmatprep.subr.bf16.mxu0 0
    %1717 = vmatpush1.bf16.xpose.msra.mxu0 0
    %1718 = vmatprep.subr.bf16.mxu0 0
    %1719 = vmatpush1.bf16.xpose.msra.mxu0 0
    %1720 = vmatprep.subr.bf16.mxu0 0
    %1721 = vmatpush1.bf16.xpose.msra.mxu0 0
    %1722 = vmatprep.subr.bf16.mxu0 0
    %1723 = vmatpush1.bf16.xpose.msra.mxu0 0
    %1724 = vmatprep.subr.bf16.mxu0 0
    %1725 = vmatpush1.bf16.xpose.msra.mxu0 0
    %1726 = vmatprep.subr.bf16.mxu0 0
    %1727 = vmatpush1.bf16.xpose.msra.mxu0 0
    %1728 = vmatprep.subr.bf16.mxu0 0
    %1729 = vmatpush1.bf16.xpose.msra.mxu0 0
    %1730 = vmatprep.subr.bf16.mxu0 0
    %1731 = vmatpush1.bf16.xpose.msra.mxu0 0
    %1732 = vmatprep.subr.bf16.mxu0 0
    %1733 = vmatpush1.bf16.xpose.msra.mxu0 0
    %1734 = vmatprep.mubr.bf16.mxu0 0
    %1735 = vmatmul.mubr.bf16.gmra.mrb[0].mxu0 %v1131
    %v1736 = vpop.f32.mrb[0].mxu0
    %v1737 = vadd.f32 0.0, %v1736
    %v1738 = vpop.f32.mrb[0].mxu0
    %v1739 = vpop.f32.mrb[0].mxu0
    %v1740 = vpop.f32.mrb[0].mxu0
    %1741 = vdwg.mxu0
    %1742 = vmatprep.subr.bf16.mxu0 0
    %1743 = vmatpush1.bf16.xpose.msra.mxu0 %v1164
    %1744 = vmatprep.subr.bf16.mxu0 0
    %1745 = vmatpush1.bf16.xpose.msra.mxu0 0
    %1746 = vmatprep.subr.bf16.mxu0 0
    %1747 = vmatpush1.bf16.xpose.msra.mxu0 0
    %1748 = vmatprep.subr.bf16.mxu0 0
    %1749 = vmatpush1.bf16.xpose.msra.mxu0 0
    %1750 = vmatprep.subr.bf16.mxu0 0
    %1751 = vmatpush1.bf16.xpose.msra.mxu0 0
    %1752 = vmatprep.subr.bf16.mxu0 0
    %1753 = vmatpush1.bf16.xpose.msra.mxu0 0
    %1754 = vmatprep.subr.bf16.mxu0 0
    %1755 = vmatpush1.bf16.xpose.msra.mxu0 0
    %1756 = vmatprep.subr.bf16.mxu0 0
    %1757 = vmatpush1.bf16.xpose.msra.mxu0 0
    %1758 = vmatprep.subr.bf16.mxu0 0
    %1759 = vmatpush1.bf16.xpose.msra.mxu0 0
    %1760 = vmatprep.subr.bf16.mxu0 0
    %1761 = vmatpush1.bf16.xpose.msra.mxu0 0
    %1762 = vmatprep.subr.bf16.mxu0 0
    %1763 = vmatpush1.bf16.xpose.msra.mxu0 0
    %1764 = vmatprep.subr.bf16.mxu0 0
    %1765 = vmatpush1.bf16.xpose.msra.mxu0 0
    %1766 = vmatprep.subr.bf16.mxu0 0
    %1767 = vmatpush1.bf16.xpose.msra.mxu0 0
    %1768 = vmatprep.subr.bf16.mxu0 0
    %1769 = vmatpush1.bf16.xpose.msra.mxu0 0
    %1770 = vmatprep.subr.bf16.mxu0 0
    %1771 = vmatpush1.bf16.xpose.msra.mxu0 0
    %1772 = vmatprep.subr.bf16.mxu0 0
    %1773 = vmatpush1.bf16.xpose.msra.mxu0 0
    %1774 = vmatprep.mubr.bf16.mxu0 0
    %1775 = vmatmul.mubr.bf16.gmra.mrb[0].mxu0 %v1132
    %v1776 = vpop.f32.mrb[0].mxu0
    %v1777 = vadd.f32 0.0, %v1776
    %v1778 = vpop.f32.mrb[0].mxu0
    %v1779 = vpop.f32.mrb[0].mxu0
    %v1780 = vpop.f32.mrb[0].mxu0
    %1781 = vdwg.mxu0
    %1782 = vmatprep.subr.bf16.mxu0 0
    %1783 = vmatpush1.bf16.xpose.msra.mxu0 %v1165
    %1784 = vmatprep.subr.bf16.mxu0 0
    %1785 = vmatpush1.bf16.xpose.msra.mxu0 0
    %1786 = vmatprep.subr.bf16.mxu0 0
    %1787 = vmatpush1.bf16.xpose.msra.mxu0 0
    %1788 = vmatprep.subr.bf16.mxu0 0
    %1789 = vmatpush1.bf16.xpose.msra.mxu0 0
    %1790 = vmatprep.subr.bf16.mxu0 0
    %1791 = vmatpush1.bf16.xpose.msra.mxu0 0
    %1792 = vmatprep.subr.bf16.mxu0 0
    %1793 = vmatpush1.bf16.xpose.msra.mxu0 0
    %1794 = vmatprep.subr.bf16.mxu0 0
    %1795 = vmatpush1.bf16.xpose.msra.mxu0 0
    %1796 = vmatprep.subr.bf16.mxu0 0
    %1797 = vmatpush1.bf16.xpose.msra.mxu0 0
    %1798 = vmatprep.subr.bf16.mxu0 0
    %1799 = vmatpush1.bf16.xpose.msra.mxu0 0
    %1800 = vmatprep.subr.bf16.mxu0 0
    %1801 = vmatpush1.bf16.xpose.msra.mxu0 0
    %1802 = vmatprep.subr.bf16.mxu0 0
    %1803 = vmatpush1.bf16.xpose.msra.mxu0 0
    %1804 = vmatprep.subr.bf16.mxu0 0
    %1805 = vmatpush1.bf16.xpose.msra.mxu0 0
    %1806 = vmatprep.subr.bf16.mxu0 0
    %1807 = vmatpush1.bf16.xpose.msra.mxu0 0
    %1808 = vmatprep.subr.bf16.mxu0 0
    %1809 = vmatpush1.bf16.xpose.msra.mxu0 0
    %1810 = vmatprep.subr.bf16.mxu0 0
    %1811 = vmatpush1.bf16.xpose.msra.mxu0 0
    %1812 = vmatprep.subr.bf16.mxu0 0
    %1813 = vmatpush1.bf16.xpose.msra.mxu0 0
    %1814 = vmatprep.mubr.bf16.mxu0 0
    %1815 = vmatmul.mubr.bf16.gmra.mrb[0].mxu0 %v1133
    %v1816 = vpop.f32.mrb[0].mxu0
    %v1817 = vadd.f32 0.0, %v1816
    %v1818 = vpop.f32.mrb[0].mxu0
    %v1819 = vpop.f32.mrb[0].mxu0
    %v1820 = vpop.f32.mrb[0].mxu0
    %1821 = vdwg.mxu0
    %1822 = vmatprep.subr.bf16.mxu0 0
    %1823 = vmatpush1.bf16.xpose.msra.mxu0 %v1166
    %1824 = vmatprep.subr.bf16.mxu0 0
    %1825 = vmatpush1.bf16.xpose.msra.mxu0 0
    %1826 = vmatprep.subr.bf16.mxu0 0
    %1827 = vmatpush1.bf16.xpose.msra.mxu0 0
    %1828 = vmatprep.subr.bf16.mxu0 0
    %1829 = vmatpush1.bf16.xpose.msra.mxu0 0
    %1830 = vmatprep.subr.bf16.mxu0 0
    %1831 = vmatpush1.bf16.xpose.msra.mxu0 0
    %1832 = vmatprep.subr.bf16.mxu0 0
    %1833 = vmatpush1.bf16.xpose.msra.mxu0 0
    %1834 = vmatprep.subr.bf16.mxu0 0
    %1835 = vmatpush1.bf16.xpose.msra.mxu0 0
    %1836 = vmatprep.subr.bf16.mxu0 0
    %1837 = vmatpush1.bf16.xpose.msra.mxu0 0
    %1838 = vmatprep.subr.bf16.mxu0 0
    %1839 = vmatpush1.bf16.xpose.msra.mxu0 0
    %1840 = vmatprep.subr.bf16.mxu0 0
    %1841 = vmatpush1.bf16.xpose.msra.mxu0 0
    %1842 = vmatprep.subr.bf16.mxu0 0
    %1843 = vmatpush1.bf16.xpose.msra.mxu0 0
    %1844 = vmatprep.subr.bf16.mxu0 0
    %1845 = vmatpush1.bf16.xpose.msra.mxu0 0
    %1846 = vmatprep.subr.bf16.mxu0 0
    %1847 = vmatpush1.bf16.xpose.msra.mxu0 0
    %1848 = vmatprep.subr.bf16.mxu0 0
    %1849 = vmatpush1.bf16.xpose.msra.mxu0 0
    %1850 = vmatprep.subr.bf16.mxu0 0
    %1851 = vmatpush1.bf16.xpose.msra.mxu0 0
    %1852 = vmatprep.subr.bf16.mxu0 0
    %1853 = vmatpush1.bf16.xpose.msra.mxu0 0
    %1854 = vmatprep.mubr.bf16.mxu0 0
    %1855 = vmatmul.mubr.bf16.gmra.mrb[0].mxu0 %v1134
    %v1856 = vpop.f32.mrb[0].mxu0
    %v1857 = vadd.f32 0.0, %v1856
    %v1858 = vpop.f32.mrb[0].mxu0
    %v1859 = vpop.f32.mrb[0].mxu0
    %v1860 = vpop.f32.mrb[0].mxu0
    %1861 = vdwg.mxu0
    %1862 = vmatprep.subr.bf16.mxu0 0
    %1863 = vmatpush1.bf16.xpose.msra.mxu0 %v1167
    %1864 = vmatprep.subr.bf16.mxu0 0
    %1865 = vmatpush1.bf16.xpose.msra.mxu0 0
    %1866 = vmatprep.subr.bf16.mxu0 0
    %1867 = vmatpush1.bf16.xpose.msra.mxu0 0
    %1868 = vmatprep.subr.bf16.mxu0 0
    %1869 = vmatpush1.bf16.xpose.msra.mxu0 0
    %1870 = vmatprep.subr.bf16.mxu0 0
    %1871 = vmatpush1.bf16.xpose.msra.mxu0 0
    %1872 = vmatprep.subr.bf16.mxu0 0
    %1873 = vmatpush1.bf16.xpose.msra.mxu0 0
    %1874 = vmatprep.subr.bf16.mxu0 0
    %1875 = vmatpush1.bf16.xpose.msra.mxu0 0
    %1876 = vmatprep.subr.bf16.mxu0 0
    %1877 = vmatpush1.bf16.xpose.msra.mxu0 0
    %1878 = vmatprep.subr.bf16.mxu0 0
    %1879 = vmatpush1.bf16.xpose.msra.mxu0 0
    %1880 = vmatprep.subr.bf16.mxu0 0
    %1881 = vmatpush1.bf16.xpose.msra.mxu0 0
    %1882 = vmatprep.subr.bf16.mxu0 0
    %1883 = vmatpush1.bf16.xpose.msra.mxu0 0
    %1884 = vmatprep.subr.bf16.mxu0 0
    %1885 = vmatpush1.bf16.xpose.msra.mxu0 0
    %1886 = vmatprep.subr.bf16.mxu0 0
    %1887 = vmatpush1.bf16.xpose.msra.mxu0 0
    %1888 = vmatprep.subr.bf16.mxu0 0
    %1889 = vmatpush1.bf16.xpose.msra.mxu0 0
    %1890 = vmatprep.subr.bf16.mxu0 0
    %1891 = vmatpush1.bf16.xpose.msra.mxu0 0
    %1892 = vmatprep.subr.bf16.mxu0 0
    %1893 = vmatpush1.bf16.xpose.msra.mxu0 0
    %1894 = vmatprep.mubr.bf16.mxu0 0
    %1895 = vmatmul.mubr.bf16.gmra.mrb[0].mxu0 %v1135
    %v1896 = vpop.f32.mrb[0].mxu0
    %v1897 = vadd.f32 0.0, %v1896
    %v1898 = vpop.f32.mrb[0].mxu0
    %v1899 = vpop.f32.mrb[0].mxu0
    %v1900 = vpop.f32.mrb[0].mxu0
    %1901 = vdwg.mxu0
    %1902 = vmatprep.subr.bf16.mxu0 0
    %1903 = vmatpush1.bf16.xpose.msra.mxu0 %v1168
    %1904 = vmatprep.subr.bf16.mxu0 0
    %1905 = vmatpush1.bf16.xpose.msra.mxu0 0
    %1906 = vmatprep.subr.bf16.mxu0 0
    %1907 = vmatpush1.bf16.xpose.msra.mxu0 0
    %1908 = vmatprep.subr.bf16.mxu0 0
    %1909 = vmatpush1.bf16.xpose.msra.mxu0 0
    %1910 = vmatprep.subr.bf16.mxu0 0
    %1911 = vmatpush1.bf16.xpose.msra.mxu0 0
    %1912 = vmatprep.subr.bf16.mxu0 0
    %1913 = vmatpush1.bf16.xpose.msra.mxu0 0
    %1914 = vmatprep.subr.bf16.mxu0 0
    %1915 = vmatpush1.bf16.xpose.msra.mxu0 0
    %1916 = vmatprep.subr.bf16.mxu0 0
    %1917 = vmatpush1.bf16.xpose.msra.mxu0 0
    %1918 = vmatprep.subr.bf16.mxu0 0
    %1919 = vmatpush1.bf16.xpose.msra.mxu0 0
    %1920 = vmatprep.subr.bf16.mxu0 0
    %1921 = vmatpush1.bf16.xpose.msra.mxu0 0
    %1922 = vmatprep.subr.bf16.mxu0 0
    %1923 = vmatpush1.bf16.xpose.msra.mxu0 0
    %1924 = vmatprep.subr.bf16.mxu0 0
    %1925 = vmatpush1.bf16.xpose.msra.mxu0 0
    %1926 = vmatprep.subr.bf16.mxu0 0
    %1927 = vmatpush1.bf16.xpose.msra.mxu0 0
    %1928 = vmatprep.subr.bf16.mxu0 0
    %1929 = vmatpush1.bf16.xpose.msra.mxu0 0
    %1930 = vmatprep.subr.bf16.mxu0 0
    %1931 = vmatpush1.bf16.xpose.msra.mxu0 0
    %1932 = vmatprep.subr.bf16.mxu0 0
    %1933 = vmatpush1.bf16.xpose.msra.mxu0 0
    %1934 = vmatprep.mubr.bf16.mxu0 0
    %1935 = vmatmul.mubr.bf16.gmra.mrb[0].mxu0 %v1136
    %v1936 = vpop.f32.mrb[0].mxu0
    %v1937 = vadd.f32 0.0, %v1936
    %v1938 = vpop.f32.mrb[0].mxu0
    %v1939 = vpop.f32.mrb[0].mxu0
    %v1940 = vpop.f32.mrb[0].mxu0
    %1941 = vdwg.mxu0
    %1942 = vmatprep.subr.bf16.mxu0 0
    %1943 = vmatpush1.bf16.xpose.msra.mxu0 %v1169
    %1944 = vmatprep.subr.bf16.mxu0 0
    %1945 = vmatpush1.bf16.xpose.msra.mxu0 0
    %1946 = vmatprep.subr.bf16.mxu0 0
    %1947 = vmatpush1.bf16.xpose.msra.mxu0 0
    %1948 = vmatprep.subr.bf16.mxu0 0
    %1949 = vmatpush1.bf16.xpose.msra.mxu0 0
    %1950 = vmatprep.subr.bf16.mxu0 0
    %1951 = vmatpush1.bf16.xpose.msra.mxu0 0
    %1952 = vmatprep.subr.bf16.mxu0 0
    %1953 = vmatpush1.bf16.xpose.msra.mxu0 0
    %1954 = vmatprep.subr.bf16.mxu0 0
    %1955 = vmatpush1.bf16.xpose.msra.mxu0 0
    %1956 = vmatprep.subr.bf16.mxu0 0
    %1957 = vmatpush1.bf16.xpose.msra.mxu0 0
    %1958 = vmatprep.subr.bf16.mxu0 0
    %1959 = vmatpush1.bf16.xpose.msra.mxu0 0
    %1960 = vmatprep.subr.bf16.mxu0 0
    %1961 = vmatpush1.bf16.xpose.msra.mxu0 0
    %1962 = vmatprep.subr.bf16.mxu0 0
    %1963 = vmatpush1.bf16.xpose.msra.mxu0 0
    %1964 = vmatprep.subr.bf16.mxu0 0
    %1965 = vmatpush1.bf16.xpose.msra.mxu0 0
    %1966 = vmatprep.subr.bf16.mxu0 0
    %1967 = vmatpush1.bf16.xpose.msra.mxu0 0
    %1968 = vmatprep.subr.bf16.mxu0 0
    %1969 = vmatpush1.bf16.xpose.msra.mxu0 0
    %1970 = vmatprep.subr.bf16.mxu0 0
    %1971 = vmatpush1.bf16.xpose.msra.mxu0 0
    %1972 = vmatprep.subr.bf16.mxu0 0
    %1973 = vmatpush1.bf16.xpose.msra.mxu0 0
    %1974 = vmatprep.mubr.bf16.mxu0 0
    %1975 = vmatmul.mubr.bf16.gmra.mrb[0].mxu0 %v1137
    %v1976 = vpop.f32.mrb[0].mxu0
    %v1977 = vadd.f32 0.0, %v1976
    %v1978 = vpop.f32.mrb[0].mxu0
    %v1979 = vpop.f32.mrb[0].mxu0
    %v1980 = vpop.f32.mrb[0].mxu0
    %1981 = vdwg.mxu0
    %1982 = vmatprep.subr.bf16.mxu0 0
    %1983 = vmatpush1.bf16.xpose.msra.mxu0 %v1170
    %1984 = vmatprep.subr.bf16.mxu0 0
    %1985 = vmatpush1.bf16.xpose.msra.mxu0 0
    %1986 = vmatprep.subr.bf16.mxu0 0
    %1987 = vmatpush1.bf16.xpose.msra.mxu0 0
    %1988 = vmatprep.subr.bf16.mxu0 0
    %1989 = vmatpush1.bf16.xpose.msra.mxu0 0
    %1990 = vmatprep.subr.bf16.mxu0 0
    %1991 = vmatpush1.bf16.xpose.msra.mxu0 0
    %1992 = vmatprep.subr.bf16.mxu0 0
    %1993 = vmatpush1.bf16.xpose.msra.mxu0 0
    %1994 = vmatprep.subr.bf16.mxu0 0
    %1995 = vmatpush1.bf16.xpose.msra.mxu0 0
    %1996 = vmatprep.subr.bf16.mxu0 0
    %1997 = vmatpush1.bf16.xpose.msra.mxu0 0
    %1998 = vmatprep.subr.bf16.mxu0 0
    %1999 = vmatpush1.bf16.xpose.msra.mxu0 0
    %2000 = vmatprep.subr.bf16.mxu0 0
    %2001 = vmatpush1.bf16.xpose.msra.mxu0 0
    %2002 = vmatprep.subr.bf16.mxu0 0
    %2003 = vmatpush1.bf16.xpose.msra.mxu0 0
    %2004 = vmatprep.subr.bf16.mxu0 0
    %2005 = vmatpush1.bf16.xpose.msra.mxu0 0
    %2006 = vmatprep.subr.bf16.mxu0 0
    %2007 = vmatpush1.bf16.xpose.msra.mxu0 0
    %2008 = vmatprep.subr.bf16.mxu0 0
    %2009 = vmatpush1.bf16.xpose.msra.mxu0 0
    %2010 = vmatprep.subr.bf16.mxu0 0
    %2011 = vmatpush1.bf16.xpose.msra.mxu0 0
    %2012 = vmatprep.subr.bf16.mxu0 0
    %2013 = vmatpush1.bf16.xpose.msra.mxu0 0
    %2014 = vmatprep.mubr.bf16.mxu0 0
    %2015 = vmatmul.mubr.bf16.gmra.mrb[0].mxu0 %v1138
    %v2016 = vpop.f32.mrb[0].mxu0
    %v2017 = vadd.f32 0.0, %v2016
    %v2018 = vpop.f32.mrb[0].mxu0
    %v2019 = vpop.f32.mrb[0].mxu0
    %v2020 = vpop.f32.mrb[0].mxu0
    %2021 = vdwg.mxu0
    %2022 = vmatprep.subr.bf16.mxu0 0
    %2023 = vmatpush1.bf16.xpose.msra.mxu0 %v1171
    %2024 = vmatprep.subr.bf16.mxu0 0
    %2025 = vmatpush1.bf16.xpose.msra.mxu0 0
    %2026 = vmatprep.subr.bf16.mxu0 0
    %2027 = vmatpush1.bf16.xpose.msra.mxu0 0
    %2028 = vmatprep.subr.bf16.mxu0 0
    %2029 = vmatpush1.bf16.xpose.msra.mxu0 0
    %2030 = vmatprep.subr.bf16.mxu0 0
    %2031 = vmatpush1.bf16.xpose.msra.mxu0 0
    %2032 = vmatprep.subr.bf16.mxu0 0
    %2033 = vmatpush1.bf16.xpose.msra.mxu0 0
    %2034 = vmatprep.subr.bf16.mxu0 0
    %2035 = vmatpush1.bf16.xpose.msra.mxu0 0
    %2036 = vmatprep.subr.bf16.mxu0 0
    %2037 = vmatpush1.bf16.xpose.msra.mxu0 0
    %2038 = vmatprep.subr.bf16.mxu0 0
    %2039 = vmatpush1.bf16.xpose.msra.mxu0 0
    %2040 = vmatprep.subr.bf16.mxu0 0
    %2041 = vmatpush1.bf16.xpose.msra.mxu0 0
    %2042 = vmatprep.subr.bf16.mxu0 0
    %2043 = vmatpush1.bf16.xpose.msra.mxu0 0
    %2044 = vmatprep.subr.bf16.mxu0 0
    %2045 = vmatpush1.bf16.xpose.msra.mxu0 0
    %2046 = vmatprep.subr.bf16.mxu0 0
    %2047 = vmatpush1.bf16.xpose.msra.mxu0 0
    %2048 = vmatprep.subr.bf16.mxu0 0
    %2049 = vmatpush1.bf16.xpose.msra.mxu0 0
    %2050 = vmatprep.subr.bf16.mxu0 0
    %2051 = vmatpush1.bf16.xpose.msra.mxu0 0
    %2052 = vmatprep.subr.bf16.mxu0 0
    %2053 = vmatpush1.bf16.xpose.msra.mxu0 0
    %2054 = vmatprep.mubr.bf16.mxu0 0
    %2055 = vmatmul.mubr.bf16.gmra.mrb[0].mxu0 %v1139
    %v2056 = vpop.f32.mrb[0].mxu0
    %v2057 = vadd.f32 0.0, %v2056
    %v2058 = vpop.f32.mrb[0].mxu0
    %v2059 = vpop.f32.mrb[0].mxu0
    %v2060 = vpop.f32.mrb[0].mxu0
    %2061 = vdwg.mxu0
    %2062 = vmatprep.subr.bf16.mxu0 0
    %2063 = vmatpush1.bf16.xpose.msra.mxu0 %v1172
    %2064 = vmatprep.subr.bf16.mxu0 0
    %2065 = vmatpush1.bf16.xpose.msra.mxu0 0
    %2066 = vmatprep.subr.bf16.mxu0 0
    %2067 = vmatpush1.bf16.xpose.msra.mxu0 0
    %2068 = vmatprep.subr.bf16.mxu0 0
    %2069 = vmatpush1.bf16.xpose.msra.mxu0 0
    %2070 = vmatprep.subr.bf16.mxu0 0
    %2071 = vmatpush1.bf16.xpose.msra.mxu0 0
    %2072 = vmatprep.subr.bf16.mxu0 0
    %2073 = vmatpush1.bf16.xpose.msra.mxu0 0
    %2074 = vmatprep.subr.bf16.mxu0 0
    %2075 = vmatpush1.bf16.xpose.msra.mxu0 0
    %2076 = vmatprep.subr.bf16.mxu0 0
    %2077 = vmatpush1.bf16.xpose.msra.mxu0 0
    %2078 = vmatprep.subr.bf16.mxu0 0
    %2079 = vmatpush1.bf16.xpose.msra.mxu0 0
    %2080 = vmatprep.subr.bf16.mxu0 0
    %2081 = vmatpush1.bf16.xpose.msra.mxu0 0
    %2082 = vmatprep.subr.bf16.mxu0 0
    %2083 = vmatpush1.bf16.xpose.msra.mxu0 0
    %2084 = vmatprep.subr.bf16.mxu0 0
    %2085 = vmatpush1.bf16.xpose.msra.mxu0 0
    %2086 = vmatprep.subr.bf16.mxu0 0
    %2087 = vmatpush1.bf16.xpose.msra.mxu0 0
    %2088 = vmatprep.subr.bf16.mxu0 0
    %2089 = vmatpush1.bf16.xpose.msra.mxu0 0
    %2090 = vmatprep.subr.bf16.mxu0 0
    %2091 = vmatpush1.bf16.xpose.msra.mxu0 0
    %2092 = vmatprep.subr.bf16.mxu0 0
    %2093 = vmatpush1.bf16.xpose.msra.mxu0 0
    %2094 = vmatprep.mubr.bf16.mxu0 0
    %2095 = vmatmul.mubr.bf16.gmra.mrb[0].mxu0 %v1140
    %v2096 = vpop.f32.mrb[0].mxu0
    %v2097 = vadd.f32 0.0, %v2096
    %v2098 = vpop.f32.mrb[0].mxu0
    %v2099 = vpop.f32.mrb[0].mxu0
    %v2100 = vpop.f32.mrb[0].mxu0
    %2101 = vdwg.mxu0
    %2102 = vmatprep.subr.bf16.mxu0 0
    %2103 = vmatpush1.bf16.xpose.msra.mxu0 %v1173
    %2104 = vmatprep.subr.bf16.mxu0 0
    %2105 = vmatpush1.bf16.xpose.msra.mxu0 0
    %2106 = vmatprep.subr.bf16.mxu0 0
    %2107 = vmatpush1.bf16.xpose.msra.mxu0 0
    %2108 = vmatprep.subr.bf16.mxu0 0
    %2109 = vmatpush1.bf16.xpose.msra.mxu0 0
    %2110 = vmatprep.subr.bf16.mxu0 0
    %2111 = vmatpush1.bf16.xpose.msra.mxu0 0
    %2112 = vmatprep.subr.bf16.mxu0 0
    %2113 = vmatpush1.bf16.xpose.msra.mxu0 0
    %2114 = vmatprep.subr.bf16.mxu0 0
    %2115 = vmatpush1.bf16.xpose.msra.mxu0 0
    %2116 = vmatprep.subr.bf16.mxu0 0
    %2117 = vmatpush1.bf16.xpose.msra.mxu0 0
    %2118 = vmatprep.subr.bf16.mxu0 0
    %2119 = vmatpush1.bf16.xpose.msra.mxu0 0
    %2120 = vmatprep.subr.bf16.mxu0 0
    %2121 = vmatpush1.bf16.xpose.msra.mxu0 0
    %2122 = vmatprep.subr.bf16.mxu0 0
    %2123 = vmatpush1.bf16.xpose.msra.mxu0 0
    %2124 = vmatprep.subr.bf16.mxu0 0
    %2125 = vmatpush1.bf16.xpose.msra.mxu0 0
    %2126 = vmatprep.subr.bf16.mxu0 0
    %2127 = vmatpush1.bf16.xpose.msra.mxu0 0
    %2128 = vmatprep.subr.bf16.mxu0 0
    %2129 = vmatpush1.bf16.xpose.msra.mxu0 0
    %2130 = vmatprep.subr.bf16.mxu0 0
    %2131 = vmatpush1.bf16.xpose.msra.mxu0 0
    %2132 = vmatprep.subr.bf16.mxu0 0
    %2133 = vmatpush1.bf16.xpose.msra.mxu0 0
    %2134 = vmatprep.mubr.bf16.mxu0 0
    %2135 = vmatmul.mubr.bf16.gmra.mrb[0].mxu0 %v1141
    %v2136 = vpop.f32.mrb[0].mxu0
    %v2137 = vadd.f32 0.0, %v2136
    %v2138 = vpop.f32.mrb[0].mxu0
    %v2139 = vpop.f32.mrb[0].mxu0
    %v2140 = vpop.f32.mrb[0].mxu0
    %2141 = vdwg.mxu0
    %2142 = vmatprep.subr.bf16.mxu0 0
    %2143 = vmatpush1.bf16.xpose.msra.mxu0 %v1174
    %2144 = vmatprep.subr.bf16.mxu0 0
    %2145 = vmatpush1.bf16.xpose.msra.mxu0 0
    %2146 = vmatprep.subr.bf16.mxu0 0
    %2147 = vmatpush1.bf16.xpose.msra.mxu0 0
    %2148 = vmatprep.subr.bf16.mxu0 0
    %2149 = vmatpush1.bf16.xpose.msra.mxu0 0
    %2150 = vmatprep.subr.bf16.mxu0 0
    %2151 = vmatpush1.bf16.xpose.msra.mxu0 0
    %2152 = vmatprep.subr.bf16.mxu0 0
    %2153 = vmatpush1.bf16.xpose.msra.mxu0 0
    %2154 = vmatprep.subr.bf16.mxu0 0
    %2155 = vmatpush1.bf16.xpose.msra.mxu0 0
    %2156 = vmatprep.subr.bf16.mxu0 0
    %2157 = vmatpush1.bf16.xpose.msra.mxu0 0
    %2158 = vmatprep.subr.bf16.mxu0 0
    %2159 = vmatpush1.bf16.xpose.msra.mxu0 0
    %2160 = vmatprep.subr.bf16.mxu0 0
    %2161 = vmatpush1.bf16.xpose.msra.mxu0 0
    %2162 = vmatprep.subr.bf16.mxu0 0
    %2163 = vmatpush1.bf16.xpose.msra.mxu0 0
    %2164 = vmatprep.subr.bf16.mxu0 0
    %2165 = vmatpush1.bf16.xpose.msra.mxu0 0
    %2166 = vmatprep.subr.bf16.mxu0 0
    %2167 = vmatpush1.bf16.xpose.msra.mxu0 0
    %2168 = vmatprep.subr.bf16.mxu0 0
    %2169 = vmatpush1.bf16.xpose.msra.mxu0 0
    %2170 = vmatprep.subr.bf16.mxu0 0
    %2171 = vmatpush1.bf16.xpose.msra.mxu0 0
    %2172 = vmatprep.subr.bf16.mxu0 0
    %2173 = vmatpush1.bf16.xpose.msra.mxu0 0
    %2174 = vmatprep.mubr.bf16.mxu0 0
    %2175 = vmatmul.mubr.bf16.gmra.mrb[0].mxu0 %v1142
    %v2176 = vpop.f32.mrb[0].mxu0
    %v2177 = vadd.f32 0.0, %v2176
    %v2178 = vpop.f32.mrb[0].mxu0
    %v2179 = vpop.f32.mrb[0].mxu0
    %v2180 = vpop.f32.mrb[0].mxu0
    %2181 = vdwg.mxu0
    %2182 = vmatprep.subr.bf16.mxu0 0
    %2183 = vmatpush1.bf16.xpose.msra.mxu0 %v1175
    %2184 = vmatprep.subr.bf16.mxu0 0
    %2185 = vmatpush1.bf16.xpose.msra.mxu0 0
    %2186 = vmatprep.subr.bf16.mxu0 0
    %2187 = vmatpush1.bf16.xpose.msra.mxu0 0
    %2188 = vmatprep.subr.bf16.mxu0 0
    %2189 = vmatpush1.bf16.xpose.msra.mxu0 0
    %2190 = vmatprep.subr.bf16.mxu0 0
    %2191 = vmatpush1.bf16.xpose.msra.mxu0 0
    %2192 = vmatprep.subr.bf16.mxu0 0
    %2193 = vmatpush1.bf16.xpose.msra.mxu0 0
    %2194 = vmatprep.subr.bf16.mxu0 0
    %2195 = vmatpush1.bf16.xpose.msra.mxu0 0
    %2196 = vmatprep.subr.bf16.mxu0 0
    %2197 = vmatpush1.bf16.xpose.msra.mxu0 0
    %2198 = vmatprep.subr.bf16.mxu0 0
    %2199 = vmatpush1.bf16.xpose.msra.mxu0 0
    %2200 = vmatprep.subr.bf16.mxu0 0
    %2201 = vmatpush1.bf16.xpose.msra.mxu0 0
    %2202 = vmatprep.subr.bf16.mxu0 0
    %2203 = vmatpush1.bf16.xpose.msra.mxu0 0
    %2204 = vmatprep.subr.bf16.mxu0 0
    %2205 = vmatpush1.bf16.xpose.msra.mxu0 0
    %2206 = vmatprep.subr.bf16.mxu0 0
    %2207 = vmatpush1.bf16.xpose.msra.mxu0 0
    %2208 = vmatprep.subr.bf16.mxu0 0
    %2209 = vmatpush1.bf16.xpose.msra.mxu0 0
    %2210 = vmatprep.subr.bf16.mxu0 0
    %2211 = vmatpush1.bf16.xpose.msra.mxu0 0
    %2212 = vmatprep.subr.bf16.mxu0 0
    %2213 = vmatpush1.bf16.xpose.msra.mxu0 0
    %2214 = vmatprep.mubr.bf16.mxu0 0
    %2215 = vmatmul.mubr.bf16.gmra.mrb[0].mxu0 %v1143
    %v2216 = vpop.f32.mrb[0].mxu0
    %v2217 = vadd.f32 0.0, %v2216
    %v2218 = vpop.f32.mrb[0].mxu0
    %v2219 = vpop.f32.mrb[0].mxu0
    %v2220 = vpop.f32.mrb[0].mxu0
    %2221 = vdwg.mxu0
    %2222 = vmatprep.subr.bf16.mxu0 0
    %2223 = vmatpush1.bf16.xpose.msra.mxu0 %v1176
    %2224 = vmatprep.subr.bf16.mxu0 0
    %2225 = vmatpush1.bf16.xpose.msra.mxu0 0
    %2226 = vmatprep.subr.bf16.mxu0 0
    %2227 = vmatpush1.bf16.xpose.msra.mxu0 0
    %2228 = vmatprep.subr.bf16.mxu0 0
    %2229 = vmatpush1.bf16.xpose.msra.mxu0 0
    %2230 = vmatprep.subr.bf16.mxu0 0
    %2231 = vmatpush1.bf16.xpose.msra.mxu0 0
    %2232 = vmatprep.subr.bf16.mxu0 0
    %2233 = vmatpush1.bf16.xpose.msra.mxu0 0
    %2234 = vmatprep.subr.bf16.mxu0 0
    %2235 = vmatpush1.bf16.xpose.msra.mxu0 0
    %2236 = vmatprep.subr.bf16.mxu0 0
    %2237 = vmatpush1.bf16.xpose.msra.mxu0 0
    %2238 = vmatprep.subr.bf16.mxu0 0
    %2239 = vmatpush1.bf16.xpose.msra.mxu0 0
    %2240 = vmatprep.subr.bf16.mxu0 0
    %2241 = vmatpush1.bf16.xpose.msra.mxu0 0
    %2242 = vmatprep.subr.bf16.mxu0 0
    %2243 = vmatpush1.bf16.xpose.msra.mxu0 0
    %2244 = vmatprep.subr.bf16.mxu0 0
    %2245 = vmatpush1.bf16.xpose.msra.mxu0 0
    %2246 = vmatprep.subr.bf16.mxu0 0
    %2247 = vmatpush1.bf16.xpose.msra.mxu0 0
    %2248 = vmatprep.subr.bf16.mxu0 0
    %2249 = vmatpush1.bf16.xpose.msra.mxu0 0
    %2250 = vmatprep.subr.bf16.mxu0 0
    %2251 = vmatpush1.bf16.xpose.msra.mxu0 0
    %2252 = vmatprep.subr.bf16.mxu0 0
    %2253 = vmatpush1.bf16.xpose.msra.mxu0 0
    %2254 = vmatprep.mubr.bf16.mxu0 0
    %2255 = vmatmul.mubr.bf16.gmra.mrb[0].mxu0 %v1144
    %v2256 = vpop.f32.mrb[0].mxu0
    %v2257 = vadd.f32 0.0, %v2256
    %v2258 = vpop.f32.mrb[0].mxu0
    %v2259 = vpop.f32.mrb[0].mxu0
    %v2260 = vpop.f32.mrb[0].mxu0
    %2261 = vdwg.mxu0
    %2262 = vmatprep.subr.bf16.mxu0 0
    %2263 = vmatpush1.bf16.xpose.msra.mxu0 %v1177
    %2264 = vmatprep.subr.bf16.mxu0 0
    %2265 = vmatpush1.bf16.xpose.msra.mxu0 0
    %2266 = vmatprep.subr.bf16.mxu0 0
    %2267 = vmatpush1.bf16.xpose.msra.mxu0 0
    %2268 = vmatprep.subr.bf16.mxu0 0
    %2269 = vmatpush1.bf16.xpose.msra.mxu0 0
    %2270 = vmatprep.subr.bf16.mxu0 0
    %2271 = vmatpush1.bf16.xpose.msra.mxu0 0
    %2272 = vmatprep.subr.bf16.mxu0 0
    %2273 = vmatpush1.bf16.xpose.msra.mxu0 0
    %2274 = vmatprep.subr.bf16.mxu0 0
    %2275 = vmatpush1.bf16.xpose.msra.mxu0 0
    %2276 = vmatprep.subr.bf16.mxu0 0
    %2277 = vmatpush1.bf16.xpose.msra.mxu0 0
    %2278 = vmatprep.subr.bf16.mxu0 0
    %2279 = vmatpush1.bf16.xpose.msra.mxu0 0
    %2280 = vmatprep.subr.bf16.mxu0 0
    %2281 = vmatpush1.bf16.xpose.msra.mxu0 0
    %2282 = vmatprep.subr.bf16.mxu0 0
    %2283 = vmatpush1.bf16.xpose.msra.mxu0 0
    %2284 = vmatprep.subr.bf16.mxu0 0
    %2285 = vmatpush1.bf16.xpose.msra.mxu0 0
    %2286 = vmatprep.subr.bf16.mxu0 0
    %2287 = vmatpush1.bf16.xpose.msra.mxu0 0
    %2288 = vmatprep.subr.bf16.mxu0 0
    %2289 = vmatpush1.bf16.xpose.msra.mxu0 0
    %2290 = vmatprep.subr.bf16.mxu0 0
    %2291 = vmatpush1.bf16.xpose.msra.mxu0 0
    %2292 = vmatprep.subr.bf16.mxu0 0
    %2293 = vmatpush1.bf16.xpose.msra.mxu0 0
    %2294 = vmatprep.mubr.bf16.mxu0 0
    %2295 = vmatmul.mubr.bf16.gmra.mrb[0].mxu0 %v1145
    %v2296 = vpop.f32.mrb[0].mxu0
    %v2297 = vadd.f32 0.0, %v2296
    %v2298 = vpop.f32.mrb[0].mxu0
    %v2299 = vpop.f32.mrb[0].mxu0
    %v2300 = vpop.f32.mrb[0].mxu0
    %2301 = vdwg.mxu0
    %2302 = vmatprep.subr.bf16.mxu0 0
    %2303 = vmatpush1.bf16.xpose.msra.mxu0 %v1178
    %2304 = vmatprep.subr.bf16.mxu0 0
    %2305 = vmatpush1.bf16.xpose.msra.mxu0 0
    %2306 = vmatprep.subr.bf16.mxu0 0
    %2307 = vmatpush1.bf16.xpose.msra.mxu0 0
    %2308 = vmatprep.subr.bf16.mxu0 0
    %2309 = vmatpush1.bf16.xpose.msra.mxu0 0
    %2310 = vmatprep.subr.bf16.mxu0 0
    %2311 = vmatpush1.bf16.xpose.msra.mxu0 0
    %2312 = vmatprep.subr.bf16.mxu0 0
    %2313 = vmatpush1.bf16.xpose.msra.mxu0 0
    %2314 = vmatprep.subr.bf16.mxu0 0
    %2315 = vmatpush1.bf16.xpose.msra.mxu0 0
    %2316 = vmatprep.subr.bf16.mxu0 0
    %2317 = vmatpush1.bf16.xpose.msra.mxu0 0
    %2318 = vmatprep.subr.bf16.mxu0 0
    %2319 = vmatpush1.bf16.xpose.msra.mxu0 0
    %2320 = vmatprep.subr.bf16.mxu0 0
    %2321 = vmatpush1.bf16.xpose.msra.mxu0 0
    %2322 = vmatprep.subr.bf16.mxu0 0
    %2323 = vmatpush1.bf16.xpose.msra.mxu0 0
    %2324 = vmatprep.subr.bf16.mxu0 0
    %2325 = vmatpush1.bf16.xpose.msra.mxu0 0
    %2326 = vmatprep.subr.bf16.mxu0 0
    %2327 = vmatpush1.bf16.xpose.msra.mxu0 0
    %2328 = vmatprep.subr.bf16.mxu0 0
    %2329 = vmatpush1.bf16.xpose.msra.mxu0 0
    %2330 = vmatprep.subr.bf16.mxu0 0
    %2331 = vmatpush1.bf16.xpose.msra.mxu0 0
    %2332 = vmatprep.subr.bf16.mxu0 0
    %2333 = vmatpush1.bf16.xpose.msra.mxu0 0
    %2334 = vmatprep.mubr.bf16.mxu0 0
    %2335 = vmatmul.mubr.bf16.gmra.mrb[0].mxu0 %v1146
    %v2336 = vpop.f32.mrb[0].mxu0
    %v2337 = vadd.f32 0.0, %v2336
    %v2338 = vpop.f32.mrb[0].mxu0
    %v2339 = vpop.f32.mrb[0].mxu0
    %v2340 = vpop.f32.mrb[0].mxu0
    %2341 = vdwg.mxu0
    %2342 = vmatprep.subr.bf16.mxu0 0
    %2343 = vmatpush1.bf16.xpose.msra.mxu0 %v1179
    %2344 = vmatprep.subr.bf16.mxu0 0
    %2345 = vmatpush1.bf16.xpose.msra.mxu0 0
    %2346 = vmatprep.subr.bf16.mxu0 0
    %2347 = vmatpush1.bf16.xpose.msra.mxu0 0
    %2348 = vmatprep.subr.bf16.mxu0 0
    %2349 = vmatpush1.bf16.xpose.msra.mxu0 0
    %2350 = vmatprep.subr.bf16.mxu0 0
    %2351 = vmatpush1.bf16.xpose.msra.mxu0 0
    %2352 = vmatprep.subr.bf16.mxu0 0
    %2353 = vmatpush1.bf16.xpose.msra.mxu0 0
    %2354 = vmatprep.subr.bf16.mxu0 0
    %2355 = vmatpush1.bf16.xpose.msra.mxu0 0
    %2356 = vmatprep.subr.bf16.mxu0 0
    %2357 = vmatpush1.bf16.xpose.msra.mxu0 0
    %2358 = vmatprep.subr.bf16.mxu0 0
    %2359 = vmatpush1.bf16.xpose.msra.mxu0 0
    %2360 = vmatprep.subr.bf16.mxu0 0
    %2361 = vmatpush1.bf16.xpose.msra.mxu0 0
    %2362 = vmatprep.subr.bf16.mxu0 0
    %2363 = vmatpush1.bf16.xpose.msra.mxu0 0
    %2364 = vmatprep.subr.bf16.mxu0 0
    %2365 = vmatpush1.bf16.xpose.msra.mxu0 0
    %2366 = vmatprep.subr.bf16.mxu0 0
    %2367 = vmatpush1.bf16.xpose.msra.mxu0 0
    %2368 = vmatprep.subr.bf16.mxu0 0
    %2369 = vmatpush1.bf16.xpose.msra.mxu0 0
    %2370 = vmatprep.subr.bf16.mxu0 0
    %2371 = vmatpush1.bf16.xpose.msra.mxu0 0
    %2372 = vmatprep.subr.bf16.mxu0 0
    %2373 = vmatpush1.bf16.xpose.msra.mxu0 0
    %2374 = vmatprep.mubr.bf16.mxu0 0
    %2375 = vmatmul.mubr.bf16.gmra.mrb[0].mxu0 %v1147
    %v2376 = vpop.f32.mrb[0].mxu0
    %v2377 = vadd.f32 0.0, %v2376
    %v2378 = vpop.f32.mrb[0].mxu0
    %v2379 = vpop.f32.mrb[0].mxu0
    %v2380 = vpop.f32.mrb[0].mxu0
    %2381 = vdwg.mxu0
    %2382 = vmatprep.subr.bf16.mxu0 0
    %2383 = vmatpush1.bf16.xpose.msra.mxu0 %v1180
    %2384 = vmatprep.subr.bf16.mxu0 0
    %2385 = vmatpush1.bf16.xpose.msra.mxu0 0
    %2386 = vmatprep.subr.bf16.mxu0 0
    %2387 = vmatpush1.bf16.xpose.msra.mxu0 0
    %2388 = vmatprep.subr.bf16.mxu0 0
    %2389 = vmatpush1.bf16.xpose.msra.mxu0 0
    %2390 = vmatprep.subr.bf16.mxu0 0
    %2391 = vmatpush1.bf16.xpose.msra.mxu0 0
    %2392 = vmatprep.subr.bf16.mxu0 0
    %2393 = vmatpush1.bf16.xpose.msra.mxu0 0
    %2394 = vmatprep.subr.bf16.mxu0 0
    %2395 = vmatpush1.bf16.xpose.msra.mxu0 0
    %2396 = vmatprep.subr.bf16.mxu0 0
    %2397 = vmatpush1.bf16.xpose.msra.mxu0 0
    %2398 = vmatprep.subr.bf16.mxu0 0
    %2399 = vmatpush1.bf16.xpose.msra.mxu0 0
    %2400 = vmatprep.subr.bf16.mxu0 0
    %2401 = vmatpush1.bf16.xpose.msra.mxu0 0
    %2402 = vmatprep.subr.bf16.mxu0 0
    %2403 = vmatpush1.bf16.xpose.msra.mxu0 0
    %2404 = vmatprep.subr.bf16.mxu0 0
    %2405 = vmatpush1.bf16.xpose.msra.mxu0 0
    %2406 = vmatprep.subr.bf16.mxu0 0
    %2407 = vmatpush1.bf16.xpose.msra.mxu0 0
    %2408 = vmatprep.subr.bf16.mxu0 0
    %2409 = vmatpush1.bf16.xpose.msra.mxu0 0
    %2410 = vmatprep.subr.bf16.mxu0 0
    %2411 = vmatpush1.bf16.xpose.msra.mxu0 0
    %2412 = vmatprep.subr.bf16.mxu0 0
    %2413 = vmatpush1.bf16.xpose.msra.mxu0 0
    %2414 = vmatprep.mubr.bf16.mxu0 0
    %2415 = vmatmul.mubr.bf16.gmra.mrb[0].mxu0 %v1148
    %v2416 = vpop.f32.mrb[0].mxu0
    %v2417 = vadd.f32 0.0, %v2416
    %v2418 = vpop.f32.mrb[0].mxu0
    %v2419 = vpop.f32.mrb[0].mxu0
    %v2420 = vpop.f32.mrb[0].mxu0
    %2421 = vdwg.mxu0
    %2422 = vmatprep.subr.bf16.mxu0 0
    %2423 = vmatpush1.bf16.xpose.msra.mxu0 %v1181
    %2424 = vmatprep.subr.bf16.mxu0 0
    %2425 = vmatpush1.bf16.xpose.msra.mxu0 0
    %2426 = vmatprep.subr.bf16.mxu0 0
    %2427 = vmatpush1.bf16.xpose.msra.mxu0 0
    %2428 = vmatprep.subr.bf16.mxu0 0
    %2429 = vmatpush1.bf16.xpose.msra.mxu0 0
    %2430 = vmatprep.subr.bf16.mxu0 0
    %2431 = vmatpush1.bf16.xpose.msra.mxu0 0
    %2432 = vmatprep.subr.bf16.mxu0 0
    %2433 = vmatpush1.bf16.xpose.msra.mxu0 0
    %2434 = vmatprep.subr.bf16.mxu0 0
    %2435 = vmatpush1.bf16.xpose.msra.mxu0 0
    %2436 = vmatprep.subr.bf16.mxu0 0
    %2437 = vmatpush1.bf16.xpose.msra.mxu0 0
    %2438 = vmatprep.subr.bf16.mxu0 0
    %2439 = vmatpush1.bf16.xpose.msra.mxu0 0
    %2440 = vmatprep.subr.bf16.mxu0 0
    %2441 = vmatpush1.bf16.xpose.msra.mxu0 0
    %2442 = vmatprep.subr.bf16.mxu0 0
    %2443 = vmatpush1.bf16.xpose.msra.mxu0 0
    %2444 = vmatprep.subr.bf16.mxu0 0
    %2445 = vmatpush1.bf16.xpose.msra.mxu0 0
    %2446 = vmatprep.subr.bf16.mxu0 0
    %2447 = vmatpush1.bf16.xpose.msra.mxu0 0
    %2448 = vmatprep.subr.bf16.mxu0 0
    %2449 = vmatpush1.bf16.xpose.msra.mxu0 0
    %2450 = vmatprep.subr.bf16.mxu0 0
    %2451 = vmatpush1.bf16.xpose.msra.mxu0 0
    %2452 = vmatprep.subr.bf16.mxu0 0
    %2453 = vmatpush1.bf16.xpose.msra.mxu0 0
    %2454 = vmatprep.mubr.bf16.mxu0 0
    %2455 = vmatmul.mubr.bf16.gmra.mrb[0].mxu0 %v1149
    %v2456 = vpop.f32.mrb[0].mxu0
    %v2457 = vadd.f32 0.0, %v2456
    %v2458 = vpop.f32.mrb[0].mxu0
    %v2459 = vpop.f32.mrb[0].mxu0
    %v2460 = vpop.f32.mrb[0].mxu0
    %2461 = vdwg.mxu0
    %v2462 = vmul.f32 %v1217, 0.35355338
    %v2463 = vmul.f32 %v1257, 0.35355338
    %v2464 = vmul.f32 %v1297, 0.35355338
    %v2465 = vmul.f32 %v1337, 0.35355338
    %v2466 = vmul.f32 %v1377, 0.35355338
    %v2467 = vmul.f32 %v1417, 0.35355338
    %v2468 = vmul.f32 %v1457, 0.35355338
    %v2469 = vmul.f32 %v1497, 0.35355338
    %v2470 = vmul.f32 %v1537, 0.35355338
    %v2471 = vmul.f32 %v1577, 0.35355338
    %v2472 = vmul.f32 %v1617, 0.35355338
    %v2473 = vmul.f32 %v1657, 0.35355338
    %v2474 = vmul.f32 %v1697, 0.35355338
    %v2475 = vmul.f32 %v1737, 0.35355338
    %v2476 = vmul.f32 %v1777, 0.35355338
    %v2477 = vmul.f32 %v1817, 0.35355338
    %v2478 = vmul.f32 %v1857, 0.35355338
    %v2479 = vmul.f32 %v1897, 0.35355338
    %v2480 = vmul.f32 %v1937, 0.35355338
    %v2481 = vmul.f32 %v1977, 0.35355338
    %v2482 = vmul.f32 %v2017, 0.35355338
    %v2483 = vmul.f32 %v2057, 0.35355338
    %v2484 = vmul.f32 %v2097, 0.35355338
    %v2485 = vmul.f32 %v2137, 0.35355338
    %v2486 = vmul.f32 %v2177, 0.35355338
    %v2487 = vmul.f32 %v2217, 0.35355338
    %v2488 = vmul.f32 %v2257, 0.35355338
    %v2489 = vmul.f32 %v2297, 0.35355338
    %v2490 = vmul.f32 %v2337, 0.35355338
    %v2491 = vmul.f32 %v2377, 0.35355338
    %v2492 = vmul.f32 %v2417, 0.35355338
    %v2493 = vmul.f32 %v2457, 0.35355338
    %v2494 = vlaneseq
    %v2495 = vshrl.u32 %v2494, 7
    %v2496 = vsub.s32 0, %v2495
    %v2497 = vrot.slane %v164, %v2496
    %v2498 = vlaneseq
    %v2499 = vshrl.u32 %v2498, 7
    %v2500 = vsub.s32 0, %v2499
    %v2501 = vrot.slane %v178, %v2500
    %v2502 = vlaneseq
    %v2503 = vshrl.u32 %v2502, 7
    %v2504 = vsub.s32 0, %v2503
    %v2505 = vrot.slane %v186, %v2504
    %v2506 = vlaneseq
    %v2507 = vshrl.u32 %v2506, 7
    %v2508 = vsub.s32 0, %v2507
    %v2509 = vrot.slane %v188, %v2508
    %v2510 = vlaneseq
    %v2511 = vshrl.u32 %v2510, 7
    %v2512 = vsub.s32 0, %v2511
    %v2513 = vrot.slane %v171, %v2512
    %v2514 = vlaneseq
    %v2515 = vshrl.u32 %v2514, 7
    %v2516 = vsub.s32 0, %v2515
    %v2517 = vrot.slane %v185, %v2516
    %v2518 = vlaneseq
    %v2519 = vshrl.u32 %v2518, 7
    %v2520 = vsub.s32 0, %v2519
    %v2521 = vrot.slane %v187, %v2520
    %v2522 = vlaneseq
    %v2523 = vshrl.u32 %v2522, 7
    %v2524 = vsub.s32 0, %v2523
    %v2525 = vrot.slane %v189, %v2524
    %v2526 = vlaneseq
    %v2527 = vshrl.u32 %v2526, 7
    %v2528 = vsub.s32 0, %v2527
    %v2529 = vrot.slane %v213, %v2528
    %v2530 = vlaneseq
    %v2531 = vshrl.u32 %v2530, 7
    %v2532 = vsub.s32 0, %v2531
    %v2533 = vrot.slane %v227, %v2532
    %v2534 = vlaneseq
    %v2535 = vshrl.u32 %v2534, 7
    %v2536 = vsub.s32 0, %v2535
    %v2537 = vrot.slane %v235, %v2536
    %v2538 = vlaneseq
    %v2539 = vshrl.u32 %v2538, 7
    %v2540 = vsub.s32 0, %v2539
    %v2541 = vrot.slane %v237, %v2540
    %v2542 = vlaneseq
    %v2543 = vshrl.u32 %v2542, 7
    %v2544 = vsub.s32 0, %v2543
    %v2545 = vrot.slane %v220, %v2544
    %v2546 = vlaneseq
    %v2547 = vshrl.u32 %v2546, 7
    %v2548 = vsub.s32 0, %v2547
    %v2549 = vrot.slane %v234, %v2548
    %v2550 = vlaneseq
    %v2551 = vshrl.u32 %v2550, 7
    %v2552 = vsub.s32 0, %v2551
    %v2553 = vrot.slane %v236, %v2552
    %v2554 = vlaneseq
    %v2555 = vshrl.u32 %v2554, 7
    %v2556 = vsub.s32 0, %v2555
    %v2557 = vrot.slane %v238, %v2556
    %v2574 = vadd.f32 %v2462, %v2497
    %v2575 = vadd.f32 %v2463, %v2501
    %v2576 = vadd.f32 %v2464, %v2505
    %v2577 = vadd.f32 %v2465, %v2509
    %v2578 = vadd.f32 %v2466, %v2513
    %v2579 = vadd.f32 %v2467, %v2517
    %v2580 = vadd.f32 %v2468, %v2521
    %v2581 = vadd.f32 %v2469, %v2525
    %v2582 = vadd.f32 %v2470, %v2529
    %v2583 = vadd.f32 %v2471, %v2533
    %v2584 = vadd.f32 %v2472, %v2537
    %v2585 = vadd.f32 %v2473, %v2541
    %v2586 = vadd.f32 %v2474, %v2545
    %v2587 = vadd.f32 %v2475, %v2549
    %v2588 = vadd.f32 %v2476, %v2553
    %v2589 = vadd.f32 %v2477, %v2557
    %v2590 = vadd.f32 %v2478, %v2497
    %v2591 = vadd.f32 %v2479, %v2501
    %v2592 = vadd.f32 %v2480, %v2505
    %v2593 = vadd.f32 %v2481, %v2509
    %v2594 = vadd.f32 %v2482, %v2513
    %v2595 = vadd.f32 %v2483, %v2517
    %v2596 = vadd.f32 %v2484, %v2521
    %v2597 = vadd.f32 %v2485, %v2525
    %v2598 = vadd.f32 %v2486, %v2529
    %v2599 = vadd.f32 %v2487, %v2533
    %v2600 = vadd.f32 %v2488, %v2537
    %v2601 = vadd.f32 %v2489, %v2541
    %v2602 = vadd.f32 %v2490, %v2545
    %v2603 = vadd.f32 %v2491, %v2549
    %v2604 = vadd.f32 %v2492, %v2553
    %v2605 = vadd.f32 %v2493, %v2557
    %vm2606 = vcmask 27648
    %v2607 = vsel %vm2606, %v2574, -inf
    %2608 = vmax.xlane.f32.xlu0 %v2607
    %v2609 = vpop.xlane.xlu0 %2608
    %v2610 = vsel %vm2606, %v2575, -inf
    %2611 = vmax.xlane.f32.xlu0 %v2610
    %v2612 = vpop.xlane.xlu0 %2611
    %v2613 = vsel %vm2606, %v2576, -inf
    %2614 = vmax.xlane.f32.xlu0 %v2613
    %v2615 = vpop.xlane.xlu0 %2614
    %v2616 = vsel %vm2606, %v2577, -inf
    %2617 = vmax.xlane.f32.xlu0 %v2616
    %v2618 = vpop.xlane.xlu0 %2617
    %v2619 = vsel %vm2606, %v2578, -inf
    %2620 = vmax.xlane.f32.xlu0 %v2619
    %v2621 = vpop.xlane.xlu0 %2620
    %v2622 = vsel %vm2606, %v2579, -inf
    %2623 = vmax.xlane.f32.xlu0 %v2622
    %v2624 = vpop.xlane.xlu0 %2623
    %v2625 = vsel %vm2606, %v2580, -inf
    %2626 = vmax.xlane.f32.xlu0 %v2625
    %v2627 = vpop.xlane.xlu0 %2626
    %v2628 = vsel %vm2606, %v2581, -inf
    %2629 = vmax.xlane.f32.xlu0 %v2628
    %v2630 = vpop.xlane.xlu0 %2629
    %v2631 = vsel %vm2606, %v2582, -inf
    %2632 = vmax.xlane.f32.xlu0 %v2631
    %v2633 = vpop.xlane.xlu0 %2632
    %v2634 = vsel %vm2606, %v2583, -inf
    %2635 = vmax.xlane.f32.xlu0 %v2634
    %v2636 = vpop.xlane.xlu0 %2635
    %v2637 = vsel %vm2606, %v2584, -inf
    %2638 = vmax.xlane.f32.xlu0 %v2637
    %v2639 = vpop.xlane.xlu0 %2638
    %v2640 = vsel %vm2606, %v2585, -inf
    %2641 = vmax.xlane.f32.xlu0 %v2640
    %v2642 = vpop.xlane.xlu0 %2641
    %v2643 = vsel %vm2606, %v2586, -inf
    %2644 = vmax.xlane.f32.xlu0 %v2643
    %v2645 = vpop.xlane.xlu0 %2644
    %v2646 = vsel %vm2606, %v2587, -inf
    %2647 = vmax.xlane.f32.xlu0 %v2646
    %v2648 = vpop.xlane.xlu0 %2647
    %v2649 = vsel %vm2606, %v2588, -inf
    %2650 = vmax.xlane.f32.xlu0 %v2649
    %v2651 = vpop.xlane.xlu0 %2650
    %v2652 = vsel %vm2606, %v2589, -inf
    %2653 = vmax.xlane.f32.xlu0 %v2652
    %v2654 = vpop.xlane.xlu0 %2653
    %v2655 = vsel %vm2606, %v2590, -inf
    %2656 = vmax.xlane.f32.xlu0 %v2655
    %v2657 = vpop.xlane.xlu0 %2656
    %v2658 = vsel %vm2606, %v2591, -inf
    %2659 = vmax.xlane.f32.xlu0 %v2658
    %v2660 = vpop.xlane.xlu0 %2659
    %v2661 = vsel %vm2606, %v2592, -inf
    %2662 = vmax.xlane.f32.xlu0 %v2661
    %v2663 = vpop.xlane.xlu0 %2662
    %v2664 = vsel %vm2606, %v2593, -inf
    %2665 = vmax.xlane.f32.xlu0 %v2664
    %v2666 = vpop.xlane.xlu0 %2665
    %v2667 = vsel %vm2606, %v2594, -inf
    %2668 = vmax.xlane.f32.xlu0 %v2667
    %v2669 = vpop.xlane.xlu0 %2668
    %v2670 = vsel %vm2606, %v2595, -inf
    %2671 = vmax.xlane.f32.xlu0 %v2670
    %v2672 = vpop.xlane.xlu0 %2671
    %v2673 = vsel %vm2606, %v2596, -inf
    %2674 = vmax.xlane.f32.xlu0 %v2673
    %v2675 = vpop.xlane.xlu0 %2674
    %v2676 = vsel %vm2606, %v2597, -inf
    %2677 = vmax.xlane.f32.xlu0 %v2676
    %v2678 = vpop.xlane.xlu0 %2677
    %v2679 = vsel %vm2606, %v2598, -inf
    %2680 = vmax.xlane.f32.xlu0 %v2679
    %v2681 = vpop.xlane.xlu0 %2680
    %v2682 = vsel %vm2606, %v2599, -inf
    %2683 = vmax.xlane.f32.xlu0 %v2682
    %v2684 = vpop.xlane.xlu0 %2683
    %v2685 = vsel %vm2606, %v2600, -inf
    %2686 = vmax.xlane.f32.xlu0 %v2685
    %v2687 = vpop.xlane.xlu0 %2686
    %v2688 = vsel %vm2606, %v2601, -inf
    %2689 = vmax.xlane.f32.xlu0 %v2688
    %v2690 = vpop.xlane.xlu0 %2689
    %v2691 = vsel %vm2606, %v2602, -inf
    %2692 = vmax.xlane.f32.xlu0 %v2691
    %v2693 = vpop.xlane.xlu0 %2692
    %v2694 = vsel %vm2606, %v2603, -inf
    %2695 = vmax.xlane.f32.xlu0 %v2694
    %v2696 = vpop.xlane.xlu0 %2695
    %v2697 = vsel %vm2606, %v2604, -inf
    %2698 = vmax.xlane.f32.xlu0 %v2697
    %v2699 = vpop.xlane.xlu0 %2698
    %v2700 = vsel %vm2606, %v2605, -inf
    %2701 = vmax.xlane.f32.xlu0 %v2700
    %v2702 = vpop.xlane.xlu0 %2701
    %v2703 = vsub.f32 %v2574, %v2609
    %v2704 = vsub.f32 %v2575, %v2612
    %v2705 = vsub.f32 %v2576, %v2615
    %v2706 = vsub.f32 %v2577, %v2618
    %v2707 = vsub.f32 %v2578, %v2621
    %v2708 = vsub.f32 %v2579, %v2624
    %v2709 = vsub.f32 %v2580, %v2627
    %v2710 = vsub.f32 %v2581, %v2630
    %v2711 = vsub.f32 %v2582, %v2633
    %v2712 = vsub.f32 %v2583, %v2636
    %v2713 = vsub.f32 %v2584, %v2639
    %v2714 = vsub.f32 %v2585, %v2642
    %v2715 = vsub.f32 %v2586, %v2645
    %v2716 = vsub.f32 %v2587, %v2648
    %v2717 = vsub.f32 %v2588, %v2651
    %v2718 = vsub.f32 %v2589, %v2654
    %v2719 = vsub.f32 %v2590, %v2657
    %v2720 = vsub.f32 %v2591, %v2660
    %v2721 = vsub.f32 %v2592, %v2663
    %v2722 = vsub.f32 %v2593, %v2666
    %v2723 = vsub.f32 %v2594, %v2669
    %v2724 = vsub.f32 %v2595, %v2672
    %v2725 = vsub.f32 %v2596, %v2675
    %v2726 = vsub.f32 %v2597, %v2678
    %v2727 = vsub.f32 %v2598, %v2681
    %v2728 = vsub.f32 %v2599, %v2684
    %v2729 = vsub.f32 %v2600, %v2687
    %v2730 = vsub.f32 %v2601, %v2690
    %v2731 = vsub.f32 %v2602, %v2693
    %v2732 = vsub.f32 %v2603, %v2696
    %v2733 = vsub.f32 %v2604, %v2699
    %v2734 = vsub.f32 %v2605, %v2702
    %v2735 = vmul.f32 %v2703, 1.442695
    %v2736 = vpow.pop %v2735
    %v2737 = vmul.f32 %v2704, 1.442695
    %v2738 = vpow.pop %v2737
    %v2739 = vmul.f32 %v2705, 1.442695
    %v2740 = vpow.pop %v2739
    %v2741 = vmul.f32 %v2706, 1.442695
    %v2742 = vpow.pop %v2741
    %v2743 = vmul.f32 %v2707, 1.442695
    %v2744 = vpow.pop %v2743
    %v2745 = vmul.f32 %v2708, 1.442695
    %v2746 = vpow.pop %v2745
    %v2747 = vmul.f32 %v2709, 1.442695
    %v2748 = vpow.pop %v2747
    %v2749 = vmul.f32 %v2710, 1.442695
    %v2750 = vpow.pop %v2749
    %v2751 = vmul.f32 %v2711, 1.442695
    %v2752 = vpow.pop %v2751
    %v2753 = vmul.f32 %v2712, 1.442695
    %v2754 = vpow.pop %v2753
    %v2755 = vmul.f32 %v2713, 1.442695
    %v2756 = vpow.pop %v2755
    %v2757 = vmul.f32 %v2714, 1.442695
    %v2758 = vpow.pop %v2757
    %v2759 = vmul.f32 %v2715, 1.442695
    %v2760 = vpow.pop %v2759
    %v2761 = vmul.f32 %v2716, 1.442695
    %v2762 = vpow.pop %v2761
    %v2763 = vmul.f32 %v2717, 1.442695
    %v2764 = vpow.pop %v2763
    %v2765 = vmul.f32 %v2718, 1.442695
    %v2766 = vpow.pop %v2765
    %v2767 = vmul.f32 %v2719, 1.442695
    %v2768 = vpow.pop %v2767
    %v2769 = vmul.f32 %v2720, 1.442695
    %v2770 = vpow.pop %v2769
    %v2771 = vmul.f32 %v2721, 1.442695
    %v2772 = vpow.pop %v2771
    %v2773 = vmul.f32 %v2722, 1.442695
    %v2774 = vpow.pop %v2773
    %v2775 = vmul.f32 %v2723, 1.442695
    %v2776 = vpow.pop %v2775
    %v2777 = vmul.f32 %v2724, 1.442695
    %v2778 = vpow.pop %v2777
    %v2779 = vmul.f32 %v2725, 1.442695
    %v2780 = vpow.pop %v2779
    %v2781 = vmul.f32 %v2726, 1.442695
    %v2782 = vpow.pop %v2781
    %v2783 = vmul.f32 %v2727, 1.442695
    %v2784 = vpow.pop %v2783
    %v2785 = vmul.f32 %v2728, 1.442695
    %v2786 = vpow.pop %v2785
    %v2787 = vmul.f32 %v2729, 1.442695
    %v2788 = vpow.pop %v2787
    %v2789 = vmul.f32 %v2730, 1.442695
    %v2790 = vpow.pop %v2789
    %v2791 = vmul.f32 %v2731, 1.442695
    %v2792 = vpow.pop %v2791
    %v2793 = vmul.f32 %v2732, 1.442695
    %v2794 = vpow.pop %v2793
    %v2795 = vmul.f32 %v2733, 1.442695
    %v2796 = vpow.pop %v2795
    %v2797 = vmul.f32 %v2734, 1.442695
    %v2798 = vpow.pop %v2797
    %v2799 = vsel %vm2606, %v2736, 0.0
    %2800 = vadd.xlane.f32.xlu0 %v2799
    %v2801 = vpop.xlane.xlu0 %2800
    %v2802 = vsel %vm2606, %v2738, 0.0
    %2803 = vadd.xlane.f32.xlu0 %v2802
    %v2804 = vpop.xlane.xlu0 %2803
    %v2805 = vsel %vm2606, %v2740, 0.0
    %2806 = vadd.xlane.f32.xlu0 %v2805
    %v2807 = vpop.xlane.xlu0 %2806
    %v2808 = vsel %vm2606, %v2742, 0.0
    %2809 = vadd.xlane.f32.xlu0 %v2808
    %v2810 = vpop.xlane.xlu0 %2809
    %v2811 = vsel %vm2606, %v2744, 0.0
    %2812 = vadd.xlane.f32.xlu0 %v2811
    %v2813 = vpop.xlane.xlu0 %2812
    %v2814 = vsel %vm2606, %v2746, 0.0
    %2815 = vadd.xlane.f32.xlu0 %v2814
    %v2816 = vpop.xlane.xlu0 %2815
    %v2817 = vsel %vm2606, %v2748, 0.0
    %2818 = vadd.xlane.f32.xlu0 %v2817
    %v2819 = vpop.xlane.xlu0 %2818
    %v2820 = vsel %vm2606, %v2750, 0.0
    %2821 = vadd.xlane.f32.xlu0 %v2820
    %v2822 = vpop.xlane.xlu0 %2821
    %v2823 = vsel %vm2606, %v2752, 0.0
    %2824 = vadd.xlane.f32.xlu0 %v2823
    %v2825 = vpop.xlane.xlu0 %2824
    %v2826 = vsel %vm2606, %v2754, 0.0
    %2827 = vadd.xlane.f32.xlu0 %v2826
    %v2828 = vpop.xlane.xlu0 %2827
    %v2829 = vsel %vm2606, %v2756, 0.0
    %2830 = vadd.xlane.f32.xlu0 %v2829
    %v2831 = vpop.xlane.xlu0 %2830
    %v2832 = vsel %vm2606, %v2758, 0.0
    %2833 = vadd.xlane.f32.xlu0 %v2832
    %v2834 = vpop.xlane.xlu0 %2833
    %v2835 = vsel %vm2606, %v2760, 0.0
    %2836 = vadd.xlane.f32.xlu0 %v2835
    %v2837 = vpop.xlane.xlu0 %2836
    %v2838 = vsel %vm2606, %v2762, 0.0
    %2839 = vadd.xlane.f32.xlu0 %v2838
    %v2840 = vpop.xlane.xlu0 %2839
    %v2841 = vsel %vm2606, %v2764, 0.0
    %2842 = vadd.xlane.f32.xlu0 %v2841
    %v2843 = vpop.xlane.xlu0 %2842
    %v2844 = vsel %vm2606, %v2766, 0.0
    %2845 = vadd.xlane.f32.xlu0 %v2844
    %v2846 = vpop.xlane.xlu0 %2845
    %v2847 = vsel %vm2606, %v2768, 0.0
    %2848 = vadd.xlane.f32.xlu0 %v2847
    %v2849 = vpop.xlane.xlu0 %2848
    %v2850 = vsel %vm2606, %v2770, 0.0
    %2851 = vadd.xlane.f32.xlu0 %v2850
    %v2852 = vpop.xlane.xlu0 %2851
    %v2853 = vsel %vm2606, %v2772, 0.0
    %2854 = vadd.xlane.f32.xlu0 %v2853
    %v2855 = vpop.xlane.xlu0 %2854
    %v2856 = vsel %vm2606, %v2774, 0.0
    %2857 = vadd.xlane.f32.xlu0 %v2856
    %v2858 = vpop.xlane.xlu0 %2857
    %v2859 = vsel %vm2606, %v2776, 0.0
    %2860 = vadd.xlane.f32.xlu0 %v2859
    %v2861 = vpop.xlane.xlu0 %2860
    %v2862 = vsel %vm2606, %v2778, 0.0
    %2863 = vadd.xlane.f32.xlu0 %v2862
    %v2864 = vpop.xlane.xlu0 %2863
    %v2865 = vsel %vm2606, %v2780, 0.0
    %2866 = vadd.xlane.f32.xlu0 %v2865
    %v2867 = vpop.xlane.xlu0 %2866
    %v2868 = vsel %vm2606, %v2782, 0.0
    %2869 = vadd.xlane.f32.xlu0 %v2868
    %v2870 = vpop.xlane.xlu0 %2869
    %v2871 = vsel %vm2606, %v2784, 0.0
    %2872 = vadd.xlane.f32.xlu0 %v2871
    %v2873 = vpop.xlane.xlu0 %2872
    %v2874 = vsel %vm2606, %v2786, 0.0
    %2875 = vadd.xlane.f32.xlu0 %v2874
    %v2876 = vpop.xlane.xlu0 %2875
    %v2877 = vsel %vm2606, %v2788, 0.0
    %2878 = vadd.xlane.f32.xlu0 %v2877
    %v2879 = vpop.xlane.xlu0 %2878
    %v2880 = vsel %vm2606, %v2790, 0.0
    %2881 = vadd.xlane.f32.xlu0 %v2880
    %v2882 = vpop.xlane.xlu0 %2881
    %v2883 = vsel %vm2606, %v2792, 0.0
    %2884 = vadd.xlane.f32.xlu0 %v2883
    %v2885 = vpop.xlane.xlu0 %2884
    %v2886 = vsel %vm2606, %v2794, 0.0
    %2887 = vadd.xlane.f32.xlu0 %v2886
    %v2888 = vpop.xlane.xlu0 %2887
    %v2889 = vsel %vm2606, %v2796, 0.0
    %2890 = vadd.xlane.f32.xlu0 %v2889
    %v2891 = vpop.xlane.xlu0 %2890
    %v2892 = vsel %vm2606, %v2798, 0.0
    %2893 = vadd.xlane.f32.xlu0 %v2892
    %v2894 = vpop.xlane.xlu0 %2893
    %v2895 = vrcp.pop %v2801
    %v2896 = vrcp.pop %v2804
    %v2897 = vrcp.pop %v2807
    %v2898 = vrcp.pop %v2810
    %v2899 = vrcp.pop %v2813
    %v2900 = vrcp.pop %v2816
    %v2901 = vrcp.pop %v2819
    %v2902 = vrcp.pop %v2822
    %v2903 = vrcp.pop %v2825
    %v2904 = vrcp.pop %v2828
    %v2905 = vrcp.pop %v2831
    %v2906 = vrcp.pop %v2834
    %v2907 = vrcp.pop %v2837
    %v2908 = vrcp.pop %v2840
    %v2909 = vrcp.pop %v2843
    %v2910 = vrcp.pop %v2846
    %v2911 = vrcp.pop %v2849
    %v2912 = vrcp.pop %v2852
    %v2913 = vrcp.pop %v2855
    %v2914 = vrcp.pop %v2858
    %v2915 = vrcp.pop %v2861
    %v2916 = vrcp.pop %v2864
    %v2917 = vrcp.pop %v2867
    %v2918 = vrcp.pop %v2870
    %v2919 = vrcp.pop %v2873
    %v2920 = vrcp.pop %v2876
    %v2921 = vrcp.pop %v2879
    %v2922 = vrcp.pop %v2882
    %v2923 = vrcp.pop %v2885
    %v2924 = vrcp.pop %v2888
    %v2925 = vrcp.pop %v2891
    %v2926 = vrcp.pop %v2894
    %v2927 = vmul.f32 %v2736, %v2895
    %v2928 = vmul.f32 %v2738, %v2896
    %v2929 = vmul.f32 %v2740, %v2897
    %v2930 = vmul.f32 %v2742, %v2898
    %v2931 = vmul.f32 %v2744, %v2899
    %v2932 = vmul.f32 %v2746, %v2900
    %v2933 = vmul.f32 %v2748, %v2901
    %v2934 = vmul.f32 %v2750, %v2902
    %v2935 = vmul.f32 %v2752, %v2903
    %v2936 = vmul.f32 %v2754, %v2904
    %v2937 = vmul.f32 %v2756, %v2905
    %v2938 = vmul.f32 %v2758, %v2906
    %v2939 = vmul.f32 %v2760, %v2907
    %v2940 = vmul.f32 %v2762, %v2908
    %v2941 = vmul.f32 %v2764, %v2909
    %v2942 = vmul.f32 %v2766, %v2910
    %v2943 = vmul.f32 %v2768, %v2911
    %v2944 = vmul.f32 %v2770, %v2912
    %v2945 = vmul.f32 %v2772, %v2913
    %v2946 = vmul.f32 %v2774, %v2914
    %v2947 = vmul.f32 %v2776, %v2915
    %v2948 = vmul.f32 %v2778, %v2916
    %v2949 = vmul.f32 %v2780, %v2917
    %v2950 = vmul.f32 %v2782, %v2918
    %v2951 = vmul.f32 %v2784, %v2919
    %v2952 = vmul.f32 %v2786, %v2920
    %v2953 = vmul.f32 %v2788, %v2921
    %v2954 = vmul.f32 %v2790, %v2922
    %v2955 = vmul.f32 %v2792, %v2923
    %v2956 = vmul.f32 %v2794, %v2924
    %v2957 = vmul.f32 %v2796, %v2925
    %v2958 = vmul.f32 %v2798, %v2926
    %v2959 = vpack.c.bf16 %v2927, %v2927
    %v2960 = vpack.c.bf16 %v2928, %v2928
    %v2961 = vpack.c.bf16 %v2929, %v2929
    %v2962 = vpack.c.bf16 %v2930, %v2930
    %v2963 = vpack.c.bf16 %v2931, %v2931
    %v2964 = vpack.c.bf16 %v2932, %v2932
    %v2965 = vpack.c.bf16 %v2933, %v2933
    %v2966 = vpack.c.bf16 %v2934, %v2934
    %v2967 = vpack.c.bf16 %v2935, %v2935
    %v2968 = vpack.c.bf16 %v2936, %v2936
    %v2969 = vpack.c.bf16 %v2937, %v2937
    %v2970 = vpack.c.bf16 %v2938, %v2938
    %v2971 = vpack.c.bf16 %v2939, %v2939
    %v2972 = vpack.c.bf16 %v2940, %v2940
    %v2973 = vpack.c.bf16 %v2941, %v2941
    %v2974 = vpack.c.bf16 %v2942, %v2942
    %v2975 = vpack.c.bf16 %v2943, %v2943
    %v2976 = vpack.c.bf16 %v2944, %v2944
    %v2977 = vpack.c.bf16 %v2945, %v2945
    %v2978 = vpack.c.bf16 %v2946, %v2946
    %v2979 = vpack.c.bf16 %v2947, %v2947
    %v2980 = vpack.c.bf16 %v2948, %v2948
    %v2981 = vpack.c.bf16 %v2949, %v2949
    %v2982 = vpack.c.bf16 %v2950, %v2950
    %v2983 = vpack.c.bf16 %v2951, %v2951
    %v2984 = vpack.c.bf16 %v2952, %v2952
    %v2985 = vpack.c.bf16 %v2953, %v2953
    %v2986 = vpack.c.bf16 %v2954, %v2954
    %v2987 = vpack.c.bf16 %v2955, %v2955
    %v2988 = vpack.c.bf16 %v2956, %v2956
    %v2989 = vpack.c.bf16 %v2957, %v2957
    %v2990 = vpack.c.bf16 %v2958, %v2958
    %v2991 = vpack.c.bf16 %v930, %v930
    %v2992 = vpack.c.bf16 %v931, %v931
    %v2993 = vpack.c.bf16 %v936, %v936
    %v2994 = vpack.c.bf16 %v937, %v937
    %v2995 = vpack.c.bf16 %v942, %v942
    %v2996 = vpack.c.bf16 %v943, %v943
    %v2997 = vpack.c.bf16 %v948, %v948
    %v2998 = vpack.c.bf16 %v949, %v949
    %v2999 = vpack.c.bf16 %v954, %v954
    %v3000 = vpack.c.bf16 %v955, %v955
    %v3001 = vpack.c.bf16 %v960, %v960
    %v3002 = vpack.c.bf16 %v961, %v961
    %v3003 = vpack.c.bf16 %v966, %v966
    %v3004 = vpack.c.bf16 %v967, %v967
    %v3005 = vpack.c.bf16 %v972, %v972
    %v3006 = vpack.c.bf16 %v973, %v973
    %v3007 = vpack.c.bf16 %v1086, %v1086
    %v3008 = vpack.c.bf16 %v1087, %v1087
    %v3009 = vpack.c.bf16 %v1088, %v1088
    %v3010 = vpack.c.bf16 %v1089, %v1089
    %v3011 = vpack.c.bf16 %v1090, %v1090
    %v3012 = vpack.c.bf16 %v1091, %v1091
    %v3013 = vpack.c.bf16 %v1092, %v1092
    %v3014 = vpack.c.bf16 %v1093, %v1093
    %v3015 = vpack.c.bf16 %v1094, %v1094
    %v3016 = vpack.c.bf16 %v1095, %v1095
    %v3017 = vpack.c.bf16 %v1096, %v1096
    %v3018 = vpack.c.bf16 %v1097, %v1097
    %v3019 = vpack.c.bf16 %v1098, %v1098
    %v3020 = vpack.c.bf16 %v1099, %v1099
    %v3021 = vpack.c.bf16 %v1100, %v1100
    %v3022 = vpack.c.bf16 %v1101, %v1101
    %vm3023 = vcmask 31744
    %v3025 = vsel %vm3023, %v2959, 0
    %vm3027 = vcmask 1041408
    %v3029 = vsel %vm3027, %v2991, 0
    %3031 = vmatprep.subr.bf16.mxu0 0
    %3032 = vmatpush1.bf16.msra.mxu0 %v3029
    %3033 = vmatprep.subr.bf16.mxu0 0
    %3034 = vmatpush1.bf16.msra.mxu0 0
    %3035 = vmatprep.subr.bf16.mxu0 0
    %3036 = vmatpush1.bf16.msra.mxu0 0
    %3037 = vmatprep.subr.bf16.mxu0 0
    %3038 = vmatpush1.bf16.msra.mxu0 0
    %3039 = vmatprep.subr.bf16.mxu0 0
    %3040 = vmatpush1.bf16.msra.mxu0 0
    %3041 = vmatprep.subr.bf16.mxu0 0
    %3042 = vmatpush1.bf16.msra.mxu0 0
    %3043 = vmatprep.subr.bf16.mxu0 0
    %3044 = vmatpush1.bf16.msra.mxu0 0
    %3045 = vmatprep.subr.bf16.mxu0 0
    %3046 = vmatpush1.bf16.msra.mxu0 0
    %3047 = vmatprep.subr.bf16.mxu0 0
    %3048 = vmatpush1.bf16.msra.mxu0 0
    %3049 = vmatprep.subr.bf16.mxu0 0
    %3050 = vmatpush1.bf16.msra.mxu0 0
    %3051 = vmatprep.subr.bf16.mxu0 0
    %3052 = vmatpush1.bf16.msra.mxu0 0
    %3053 = vmatprep.subr.bf16.mxu0 0
    %3054 = vmatpush1.bf16.msra.mxu0 0
    %3055 = vmatprep.subr.bf16.mxu0 0
    %3056 = vmatpush1.bf16.msra.mxu0 0
    %3057 = vmatprep.subr.bf16.mxu0 0
    %3058 = vmatpush1.bf16.msra.mxu0 0
    %3059 = vmatprep.subr.bf16.mxu0 0
    %3060 = vmatpush1.bf16.msra.mxu0 0
    %3061 = vmatprep.subr.bf16.mxu0 0
    %3062 = vmatpush1.bf16.msra.mxu0 0
    %3063 = vmatprep.mubr.bf16.mxu0 0
    %3064 = vmatmul.mubr.bf16.gmra.mrb[0].mxu0 %v3025
    %v3065 = vpop.f32.mrb[0].mxu0
    %v3066 = vadd.f32 0.0, %v3065
    %v3067 = vpop.f32.mrb[0].mxu0
    %v3068 = vpop.f32.mrb[0].mxu0
    %v3069 = vpop.f32.mrb[0].mxu0
    %3070 = vdwg.mxu0
    %v3072 = vsel %vm3023, %v2960, 0
    %v3075 = vsel %vm3027, %v2992, 0
    %3077 = vmatprep.subr.bf16.mxu0 0
    %3078 = vmatpush1.bf16.msra.mxu0 %v3075
    %3079 = vmatprep.subr.bf16.mxu0 0
    %3080 = vmatpush1.bf16.msra.mxu0 0
    %3081 = vmatprep.subr.bf16.mxu0 0
    %3082 = vmatpush1.bf16.msra.mxu0 0
    %3083 = vmatprep.subr.bf16.mxu0 0
    %3084 = vmatpush1.bf16.msra.mxu0 0
    %3085 = vmatprep.subr.bf16.mxu0 0
    %3086 = vmatpush1.bf16.msra.mxu0 0
    %3087 = vmatprep.subr.bf16.mxu0 0
    %3088 = vmatpush1.bf16.msra.mxu0 0
    %3089 = vmatprep.subr.bf16.mxu0 0
    %3090 = vmatpush1.bf16.msra.mxu0 0
    %3091 = vmatprep.subr.bf16.mxu0 0
    %3092 = vmatpush1.bf16.msra.mxu0 0
    %3093 = vmatprep.subr.bf16.mxu0 0
    %3094 = vmatpush1.bf16.msra.mxu0 0
    %3095 = vmatprep.subr.bf16.mxu0 0
    %3096 = vmatpush1.bf16.msra.mxu0 0
    %3097 = vmatprep.subr.bf16.mxu0 0
    %3098 = vmatpush1.bf16.msra.mxu0 0
    %3099 = vmatprep.subr.bf16.mxu0 0
    %3100 = vmatpush1.bf16.msra.mxu0 0
    %3101 = vmatprep.subr.bf16.mxu0 0
    %3102 = vmatpush1.bf16.msra.mxu0 0
    %3103 = vmatprep.subr.bf16.mxu0 0
    %3104 = vmatpush1.bf16.msra.mxu0 0
    %3105 = vmatprep.subr.bf16.mxu0 0
    %3106 = vmatpush1.bf16.msra.mxu0 0
    %3107 = vmatprep.subr.bf16.mxu0 0
    %3108 = vmatpush1.bf16.msra.mxu0 0
    %3109 = vmatprep.mubr.bf16.mxu0 0
    %3110 = vmatmul.mubr.bf16.gmra.mrb[0].mxu0 %v3072
    %v3111 = vpop.f32.mrb[0].mxu0
    %v3112 = vadd.f32 0.0, %v3111
    %v3113 = vpop.f32.mrb[0].mxu0
    %v3114 = vpop.f32.mrb[0].mxu0
    %v3115 = vpop.f32.mrb[0].mxu0
    %3116 = vdwg.mxu0
    %v3118 = vsel %vm3023, %v2961, 0
    %v3121 = vsel %vm3027, %v2993, 0
    %3123 = vmatprep.subr.bf16.mxu0 0
    %3124 = vmatpush1.bf16.msra.mxu0 %v3121
    %3125 = vmatprep.subr.bf16.mxu0 0
    %3126 = vmatpush1.bf16.msra.mxu0 0
    %3127 = vmatprep.subr.bf16.mxu0 0
    %3128 = vmatpush1.bf16.msra.mxu0 0
    %3129 = vmatprep.subr.bf16.mxu0 0
    %3130 = vmatpush1.bf16.msra.mxu0 0
    %3131 = vmatprep.subr.bf16.mxu0 0
    %3132 = vmatpush1.bf16.msra.mxu0 0
    %3133 = vmatprep.subr.bf16.mxu0 0
    %3134 = vmatpush1.bf16.msra.mxu0 0
    %3135 = vmatprep.subr.bf16.mxu0 0
    %3136 = vmatpush1.bf16.msra.mxu0 0
    %3137 = vmatprep.subr.bf16.mxu0 0
    %3138 = vmatpush1.bf16.msra.mxu0 0
    %3139 = vmatprep.subr.bf16.mxu0 0
    %3140 = vmatpush1.bf16.msra.mxu0 0
    %3141 = vmatprep.subr.bf16.mxu0 0
    %3142 = vmatpush1.bf16.msra.mxu0 0
    %3143 = vmatprep.subr.bf16.mxu0 0
    %3144 = vmatpush1.bf16.msra.mxu0 0
    %3145 = vmatprep.subr.bf16.mxu0 0
    %3146 = vmatpush1.bf16.msra.mxu0 0
    %3147 = vmatprep.subr.bf16.mxu0 0
    %3148 = vmatpush1.bf16.msra.mxu0 0
    %3149 = vmatprep.subr.bf16.mxu0 0
    %3150 = vmatpush1.bf16.msra.mxu0 0
    %3151 = vmatprep.subr.bf16.mxu0 0
    %3152 = vmatpush1.bf16.msra.mxu0 0
    %3153 = vmatprep.subr.bf16.mxu0 0
    %3154 = vmatpush1.bf16.msra.mxu0 0
    %3155 = vmatprep.mubr.bf16.mxu0 0
    %3156 = vmatmul.mubr.bf16.gmra.mrb[0].mxu0 %v3118
    %v3157 = vpop.f32.mrb[0].mxu0
    %v3158 = vadd.f32 0.0, %v3157
    %v3159 = vpop.f32.mrb[0].mxu0
    %v3160 = vpop.f32.mrb[0].mxu0
    %v3161 = vpop.f32.mrb[0].mxu0
    %3162 = vdwg.mxu0
    %v3164 = vsel %vm3023, %v2962, 0
    %v3167 = vsel %vm3027, %v2994, 0
    %3169 = vmatprep.subr.bf16.mxu0 0
    %3170 = vmatpush1.bf16.msra.mxu0 %v3167
    %3171 = vmatprep.subr.bf16.mxu0 0
    %3172 = vmatpush1.bf16.msra.mxu0 0
    %3173 = vmatprep.subr.bf16.mxu0 0
    %3174 = vmatpush1.bf16.msra.mxu0 0
    %3175 = vmatprep.subr.bf16.mxu0 0
    %3176 = vmatpush1.bf16.msra.mxu0 0
    %3177 = vmatprep.subr.bf16.mxu0 0
    %3178 = vmatpush1.bf16.msra.mxu0 0
    %3179 = vmatprep.subr.bf16.mxu0 0
    %3180 = vmatpush1.bf16.msra.mxu0 0
    %3181 = vmatprep.subr.bf16.mxu0 0
    %3182 = vmatpush1.bf16.msra.mxu0 0
    %3183 = vmatprep.subr.bf16.mxu0 0
    %3184 = vmatpush1.bf16.msra.mxu0 0
    %3185 = vmatprep.subr.bf16.mxu0 0
    %3186 = vmatpush1.bf16.msra.mxu0 0
    %3187 = vmatprep.subr.bf16.mxu0 0
    %3188 = vmatpush1.bf16.msra.mxu0 0
    %3189 = vmatprep.subr.bf16.mxu0 0
    %3190 = vmatpush1.bf16.msra.mxu0 0
    %3191 = vmatprep.subr.bf16.mxu0 0
    %3192 = vmatpush1.bf16.msra.mxu0 0
    %3193 = vmatprep.subr.bf16.mxu0 0
    %3194 = vmatpush1.bf16.msra.mxu0 0
    %3195 = vmatprep.subr.bf16.mxu0 0
    %3196 = vmatpush1.bf16.msra.mxu0 0
    %3197 = vmatprep.subr.bf16.mxu0 0
    %3198 = vmatpush1.bf16.msra.mxu0 0
    %3199 = vmatprep.subr.bf16.mxu0 0
    %3200 = vmatpush1.bf16.msra.mxu0 0
    %3201 = vmatprep.mubr.bf16.mxu0 0
    %3202 = vmatmul.mubr.bf16.gmra.mrb[0].mxu0 %v3164
    %v3203 = vpop.f32.mrb[0].mxu0
    %v3204 = vadd.f32 0.0, %v3203
    %v3205 = vpop.f32.mrb[0].mxu0
    %v3206 = vpop.f32.mrb[0].mxu0
    %v3207 = vpop.f32.mrb[0].mxu0
    %3208 = vdwg.mxu0
    %v3210 = vsel %vm3023, %v2963, 0
    %v3213 = vsel %vm3027, %v2995, 0
    %3215 = vmatprep.subr.bf16.mxu0 0
    %3216 = vmatpush1.bf16.msra.mxu0 %v3213
    %3217 = vmatprep.subr.bf16.mxu0 0
    %3218 = vmatpush1.bf16.msra.mxu0 0
    %3219 = vmatprep.subr.bf16.mxu0 0
    %3220 = vmatpush1.bf16.msra.mxu0 0
    %3221 = vmatprep.subr.bf16.mxu0 0
    %3222 = vmatpush1.bf16.msra.mxu0 0
    %3223 = vmatprep.subr.bf16.mxu0 0
    %3224 = vmatpush1.bf16.msra.mxu0 0
    %3225 = vmatprep.subr.bf16.mxu0 0
    %3226 = vmatpush1.bf16.msra.mxu0 0
    %3227 = vmatprep.subr.bf16.mxu0 0
    %3228 = vmatpush1.bf16.msra.mxu0 0
    %3229 = vmatprep.subr.bf16.mxu0 0
    %3230 = vmatpush1.bf16.msra.mxu0 0
    %3231 = vmatprep.subr.bf16.mxu0 0
    %3232 = vmatpush1.bf16.msra.mxu0 0
    %3233 = vmatprep.subr.bf16.mxu0 0
    %3234 = vmatpush1.bf16.msra.mxu0 0
    %3235 = vmatprep.subr.bf16.mxu0 0
    %3236 = vmatpush1.bf16.msra.mxu0 0
    %3237 = vmatprep.subr.bf16.mxu0 0
    %3238 = vmatpush1.bf16.msra.mxu0 0
    %3239 = vmatprep.subr.bf16.mxu0 0
    %3240 = vmatpush1.bf16.msra.mxu0 0
    %3241 = vmatprep.subr.bf16.mxu0 0
    %3242 = vmatpush1.bf16.msra.mxu0 0
    %3243 = vmatprep.subr.bf16.mxu0 0
    %3244 = vmatpush1.bf16.msra.mxu0 0
    %3245 = vmatprep.subr.bf16.mxu0 0
    %3246 = vmatpush1.bf16.msra.mxu0 0
    %3247 = vmatprep.mubr.bf16.mxu0 0
    %3248 = vmatmul.mubr.bf16.gmra.mrb[0].mxu0 %v3210
    %v3249 = vpop.f32.mrb[0].mxu0
    %v3250 = vadd.f32 0.0, %v3249
    %v3251 = vpop.f32.mrb[0].mxu0
    %v3252 = vpop.f32.mrb[0].mxu0
    %v3253 = vpop.f32.mrb[0].mxu0
    %3254 = vdwg.mxu0
    %v3256 = vsel %vm3023, %v2964, 0
    %v3259 = vsel %vm3027, %v2996, 0
    %3261 = vmatprep.subr.bf16.mxu0 0
    %3262 = vmatpush1.bf16.msra.mxu0 %v3259
    %3263 = vmatprep.subr.bf16.mxu0 0
    %3264 = vmatpush1.bf16.msra.mxu0 0
    %3265 = vmatprep.subr.bf16.mxu0 0
    %3266 = vmatpush1.bf16.msra.mxu0 0
    %3267 = vmatprep.subr.bf16.mxu0 0
    %3268 = vmatpush1.bf16.msra.mxu0 0
    %3269 = vmatprep.subr.bf16.mxu0 0
    %3270 = vmatpush1.bf16.msra.mxu0 0
    %3271 = vmatprep.subr.bf16.mxu0 0
    %3272 = vmatpush1.bf16.msra.mxu0 0
    %3273 = vmatprep.subr.bf16.mxu0 0
    %3274 = vmatpush1.bf16.msra.mxu0 0
    %3275 = vmatprep.subr.bf16.mxu0 0
    %3276 = vmatpush1.bf16.msra.mxu0 0
    %3277 = vmatprep.subr.bf16.mxu0 0
    %3278 = vmatpush1.bf16.msra.mxu0 0
    %3279 = vmatprep.subr.bf16.mxu0 0
    %3280 = vmatpush1.bf16.msra.mxu0 0
    %3281 = vmatprep.subr.bf16.mxu0 0
    %3282 = vmatpush1.bf16.msra.mxu0 0
    %3283 = vmatprep.subr.bf16.mxu0 0
    %3284 = vmatpush1.bf16.msra.mxu0 0
    %3285 = vmatprep.subr.bf16.mxu0 0
    %3286 = vmatpush1.bf16.msra.mxu0 0
    %3287 = vmatprep.subr.bf16.mxu0 0
    %3288 = vmatpush1.bf16.msra.mxu0 0
    %3289 = vmatprep.subr.bf16.mxu0 0
    %3290 = vmatpush1.bf16.msra.mxu0 0
    %3291 = vmatprep.subr.bf16.mxu0 0
    %3292 = vmatpush1.bf16.msra.mxu0 0
    %3293 = vmatprep.mubr.bf16.mxu0 0
    %3294 = vmatmul.mubr.bf16.gmra.mrb[0].mxu0 %v3256
    %v3295 = vpop.f32.mrb[0].mxu0
    %v3296 = vadd.f32 0.0, %v3295
    %v3297 = vpop.f32.mrb[0].mxu0
    %v3298 = vpop.f32.mrb[0].mxu0
    %v3299 = vpop.f32.mrb[0].mxu0
    %3300 = vdwg.mxu0
    %v3302 = vsel %vm3023, %v2965, 0
    %v3305 = vsel %vm3027, %v2997, 0
    %3307 = vmatprep.subr.bf16.mxu0 0
    %3308 = vmatpush1.bf16.msra.mxu0 %v3305
    %3309 = vmatprep.subr.bf16.mxu0 0
    %3310 = vmatpush1.bf16.msra.mxu0 0
    %3311 = vmatprep.subr.bf16.mxu0 0
    %3312 = vmatpush1.bf16.msra.mxu0 0
    %3313 = vmatprep.subr.bf16.mxu0 0
    %3314 = vmatpush1.bf16.msra.mxu0 0
    %3315 = vmatprep.subr.bf16.mxu0 0
    %3316 = vmatpush1.bf16.msra.mxu0 0
    %3317 = vmatprep.subr.bf16.mxu0 0
    %3318 = vmatpush1.bf16.msra.mxu0 0
    %3319 = vmatprep.subr.bf16.mxu0 0
    %3320 = vmatpush1.bf16.msra.mxu0 0
    %3321 = vmatprep.subr.bf16.mxu0 0
    %3322 = vmatpush1.bf16.msra.mxu0 0
    %3323 = vmatprep.subr.bf16.mxu0 0
    %3324 = vmatpush1.bf16.msra.mxu0 0
    %3325 = vmatprep.subr.bf16.mxu0 0
    %3326 = vmatpush1.bf16.msra.mxu0 0
    %3327 = vmatprep.subr.bf16.mxu0 0
    %3328 = vmatpush1.bf16.msra.mxu0 0
    %3329 = vmatprep.subr.bf16.mxu0 0
    %3330 = vmatpush1.bf16.msra.mxu0 0
    %3331 = vmatprep.subr.bf16.mxu0 0
    %3332 = vmatpush1.bf16.msra.mxu0 0
    %3333 = vmatprep.subr.bf16.mxu0 0
    %3334 = vmatpush1.bf16.msra.mxu0 0
    %3335 = vmatprep.subr.bf16.mxu0 0
    %3336 = vmatpush1.bf16.msra.mxu0 0
    %3337 = vmatprep.subr.bf16.mxu0 0
    %3338 = vmatpush1.bf16.msra.mxu0 0
    %3339 = vmatprep.mubr.bf16.mxu0 0
    %3340 = vmatmul.mubr.bf16.gmra.mrb[0].mxu0 %v3302
    %v3341 = vpop.f32.mrb[0].mxu0
    %v3342 = vadd.f32 0.0, %v3341
    %v3343 = vpop.f32.mrb[0].mxu0
    %v3344 = vpop.f32.mrb[0].mxu0
    %v3345 = vpop.f32.mrb[0].mxu0
    %3346 = vdwg.mxu0
    %v3348 = vsel %vm3023, %v2966, 0
    %v3351 = vsel %vm3027, %v2998, 0
    %3353 = vmatprep.subr.bf16.mxu0 0
    %3354 = vmatpush1.bf16.msra.mxu0 %v3351
    %3355 = vmatprep.subr.bf16.mxu0 0
    %3356 = vmatpush1.bf16.msra.mxu0 0
    %3357 = vmatprep.subr.bf16.mxu0 0
    %3358 = vmatpush1.bf16.msra.mxu0 0
    %3359 = vmatprep.subr.bf16.mxu0 0
    %3360 = vmatpush1.bf16.msra.mxu0 0
    %3361 = vmatprep.subr.bf16.mxu0 0
    %3362 = vmatpush1.bf16.msra.mxu0 0
    %3363 = vmatprep.subr.bf16.mxu0 0
    %3364 = vmatpush1.bf16.msra.mxu0 0
    %3365 = vmatprep.subr.bf16.mxu0 0
    %3366 = vmatpush1.bf16.msra.mxu0 0
    %3367 = vmatprep.subr.bf16.mxu0 0
    %3368 = vmatpush1.bf16.msra.mxu0 0
    %3369 = vmatprep.subr.bf16.mxu0 0
    %3370 = vmatpush1.bf16.msra.mxu0 0
    %3371 = vmatprep.subr.bf16.mxu0 0
    %3372 = vmatpush1.bf16.msra.mxu0 0
    %3373 = vmatprep.subr.bf16.mxu0 0
    %3374 = vmatpush1.bf16.msra.mxu0 0
    %3375 = vmatprep.subr.bf16.mxu0 0
    %3376 = vmatpush1.bf16.msra.mxu0 0
    %3377 = vmatprep.subr.bf16.mxu0 0
    %3378 = vmatpush1.bf16.msra.mxu0 0
    %3379 = vmatprep.subr.bf16.mxu0 0
    %3380 = vmatpush1.bf16.msra.mxu0 0
    %3381 = vmatprep.subr.bf16.mxu0 0
    %3382 = vmatpush1.bf16.msra.mxu0 0
    %3383 = vmatprep.subr.bf16.mxu0 0
    %3384 = vmatpush1.bf16.msra.mxu0 0
    %3385 = vmatprep.mubr.bf16.mxu0 0
    %3386 = vmatmul.mubr.bf16.gmra.mrb[0].mxu0 %v3348
    %v3387 = vpop.f32.mrb[0].mxu0
    %v3388 = vadd.f32 0.0, %v3387
    %v3389 = vpop.f32.mrb[0].mxu0
    %v3390 = vpop.f32.mrb[0].mxu0
    %v3391 = vpop.f32.mrb[0].mxu0
    %3392 = vdwg.mxu0
    %v3394 = vsel %vm3023, %v2967, 0
    %v3397 = vsel %vm3027, %v2999, 0
    %3399 = vmatprep.subr.bf16.mxu0 0
    %3400 = vmatpush1.bf16.msra.mxu0 %v3397
    %3401 = vmatprep.subr.bf16.mxu0 0
    %3402 = vmatpush1.bf16.msra.mxu0 0
    %3403 = vmatprep.subr.bf16.mxu0 0
    %3404 = vmatpush1.bf16.msra.mxu0 0
    %3405 = vmatprep.subr.bf16.mxu0 0
    %3406 = vmatpush1.bf16.msra.mxu0 0
    %3407 = vmatprep.subr.bf16.mxu0 0
    %3408 = vmatpush1.bf16.msra.mxu0 0
    %3409 = vmatprep.subr.bf16.mxu0 0
    %3410 = vmatpush1.bf16.msra.mxu0 0
    %3411 = vmatprep.subr.bf16.mxu0 0
    %3412 = vmatpush1.bf16.msra.mxu0 0
    %3413 = vmatprep.subr.bf16.mxu0 0
    %3414 = vmatpush1.bf16.msra.mxu0 0
    %3415 = vmatprep.subr.bf16.mxu0 0
    %3416 = vmatpush1.bf16.msra.mxu0 0
    %3417 = vmatprep.subr.bf16.mxu0 0
    %3418 = vmatpush1.bf16.msra.mxu0 0
    %3419 = vmatprep.subr.bf16.mxu0 0
    %3420 = vmatpush1.bf16.msra.mxu0 0
    %3421 = vmatprep.subr.bf16.mxu0 0
    %3422 = vmatpush1.bf16.msra.mxu0 0
    %3423 = vmatprep.subr.bf16.mxu0 0
    %3424 = vmatpush1.bf16.msra.mxu0 0
    %3425 = vmatprep.subr.bf16.mxu0 0
    %3426 = vmatpush1.bf16.msra.mxu0 0
    %3427 = vmatprep.subr.bf16.mxu0 0
    %3428 = vmatpush1.bf16.msra.mxu0 0
    %3429 = vmatprep.subr.bf16.mxu0 0
    %3430 = vmatpush1.bf16.msra.mxu0 0
    %3431 = vmatprep.mubr.bf16.mxu0 0
    %3432 = vmatmul.mubr.bf16.gmra.mrb[0].mxu0 %v3394
    %v3433 = vpop.f32.mrb[0].mxu0
    %v3434 = vadd.f32 0.0, %v3433
    %v3435 = vpop.f32.mrb[0].mxu0
    %v3436 = vpop.f32.mrb[0].mxu0
    %v3437 = vpop.f32.mrb[0].mxu0
    %3438 = vdwg.mxu0
    %v3440 = vsel %vm3023, %v2968, 0
    %v3443 = vsel %vm3027, %v3000, 0
    %3445 = vmatprep.subr.bf16.mxu0 0
    %3446 = vmatpush1.bf16.msra.mxu0 %v3443
    %3447 = vmatprep.subr.bf16.mxu0 0
    %3448 = vmatpush1.bf16.msra.mxu0 0
    %3449 = vmatprep.subr.bf16.mxu0 0
    %3450 = vmatpush1.bf16.msra.mxu0 0
    %3451 = vmatprep.subr.bf16.mxu0 0
    %3452 = vmatpush1.bf16.msra.mxu0 0
    %3453 = vmatprep.subr.bf16.mxu0 0
    %3454 = vmatpush1.bf16.msra.mxu0 0
    %3455 = vmatprep.subr.bf16.mxu0 0
    %3456 = vmatpush1.bf16.msra.mxu0 0
    %3457 = vmatprep.subr.bf16.mxu0 0
    %3458 = vmatpush1.bf16.msra.mxu0 0
    %3459 = vmatprep.subr.bf16.mxu0 0
    %3460 = vmatpush1.bf16.msra.mxu0 0
    %3461 = vmatprep.subr.bf16.mxu0 0
    %3462 = vmatpush1.bf16.msra.mxu0 0
    %3463 = vmatprep.subr.bf16.mxu0 0
    %3464 = vmatpush1.bf16.msra.mxu0 0
    %3465 = vmatprep.subr.bf16.mxu0 0
    %3466 = vmatpush1.bf16.msra.mxu0 0
    %3467 = vmatprep.subr.bf16.mxu0 0
    %3468 = vmatpush1.bf16.msra.mxu0 0
    %3469 = vmatprep.subr.bf16.mxu0 0
    %3470 = vmatpush1.bf16.msra.mxu0 0
    %3471 = vmatprep.subr.bf16.mxu0 0
    %3472 = vmatpush1.bf16.msra.mxu0 0
    %3473 = vmatprep.subr.bf16.mxu0 0
    %3474 = vmatpush1.bf16.msra.mxu0 0
    %3475 = vmatprep.subr.bf16.mxu0 0
    %3476 = vmatpush1.bf16.msra.mxu0 0
    %3477 = vmatprep.mubr.bf16.mxu0 0
    %3478 = vmatmul.mubr.bf16.gmra.mrb[0].mxu0 %v3440
    %v3479 = vpop.f32.mrb[0].mxu0
    %v3480 = vadd.f32 0.0, %v3479
    %v3481 = vpop.f32.mrb[0].mxu0
    %v3482 = vpop.f32.mrb[0].mxu0
    %v3483 = vpop.f32.mrb[0].mxu0
    %3484 = vdwg.mxu0
    %v3486 = vsel %vm3023, %v2969, 0
    %v3489 = vsel %vm3027, %v3001, 0
    %3491 = vmatprep.subr.bf16.mxu0 0
    %3492 = vmatpush1.bf16.msra.mxu0 %v3489
    %3493 = vmatprep.subr.bf16.mxu0 0
    %3494 = vmatpush1.bf16.msra.mxu0 0
    %3495 = vmatprep.subr.bf16.mxu0 0
    %3496 = vmatpush1.bf16.msra.mxu0 0
    %3497 = vmatprep.subr.bf16.mxu0 0
    %3498 = vmatpush1.bf16.msra.mxu0 0
    %3499 = vmatprep.subr.bf16.mxu0 0
    %3500 = vmatpush1.bf16.msra.mxu0 0
    %3501 = vmatprep.subr.bf16.mxu0 0
    %3502 = vmatpush1.bf16.msra.mxu0 0
    %3503 = vmatprep.subr.bf16.mxu0 0
    %3504 = vmatpush1.bf16.msra.mxu0 0
    %3505 = vmatprep.subr.bf16.mxu0 0
    %3506 = vmatpush1.bf16.msra.mxu0 0
    %3507 = vmatprep.subr.bf16.mxu0 0
    %3508 = vmatpush1.bf16.msra.mxu0 0
    %3509 = vmatprep.subr.bf16.mxu0 0
    %3510 = vmatpush1.bf16.msra.mxu0 0
    %3511 = vmatprep.subr.bf16.mxu0 0
    %3512 = vmatpush1.bf16.msra.mxu0 0
    %3513 = vmatprep.subr.bf16.mxu0 0
    %3514 = vmatpush1.bf16.msra.mxu0 0
    %3515 = vmatprep.subr.bf16.mxu0 0
    %3516 = vmatpush1.bf16.msra.mxu0 0
    %3517 = vmatprep.subr.bf16.mxu0 0
    %3518 = vmatpush1.bf16.msra.mxu0 0
    %3519 = vmatprep.subr.bf16.mxu0 0
    %3520 = vmatpush1.bf16.msra.mxu0 0
    %3521 = vmatprep.subr.bf16.mxu0 0
    %3522 = vmatpush1.bf16.msra.mxu0 0
    %3523 = vmatprep.mubr.bf16.mxu0 0
    %3524 = vmatmul.mubr.bf16.gmra.mrb[0].mxu0 %v3486
    %v3525 = vpop.f32.mrb[0].mxu0
    %v3526 = vadd.f32 0.0, %v3525
    %v3527 = vpop.f32.mrb[0].mxu0
    %v3528 = vpop.f32.mrb[0].mxu0
    %v3529 = vpop.f32.mrb[0].mxu0
    %3530 = vdwg.mxu0
    %v3532 = vsel %vm3023, %v2970, 0
    %v3535 = vsel %vm3027, %v3002, 0
    %3537 = vmatprep.subr.bf16.mxu0 0
    %3538 = vmatpush1.bf16.msra.mxu0 %v3535
    %3539 = vmatprep.subr.bf16.mxu0 0
    %3540 = vmatpush1.bf16.msra.mxu0 0
    %3541 = vmatprep.subr.bf16.mxu0 0
    %3542 = vmatpush1.bf16.msra.mxu0 0
    %3543 = vmatprep.subr.bf16.mxu0 0
    %3544 = vmatpush1.bf16.msra.mxu0 0
    %3545 = vmatprep.subr.bf16.mxu0 0
    %3546 = vmatpush1.bf16.msra.mxu0 0
    %3547 = vmatprep.subr.bf16.mxu0 0
    %3548 = vmatpush1.bf16.msra.mxu0 0
    %3549 = vmatprep.subr.bf16.mxu0 0
    %3550 = vmatpush1.bf16.msra.mxu0 0
    %3551 = vmatprep.subr.bf16.mxu0 0
    %3552 = vmatpush1.bf16.msra.mxu0 0
    %3553 = vmatprep.subr.bf16.mxu0 0
    %3554 = vmatpush1.bf16.msra.mxu0 0
    %3555 = vmatprep.subr.bf16.mxu0 0
    %3556 = vmatpush1.bf16.msra.mxu0 0
    %3557 = vmatprep.subr.bf16.mxu0 0
    %3558 = vmatpush1.bf16.msra.mxu0 0
    %3559 = vmatprep.subr.bf16.mxu0 0
    %3560 = vmatpush1.bf16.msra.mxu0 0
    %3561 = vmatprep.subr.bf16.mxu0 0
    %3562 = vmatpush1.bf16.msra.mxu0 0
    %3563 = vmatprep.subr.bf16.mxu0 0
    %3564 = vmatpush1.bf16.msra.mxu0 0
    %3565 = vmatprep.subr.bf16.mxu0 0
    %3566 = vmatpush1.bf16.msra.mxu0 0
    %3567 = vmatprep.subr.bf16.mxu0 0
    %3568 = vmatpush1.bf16.msra.mxu0 0
    %3569 = vmatprep.mubr.bf16.mxu0 0
    %3570 = vmatmul.mubr.bf16.gmra.mrb[0].mxu0 %v3532
    %v3571 = vpop.f32.mrb[0].mxu0
    %v3572 = vadd.f32 0.0, %v3571
    %v3573 = vpop.f32.mrb[0].mxu0
    %v3574 = vpop.f32.mrb[0].mxu0
    %v3575 = vpop.f32.mrb[0].mxu0
    %3576 = vdwg.mxu0
    %v3578 = vsel %vm3023, %v2971, 0
    %v3581 = vsel %vm3027, %v3003, 0
    %3583 = vmatprep.subr.bf16.mxu0 0
    %3584 = vmatpush1.bf16.msra.mxu0 %v3581
    %3585 = vmatprep.subr.bf16.mxu0 0
    %3586 = vmatpush1.bf16.msra.mxu0 0
    %3587 = vmatprep.subr.bf16.mxu0 0
    %3588 = vmatpush1.bf16.msra.mxu0 0
    %3589 = vmatprep.subr.bf16.mxu0 0
    %3590 = vmatpush1.bf16.msra.mxu0 0
    %3591 = vmatprep.subr.bf16.mxu0 0
    %3592 = vmatpush1.bf16.msra.mxu0 0
    %3593 = vmatprep.subr.bf16.mxu0 0
    %3594 = vmatpush1.bf16.msra.mxu0 0
    %3595 = vmatprep.subr.bf16.mxu0 0
    %3596 = vmatpush1.bf16.msra.mxu0 0
    %3597 = vmatprep.subr.bf16.mxu0 0
    %3598 = vmatpush1.bf16.msra.mxu0 0
    %3599 = vmatprep.subr.bf16.mxu0 0
    %3600 = vmatpush1.bf16.msra.mxu0 0
    %3601 = vmatprep.subr.bf16.mxu0 0
    %3602 = vmatpush1.bf16.msra.mxu0 0
    %3603 = vmatprep.subr.bf16.mxu0 0
    %3604 = vmatpush1.bf16.msra.mxu0 0
    %3605 = vmatprep.subr.bf16.mxu0 0
    %3606 = vmatpush1.bf16.msra.mxu0 0
    %3607 = vmatprep.subr.bf16.mxu0 0
    %3608 = vmatpush1.bf16.msra.mxu0 0
    %3609 = vmatprep.subr.bf16.mxu0 0
    %3610 = vmatpush1.bf16.msra.mxu0 0
    %3611 = vmatprep.subr.bf16.mxu0 0
    %3612 = vmatpush1.bf16.msra.mxu0 0
    %3613 = vmatprep.subr.bf16.mxu0 0
    %3614 = vmatpush1.bf16.msra.mxu0 0
    %3615 = vmatprep.mubr.bf16.mxu0 0
    %3616 = vmatmul.mubr.bf16.gmra.mrb[0].mxu0 %v3578
    %v3617 = vpop.f32.mrb[0].mxu0
    %v3618 = vadd.f32 0.0, %v3617
    %v3619 = vpop.f32.mrb[0].mxu0
    %v3620 = vpop.f32.mrb[0].mxu0
    %v3621 = vpop.f32.mrb[0].mxu0
    %3622 = vdwg.mxu0
    %v3624 = vsel %vm3023, %v2972, 0
    %v3627 = vsel %vm3027, %v3004, 0
    %3629 = vmatprep.subr.bf16.mxu0 0
    %3630 = vmatpush1.bf16.msra.mxu0 %v3627
    %3631 = vmatprep.subr.bf16.mxu0 0
    %3632 = vmatpush1.bf16.msra.mxu0 0
    %3633 = vmatprep.subr.bf16.mxu0 0
    %3634 = vmatpush1.bf16.msra.mxu0 0
    %3635 = vmatprep.subr.bf16.mxu0 0
    %3636 = vmatpush1.bf16.msra.mxu0 0
    %3637 = vmatprep.subr.bf16.mxu0 0
    %3638 = vmatpush1.bf16.msra.mxu0 0
    %3639 = vmatprep.subr.bf16.mxu0 0
    %3640 = vmatpush1.bf16.msra.mxu0 0
    %3641 = vmatprep.subr.bf16.mxu0 0
    %3642 = vmatpush1.bf16.msra.mxu0 0
    %3643 = vmatprep.subr.bf16.mxu0 0
    %3644 = vmatpush1.bf16.msra.mxu0 0
    %3645 = vmatprep.subr.bf16.mxu0 0
    %3646 = vmatpush1.bf16.msra.mxu0 0
    %3647 = vmatprep.subr.bf16.mxu0 0
    %3648 = vmatpush1.bf16.msra.mxu0 0
    %3649 = vmatprep.subr.bf16.mxu0 0
    %3650 = vmatpush1.bf16.msra.mxu0 0
    %3651 = vmatprep.subr.bf16.mxu0 0
    %3652 = vmatpush1.bf16.msra.mxu0 0
    %3653 = vmatprep.subr.bf16.mxu0 0
    %3654 = vmatpush1.bf16.msra.mxu0 0
    %3655 = vmatprep.subr.bf16.mxu0 0
    %3656 = vmatpush1.bf16.msra.mxu0 0
    %3657 = vmatprep.subr.bf16.mxu0 0
    %3658 = vmatpush1.bf16.msra.mxu0 0
    %3659 = vmatprep.subr.bf16.mxu0 0
    %3660 = vmatpush1.bf16.msra.mxu0 0
    %3661 = vmatprep.mubr.bf16.mxu0 0
    %3662 = vmatmul.mubr.bf16.gmra.mrb[0].mxu0 %v3624
    %v3663 = vpop.f32.mrb[0].mxu0
    %v3664 = vadd.f32 0.0, %v3663
    %v3665 = vpop.f32.mrb[0].mxu0
    %v3666 = vpop.f32.mrb[0].mxu0
    %v3667 = vpop.f32.mrb[0].mxu0
    %3668 = vdwg.mxu0
    %v3670 = vsel %vm3023, %v2973, 0
    %v3673 = vsel %vm3027, %v3005, 0
    %3675 = vmatprep.subr.bf16.mxu0 0
    %3676 = vmatpush1.bf16.msra.mxu0 %v3673
    %3677 = vmatprep.subr.bf16.mxu0 0
    %3678 = vmatpush1.bf16.msra.mxu0 0
    %3679 = vmatprep.subr.bf16.mxu0 0
    %3680 = vmatpush1.bf16.msra.mxu0 0
    %3681 = vmatprep.subr.bf16.mxu0 0
    %3682 = vmatpush1.bf16.msra.mxu0 0
    %3683 = vmatprep.subr.bf16.mxu0 0
    %3684 = vmatpush1.bf16.msra.mxu0 0
    %3685 = vmatprep.subr.bf16.mxu0 0
    %3686 = vmatpush1.bf16.msra.mxu0 0
    %3687 = vmatprep.subr.bf16.mxu0 0
    %3688 = vmatpush1.bf16.msra.mxu0 0
    %3689 = vmatprep.subr.bf16.mxu0 0
    %3690 = vmatpush1.bf16.msra.mxu0 0
    %3691 = vmatprep.subr.bf16.mxu0 0
    %3692 = vmatpush1.bf16.msra.mxu0 0
    %3693 = vmatprep.subr.bf16.mxu0 0
    %3694 = vmatpush1.bf16.msra.mxu0 0
    %3695 = vmatprep.subr.bf16.mxu0 0
    %3696 = vmatpush1.bf16.msra.mxu0 0
    %3697 = vmatprep.subr.bf16.mxu0 0
    %3698 = vmatpush1.bf16.msra.mxu0 0
    %3699 = vmatprep.subr.bf16.mxu0 0
    %3700 = vmatpush1.bf16.msra.mxu0 0
    %3701 = vmatprep.subr.bf16.mxu0 0
    %3702 = vmatpush1.bf16.msra.mxu0 0
    %3703 = vmatprep.subr.bf16.mxu0 0
    %3704 = vmatpush1.bf16.msra.mxu0 0
    %3705 = vmatprep.subr.bf16.mxu0 0
    %3706 = vmatpush1.bf16.msra.mxu0 0
    %3707 = vmatprep.mubr.bf16.mxu0 0
    %3708 = vmatmul.mubr.bf16.gmra.mrb[0].mxu0 %v3670
    %v3709 = vpop.f32.mrb[0].mxu0
    %v3710 = vadd.f32 0.0, %v3709
    %v3711 = vpop.f32.mrb[0].mxu0
    %v3712 = vpop.f32.mrb[0].mxu0
    %v3713 = vpop.f32.mrb[0].mxu0
    %3714 = vdwg.mxu0
    %v3716 = vsel %vm3023, %v2974, 0
    %v3719 = vsel %vm3027, %v3006, 0
    %3721 = vmatprep.subr.bf16.mxu0 0
    %3722 = vmatpush1.bf16.msra.mxu0 %v3719
    %3723 = vmatprep.subr.bf16.mxu0 0
    %3724 = vmatpush1.bf16.msra.mxu0 0
    %3725 = vmatprep.subr.bf16.mxu0 0
    %3726 = vmatpush1.bf16.msra.mxu0 0
    %3727 = vmatprep.subr.bf16.mxu0 0
    %3728 = vmatpush1.bf16.msra.mxu0 0
    %3729 = vmatprep.subr.bf16.mxu0 0
    %3730 = vmatpush1.bf16.msra.mxu0 0
    %3731 = vmatprep.subr.bf16.mxu0 0
    %3732 = vmatpush1.bf16.msra.mxu0 0
    %3733 = vmatprep.subr.bf16.mxu0 0
    %3734 = vmatpush1.bf16.msra.mxu0 0
    %3735 = vmatprep.subr.bf16.mxu0 0
    %3736 = vmatpush1.bf16.msra.mxu0 0
    %3737 = vmatprep.subr.bf16.mxu0 0
    %3738 = vmatpush1.bf16.msra.mxu0 0
    %3739 = vmatprep.subr.bf16.mxu0 0
    %3740 = vmatpush1.bf16.msra.mxu0 0
    %3741 = vmatprep.subr.bf16.mxu0 0
    %3742 = vmatpush1.bf16.msra.mxu0 0
    %3743 = vmatprep.subr.bf16.mxu0 0
    %3744 = vmatpush1.bf16.msra.mxu0 0
    %3745 = vmatprep.subr.bf16.mxu0 0
    %3746 = vmatpush1.bf16.msra.mxu0 0
    %3747 = vmatprep.subr.bf16.mxu0 0
    %3748 = vmatpush1.bf16.msra.mxu0 0
    %3749 = vmatprep.subr.bf16.mxu0 0
    %3750 = vmatpush1.bf16.msra.mxu0 0
    %3751 = vmatprep.subr.bf16.mxu0 0
    %3752 = vmatpush1.bf16.msra.mxu0 0
    %3753 = vmatprep.mubr.bf16.mxu0 0
    %3754 = vmatmul.mubr.bf16.gmra.mrb[0].mxu0 %v3716
    %v3755 = vpop.f32.mrb[0].mxu0
    %v3756 = vadd.f32 0.0, %v3755
    %v3757 = vpop.f32.mrb[0].mxu0
    %v3758 = vpop.f32.mrb[0].mxu0
    %v3759 = vpop.f32.mrb[0].mxu0
    %3760 = vdwg.mxu0
    %v3762 = vsel %vm3023, %v2975, 0
    %v3765 = vsel %vm3027, %v3007, 0
    %3767 = vmatprep.subr.bf16.mxu0 0
    %3768 = vmatpush1.bf16.msra.mxu0 %v3765
    %3769 = vmatprep.subr.bf16.mxu0 0
    %3770 = vmatpush1.bf16.msra.mxu0 0
    %3771 = vmatprep.subr.bf16.mxu0 0
    %3772 = vmatpush1.bf16.msra.mxu0 0
    %3773 = vmatprep.subr.bf16.mxu0 0
    %3774 = vmatpush1.bf16.msra.mxu0 0
    %3775 = vmatprep.subr.bf16.mxu0 0
    %3776 = vmatpush1.bf16.msra.mxu0 0
    %3777 = vmatprep.subr.bf16.mxu0 0
    %3778 = vmatpush1.bf16.msra.mxu0 0
    %3779 = vmatprep.subr.bf16.mxu0 0
    %3780 = vmatpush1.bf16.msra.mxu0 0
    %3781 = vmatprep.subr.bf16.mxu0 0
    %3782 = vmatpush1.bf16.msra.mxu0 0
    %3783 = vmatprep.subr.bf16.mxu0 0
    %3784 = vmatpush1.bf16.msra.mxu0 0
    %3785 = vmatprep.subr.bf16.mxu0 0
    %3786 = vmatpush1.bf16.msra.mxu0 0
    %3787 = vmatprep.subr.bf16.mxu0 0
    %3788 = vmatpush1.bf16.msra.mxu0 0
    %3789 = vmatprep.subr.bf16.mxu0 0
    %3790 = vmatpush1.bf16.msra.mxu0 0
    %3791 = vmatprep.subr.bf16.mxu0 0
    %3792 = vmatpush1.bf16.msra.mxu0 0
    %3793 = vmatprep.subr.bf16.mxu0 0
    %3794 = vmatpush1.bf16.msra.mxu0 0
    %3795 = vmatprep.subr.bf16.mxu0 0
    %3796 = vmatpush1.bf16.msra.mxu0 0
    %3797 = vmatprep.subr.bf16.mxu0 0
    %3798 = vmatpush1.bf16.msra.mxu0 0
    %3799 = vmatprep.mubr.bf16.mxu0 0
    %3800 = vmatmul.mubr.bf16.gmra.mrb[0].mxu0 %v3762
    %v3801 = vpop.f32.mrb[0].mxu0
    %v3802 = vadd.f32 0.0, %v3801
    %v3803 = vpop.f32.mrb[0].mxu0
    %v3804 = vpop.f32.mrb[0].mxu0
    %v3805 = vpop.f32.mrb[0].mxu0
    %3806 = vdwg.mxu0
    %v3808 = vsel %vm3023, %v2976, 0
    %v3811 = vsel %vm3027, %v3008, 0
    %3813 = vmatprep.subr.bf16.mxu0 0
    %3814 = vmatpush1.bf16.msra.mxu0 %v3811
    %3815 = vmatprep.subr.bf16.mxu0 0
    %3816 = vmatpush1.bf16.msra.mxu0 0
    %3817 = vmatprep.subr.bf16.mxu0 0
    %3818 = vmatpush1.bf16.msra.mxu0 0
    %3819 = vmatprep.subr.bf16.mxu0 0
    %3820 = vmatpush1.bf16.msra.mxu0 0
    %3821 = vmatprep.subr.bf16.mxu0 0
    %3822 = vmatpush1.bf16.msra.mxu0 0
    %3823 = vmatprep.subr.bf16.mxu0 0
    %3824 = vmatpush1.bf16.msra.mxu0 0
    %3825 = vmatprep.subr.bf16.mxu0 0
    %3826 = vmatpush1.bf16.msra.mxu0 0
    %3827 = vmatprep.subr.bf16.mxu0 0
    %3828 = vmatpush1.bf16.msra.mxu0 0
    %3829 = vmatprep.subr.bf16.mxu0 0
    %3830 = vmatpush1.bf16.msra.mxu0 0
    %3831 = vmatprep.subr.bf16.mxu0 0
    %3832 = vmatpush1.bf16.msra.mxu0 0
    %3833 = vmatprep.subr.bf16.mxu0 0
    %3834 = vmatpush1.bf16.msra.mxu0 0
    %3835 = vmatprep.subr.bf16.mxu0 0
    %3836 = vmatpush1.bf16.msra.mxu0 0
    %3837 = vmatprep.subr.bf16.mxu0 0
    %3838 = vmatpush1.bf16.msra.mxu0 0
    %3839 = vmatprep.subr.bf16.mxu0 0
    %3840 = vmatpush1.bf16.msra.mxu0 0
    %3841 = vmatprep.subr.bf16.mxu0 0
    %3842 = vmatpush1.bf16.msra.mxu0 0
    %3843 = vmatprep.subr.bf16.mxu0 0
    %3844 = vmatpush1.bf16.msra.mxu0 0
    %3845 = vmatprep.mubr.bf16.mxu0 0
    %3846 = vmatmul.mubr.bf16.gmra.mrb[0].mxu0 %v3808
    %v3847 = vpop.f32.mrb[0].mxu0
    %v3848 = vadd.f32 0.0, %v3847
    %v3849 = vpop.f32.mrb[0].mxu0
    %v3850 = vpop.f32.mrb[0].mxu0
    %v3851 = vpop.f32.mrb[0].mxu0
    %3852 = vdwg.mxu0
    %v3854 = vsel %vm3023, %v2977, 0
    %v3857 = vsel %vm3027, %v3009, 0
    %3859 = vmatprep.subr.bf16.mxu0 0
    %3860 = vmatpush1.bf16.msra.mxu0 %v3857
    %3861 = vmatprep.subr.bf16.mxu0 0
    %3862 = vmatpush1.bf16.msra.mxu0 0
    %3863 = vmatprep.subr.bf16.mxu0 0
    %3864 = vmatpush1.bf16.msra.mxu0 0
    %3865 = vmatprep.subr.bf16.mxu0 0
    %3866 = vmatpush1.bf16.msra.mxu0 0
    %3867 = vmatprep.subr.bf16.mxu0 0
    %3868 = vmatpush1.bf16.msra.mxu0 0
    %3869 = vmatprep.subr.bf16.mxu0 0
    %3870 = vmatpush1.bf16.msra.mxu0 0
    %3871 = vmatprep.subr.bf16.mxu0 0
    %3872 = vmatpush1.bf16.msra.mxu0 0
    %3873 = vmatprep.subr.bf16.mxu0 0
    %3874 = vmatpush1.bf16.msra.mxu0 0
    %3875 = vmatprep.subr.bf16.mxu0 0
    %3876 = vmatpush1.bf16.msra.mxu0 0
    %3877 = vmatprep.subr.bf16.mxu0 0
    %3878 = vmatpush1.bf16.msra.mxu0 0
    %3879 = vmatprep.subr.bf16.mxu0 0
    %3880 = vmatpush1.bf16.msra.mxu0 0
    %3881 = vmatprep.subr.bf16.mxu0 0
    %3882 = vmatpush1.bf16.msra.mxu0 0
    %3883 = vmatprep.subr.bf16.mxu0 0
    %3884 = vmatpush1.bf16.msra.mxu0 0
    %3885 = vmatprep.subr.bf16.mxu0 0
    %3886 = vmatpush1.bf16.msra.mxu0 0
    %3887 = vmatprep.subr.bf16.mxu0 0
    %3888 = vmatpush1.bf16.msra.mxu0 0
    %3889 = vmatprep.subr.bf16.mxu0 0
    %3890 = vmatpush1.bf16.msra.mxu0 0
    %3891 = vmatprep.mubr.bf16.mxu0 0
    %3892 = vmatmul.mubr.bf16.gmra.mrb[0].mxu0 %v3854
    %v3893 = vpop.f32.mrb[0].mxu0
    %v3894 = vadd.f32 0.0, %v3893
    %v3895 = vpop.f32.mrb[0].mxu0
    %v3896 = vpop.f32.mrb[0].mxu0
    %v3897 = vpop.f32.mrb[0].mxu0
    %3898 = vdwg.mxu0
    %v3900 = vsel %vm3023, %v2978, 0
    %v3903 = vsel %vm3027, %v3010, 0
    %3905 = vmatprep.subr.bf16.mxu0 0
    %3906 = vmatpush1.bf16.msra.mxu0 %v3903
    %3907 = vmatprep.subr.bf16.mxu0 0
    %3908 = vmatpush1.bf16.msra.mxu0 0
    %3909 = vmatprep.subr.bf16.mxu0 0
    %3910 = vmatpush1.bf16.msra.mxu0 0
    %3911 = vmatprep.subr.bf16.mxu0 0
    %3912 = vmatpush1.bf16.msra.mxu0 0
    %3913 = vmatprep.subr.bf16.mxu0 0
    %3914 = vmatpush1.bf16.msra.mxu0 0
    %3915 = vmatprep.subr.bf16.mxu0 0
    %3916 = vmatpush1.bf16.msra.mxu0 0
    %3917 = vmatprep.subr.bf16.mxu0 0
    %3918 = vmatpush1.bf16.msra.mxu0 0
    %3919 = vmatprep.subr.bf16.mxu0 0
    %3920 = vmatpush1.bf16.msra.mxu0 0
    %3921 = vmatprep.subr.bf16.mxu0 0
    %3922 = vmatpush1.bf16.msra.mxu0 0
    %3923 = vmatprep.subr.bf16.mxu0 0
    %3924 = vmatpush1.bf16.msra.mxu0 0
    %3925 = vmatprep.subr.bf16.mxu0 0
    %3926 = vmatpush1.bf16.msra.mxu0 0
    %3927 = vmatprep.subr.bf16.mxu0 0
    %3928 = vmatpush1.bf16.msra.mxu0 0
    %3929 = vmatprep.subr.bf16.mxu0 0
    %3930 = vmatpush1.bf16.msra.mxu0 0
    %3931 = vmatprep.subr.bf16.mxu0 0
    %3932 = vmatpush1.bf16.msra.mxu0 0
    %3933 = vmatprep.subr.bf16.mxu0 0
    %3934 = vmatpush1.bf16.msra.mxu0 0
    %3935 = vmatprep.subr.bf16.mxu0 0
    %3936 = vmatpush1.bf16.msra.mxu0 0
    %3937 = vmatprep.mubr.bf16.mxu0 0
    %3938 = vmatmul.mubr.bf16.gmra.mrb[0].mxu0 %v3900
    %v3939 = vpop.f32.mrb[0].mxu0
    %v3940 = vadd.f32 0.0, %v3939
    %v3941 = vpop.f32.mrb[0].mxu0
    %v3942 = vpop.f32.mrb[0].mxu0
    %v3943 = vpop.f32.mrb[0].mxu0
    %3944 = vdwg.mxu0
    %v3946 = vsel %vm3023, %v2979, 0
    %v3949 = vsel %vm3027, %v3011, 0
    %3951 = vmatprep.subr.bf16.mxu0 0
    %3952 = vmatpush1.bf16.msra.mxu0 %v3949
    %3953 = vmatprep.subr.bf16.mxu0 0
    %3954 = vmatpush1.bf16.msra.mxu0 0
    %3955 = vmatprep.subr.bf16.mxu0 0
    %3956 = vmatpush1.bf16.msra.mxu0 0
    %3957 = vmatprep.subr.bf16.mxu0 0
    %3958 = vmatpush1.bf16.msra.mxu0 0
    %3959 = vmatprep.subr.bf16.mxu0 0
    %3960 = vmatpush1.bf16.msra.mxu0 0
    %3961 = vmatprep.subr.bf16.mxu0 0
    %3962 = vmatpush1.bf16.msra.mxu0 0
    %3963 = vmatprep.subr.bf16.mxu0 0
    %3964 = vmatpush1.bf16.msra.mxu0 0
    %3965 = vmatprep.subr.bf16.mxu0 0
    %3966 = vmatpush1.bf16.msra.mxu0 0
    %3967 = vmatprep.subr.bf16.mxu0 0
    %3968 = vmatpush1.bf16.msra.mxu0 0
    %3969 = vmatprep.subr.bf16.mxu0 0
    %3970 = vmatpush1.bf16.msra.mxu0 0
    %3971 = vmatprep.subr.bf16.mxu0 0
    %3972 = vmatpush1.bf16.msra.mxu0 0
    %3973 = vmatprep.subr.bf16.mxu0 0
    %3974 = vmatpush1.bf16.msra.mxu0 0
    %3975 = vmatprep.subr.bf16.mxu0 0
    %3976 = vmatpush1.bf16.msra.mxu0 0
    %3977 = vmatprep.subr.bf16.mxu0 0
    %3978 = vmatpush1.bf16.msra.mxu0 0
    %3979 = vmatprep.subr.bf16.mxu0 0
    %3980 = vmatpush1.bf16.msra.mxu0 0
    %3981 = vmatprep.subr.bf16.mxu0 0
    %3982 = vmatpush1.bf16.msra.mxu0 0
    %3983 = vmatprep.mubr.bf16.mxu0 0
    %3984 = vmatmul.mubr.bf16.gmra.mrb[0].mxu0 %v3946
    %v3985 = vpop.f32.mrb[0].mxu0
    %v3986 = vadd.f32 0.0, %v3985
    %v3987 = vpop.f32.mrb[0].mxu0
    %v3988 = vpop.f32.mrb[0].mxu0
    %v3989 = vpop.f32.mrb[0].mxu0
    %3990 = vdwg.mxu0
    %v3992 = vsel %vm3023, %v2980, 0
    %v3995 = vsel %vm3027, %v3012, 0
    %3997 = vmatprep.subr.bf16.mxu0 0
    %3998 = vmatpush1.bf16.msra.mxu0 %v3995
    %3999 = vmatprep.subr.bf16.mxu0 0
    %4000 = vmatpush1.bf16.msra.mxu0 0
    %4001 = vmatprep.subr.bf16.mxu0 0
    %4002 = vmatpush1.bf16.msra.mxu0 0
    %4003 = vmatprep.subr.bf16.mxu0 0
    %4004 = vmatpush1.bf16.msra.mxu0 0
    %4005 = vmatprep.subr.bf16.mxu0 0
    %4006 = vmatpush1.bf16.msra.mxu0 0
    %4007 = vmatprep.subr.bf16.mxu0 0
    %4008 = vmatpush1.bf16.msra.mxu0 0
    %4009 = vmatprep.subr.bf16.mxu0 0
    %4010 = vmatpush1.bf16.msra.mxu0 0
    %4011 = vmatprep.subr.bf16.mxu0 0
    %4012 = vmatpush1.bf16.msra.mxu0 0
    %4013 = vmatprep.subr.bf16.mxu0 0
    %4014 = vmatpush1.bf16.msra.mxu0 0
    %4015 = vmatprep.subr.bf16.mxu0 0
    %4016 = vmatpush1.bf16.msra.mxu0 0
    %4017 = vmatprep.subr.bf16.mxu0 0
    %4018 = vmatpush1.bf16.msra.mxu0 0
    %4019 = vmatprep.subr.bf16.mxu0 0
    %4020 = vmatpush1.bf16.msra.mxu0 0
    %4021 = vmatprep.subr.bf16.mxu0 0
    %4022 = vmatpush1.bf16.msra.mxu0 0
    %4023 = vmatprep.subr.bf16.mxu0 0
    %4024 = vmatpush1.bf16.msra.mxu0 0
    %4025 = vmatprep.subr.bf16.mxu0 0
    %4026 = vmatpush1.bf16.msra.mxu0 0
    %4027 = vmatprep.subr.bf16.mxu0 0
    %4028 = vmatpush1.bf16.msra.mxu0 0
    %4029 = vmatprep.mubr.bf16.mxu0 0
    %4030 = vmatmul.mubr.bf16.gmra.mrb[0].mxu0 %v3992
    %v4031 = vpop.f32.mrb[0].mxu0
    %v4032 = vadd.f32 0.0, %v4031
    %v4033 = vpop.f32.mrb[0].mxu0
    %v4034 = vpop.f32.mrb[0].mxu0
    %v4035 = vpop.f32.mrb[0].mxu0
    %4036 = vdwg.mxu0
    %v4038 = vsel %vm3023, %v2981, 0
    %v4041 = vsel %vm3027, %v3013, 0
    %4043 = vmatprep.subr.bf16.mxu0 0
    %4044 = vmatpush1.bf16.msra.mxu0 %v4041
    %4045 = vmatprep.subr.bf16.mxu0 0
    %4046 = vmatpush1.bf16.msra.mxu0 0
    %4047 = vmatprep.subr.bf16.mxu0 0
    %4048 = vmatpush1.bf16.msra.mxu0 0
    %4049 = vmatprep.subr.bf16.mxu0 0
    %4050 = vmatpush1.bf16.msra.mxu0 0
    %4051 = vmatprep.subr.bf16.mxu0 0
    %4052 = vmatpush1.bf16.msra.mxu0 0
    %4053 = vmatprep.subr.bf16.mxu0 0
    %4054 = vmatpush1.bf16.msra.mxu0 0
    %4055 = vmatprep.subr.bf16.mxu0 0
    %4056 = vmatpush1.bf16.msra.mxu0 0
    %4057 = vmatprep.subr.bf16.mxu0 0
    %4058 = vmatpush1.bf16.msra.mxu0 0
    %4059 = vmatprep.subr.bf16.mxu0 0
    %4060 = vmatpush1.bf16.msra.mxu0 0
    %4061 = vmatprep.subr.bf16.mxu0 0
    %4062 = vmatpush1.bf16.msra.mxu0 0
    %4063 = vmatprep.subr.bf16.mxu0 0
    %4064 = vmatpush1.bf16.msra.mxu0 0
    %4065 = vmatprep.subr.bf16.mxu0 0
    %4066 = vmatpush1.bf16.msra.mxu0 0
    %4067 = vmatprep.subr.bf16.mxu0 0
    %4068 = vmatpush1.bf16.msra.mxu0 0
    %4069 = vmatprep.subr.bf16.mxu0 0
    %4070 = vmatpush1.bf16.msra.mxu0 0
    %4071 = vmatprep.subr.bf16.mxu0 0
    %4072 = vmatpush1.bf16.msra.mxu0 0
    %4073 = vmatprep.subr.bf16.mxu0 0
    %4074 = vmatpush1.bf16.msra.mxu0 0
    %4075 = vmatprep.mubr.bf16.mxu0 0
    %4076 = vmatmul.mubr.bf16.gmra.mrb[0].mxu0 %v4038
    %v4077 = vpop.f32.mrb[0].mxu0
    %v4078 = vadd.f32 0.0, %v4077
    %v4079 = vpop.f32.mrb[0].mxu0
    %v4080 = vpop.f32.mrb[0].mxu0
    %v4081 = vpop.f32.mrb[0].mxu0
    %4082 = vdwg.mxu0
    %v4084 = vsel %vm3023, %v2982, 0
    %v4087 = vsel %vm3027, %v3014, 0
    %4089 = vmatprep.subr.bf16.mxu0 0
    %4090 = vmatpush1.bf16.msra.mxu0 %v4087
    %4091 = vmatprep.subr.bf16.mxu0 0
    %4092 = vmatpush1.bf16.msra.mxu0 0
    %4093 = vmatprep.subr.bf16.mxu0 0
    %4094 = vmatpush1.bf16.msra.mxu0 0
    %4095 = vmatprep.subr.bf16.mxu0 0
    %4096 = vmatpush1.bf16.msra.mxu0 0
    %4097 = vmatprep.subr.bf16.mxu0 0
    %4098 = vmatpush1.bf16.msra.mxu0 0
    %4099 = vmatprep.subr.bf16.mxu0 0
    %4100 = vmatpush1.bf16.msra.mxu0 0
    %4101 = vmatprep.subr.bf16.mxu0 0
    %4102 = vmatpush1.bf16.msra.mxu0 0
    %4103 = vmatprep.subr.bf16.mxu0 0
    %4104 = vmatpush1.bf16.msra.mxu0 0
    %4105 = vmatprep.subr.bf16.mxu0 0
    %4106 = vmatpush1.bf16.msra.mxu0 0
    %4107 = vmatprep.subr.bf16.mxu0 0
    %4108 = vmatpush1.bf16.msra.mxu0 0
    %4109 = vmatprep.subr.bf16.mxu0 0
    %4110 = vmatpush1.bf16.msra.mxu0 0
    %4111 = vmatprep.subr.bf16.mxu0 0
    %4112 = vmatpush1.bf16.msra.mxu0 0
    %4113 = vmatprep.subr.bf16.mxu0 0
    %4114 = vmatpush1.bf16.msra.mxu0 0
    %4115 = vmatprep.subr.bf16.mxu0 0
    %4116 = vmatpush1.bf16.msra.mxu0 0
    %4117 = vmatprep.subr.bf16.mxu0 0
    %4118 = vmatpush1.bf16.msra.mxu0 0
    %4119 = vmatprep.subr.bf16.mxu0 0
    %4120 = vmatpush1.bf16.msra.mxu0 0
    %4121 = vmatprep.mubr.bf16.mxu0 0
    %4122 = vmatmul.mubr.bf16.gmra.mrb[0].mxu0 %v4084
    %v4123 = vpop.f32.mrb[0].mxu0
    %v4124 = vadd.f32 0.0, %v4123
    %v4125 = vpop.f32.mrb[0].mxu0
    %v4126 = vpop.f32.mrb[0].mxu0
    %v4127 = vpop.f32.mrb[0].mxu0
    %4128 = vdwg.mxu0
    %v4130 = vsel %vm3023, %v2983, 0
    %v4133 = vsel %vm3027, %v3015, 0
    %4135 = vmatprep.subr.bf16.mxu0 0
    %4136 = vmatpush1.bf16.msra.mxu0 %v4133
    %4137 = vmatprep.subr.bf16.mxu0 0
    %4138 = vmatpush1.bf16.msra.mxu0 0
    %4139 = vmatprep.subr.bf16.mxu0 0
    %4140 = vmatpush1.bf16.msra.mxu0 0
    %4141 = vmatprep.subr.bf16.mxu0 0
    %4142 = vmatpush1.bf16.msra.mxu0 0
    %4143 = vmatprep.subr.bf16.mxu0 0
    %4144 = vmatpush1.bf16.msra.mxu0 0
    %4145 = vmatprep.subr.bf16.mxu0 0
    %4146 = vmatpush1.bf16.msra.mxu0 0
    %4147 = vmatprep.subr.bf16.mxu0 0
    %4148 = vmatpush1.bf16.msra.mxu0 0
    %4149 = vmatprep.subr.bf16.mxu0 0
    %4150 = vmatpush1.bf16.msra.mxu0 0
    %4151 = vmatprep.subr.bf16.mxu0 0
    %4152 = vmatpush1.bf16.msra.mxu0 0
    %4153 = vmatprep.subr.bf16.mxu0 0
    %4154 = vmatpush1.bf16.msra.mxu0 0
    %4155 = vmatprep.subr.bf16.mxu0 0
    %4156 = vmatpush1.bf16.msra.mxu0 0
    %4157 = vmatprep.subr.bf16.mxu0 0
    %4158 = vmatpush1.bf16.msra.mxu0 0
    %4159 = vmatprep.subr.bf16.mxu0 0
    %4160 = vmatpush1.bf16.msra.mxu0 0
    %4161 = vmatprep.subr.bf16.mxu0 0
    %4162 = vmatpush1.bf16.msra.mxu0 0
    %4163 = vmatprep.subr.bf16.mxu0 0
    %4164 = vmatpush1.bf16.msra.mxu0 0
    %4165 = vmatprep.subr.bf16.mxu0 0
    %4166 = vmatpush1.bf16.msra.mxu0 0
    %4167 = vmatprep.mubr.bf16.mxu0 0
    %4168 = vmatmul.mubr.bf16.gmra.mrb[0].mxu0 %v4130
    %v4169 = vpop.f32.mrb[0].mxu0
    %v4170 = vadd.f32 0.0, %v4169
    %v4171 = vpop.f32.mrb[0].mxu0
    %v4172 = vpop.f32.mrb[0].mxu0
    %v4173 = vpop.f32.mrb[0].mxu0
    %4174 = vdwg.mxu0
    %v4176 = vsel %vm3023, %v2984, 0
    %v4179 = vsel %vm3027, %v3016, 0
    %4181 = vmatprep.subr.bf16.mxu0 0
    %4182 = vmatpush1.bf16.msra.mxu0 %v4179
    %4183 = vmatprep.subr.bf16.mxu0 0
    %4184 = vmatpush1.bf16.msra.mxu0 0
    %4185 = vmatprep.subr.bf16.mxu0 0
    %4186 = vmatpush1.bf16.msra.mxu0 0
    %4187 = vmatprep.subr.bf16.mxu0 0
    %4188 = vmatpush1.bf16.msra.mxu0 0
    %4189 = vmatprep.subr.bf16.mxu0 0
    %4190 = vmatpush1.bf16.msra.mxu0 0
    %4191 = vmatprep.subr.bf16.mxu0 0
    %4192 = vmatpush1.bf16.msra.mxu0 0
    %4193 = vmatprep.subr.bf16.mxu0 0
    %4194 = vmatpush1.bf16.msra.mxu0 0
    %4195 = vmatprep.subr.bf16.mxu0 0
    %4196 = vmatpush1.bf16.msra.mxu0 0
    %4197 = vmatprep.subr.bf16.mxu0 0
    %4198 = vmatpush1.bf16.msra.mxu0 0
    %4199 = vmatprep.subr.bf16.mxu0 0
    %4200 = vmatpush1.bf16.msra.mxu0 0
    %4201 = vmatprep.subr.bf16.mxu0 0
    %4202 = vmatpush1.bf16.msra.mxu0 0
    %4203 = vmatprep.subr.bf16.mxu0 0
    %4204 = vmatpush1.bf16.msra.mxu0 0
    %4205 = vmatprep.subr.bf16.mxu0 0
    %4206 = vmatpush1.bf16.msra.mxu0 0
    %4207 = vmatprep.subr.bf16.mxu0 0
    %4208 = vmatpush1.bf16.msra.mxu0 0
    %4209 = vmatprep.subr.bf16.mxu0 0
    %4210 = vmatpush1.bf16.msra.mxu0 0
    %4211 = vmatprep.subr.bf16.mxu0 0
    %4212 = vmatpush1.bf16.msra.mxu0 0
    %4213 = vmatprep.mubr.bf16.mxu0 0
    %4214 = vmatmul.mubr.bf16.gmra.mrb[0].mxu0 %v4176
    %v4215 = vpop.f32.mrb[0].mxu0
    %v4216 = vadd.f32 0.0, %v4215
    %v4217 = vpop.f32.mrb[0].mxu0
    %v4218 = vpop.f32.mrb[0].mxu0
    %v4219 = vpop.f32.mrb[0].mxu0
    %4220 = vdwg.mxu0
    %v4222 = vsel %vm3023, %v2985, 0
    %v4225 = vsel %vm3027, %v3017, 0
    %4227 = vmatprep.subr.bf16.mxu0 0
    %4228 = vmatpush1.bf16.msra.mxu0 %v4225
    %4229 = vmatprep.subr.bf16.mxu0 0
    %4230 = vmatpush1.bf16.msra.mxu0 0
    %4231 = vmatprep.subr.bf16.mxu0 0
    %4232 = vmatpush1.bf16.msra.mxu0 0
    %4233 = vmatprep.subr.bf16.mxu0 0
    %4234 = vmatpush1.bf16.msra.mxu0 0
    %4235 = vmatprep.subr.bf16.mxu0 0
    %4236 = vmatpush1.bf16.msra.mxu0 0
    %4237 = vmatprep.subr.bf16.mxu0 0
    %4238 = vmatpush1.bf16.msra.mxu0 0
    %4239 = vmatprep.subr.bf16.mxu0 0
    %4240 = vmatpush1.bf16.msra.mxu0 0
    %4241 = vmatprep.subr.bf16.mxu0 0
    %4242 = vmatpush1.bf16.msra.mxu0 0
    %4243 = vmatprep.subr.bf16.mxu0 0
    %4244 = vmatpush1.bf16.msra.mxu0 0
    %4245 = vmatprep.subr.bf16.mxu0 0
    %4246 = vmatpush1.bf16.msra.mxu0 0
    %4247 = vmatprep.subr.bf16.mxu0 0
    %4248 = vmatpush1.bf16.msra.mxu0 0
    %4249 = vmatprep.subr.bf16.mxu0 0
    %4250 = vmatpush1.bf16.msra.mxu0 0
    %4251 = vmatprep.subr.bf16.mxu0 0
    %4252 = vmatpush1.bf16.msra.mxu0 0
    %4253 = vmatprep.subr.bf16.mxu0 0
    %4254 = vmatpush1.bf16.msra.mxu0 0
    %4255 = vmatprep.subr.bf16.mxu0 0
    %4256 = vmatpush1.bf16.msra.mxu0 0
    %4257 = vmatprep.subr.bf16.mxu0 0
    %4258 = vmatpush1.bf16.msra.mxu0 0
    %4259 = vmatprep.mubr.bf16.mxu0 0
    %4260 = vmatmul.mubr.bf16.gmra.mrb[0].mxu0 %v4222
    %v4261 = vpop.f32.mrb[0].mxu0
    %v4262 = vadd.f32 0.0, %v4261
    %v4263 = vpop.f32.mrb[0].mxu0
    %v4264 = vpop.f32.mrb[0].mxu0
    %v4265 = vpop.f32.mrb[0].mxu0
    %4266 = vdwg.mxu0
    %v4268 = vsel %vm3023, %v2986, 0
    %v4271 = vsel %vm3027, %v3018, 0
    %4273 = vmatprep.subr.bf16.mxu0 0
    %4274 = vmatpush1.bf16.msra.mxu0 %v4271
    %4275 = vmatprep.subr.bf16.mxu0 0
    %4276 = vmatpush1.bf16.msra.mxu0 0
    %4277 = vmatprep.subr.bf16.mxu0 0
    %4278 = vmatpush1.bf16.msra.mxu0 0
    %4279 = vmatprep.subr.bf16.mxu0 0
    %4280 = vmatpush1.bf16.msra.mxu0 0
    %4281 = vmatprep.subr.bf16.mxu0 0
    %4282 = vmatpush1.bf16.msra.mxu0 0
    %4283 = vmatprep.subr.bf16.mxu0 0
    %4284 = vmatpush1.bf16.msra.mxu0 0
    %4285 = vmatprep.subr.bf16.mxu0 0
    %4286 = vmatpush1.bf16.msra.mxu0 0
    %4287 = vmatprep.subr.bf16.mxu0 0
    %4288 = vmatpush1.bf16.msra.mxu0 0
    %4289 = vmatprep.subr.bf16.mxu0 0
    %4290 = vmatpush1.bf16.msra.mxu0 0
    %4291 = vmatprep.subr.bf16.mxu0 0
    %4292 = vmatpush1.bf16.msra.mxu0 0
    %4293 = vmatprep.subr.bf16.mxu0 0
    %4294 = vmatpush1.bf16.msra.mxu0 0
    %4295 = vmatprep.subr.bf16.mxu0 0
    %4296 = vmatpush1.bf16.msra.mxu0 0
    %4297 = vmatprep.subr.bf16.mxu0 0
    %4298 = vmatpush1.bf16.msra.mxu0 0
    %4299 = vmatprep.subr.bf16.mxu0 0
    %4300 = vmatpush1.bf16.msra.mxu0 0
    %4301 = vmatprep.subr.bf16.mxu0 0
    %4302 = vmatpush1.bf16.msra.mxu0 0
    %4303 = vmatprep.subr.bf16.mxu0 0
    %4304 = vmatpush1.bf16.msra.mxu0 0
    %4305 = vmatprep.mubr.bf16.mxu0 0
    %4306 = vmatmul.mubr.bf16.gmra.mrb[0].mxu0 %v4268
    %v4307 = vpop.f32.mrb[0].mxu0
    %v4308 = vadd.f32 0.0, %v4307
    %v4309 = vpop.f32.mrb[0].mxu0
    %v4310 = vpop.f32.mrb[0].mxu0
    %v4311 = vpop.f32.mrb[0].mxu0
    %4312 = vdwg.mxu0
    %v4314 = vsel %vm3023, %v2987, 0
    %v4317 = vsel %vm3027, %v3019, 0
    %4319 = vmatprep.subr.bf16.mxu0 0
    %4320 = vmatpush1.bf16.msra.mxu0 %v4317
    %4321 = vmatprep.subr.bf16.mxu0 0
    %4322 = vmatpush1.bf16.msra.mxu0 0
    %4323 = vmatprep.subr.bf16.mxu0 0
    %4324 = vmatpush1.bf16.msra.mxu0 0
    %4325 = vmatprep.subr.bf16.mxu0 0
    %4326 = vmatpush1.bf16.msra.mxu0 0
    %4327 = vmatprep.subr.bf16.mxu0 0
    %4328 = vmatpush1.bf16.msra.mxu0 0
    %4329 = vmatprep.subr.bf16.mxu0 0
    %4330 = vmatpush1.bf16.msra.mxu0 0
    %4331 = vmatprep.subr.bf16.mxu0 0
    %4332 = vmatpush1.bf16.msra.mxu0 0
    %4333 = vmatprep.subr.bf16.mxu0 0
    %4334 = vmatpush1.bf16.msra.mxu0 0
    %4335 = vmatprep.subr.bf16.mxu0 0
    %4336 = vmatpush1.bf16.msra.mxu0 0
    %4337 = vmatprep.subr.bf16.mxu0 0
    %4338 = vmatpush1.bf16.msra.mxu0 0
    %4339 = vmatprep.subr.bf16.mxu0 0
    %4340 = vmatpush1.bf16.msra.mxu0 0
    %4341 = vmatprep.subr.bf16.mxu0 0
    %4342 = vmatpush1.bf16.msra.mxu0 0
    %4343 = vmatprep.subr.bf16.mxu0 0
    %4344 = vmatpush1.bf16.msra.mxu0 0
    %4345 = vmatprep.subr.bf16.mxu0 0
    %4346 = vmatpush1.bf16.msra.mxu0 0
    %4347 = vmatprep.subr.bf16.mxu0 0
    %4348 = vmatpush1.bf16.msra.mxu0 0
    %4349 = vmatprep.subr.bf16.mxu0 0
    %4350 = vmatpush1.bf16.msra.mxu0 0
    %4351 = vmatprep.mubr.bf16.mxu0 0
    %4352 = vmatmul.mubr.bf16.gmra.mrb[0].mxu0 %v4314
    %v4353 = vpop.f32.mrb[0].mxu0
    %v4354 = vadd.f32 0.0, %v4353
    %v4355 = vpop.f32.mrb[0].mxu0
    %v4356 = vpop.f32.mrb[0].mxu0
    %v4357 = vpop.f32.mrb[0].mxu0
    %4358 = vdwg.mxu0
    %v4360 = vsel %vm3023, %v2988, 0
    %v4363 = vsel %vm3027, %v3020, 0
    %4365 = vmatprep.subr.bf16.mxu0 0
    %4366 = vmatpush1.bf16.msra.mxu0 %v4363
    %4367 = vmatprep.subr.bf16.mxu0 0
    %4368 = vmatpush1.bf16.msra.mxu0 0
    %4369 = vmatprep.subr.bf16.mxu0 0
    %4370 = vmatpush1.bf16.msra.mxu0 0
    %4371 = vmatprep.subr.bf16.mxu0 0
    %4372 = vmatpush1.bf16.msra.mxu0 0
    %4373 = vmatprep.subr.bf16.mxu0 0
    %4374 = vmatpush1.bf16.msra.mxu0 0
    %4375 = vmatprep.subr.bf16.mxu0 0
    %4376 = vmatpush1.bf16.msra.mxu0 0
    %4377 = vmatprep.subr.bf16.mxu0 0
    %4378 = vmatpush1.bf16.msra.mxu0 0
    %4379 = vmatprep.subr.bf16.mxu0 0
    %4380 = vmatpush1.bf16.msra.mxu0 0
    %4381 = vmatprep.subr.bf16.mxu0 0
    %4382 = vmatpush1.bf16.msra.mxu0 0
    %4383 = vmatprep.subr.bf16.mxu0 0
    %4384 = vmatpush1.bf16.msra.mxu0 0
    %4385 = vmatprep.subr.bf16.mxu0 0
    %4386 = vmatpush1.bf16.msra.mxu0 0
    %4387 = vmatprep.subr.bf16.mxu0 0
    %4388 = vmatpush1.bf16.msra.mxu0 0
    %4389 = vmatprep.subr.bf16.mxu0 0
    %4390 = vmatpush1.bf16.msra.mxu0 0
    %4391 = vmatprep.subr.bf16.mxu0 0
    %4392 = vmatpush1.bf16.msra.mxu0 0
    %4393 = vmatprep.subr.bf16.mxu0 0
    %4394 = vmatpush1.bf16.msra.mxu0 0
    %4395 = vmatprep.subr.bf16.mxu0 0
    %4396 = vmatpush1.bf16.msra.mxu0 0
    %4397 = vmatprep.mubr.bf16.mxu0 0
    %4398 = vmatmul.mubr.bf16.gmra.mrb[0].mxu0 %v4360
    %v4399 = vpop.f32.mrb[0].mxu0
    %v4400 = vadd.f32 0.0, %v4399
    %v4401 = vpop.f32.mrb[0].mxu0
    %v4402 = vpop.f32.mrb[0].mxu0
    %v4403 = vpop.f32.mrb[0].mxu0
    %4404 = vdwg.mxu0
    %v4406 = vsel %vm3023, %v2989, 0
    %v4409 = vsel %vm3027, %v3021, 0
    %4411 = vmatprep.subr.bf16.mxu0 0
    %4412 = vmatpush1.bf16.msra.mxu0 %v4409
    %4413 = vmatprep.subr.bf16.mxu0 0
    %4414 = vmatpush1.bf16.msra.mxu0 0
    %4415 = vmatprep.subr.bf16.mxu0 0
    %4416 = vmatpush1.bf16.msra.mxu0 0
    %4417 = vmatprep.subr.bf16.mxu0 0
    %4418 = vmatpush1.bf16.msra.mxu0 0
    %4419 = vmatprep.subr.bf16.mxu0 0
    %4420 = vmatpush1.bf16.msra.mxu0 0
    %4421 = vmatprep.subr.bf16.mxu0 0
    %4422 = vmatpush1.bf16.msra.mxu0 0
    %4423 = vmatprep.subr.bf16.mxu0 0
    %4424 = vmatpush1.bf16.msra.mxu0 0
    %4425 = vmatprep.subr.bf16.mxu0 0
    %4426 = vmatpush1.bf16.msra.mxu0 0
    %4427 = vmatprep.subr.bf16.mxu0 0
    %4428 = vmatpush1.bf16.msra.mxu0 0
    %4429 = vmatprep.subr.bf16.mxu0 0
    %4430 = vmatpush1.bf16.msra.mxu0 0
    %4431 = vmatprep.subr.bf16.mxu0 0
    %4432 = vmatpush1.bf16.msra.mxu0 0
    %4433 = vmatprep.subr.bf16.mxu0 0
    %4434 = vmatpush1.bf16.msra.mxu0 0
    %4435 = vmatprep.subr.bf16.mxu0 0
    %4436 = vmatpush1.bf16.msra.mxu0 0
    %4437 = vmatprep.subr.bf16.mxu0 0
    %4438 = vmatpush1.bf16.msra.mxu0 0
    %4439 = vmatprep.subr.bf16.mxu0 0
    %4440 = vmatpush1.bf16.msra.mxu0 0
    %4441 = vmatprep.subr.bf16.mxu0 0
    %4442 = vmatpush1.bf16.msra.mxu0 0
    %4443 = vmatprep.mubr.bf16.mxu0 0
    %4444 = vmatmul.mubr.bf16.gmra.mrb[0].mxu0 %v4406
    %v4445 = vpop.f32.mrb[0].mxu0
    %v4446 = vadd.f32 0.0, %v4445
    %v4447 = vpop.f32.mrb[0].mxu0
    %v4448 = vpop.f32.mrb[0].mxu0
    %v4449 = vpop.f32.mrb[0].mxu0
    %4450 = vdwg.mxu0
    %v4452 = vsel %vm3023, %v2990, 0
    %v4455 = vsel %vm3027, %v3022, 0
    %4457 = vmatprep.subr.bf16.mxu0 0
    %4458 = vmatpush1.bf16.msra.mxu0 %v4455
    %4459 = vmatprep.subr.bf16.mxu0 0
    %4460 = vmatpush1.bf16.msra.mxu0 0
    %4461 = vmatprep.subr.bf16.mxu0 0
    %4462 = vmatpush1.bf16.msra.mxu0 0
    %4463 = vmatprep.subr.bf16.mxu0 0
    %4464 = vmatpush1.bf16.msra.mxu0 0
    %4465 = vmatprep.subr.bf16.mxu0 0
    %4466 = vmatpush1.bf16.msra.mxu0 0
    %4467 = vmatprep.subr.bf16.mxu0 0
    %4468 = vmatpush1.bf16.msra.mxu0 0
    %4469 = vmatprep.subr.bf16.mxu0 0
    %4470 = vmatpush1.bf16.msra.mxu0 0
    %4471 = vmatprep.subr.bf16.mxu0 0
    %4472 = vmatpush1.bf16.msra.mxu0 0
    %4473 = vmatprep.subr.bf16.mxu0 0
    %4474 = vmatpush1.bf16.msra.mxu0 0
    %4475 = vmatprep.subr.bf16.mxu0 0
    %4476 = vmatpush1.bf16.msra.mxu0 0
    %4477 = vmatprep.subr.bf16.mxu0 0
    %4478 = vmatpush1.bf16.msra.mxu0 0
    %4479 = vmatprep.subr.bf16.mxu0 0
    %4480 = vmatpush1.bf16.msra.mxu0 0
    %4481 = vmatprep.subr.bf16.mxu0 0
    %4482 = vmatpush1.bf16.msra.mxu0 0
    %4483 = vmatprep.subr.bf16.mxu0 0
    %4484 = vmatpush1.bf16.msra.mxu0 0
    %4485 = vmatprep.subr.bf16.mxu0 0
    %4486 = vmatpush1.bf16.msra.mxu0 0
    %4487 = vmatprep.subr.bf16.mxu0 0
    %4488 = vmatpush1.bf16.msra.mxu0 0
    %4489 = vmatprep.mubr.bf16.mxu0 0
    %4490 = vmatmul.mubr.bf16.gmra.mrb[0].mxu0 %v4452
    %v4491 = vpop.f32.mrb[0].mxu0
    %v4492 = vadd.f32 0.0, %v4491
    %v4493 = vpop.f32.mrb[0].mxu0
    %v4494 = vpop.f32.mrb[0].mxu0
    %v4495 = vpop.f32.mrb[0].mxu0
    %4496 = vdwg.mxu0
    %v4529 = vcombine.low %v3066, %v3802
    %v4530 = vcombine.low %v3112, %v3848
    %v4531 = vcombine.low %v3158, %v3894
    %v4532 = vcombine.low %v3204, %v3940
    %v4533 = vcombine.low %v3250, %v3986
    %v4534 = vcombine.low %v3296, %v4032
    %v4535 = vcombine.low %v3342, %v4078
    %v4536 = vcombine.low %v3388, %v4124
    %v4537 = vcombine.low %v3434, %v4170
    %v4538 = vcombine.low %v3480, %v4216
    %v4539 = vcombine.low %v3526, %v4262
    %v4540 = vcombine.low %v3572, %v4308
    %v4541 = vcombine.low %v3618, %v4354
    %v4542 = vcombine.low %v3664, %v4400
    %v4543 = vcombine.low %v3710, %v4446
    %v4544 = vcombine.low %v3756, %v4492
    %v4545 = vcombine.low %v4529, %v4530
    %v4546 = vcombine.high %v4529, %v4530
    %v4547 = vcombine.low %v4531, %v4532
    %v4548 = vcombine.high %v4531, %v4532
    %v4549 = vcombine.low %v4533, %v4534
    %v4550 = vcombine.high %v4533, %v4534
    %v4551 = vcombine.low %v4535, %v4536
    %v4552 = vcombine.high %v4535, %v4536
    %v4553 = vcombine.low %v4537, %v4538
    %v4554 = vcombine.high %v4537, %v4538
    %v4555 = vcombine.low %v4539, %v4540
    %v4556 = vcombine.high %v4539, %v4540
    %v4557 = vcombine.low %v4541, %v4542
    %v4558 = vcombine.high %v4541, %v4542
    %v4559 = vcombine.low %v4543, %v4544
    %v4560 = vcombine.high %v4543, %v4544
    %v4577 = vpack.c.bf16 %v4547, %v4545
    %v4578 = vpack.c.bf16 %v4548, %v4546
    %v4579 = vpack.c.bf16 %v4551, %v4549
    %v4580 = vpack.c.bf16 %v4552, %v4550
    %v4581 = vpack.c.bf16 %v4555, %v4553
    %v4582 = vpack.c.bf16 %v4556, %v4554
    %v4583 = vpack.c.bf16 %v4559, %v4557
    %v4584 = vpack.c.bf16 %v4560, %v4558
    %v4585 = vld [vmem:[%s5] sm:$0x1]
    %v4587 = vlaneseq
    %v4588 = vshrl.u32 %v4587, 7
    %v4589 = vsub.s32 0, %v4588
    %v4590 = vrot.slane %v4585, %v4589
    %v4624 = vunpack.c.l.b16 %v287
    %v4625 = vunpack.c.l.b16 %v288
    %v4626 = vunpack.c.l.b16 %v289
    %v4627 = vunpack.c.l.b16 %v290
    %v4628 = vunpack.c.l.b16 %v291
    %v4629 = vunpack.c.l.b16 %v292
    %v4630 = vunpack.c.l.b16 %v293
    %v4631 = vunpack.c.l.b16 %v294
    %v4632 = vunpack.c.l.b16 %v295
    %v4633 = vunpack.c.l.b16 %v296
    %v4634 = vunpack.c.l.b16 %v297
    %v4635 = vunpack.c.l.b16 %v298
    %v4636 = vunpack.c.l.b16 %v299
    %v4637 = vunpack.c.l.b16 %v300
    %v4638 = vunpack.c.l.b16 %v301
    %v4639 = vunpack.c.l.b16 %v302
    %v4640 = vunpack.c.l.b16 %v303
    %v4641 = vunpack.c.l.b16 %v304
    %v4642 = vunpack.c.l.b16 %v305
    %v4643 = vunpack.c.l.b16 %v306
    %v4644 = vunpack.c.l.b16 %v307
    %v4645 = vunpack.c.l.b16 %v308
    %v4646 = vunpack.c.l.b16 %v309
    %v4647 = vunpack.c.l.b16 %v310
    %v4648 = vunpack.c.l.b16 %v311
    %v4649 = vunpack.c.l.b16 %v312
    %v4650 = vunpack.c.l.b16 %v313
    %v4651 = vunpack.c.l.b16 %v314
    %v4652 = vunpack.c.l.b16 %v315
    %v4653 = vunpack.c.l.b16 %v316
    %v4654 = vunpack.c.l.b16 %v317
    %v4655 = vunpack.c.l.b16 %v318
    %v4656 = vpack.c.b16 %v4625, %v4624
    %v4657 = vpack.c.b16 %v4627, %v4626
    %v4658 = vpack.c.b16 %v4629, %v4628
    %v4659 = vpack.c.b16 %v4631, %v4630
    %v4660 = vpack.c.b16 %v4633, %v4632
    %v4661 = vpack.c.b16 %v4635, %v4634
    %v4662 = vpack.c.b16 %v4637, %v4636
    %v4663 = vpack.c.b16 %v4639, %v4638
    %v4664 = vpack.c.b16 %v4641, %v4640
    %v4665 = vpack.c.b16 %v4643, %v4642
    %v4666 = vpack.c.b16 %v4645, %v4644
    %v4667 = vpack.c.b16 %v4647, %v4646
    %v4668 = vpack.c.b16 %v4649, %v4648
    %v4669 = vpack.c.b16 %v4651, %v4650
    %v4670 = vpack.c.b16 %v4653, %v4652
    %v4671 = vpack.c.b16 %v4655, %v4654
    %4688 = vmatprep.subr.bf16.mxu0 0
    %4689 = vmatpush1.bf16.msra.mxu0 %v4656
    %4690 = vmatprep.subr.bf16.mxu0 0
    %4691 = vmatpush1.bf16.msra.mxu0 %v4657
    %4692 = vmatprep.subr.bf16.mxu0 0
    %4693 = vmatpush1.bf16.msra.mxu0 %v4658
    %4694 = vmatprep.subr.bf16.mxu0 0
    %4695 = vmatpush1.bf16.msra.mxu0 %v4659
    %4696 = vmatprep.subr.bf16.mxu0 0
    %4697 = vmatpush1.bf16.msra.mxu0 %v4660
    %4698 = vmatprep.subr.bf16.mxu0 0
    %4699 = vmatpush1.bf16.msra.mxu0 %v4661
    %4700 = vmatprep.subr.bf16.mxu0 0
    %4701 = vmatpush1.bf16.msra.mxu0 %v4662
    %4702 = vmatprep.subr.bf16.mxu0 0
    %4703 = vmatpush1.bf16.msra.mxu0 %v4663
    %4704 = vmatprep.subr.bf16.mxu0 0
    %4705 = vmatpush1.bf16.msra.mxu0 %v4664
    %4706 = vmatprep.subr.bf16.mxu0 0
    %4707 = vmatpush1.bf16.msra.mxu0 %v4665
    %4708 = vmatprep.subr.bf16.mxu0 0
    %4709 = vmatpush1.bf16.msra.mxu0 %v4666
    %4710 = vmatprep.subr.bf16.mxu0 0
    %4711 = vmatpush1.bf16.msra.mxu0 %v4667
    %4712 = vmatprep.subr.bf16.mxu0 0
    %4713 = vmatpush1.bf16.msra.mxu0 %v4668
    %4714 = vmatprep.subr.bf16.mxu0 0
    %4715 = vmatpush1.bf16.msra.mxu0 %v4669
    %4716 = vmatprep.subr.bf16.mxu0 0
    %4717 = vmatpush1.bf16.msra.mxu0 %v4670
    %4718 = vmatprep.subr.bf16.mxu0 0
    %4719 = vmatpush1.bf16.msra.mxu0 %v4671
    %4720 = vmatprep.mubr.bf16.mxu0 %v4578
    %4721 = vmatmul.mubr.bf16.gmra.mrb[0].mxu0 %v4577
    %v4722 = vpop.f32.mrb[0].mxu0
    %v4723 = vadd.f32 %v4590, %v4722
    %v4724 = vpop.f32.mrb[0].mxu0
    %v4725 = vpop.f32.mrb[0].mxu0
    %v4726 = vadd.f32 %v4590, %v4725
    %v4727 = vpop.f32.mrb[0].mxu0
    %4728 = vmatprep.mubr.bf16.mxu0 %v4580
    %4729 = vmatmul.mubr.bf16.gmra.mrb[0].mxu0 %v4579
    %v4730 = vpop.f32.mrb[0].mxu0
    %v4731 = vadd.f32 %v4590, %v4730
    %v4732 = vpop.f32.mrb[0].mxu0
    %v4733 = vpop.f32.mrb[0].mxu0
    %v4734 = vadd.f32 %v4590, %v4733
    %v4735 = vpop.f32.mrb[0].mxu0
    %4736 = vmatprep.mubr.bf16.mxu0 %v4582
    %4737 = vmatmul.mubr.bf16.gmra.mrb[0].mxu0 %v4581
    %v4738 = vpop.f32.mrb[0].mxu0
    %v4739 = vadd.f32 %v4590, %v4738
    %v4740 = vpop.f32.mrb[0].mxu0
    %v4741 = vpop.f32.mrb[0].mxu0
    %v4742 = vadd.f32 %v4590, %v4741
    %v4743 = vpop.f32.mrb[0].mxu0
    %4744 = vmatprep.mubr.bf16.mxu0 %v4584
    %4745 = vmatmul.mubr.bf16.gmra.mrb[0].mxu0 %v4583
    %v4746 = vpop.f32.mrb[0].mxu0
    %v4747 = vadd.f32 %v4590, %v4746
    %v4748 = vpop.f32.mrb[0].mxu0
    %v4749 = vpop.f32.mrb[0].mxu0
    %v4750 = vadd.f32 %v4590, %v4749
    %v4751 = vpop.f32.mrb[0].mxu0
    %4752 = vdwg.mxu0
    %v4761 = vcombine.high %v4723, %v4723
    %v4762 = vcombine.high %v4726, %v4726
    %v4763 = vcombine.high %v4731, %v4731
    %v4764 = vcombine.high %v4734, %v4734
    %v4765 = vcombine.high %v4739, %v4739
    %v4766 = vcombine.high %v4742, %v4742
    %v4767 = vcombine.high %v4747, %v4747
    %v4768 = vcombine.high %v4750, %v4750
    %v4777 = vadd.f32 %v123, %v4723
    %v4778 = vadd.f32 %v124, %v4761
    %v4779 = vadd.f32 %v125, %v4726
    %v4780 = vadd.f32 %v126, %v4762
    %v4781 = vadd.f32 %v127, %v4731
    %v4782 = vadd.f32 %v128, %v4763
    %v4783 = vadd.f32 %v129, %v4734
    %v4784 = vadd.f32 %v130, %v4764
    %v4785 = vadd.f32 %v131, %v4739
    %v4786 = vadd.f32 %v132, %v4765
    %v4787 = vadd.f32 %v133, %v4742
    %v4788 = vadd.f32 %v134, %v4766
    %v4789 = vadd.f32 %v135, %v4747
    %v4790 = vadd.f32 %v136, %v4767
    %v4791 = vadd.f32 %v137, %v4750
    %v4792 = vadd.f32 %v138, %v4768
    %v4793 = vld [vmem:[%s10] sm:$0x1]
    %v4794 = vld [vmem:[%s11] sm:$0x1]
    %v4795 = vlaneseq
    %v4796 = vand.u32 %v4795, 127
    %vm4797 = vcmp.lt.s32.totalorder %v4796, 16
    %v4814 = vcombine.low %v4777, %v4778
    %v4815 = vcombine.low %v4779, %v4780
    %v4816 = vcombine.low %v4781, %v4782
    %v4817 = vcombine.low %v4783, %v4784
    %v4818 = vcombine.low %v4785, %v4786
    %v4819 = vcombine.low %v4787, %v4788
    %v4820 = vcombine.low %v4789, %v4790
    %v4821 = vcombine.low %v4791, %v4792
    %4830 = vadd.xlane.f32.xlu0 %v4814
    %v4831 = vpop.xlane.xlu0 %4830
    %4832 = vadd.xlane.f32.xlu0 %v4815
    %v4833 = vpop.xlane.xlu0 %4832
    %4834 = vadd.xlane.f32.xlu0 %v4816
    %v4835 = vpop.xlane.xlu0 %4834
    %4836 = vadd.xlane.f32.xlu0 %v4817
    %v4837 = vpop.xlane.xlu0 %4836
    %4838 = vadd.xlane.f32.xlu0 %v4818
    %v4839 = vpop.xlane.xlu0 %4838
    %4840 = vadd.xlane.f32.xlu0 %v4819
    %v4841 = vpop.xlane.xlu0 %4840
    %4842 = vadd.xlane.f32.xlu0 %v4820
    %v4843 = vpop.xlane.xlu0 %4842
    %4844 = vadd.xlane.f32.xlu0 %v4821
    %v4845 = vpop.xlane.xlu0 %4844
    %v4846 = vmul.f32 %v4831, 0.0625
    %v4847 = vmul.f32 %v4833, 0.0625
    %v4848 = vmul.f32 %v4835, 0.0625
    %v4849 = vmul.f32 %v4837, 0.0625
    %v4850 = vmul.f32 %v4839, 0.0625
    %v4851 = vmul.f32 %v4841, 0.0625
    %v4852 = vmul.f32 %v4843, 0.0625
    %v4853 = vmul.f32 %v4845, 0.0625
    %v4863 = vunpack.c.l.s4 839922192
    %v4864 = vunpack.c.0.s8 %v4863
    %v4865 = vlaneseq
    %v4866 = vshrl.u32 %v4865, 7
    %v4867 = vsub.s32 %v4864, %v4866
    %v4868 = vrot.slane %v4846, %v4867
    %v4870 = vunpack.c.l.s4 1985246804
    %v4871 = vunpack.c.0.s8 %v4870
    %v4872 = vlaneseq
    %v4873 = vshrl.u32 %v4872, 7
    %v4874 = vsub.s32 %v4871, %v4873
    %v4875 = vrot.slane %v4846, %v4874
    %v4877 = vunpack.c.l.s4 839922192
    %v4878 = vunpack.c.0.s8 %v4877
    %v4879 = vlaneseq
    %v4880 = vshrl.u32 %v4879, 7
    %v4881 = vsub.s32 %v4878, %v4880
    %v4882 = vrot.slane %v4847, %v4881
    %v4884 = vunpack.c.l.s4 1985246804
    %v4885 = vunpack.c.0.s8 %v4884
    %v4886 = vlaneseq
    %v4887 = vshrl.u32 %v4886, 7
    %v4888 = vsub.s32 %v4885, %v4887
    %v4889 = vrot.slane %v4847, %v4888
    %v4891 = vunpack.c.l.s4 839922192
    %v4892 = vunpack.c.0.s8 %v4891
    %v4893 = vlaneseq
    %v4894 = vshrl.u32 %v4893, 7
    %v4895 = vsub.s32 %v4892, %v4894
    %v4896 = vrot.slane %v4848, %v4895
    %v4898 = vunpack.c.l.s4 1985246804
    %v4899 = vunpack.c.0.s8 %v4898
    %v4900 = vlaneseq
    %v4901 = vshrl.u32 %v4900, 7
    %v4902 = vsub.s32 %v4899, %v4901
    %v4903 = vrot.slane %v4848, %v4902
    %v4905 = vunpack.c.l.s4 839922192
    %v4906 = vunpack.c.0.s8 %v4905
    %v4907 = vlaneseq
    %v4908 = vshrl.u32 %v4907, 7
    %v4909 = vsub.s32 %v4906, %v4908
    %v4910 = vrot.slane %v4849, %v4909
    %v4912 = vunpack.c.l.s4 1985246804
    %v4913 = vunpack.c.0.s8 %v4912
    %v4914 = vlaneseq
    %v4915 = vshrl.u32 %v4914, 7
    %v4916 = vsub.s32 %v4913, %v4915
    %v4917 = vrot.slane %v4849, %v4916
    %v4919 = vunpack.c.l.s4 839922192
    %v4920 = vunpack.c.0.s8 %v4919
    %v4921 = vlaneseq
    %v4922 = vshrl.u32 %v4921, 7
    %v4923 = vsub.s32 %v4920, %v4922
    %v4924 = vrot.slane %v4850, %v4923
    %v4926 = vunpack.c.l.s4 1985246804
    %v4927 = vunpack.c.0.s8 %v4926
    %v4928 = vlaneseq
    %v4929 = vshrl.u32 %v4928, 7
    %v4930 = vsub.s32 %v4927, %v4929
    %v4931 = vrot.slane %v4850, %v4930
    %v4933 = vunpack.c.l.s4 839922192
    %v4934 = vunpack.c.0.s8 %v4933
    %v4935 = vlaneseq
    %v4936 = vshrl.u32 %v4935, 7
    %v4937 = vsub.s32 %v4934, %v4936
    %v4938 = vrot.slane %v4851, %v4937
    %v4940 = vunpack.c.l.s4 1985246804
    %v4941 = vunpack.c.0.s8 %v4940
    %v4942 = vlaneseq
    %v4943 = vshrl.u32 %v4942, 7
    %v4944 = vsub.s32 %v4941, %v4943
    %v4945 = vrot.slane %v4851, %v4944
    %v4947 = vunpack.c.l.s4 839922192
    %v4948 = vunpack.c.0.s8 %v4947
    %v4949 = vlaneseq
    %v4950 = vshrl.u32 %v4949, 7
    %v4951 = vsub.s32 %v4948, %v4950
    %v4952 = vrot.slane %v4852, %v4951
    %v4954 = vunpack.c.l.s4 1985246804
    %v4955 = vunpack.c.0.s8 %v4954
    %v4956 = vlaneseq
    %v4957 = vshrl.u32 %v4956, 7
    %v4958 = vsub.s32 %v4955, %v4957
    %v4959 = vrot.slane %v4852, %v4958
    %v4961 = vunpack.c.l.s4 839922192
    %v4962 = vunpack.c.0.s8 %v4961
    %v4963 = vlaneseq
    %v4964 = vshrl.u32 %v4963, 7
    %v4965 = vsub.s32 %v4962, %v4964
    %v4966 = vrot.slane %v4853, %v4965
    %v4968 = vunpack.c.l.s4 1985246804
    %v4969 = vunpack.c.0.s8 %v4968
    %v4970 = vlaneseq
    %v4971 = vshrl.u32 %v4970, 7
    %v4972 = vsub.s32 %v4969, %v4971
    %v4973 = vrot.slane %v4853, %v4972
    %v4990 = vsub.f32 %v4777, %v4868
    %v4991 = vsub.f32 %v4778, %v4875
    %v4992 = vsub.f32 %v4779, %v4882
    %v4993 = vsub.f32 %v4780, %v4889
    %v4994 = vsub.f32 %v4781, %v4896
    %v4995 = vsub.f32 %v4782, %v4903
    %v4996 = vsub.f32 %v4783, %v4910
    %v4997 = vsub.f32 %v4784, %v4917
    %v4998 = vsub.f32 %v4785, %v4924
    %v4999 = vsub.f32 %v4786, %v4931
    %v5000 = vsub.f32 %v4787, %v4938
    %v5001 = vsub.f32 %v4788, %v4945
    %v5002 = vsub.f32 %v4789, %v4952
    %v5003 = vsub.f32 %v4790, %v4959
    %v5004 = vsub.f32 %v4791, %v4966
    %v5005 = vsub.f32 %v4792, %v4973
    %v5006 = vsel %vm4797, 1, 0
    %vm5007 = vcmp.eq.s32.totalorder %v5006, 1
    %v5024 = vcombine.low %v4990, %v4991
    %v5025 = vcombine.low %v4992, %v4993
    %v5026 = vcombine.low %v4994, %v4995
    %v5027 = vcombine.low %v4996, %v4997
    %v5028 = vcombine.low %v4998, %v4999
    %v5029 = vcombine.low %v5000, %v5001
    %v5030 = vcombine.low %v5002, %v5003
    %v5031 = vcombine.low %v5004, %v5005
    %v5040 = vsel %vm5007, %v5024, 0.0
    %v5041 = vsel %vm5007, %v5025, 0.0
    %v5042 = vsel %vm5007, %v5026, 0.0
    %v5043 = vsel %vm5007, %v5027, 0.0
    %v5044 = vsel %vm5007, %v5028, 0.0
    %v5045 = vsel %vm5007, %v5029, 0.0
    %v5046 = vsel %vm5007, %v5030, 0.0
    %v5047 = vsel %vm5007, %v5031, 0.0
    %v5048 = vmul.f32 %v5040, %v5040
    %v5049 = vmul.f32 %v5041, %v5041
    %v5050 = vmul.f32 %v5042, %v5042
    %v5051 = vmul.f32 %v5043, %v5043
    %v5052 = vmul.f32 %v5044, %v5044
    %v5053 = vmul.f32 %v5045, %v5045
    %v5054 = vmul.f32 %v5046, %v5046
    %v5055 = vmul.f32 %v5047, %v5047
    %5056 = vadd.xlane.f32.xlu0 %v5048
    %v5057 = vpop.xlane.xlu0 %5056
    %5058 = vadd.xlane.f32.xlu0 %v5049
    %v5059 = vpop.xlane.xlu0 %5058
    %5060 = vadd.xlane.f32.xlu0 %v5050
    %v5061 = vpop.xlane.xlu0 %5060
    %5062 = vadd.xlane.f32.xlu0 %v5051
    %v5063 = vpop.xlane.xlu0 %5062
    %5064 = vadd.xlane.f32.xlu0 %v5052
    %v5065 = vpop.xlane.xlu0 %5064
    %5066 = vadd.xlane.f32.xlu0 %v5053
    %v5067 = vpop.xlane.xlu0 %5066
    %5068 = vadd.xlane.f32.xlu0 %v5054
    %v5069 = vpop.xlane.xlu0 %5068
    %5070 = vadd.xlane.f32.xlu0 %v5055
    %v5071 = vpop.xlane.xlu0 %5070
    %v5072 = vmul.f32 %v5057, 0.0625
    %v5073 = vmul.f32 %v5059, 0.0625
    %v5074 = vmul.f32 %v5061, 0.0625
    %v5075 = vmul.f32 %v5063, 0.0625
    %v5076 = vmul.f32 %v5065, 0.0625
    %v5077 = vmul.f32 %v5067, 0.0625
    %v5078 = vmul.f32 %v5069, 0.0625
    %v5079 = vmul.f32 %v5071, 0.0625
    %v5080 = vadd.f32 %v5072, 1e-05
    %v5081 = vadd.f32 %v5073, 1e-05
    %v5082 = vadd.f32 %v5074, 1e-05
    %v5083 = vadd.f32 %v5075, 1e-05
    %v5084 = vadd.f32 %v5076, 1e-05
    %v5085 = vadd.f32 %v5077, 1e-05
    %v5086 = vadd.f32 %v5078, 1e-05
    %v5087 = vadd.f32 %v5079, 1e-05
    %v5088 = vrsqrt.pop %v5080
    %v5089 = vrsqrt.pop %v5081
    %v5090 = vrsqrt.pop %v5082
    %v5091 = vrsqrt.pop %v5083
    %v5092 = vrsqrt.pop %v5084
    %v5093 = vrsqrt.pop %v5085
    %v5094 = vrsqrt.pop %v5086
    %v5095 = vrsqrt.pop %v5087
    %v5096 = vmul.f32 %v5040, %v5088
    %v5097 = vmul.f32 %v5041, %v5089
    %v5098 = vmul.f32 %v5042, %v5090
    %v5099 = vmul.f32 %v5043, %v5091
    %v5100 = vmul.f32 %v5044, %v5092
    %v5101 = vmul.f32 %v5045, %v5093
    %v5102 = vmul.f32 %v5046, %v5094
    %v5103 = vmul.f32 %v5047, %v5095
    %v5105 = vlaneseq
    %v5106 = vshrl.u32 %v5105, 7
    %v5107 = vsub.s32 0, %v5106
    %v5108 = vrot.slane %v4793, %v5107
    %v5110 = vmul.f32 %v5096, %v5108
    %v5111 = vmul.f32 %v5097, %v5108
    %v5112 = vmul.f32 %v5098, %v5108
    %v5113 = vmul.f32 %v5099, %v5108
    %v5114 = vmul.f32 %v5100, %v5108
    %v5115 = vmul.f32 %v5101, %v5108
    %v5116 = vmul.f32 %v5102, %v5108
    %v5117 = vmul.f32 %v5103, %v5108
    %v5119 = vlaneseq
    %v5120 = vshrl.u32 %v5119, 7
    %v5121 = vsub.s32 0, %v5120
    %v5122 = vrot.slane %v4794, %v5121
    %v5124 = vadd.f32 %v5110, %v5122
    %v5125 = vadd.f32 %v5111, %v5122
    %v5126 = vadd.f32 %v5112, %v5122
    %v5127 = vadd.f32 %v5113, %v5122
    %v5128 = vadd.f32 %v5114, %v5122
    %v5129 = vadd.f32 %v5115, %v5122
    %v5130 = vadd.f32 %v5116, %v5122
    %v5131 = vadd.f32 %v5117, %v5122
    %v5132 = vpack.c.bf16 %v5125, %v5124
    %v5133 = vpack.c.bf16 %v5127, %v5126
    %v5134 = vpack.c.bf16 %v5129, %v5128
    %v5135 = vpack.c.bf16 %v5131, %v5130
    %v5136 = vld [vmem:[%s7] sm:$0x1]
    %v5138 = vlaneseq
    %v5139 = vshrl.u32 %v5138, 7
    %v5140 = vsub.s32 0, %v5139
    %v5141 = vrot.slane %v5136, %v5140
    %v5159 = vunpack.c.l.b16 %v319
    %v5160 = vunpack.c.l.b16 %v320
    %v5161 = vunpack.c.l.b16 %v321
    %v5162 = vunpack.c.l.b16 %v322
    %v5163 = vunpack.c.l.b16 %v323
    %v5164 = vunpack.c.l.b16 %v324
    %v5165 = vunpack.c.l.b16 %v325
    %v5166 = vunpack.c.l.b16 %v326
    %v5167 = vunpack.c.l.b16 %v327
    %v5168 = vunpack.c.l.b16 %v328
    %v5169 = vunpack.c.l.b16 %v329
    %v5170 = vunpack.c.l.b16 %v330
    %v5171 = vunpack.c.l.b16 %v331
    %v5172 = vunpack.c.l.b16 %v332
    %v5173 = vunpack.c.l.b16 %v333
    %v5174 = vunpack.c.l.b16 %v334
    %v5175 = vpack.c.b16 %v5160, %v5159
    %v5176 = vpack.c.b16 %v5162, %v5161
    %v5177 = vpack.c.b16 %v5164, %v5163
    %v5178 = vpack.c.b16 %v5166, %v5165
    %v5179 = vpack.c.b16 %v5168, %v5167
    %v5180 = vpack.c.b16 %v5170, %v5169
    %v5181 = vpack.c.b16 %v5172, %v5171
    %v5182 = vpack.c.b16 %v5174, %v5173
    %5191 = vmatprep.subr.bf16.mxu0 0
    %5192 = vmatpush1.bf16.msra.mxu0 %v5175
    %5193 = vmatprep.subr.bf16.mxu0 0
    %5194 = vmatpush1.bf16.msra.mxu0 %v5176
    %5195 = vmatprep.subr.bf16.mxu0 0
    %5196 = vmatpush1.bf16.msra.mxu0 %v5177
    %5197 = vmatprep.subr.bf16.mxu0 0
    %5198 = vmatpush1.bf16.msra.mxu0 %v5178
    %5199 = vmatprep.subr.bf16.mxu0 0
    %5200 = vmatpush1.bf16.msra.mxu0 %v5179
    %5201 = vmatprep.subr.bf16.mxu0 0
    %5202 = vmatpush1.bf16.msra.mxu0 %v5180
    %5203 = vmatprep.subr.bf16.mxu0 0
    %5204 = vmatpush1.bf16.msra.mxu0 %v5181
    %5205 = vmatprep.subr.bf16.mxu0 0
    %5206 = vmatpush1.bf16.msra.mxu0 %v5182
    %5207 = vmatprep.subr.bf16.mxu0 0
    %5208 = vmatpush1.bf16.msra.mxu0 0
    %5209 = vmatprep.subr.bf16.mxu0 0
    %5210 = vmatpush1.bf16.msra.mxu0 0
    %5211 = vmatprep.subr.bf16.mxu0 0
    %5212 = vmatpush1.bf16.msra.mxu0 0
    %5213 = vmatprep.subr.bf16.mxu0 0
    %5214 = vmatpush1.bf16.msra.mxu0 0
    %5215 = vmatprep.subr.bf16.mxu0 0
    %5216 = vmatpush1.bf16.msra.mxu0 0
    %5217 = vmatprep.subr.bf16.mxu0 0
    %5218 = vmatpush1.bf16.msra.mxu0 0
    %5219 = vmatprep.subr.bf16.mxu0 0
    %5220 = vmatpush1.bf16.msra.mxu0 0
    %5221 = vmatprep.subr.bf16.mxu0 0
    %5222 = vmatpush1.bf16.msra.mxu0 0
    %5223 = vmatprep.mubr.bf16.mxu0 0
    %5224 = vmatmul.mubr.bf16.gmra.mrb[0].mxu0 %v5132
    %v5225 = vpop.f32.mrb[0].mxu0
    %v5226 = vadd.f32 %v5141, %v5225
    %v5227 = vpop.f32.mrb[0].mxu0
    %v5228 = vpop.f32.mrb[0].mxu0
    %v5229 = vadd.f32 %v5141, %v5228
    %v5230 = vpop.f32.mrb[0].mxu0
    %5231 = vmatprep.mubr.bf16.mxu0 0
    %5232 = vmatmul.mubr.bf16.gmra.mrb[0].mxu0 %v5133
    %v5233 = vpop.f32.mrb[0].mxu0
    %v5234 = vadd.f32 %v5141, %v5233
    %v5235 = vpop.f32.mrb[0].mxu0
    %v5236 = vpop.f32.mrb[0].mxu0
    %v5237 = vadd.f32 %v5141, %v5236
    %v5238 = vpop.f32.mrb[0].mxu0
    %5239 = vmatprep.mubr.bf16.mxu0 0
    %5240 = vmatmul.mubr.bf16.gmra.mrb[0].mxu0 %v5134
    %v5241 = vpop.f32.mrb[0].mxu0
    %v5242 = vadd.f32 %v5141, %v5241
    %v5243 = vpop.f32.mrb[0].mxu0
    %v5244 = vpop.f32.mrb[0].mxu0
    %v5245 = vadd.f32 %v5141, %v5244
    %v5246 = vpop.f32.mrb[0].mxu0
    %5247 = vmatprep.mubr.bf16.mxu0 0
    %5248 = vmatmul.mubr.bf16.gmra.mrb[0].mxu0 %v5135
    %v5249 = vpop.f32.mrb[0].mxu0
    %v5250 = vadd.f32 %v5141, %v5249
    %v5251 = vpop.f32.mrb[0].mxu0
    %v5252 = vpop.f32.mrb[0].mxu0
    %v5253 = vadd.f32 %v5141, %v5252
    %v5254 = vpop.f32.mrb[0].mxu0
    %5255 = vdwg.mxu0
    %v5256 = vmax.f32 %v5226, 0.0
    %v5257 = vmax.f32 %v5229, 0.0
    %v5258 = vmax.f32 %v5234, 0.0
    %v5259 = vmax.f32 %v5237, 0.0
    %v5260 = vmax.f32 %v5242, 0.0
    %v5261 = vmax.f32 %v5245, 0.0
    %v5262 = vmax.f32 %v5250, 0.0
    %v5263 = vmax.f32 %v5253, 0.0
    %v5264 = vpack.c.bf16 %v5257, %v5256
    %v5265 = vpack.c.bf16 %v5259, %v5258
    %v5266 = vpack.c.bf16 %v5261, %v5260
    %v5267 = vpack.c.bf16 %v5263, %v5262
    %v5268 = vld [vmem:[%s9] sm:$0x1]
    %v5270 = vlaneseq
    %v5271 = vshrl.u32 %v5270, 7
    %v5272 = vsub.s32 0, %v5271
    %v5273 = vrot.slane %v5268, %v5272
    %v5291 = vunpack.c.l.b16 %v335
    %v5292 = vunpack.c.l.b16 %v336
    %v5293 = vunpack.c.l.b16 %v337
    %v5294 = vunpack.c.l.b16 %v338
    %v5295 = vunpack.c.l.b16 %v339
    %v5296 = vunpack.c.l.b16 %v340
    %v5297 = vunpack.c.l.b16 %v341
    %v5298 = vunpack.c.l.b16 %v342
    %v5299 = vunpack.c.l.b16 %v343
    %v5300 = vunpack.c.l.b16 %v344
    %v5301 = vunpack.c.l.b16 %v345
    %v5302 = vunpack.c.l.b16 %v346
    %v5303 = vunpack.c.l.b16 %v347
    %v5304 = vunpack.c.l.b16 %v348
    %v5305 = vunpack.c.l.b16 %v349
    %v5306 = vunpack.c.l.b16 %v350
    %v5307 = vpack.c.b16 %v5292, %v5291
    %v5308 = vpack.c.b16 %v5294, %v5293
    %v5309 = vpack.c.b16 %v5296, %v5295
    %v5310 = vpack.c.b16 %v5298, %v5297
    %v5311 = vpack.c.b16 %v5300, %v5299
    %v5312 = vpack.c.b16 %v5302, %v5301
    %v5313 = vpack.c.b16 %v5304, %v5303
    %v5314 = vpack.c.b16 %v5306, %v5305
    %5323 = vmatprep.subr.bf16.mxu0 0
    %5324 = vmatpush1.bf16.msra.mxu0 %v5307
    %5325 = vmatprep.subr.bf16.mxu0 0
    %5326 = vmatpush1.bf16.msra.mxu0 %v5308
    %5327 = vmatprep.subr.bf16.mxu0 0
    %5328 = vmatpush1.bf16.msra.mxu0 %v5309
    %5329 = vmatprep.subr.bf16.mxu0 0
    %5330 = vmatpush1.bf16.msra.mxu0 %v5310
    %5331 = vmatprep.subr.bf16.mxu0 0
    %5332 = vmatpush1.bf16.msra.mxu0 %v5311
    %5333 = vmatprep.subr.bf16.mxu0 0
    %5334 = vmatpush1.bf16.msra.mxu0 %v5312
    %5335 = vmatprep.subr.bf16.mxu0 0
    %5336 = vmatpush1.bf16.msra.mxu0 %v5313
    %5337 = vmatprep.subr.bf16.mxu0 0
    %5338 = vmatpush1.bf16.msra.mxu0 %v5314
    %5339 = vmatprep.subr.bf16.mxu0 0
    %5340 = vmatpush1.bf16.msra.mxu0 0
    %5341 = vmatprep.subr.bf16.mxu0 0
    %5342 = vmatpush1.bf16.msra.mxu0 0
    %5343 = vmatprep.subr.bf16.mxu0 0
    %5344 = vmatpush1.bf16.msra.mxu0 0
    %5345 = vmatprep.subr.bf16.mxu0 0
    %5346 = vmatpush1.bf16.msra.mxu0 0
    %5347 = vmatprep.subr.bf16.mxu0 0
    %5348 = vmatpush1.bf16.msra.mxu0 0
    %5349 = vmatprep.subr.bf16.mxu0 0
    %5350 = vmatpush1.bf16.msra.mxu0 0
    %5351 = vmatprep.subr.bf16.mxu0 0
    %5352 = vmatpush1.bf16.msra.mxu0 0
    %5353 = vmatprep.subr.bf16.mxu0 0
    %5354 = vmatpush1.bf16.msra.mxu0 0
    %5355 = vmatprep.mubr.bf16.mxu0 0
    %5356 = vmatmul.mubr.bf16.gmra.mrb[0].mxu0 %v5264
    %v5357 = vpop.f32.mrb[0].mxu0
    %v5358 = vadd.f32 %v5273, %v5357
    %v5359 = vpop.f32.mrb[0].mxu0
    %v5360 = vpop.f32.mrb[0].mxu0
    %v5361 = vadd.f32 %v5273, %v5360
    %v5362 = vpop.f32.mrb[0].mxu0
    %5363 = vmatprep.mubr.bf16.mxu0 0
    %5364 = vmatmul.mubr.bf16.gmra.mrb[0].mxu0 %v5265
    %v5365 = vpop.f32.mrb[0].mxu0
    %v5366 = vadd.f32 %v5273, %v5365
    %v5367 = vpop.f32.mrb[0].mxu0
    %v5368 = vpop.f32.mrb[0].mxu0
    %v5369 = vadd.f32 %v5273, %v5368
    %v5370 = vpop.f32.mrb[0].mxu0
    %5371 = vmatprep.mubr.bf16.mxu0 0
    %5372 = vmatmul.mubr.bf16.gmra.mrb[0].mxu0 %v5266
    %v5373 = vpop.f32.mrb[0].mxu0
    %v5374 = vadd.f32 %v5273, %v5373
    %v5375 = vpop.f32.mrb[0].mxu0
    %v5376 = vpop.f32.mrb[0].mxu0
    %v5377 = vadd.f32 %v5273, %v5376
    %v5378 = vpop.f32.mrb[0].mxu0
    %5379 = vmatprep.mubr.bf16.mxu0 0
    %5380 = vmatmul.mubr.bf16.gmra.mrb[0].mxu0 %v5267
    %v5381 = vpop.f32.mrb[0].mxu0
    %v5382 = vadd.f32 %v5273, %v5381
    %v5383 = vpop.f32.mrb[0].mxu0
    %v5384 = vpop.f32.mrb[0].mxu0
    %v5385 = vadd.f32 %v5273, %v5384
    %v5386 = vpop.f32.mrb[0].mxu0
    %5387 = vdwg.mxu0
    %v5388 = vadd.f32 %v5124, %v5358
    %v5389 = vadd.f32 %v5125, %v5361
    %v5390 = vadd.f32 %v5126, %v5366
    %v5391 = vadd.f32 %v5127, %v5369
    %v5392 = vadd.f32 %v5128, %v5374
    %v5393 = vadd.f32 %v5129, %v5377
    %v5394 = vadd.f32 %v5130, %v5382
    %v5395 = vadd.f32 %v5131, %v5385
    %v5396 = vld [vmem:[%s12] sm:$0x1]
    %v5397 = vld [vmem:[%s13] sm:$0x1]
    %5398 = vadd.xlane.f32.xlu0 %v5388
    %v5399 = vpop.xlane.xlu0 %5398
    %5400 = vadd.xlane.f32.xlu0 %v5389
    %v5401 = vpop.xlane.xlu0 %5400
    %5402 = vadd.xlane.f32.xlu0 %v5390
    %v5403 = vpop.xlane.xlu0 %5402
    %5404 = vadd.xlane.f32.xlu0 %v5391
    %v5405 = vpop.xlane.xlu0 %5404
    %5406 = vadd.xlane.f32.xlu0 %v5392
    %v5407 = vpop.xlane.xlu0 %5406
    %5408 = vadd.xlane.f32.xlu0 %v5393
    %v5409 = vpop.xlane.xlu0 %5408
    %5410 = vadd.xlane.f32.xlu0 %v5394
    %v5411 = vpop.xlane.xlu0 %5410
    %5412 = vadd.xlane.f32.xlu0 %v5395
    %v5413 = vpop.xlane.xlu0 %5412
    %v5414 = vmul.f32 %v5399, 0.0625
    %v5415 = vmul.f32 %v5401, 0.0625
    %v5416 = vmul.f32 %v5403, 0.0625
    %v5417 = vmul.f32 %v5405, 0.0625
    %v5418 = vmul.f32 %v5407, 0.0625
    %v5419 = vmul.f32 %v5409, 0.0625
    %v5420 = vmul.f32 %v5411, 0.0625
    %v5421 = vmul.f32 %v5413, 0.0625
    %v5422 = vsub.f32 %v5388, %v5414
    %v5423 = vsub.f32 %v5389, %v5415
    %v5424 = vsub.f32 %v5390, %v5416
    %v5425 = vsub.f32 %v5391, %v5417
    %v5426 = vsub.f32 %v5392, %v5418
    %v5427 = vsub.f32 %v5393, %v5419
    %v5428 = vsub.f32 %v5394, %v5420
    %v5429 = vsub.f32 %v5395, %v5421
    %v5430 = vsel %vm5007, %v5422, 0.0
    %v5431 = vsel %vm5007, %v5423, 0.0
    %v5432 = vsel %vm5007, %v5424, 0.0
    %v5433 = vsel %vm5007, %v5425, 0.0
    %v5434 = vsel %vm5007, %v5426, 0.0
    %v5435 = vsel %vm5007, %v5427, 0.0
    %v5436 = vsel %vm5007, %v5428, 0.0
    %v5437 = vsel %vm5007, %v5429, 0.0
    %v5438 = vmul.f32 %v5430, %v5430
    %v5439 = vmul.f32 %v5431, %v5431
    %v5440 = vmul.f32 %v5432, %v5432
    %v5441 = vmul.f32 %v5433, %v5433
    %v5442 = vmul.f32 %v5434, %v5434
    %v5443 = vmul.f32 %v5435, %v5435
    %v5444 = vmul.f32 %v5436, %v5436
    %v5445 = vmul.f32 %v5437, %v5437
    %5446 = vadd.xlane.f32.xlu0 %v5438
    %v5447 = vpop.xlane.xlu0 %5446
    %5448 = vadd.xlane.f32.xlu0 %v5439
    %v5449 = vpop.xlane.xlu0 %5448
    %5450 = vadd.xlane.f32.xlu0 %v5440
    %v5451 = vpop.xlane.xlu0 %5450
    %5452 = vadd.xlane.f32.xlu0 %v5441
    %v5453 = vpop.xlane.xlu0 %5452
    %5454 = vadd.xlane.f32.xlu0 %v5442
    %v5455 = vpop.xlane.xlu0 %5454
    %5456 = vadd.xlane.f32.xlu0 %v5443
    %v5457 = vpop.xlane.xlu0 %5456
    %5458 = vadd.xlane.f32.xlu0 %v5444
    %v5459 = vpop.xlane.xlu0 %5458
    %5460 = vadd.xlane.f32.xlu0 %v5445
    %v5461 = vpop.xlane.xlu0 %5460
    %v5462 = vmul.f32 %v5447, 0.0625
    %v5463 = vmul.f32 %v5449, 0.0625
    %v5464 = vmul.f32 %v5451, 0.0625
    %v5465 = vmul.f32 %v5453, 0.0625
    %v5466 = vmul.f32 %v5455, 0.0625
    %v5467 = vmul.f32 %v5457, 0.0625
    %v5468 = vmul.f32 %v5459, 0.0625
    %v5469 = vmul.f32 %v5461, 0.0625
    %v5470 = vadd.f32 %v5462, 1e-05
    %v5471 = vadd.f32 %v5463, 1e-05
    %v5472 = vadd.f32 %v5464, 1e-05
    %v5473 = vadd.f32 %v5465, 1e-05
    %v5474 = vadd.f32 %v5466, 1e-05
    %v5475 = vadd.f32 %v5467, 1e-05
    %v5476 = vadd.f32 %v5468, 1e-05
    %v5477 = vadd.f32 %v5469, 1e-05
    %v5478 = vrsqrt.pop %v5470
    %v5479 = vrsqrt.pop %v5471
    %v5480 = vrsqrt.pop %v5472
    %v5481 = vrsqrt.pop %v5473
    %v5482 = vrsqrt.pop %v5474
    %v5483 = vrsqrt.pop %v5475
    %v5484 = vrsqrt.pop %v5476
    %v5485 = vrsqrt.pop %v5477
    %v5486 = vmul.f32 %v5430, %v5478
    %v5487 = vmul.f32 %v5431, %v5479
    %v5488 = vmul.f32 %v5432, %v5480
    %v5489 = vmul.f32 %v5433, %v5481
    %v5490 = vmul.f32 %v5434, %v5482
    %v5491 = vmul.f32 %v5435, %v5483
    %v5492 = vmul.f32 %v5436, %v5484
    %v5493 = vmul.f32 %v5437, %v5485
    %v5495 = vlaneseq
    %v5496 = vshrl.u32 %v5495, 7
    %v5497 = vsub.s32 0, %v5496
    %v5498 = vrot.slane %v5396, %v5497
    %v5500 = vmul.f32 %v5486, %v5498
    %v5501 = vmul.f32 %v5487, %v5498
    %v5502 = vmul.f32 %v5488, %v5498
    %v5503 = vmul.f32 %v5489, %v5498
    %v5504 = vmul.f32 %v5490, %v5498
    %v5505 = vmul.f32 %v5491, %v5498
    %v5506 = vmul.f32 %v5492, %v5498
    %v5507 = vmul.f32 %v5493, %v5498
    %v5509 = vlaneseq
    %v5510 = vshrl.u32 %v5509, 7
    %v5511 = vsub.s32 0, %v5510
    %v5512 = vrot.slane %v5397, %v5511
    %v5514 = vadd.f32 %v5500, %v5512
    %v5515 = vadd.f32 %v5501, %v5512
    %v5516 = vadd.f32 %v5502, %v5512
    %v5517 = vadd.f32 %v5503, %v5512
    %v5518 = vadd.f32 %v5504, %v5512
    %v5519 = vadd.f32 %v5505, %v5512
    %v5520 = vadd.f32 %v5506, %v5512
    %v5521 = vadd.f32 %v5507, %v5512
    %s5522 = scalar_lea.vmem [#allocation5], 384
    %v5523 = vld [vmem:[%s5522] sm:$0xff]
    %v5524 = vld [vmem:[%s5522 + $0x8] sm:$0xff]
    %v5525 = vld [vmem:[%s5522 + $0x10] sm:$0xff]
    %v5526 = vld [vmem:[%s5522 + $0x18] sm:$0xff]
    %v5527 = vld [vmem:[%s5522 + $0x20] sm:$0xff]
    %v5528 = vld [vmem:[%s5522 + $0x28] sm:$0xff]
    %v5529 = vld [vmem:[%s5522 + $0x30] sm:$0xff]
    %v5530 = vld [vmem:[%s5522 + $0x38] sm:$0xff]
    %v5531 = vld [vmem:[%s5522 + $0x40] sm:$0xff]
    %v5532 = vld [vmem:[%s5522 + $0x48] sm:$0xff]
    %v5533 = vld [vmem:[%s5522 + $0x50] sm:$0xff]
    %v5534 = vld [vmem:[%s5522 + $0x58] sm:$0xff]
    %v5535 = vld [vmem:[%s5522 + $0x60] sm:$0xff]
    %v5536 = vld [vmem:[%s5522 + $0x68] sm:$0xff]
    %v5537 = vld [vmem:[%s5522 + $0x70] sm:$0xff]
    %v5538 = vld [vmem:[%s5522 + $0x78] sm:$0xff]
    %v5539 = vld [vmem:[%s5522 + $0x80] sm:$0xff]
    %v5540 = vld [vmem:[%s5522 + $0x88] sm:$0xff]
    %v5541 = vld [vmem:[%s5522 + $0x90] sm:$0xff]
    %v5542 = vld [vmem:[%s5522 + $0x98] sm:$0xff]
    %v5543 = vld [vmem:[%s5522 + $0xa0] sm:$0xff]
    %v5544 = vld [vmem:[%s5522 + $0xa8] sm:$0xff]
    %v5545 = vld [vmem:[%s5522 + $0xb0] sm:$0xff]
    %v5546 = vld [vmem:[%s5522 + $0xb8] sm:$0xff]
    %v5547 = vld [vmem:[%s5522 + $0xc0] sm:$0xff]
    %v5548 = vld [vmem:[%s5522 + $0xc8] sm:$0xff]
    %v5549 = vld [vmem:[%s5522 + $0xd0] sm:$0xff]
    %v5550 = vld [vmem:[%s5522 + $0xd8] sm:$0xff]
    %v5551 = vld [vmem:[%s5522 + $0xe0] sm:$0xff]
    %v5552 = vld [vmem:[%s5522 + $0xe8] sm:$0xff]
    %v5553 = vld [vmem:[%s5522 + $0xf0] sm:$0xff]
    %v5554 = vld [vmem:[%s5522 + $0xf8] sm:$0xff]
    %v5555 = vld [vmem:[%s5522 + $0x100] sm:$0xff]
    %v5556 = vld [vmem:[%s5522 + $0x108] sm:$0xff]
    %v5557 = vld [vmem:[%s5522 + $0x110] sm:$0xff]
    %v5558 = vld [vmem:[%s5522 + $0x118] sm:$0xff]
    %v5559 = vld [vmem:[%s5522 + $0x120] sm:$0xff]
    %v5560 = vld [vmem:[%s5522 + $0x128] sm:$0xff]
    %v5561 = vld [vmem:[%s5522 + $0x130] sm:$0xff]
    %v5562 = vld [vmem:[%s5522 + $0x138] sm:$0xff]
    %v5563 = vld [vmem:[%s5522 + $0x140] sm:$0xff]
    %v5564 = vld [vmem:[%s5522 + $0x148] sm:$0xff]
    %v5565 = vld [vmem:[%s5522 + $0x150] sm:$0xff]
    %v5566 = vld [vmem:[%s5522 + $0x158] sm:$0xff]
    %v5567 = vld [vmem:[%s5522 + $0x160] sm:$0xff]
    %v5568 = vld [vmem:[%s5522 + $0x168] sm:$0xff]
    %v5569 = vld [vmem:[%s5522 + $0x170] sm:$0xff]
    %v5570 = vld [vmem:[%s5522 + $0x178] sm:$0xff]
    %s5571 = scalar_lea.vmem [#allocation7], 128
    %v5572 = vld [vmem:[%s5571] sm:$0xf]
    %v5573 = vld [vmem:[%s5571 + $0x4] sm:$0xf]
    %v5574 = vld [vmem:[%s5571 + $0x8] sm:$0xf]
    %v5575 = vld [vmem:[%s5571 + $0xc] sm:$0xf]
    %v5576 = vld [vmem:[%s5571 + $0x10] sm:$0xf]
    %v5577 = vld [vmem:[%s5571 + $0x14] sm:$0xf]
    %v5578 = vld [vmem:[%s5571 + $0x18] sm:$0xf]
    %v5579 = vld [vmem:[%s5571 + $0x1c] sm:$0xf]
    %v5580 = vld [vmem:[%s5571 + $0x20] sm:$0xf]
    %v5581 = vld [vmem:[%s5571 + $0x24] sm:$0xf]
    %v5582 = vld [vmem:[%s5571 + $0x28] sm:$0xf]
    %v5583 = vld [vmem:[%s5571 + $0x2c] sm:$0xf]
    %v5584 = vld [vmem:[%s5571 + $0x30] sm:$0xf]
    %v5585 = vld [vmem:[%s5571 + $0x34] sm:$0xf]
    %v5586 = vld [vmem:[%s5571 + $0x38] sm:$0xf]
    %v5587 = vld [vmem:[%s5571 + $0x3c] sm:$0xf]
    %v5588 = vld [vmem:[%s5571 + $0x40] sm:$0xf]
    %v5589 = vld [vmem:[%s5571 + $0x44] sm:$0xf]
    %v5590 = vld [vmem:[%s5571 + $0x48] sm:$0xf]
    %v5591 = vld [vmem:[%s5571 + $0x4c] sm:$0xf]
    %v5592 = vld [vmem:[%s5571 + $0x50] sm:$0xf]
    %v5593 = vld [vmem:[%s5571 + $0x54] sm:$0xf]
    %v5594 = vld [vmem:[%s5571 + $0x58] sm:$0xf]
    %v5595 = vld [vmem:[%s5571 + $0x5c] sm:$0xf]
    %v5596 = vld [vmem:[%s5571 + $0x60] sm:$0xf]
    %v5597 = vld [vmem:[%s5571 + $0x64] sm:$0xf]
    %v5598 = vld [vmem:[%s5571 + $0x68] sm:$0xf]
    %v5599 = vld [vmem:[%s5571 + $0x6c] sm:$0xf]
    %v5600 = vld [vmem:[%s5571 + $0x70] sm:$0xf]
    %v5601 = vld [vmem:[%s5571 + $0x74] sm:$0xf]
    %v5602 = vld [vmem:[%s5571 + $0x78] sm:$0xf]
    %v5603 = vld [vmem:[%s5571 + $0x7c] sm:$0xf]
    %s5604 = scalar_lea.vmem [#allocation8], 64
    %v5605 = vld [vmem:[%s5604] sm:$0xf]
    %v5606 = vld [vmem:[%s5604 + $0x4] sm:$0xf]
    %v5607 = vld [vmem:[%s5604 + $0x8] sm:$0xf]
    %v5608 = vld [vmem:[%s5604 + $0xc] sm:$0xf]
    %v5609 = vld [vmem:[%s5604 + $0x10] sm:$0xf]
    %v5610 = vld [vmem:[%s5604 + $0x14] sm:$0xf]
    %v5611 = vld [vmem:[%s5604 + $0x18] sm:$0xf]
    %v5612 = vld [vmem:[%s5604 + $0x1c] sm:$0xf]
    %v5613 = vld [vmem:[%s5604 + $0x20] sm:$0xf]
    %v5614 = vld [vmem:[%s5604 + $0x24] sm:$0xf]
    %v5615 = vld [vmem:[%s5604 + $0x28] sm:$0xf]
    %v5616 = vld [vmem:[%s5604 + $0x2c] sm:$0xf]
    %v5617 = vld [vmem:[%s5604 + $0x30] sm:$0xf]
    %v5618 = vld [vmem:[%s5604 + $0x34] sm:$0xf]
    %v5619 = vld [vmem:[%s5604 + $0x38] sm:$0xf]
    %v5620 = vld [vmem:[%s5604 + $0x3c] sm:$0xf]
    %s5621 = scalar_lea.vmem [#allocation10], 64
    %v5622 = vld [vmem:[%s5621] sm:$0xf]
    %v5623 = vld [vmem:[%s5621 + $0x4] sm:$0xf]
    %v5624 = vld [vmem:[%s5621 + $0x8] sm:$0xf]
    %v5625 = vld [vmem:[%s5621 + $0xc] sm:$0xf]
    %v5626 = vld [vmem:[%s5621 + $0x10] sm:$0xf]
    %v5627 = vld [vmem:[%s5621 + $0x14] sm:$0xf]
    %v5628 = vld [vmem:[%s5621 + $0x18] sm:$0xf]
    %v5629 = vld [vmem:[%s5621 + $0x1c] sm:$0xf]
    %v5630 = vld [vmem:[%s5621 + $0x20] sm:$0xf]
    %v5631 = vld [vmem:[%s5621 + $0x24] sm:$0xf]
    %v5632 = vld [vmem:[%s5621 + $0x28] sm:$0xf]
    %v5633 = vld [vmem:[%s5621 + $0x2c] sm:$0xf]
    %v5634 = vld [vmem:[%s5621 + $0x30] sm:$0xf]
    %v5635 = vld [vmem:[%s5621 + $0x34] sm:$0xf]
    %v5636 = vld [vmem:[%s5621 + $0x38] sm:$0xf]
    %v5637 = vld [vmem:[%s5621 + $0x3c] sm:$0xf]
    %v5638 = vpack.c.bf16 %v5515, %v5514
    %v5639 = vpack.c.bf16 %v5517, %v5516
    %v5640 = vpack.c.bf16 %v5519, %v5518
    %v5641 = vpack.c.bf16 %v5521, %v5520
    %s5642 = scalar_lea.vmem %s3, 6
    %v5643 = vld [vmem:[%s5642] sm:$0x3f]
    %v5645 = vlaneseq
    %v5646 = vshrl.u32 %v5645, 7
    %v5647 = vsub.s32 0, %v5646
    %v5648 = vrot.slane %v5643, %v5647
    %v5649 = vlaneseq
    %v5650 = vshrl.u32 %v5649, 7
    %v5651 = vsub.s32 1, %v5650
    %v5652 = vrot.slane %v5643, %v5651
    %v5653 = vlaneseq
    %v5654 = vshrl.u32 %v5653, 7
    %v5655 = vsub.s32 2, %v5654
    %v5656 = vrot.slane %v5643, %v5655
    %v5657 = vlaneseq
    %v5658 = vshrl.u32 %v5657, 7
    %v5659 = vsub.s32 3, %v5658
    %v5660 = vrot.slane %v5643, %v5659
    %v5661 = vlaneseq
    %v5662 = vshrl.u32 %v5661, 7
    %v5663 = vsub.s32 4, %v5662
    %v5664 = vrot.slane %v5643, %v5663
    %v5665 = vlaneseq
    %v5666 = vshrl.u32 %v5665, 7
    %v5667 = vsub.s32 5, %v5666
    %v5668 = vrot.slane %v5643, %v5667
    %v5723 = vunpack.c.l.b16 %v5523
    %v5724 = vunpack.c.h.b16 %v5523
    %v5725 = vunpack.c.l.b16 %v5524
    %v5726 = vunpack.c.h.b16 %v5524
    %v5727 = vunpack.c.l.b16 %v5525
    %v5728 = vunpack.c.h.b16 %v5525
    %v5729 = vunpack.c.l.b16 %v5526
    %v5730 = vunpack.c.h.b16 %v5526
    %v5731 = vunpack.c.l.b16 %v5527
    %v5732 = vunpack.c.h.b16 %v5527
    %v5733 = vunpack.c.l.b16 %v5528
    %v5734 = vunpack.c.h.b16 %v5528
    %v5735 = vunpack.c.l.b16 %v5529
    %v5736 = vunpack.c.h.b16 %v5529
    %v5737 = vunpack.c.l.b16 %v5530
    %v5738 = vunpack.c.h.b16 %v5530
    %v5739 = vunpack.c.l.b16 %v5531
    %v5740 = vunpack.c.h.b16 %v5531
    %v5741 = vunpack.c.l.b16 %v5532
    %v5742 = vunpack.c.h.b16 %v5532
    %v5743 = vunpack.c.l.b16 %v5533
    %v5744 = vunpack.c.h.b16 %v5533
    %v5745 = vunpack.c.l.b16 %v5534
    %v5746 = vunpack.c.h.b16 %v5534
    %v5747 = vunpack.c.l.b16 %v5535
    %v5748 = vunpack.c.h.b16 %v5535
    %v5749 = vunpack.c.l.b16 %v5536
    %v5750 = vunpack.c.h.b16 %v5536
    %v5751 = vunpack.c.l.b16 %v5537
    %v5752 = vunpack.c.h.b16 %v5537
    %v5753 = vunpack.c.l.b16 %v5538
    %v5754 = vunpack.c.h.b16 %v5538
    %v5755 = vunpack.c.l.b16 %v5539
    %v5756 = vunpack.c.h.b16 %v5539
    %v5757 = vunpack.c.l.b16 %v5540
    %v5758 = vunpack.c.h.b16 %v5540
    %v5759 = vunpack.c.l.b16 %v5541
    %v5760 = vunpack.c.h.b16 %v5541
    %v5761 = vunpack.c.l.b16 %v5542
    %v5762 = vunpack.c.h.b16 %v5542
    %v5763 = vunpack.c.l.b16 %v5543
    %v5764 = vunpack.c.h.b16 %v5543
    %v5765 = vunpack.c.l.b16 %v5544
    %v5766 = vunpack.c.h.b16 %v5544
    %v5767 = vunpack.c.l.b16 %v5545
    %v5768 = vunpack.c.h.b16 %v5545
    %v5769 = vunpack.c.l.b16 %v5546
    %v5770 = vunpack.c.h.b16 %v5546
    %v5771 = vunpack.c.l.b16 %v5547
    %v5772 = vunpack.c.h.b16 %v5547
    %v5773 = vunpack.c.l.b16 %v5548
    %v5774 = vunpack.c.h.b16 %v5548
    %v5775 = vunpack.c.l.b16 %v5549
    %v5776 = vunpack.c.h.b16 %v5549
    %v5777 = vunpack.c.l.b16 %v5550
    %v5778 = vunpack.c.h.b16 %v5550
    %v5779 = vunpack.c.l.b16 %v5551
    %v5780 = vunpack.c.h.b16 %v5551
    %v5781 = vunpack.c.l.b16 %v5552
    %v5782 = vunpack.c.h.b16 %v5552
    %v5783 = vunpack.c.l.b16 %v5553
    %v5784 = vunpack.c.h.b16 %v5553
    %v5785 = vunpack.c.l.b16 %v5554
    %v5786 = vunpack.c.h.b16 %v5554
    %v5787 = vunpack.c.l.b16 %v5555
    %v5788 = vunpack.c.h.b16 %v5555
    %v5789 = vunpack.c.l.b16 %v5556
    %v5790 = vunpack.c.h.b16 %v5556
    %v5791 = vunpack.c.l.b16 %v5557
    %v5792 = vunpack.c.h.b16 %v5557
    %v5793 = vunpack.c.l.b16 %v5558
    %v5794 = vunpack.c.h.b16 %v5558
    %v5795 = vunpack.c.l.b16 %v5559
    %v5796 = vunpack.c.h.b16 %v5559
    %v5797 = vunpack.c.l.b16 %v5560
    %v5798 = vunpack.c.h.b16 %v5560
    %v5799 = vunpack.c.l.b16 %v5561
    %v5800 = vunpack.c.h.b16 %v5561
    %v5801 = vunpack.c.l.b16 %v5562
    %v5802 = vunpack.c.h.b16 %v5562
    %v5803 = vunpack.c.l.b16 %v5563
    %v5804 = vunpack.c.h.b16 %v5563
    %v5805 = vunpack.c.l.b16 %v5564
    %v5806 = vunpack.c.h.b16 %v5564
    %v5807 = vunpack.c.l.b16 %v5565
    %v5808 = vunpack.c.h.b16 %v5565
    %v5809 = vunpack.c.l.b16 %v5566
    %v5810 = vunpack.c.h.b16 %v5566
    %v5811 = vunpack.c.l.b16 %v5567
    %v5812 = vunpack.c.h.b16 %v5567
    %v5813 = vunpack.c.l.b16 %v5568
    %v5814 = vunpack.c.h.b16 %v5568
    %v5815 = vunpack.c.l.b16 %v5569
    %v5816 = vunpack.c.h.b16 %v5569
    %v5817 = vunpack.c.l.b16 %v5570
    %v5818 = vunpack.c.h.b16 %v5570
    %v5819 = vpack.c.b16 %v5729, %v5723
    %v5820 = vpack.c.b16 %v5730, %v5724
    %v5821 = vpack.c.b16 %v5731, %v5725
    %v5822 = vpack.c.b16 %v5732, %v5726
    %v5823 = vpack.c.b16 %v5733, %v5727
    %v5824 = vpack.c.b16 %v5734, %v5728
    %v5825 = vpack.c.b16 %v5741, %v5735
    %v5826 = vpack.c.b16 %v5742, %v5736
    %v5827 = vpack.c.b16 %v5743, %v5737
    %v5828 = vpack.c.b16 %v5744, %v5738
    %v5829 = vpack.c.b16 %v5745, %v5739
    %v5830 = vpack.c.b16 %v5746, %v5740
    %v5831 = vpack.c.b16 %v5753, %v5747
    %v5832 = vpack.c.b16 %v5754, %v5748
    %v5833 = vpack.c.b16 %v5755, %v5749
    %v5834 = vpack.c.b16 %v5756, %v5750
    %v5835 = vpack.c.b16 %v5757, %v5751
    %v5836 = vpack.c.b16 %v5758, %v5752
    %v5837 = vpack.c.b16 %v5765, %v5759
    %v5838 = vpack.c.b16 %v5766, %v5760
    %v5839 = vpack.c.b16 %v5767, %v5761
    %v5840 = vpack.c.b16 %v5768, %v5762
    %v5841 = vpack.c.b16 %v5769, %v5763
    %v5842 = vpack.c.b16 %v5770, %v5764
    %v5843 = vpack.c.b16 %v5777, %v5771
    %v5844 = vpack.c.b16 %v5778, %v5772
    %v5845 = vpack.c.b16 %v5779, %v5773
    %v5846 = vpack.c.b16 %v5780, %v5774
    %v5847 = vpack.c.b16 %v5781, %v5775
    %v5848 = vpack.c.b16 %v5782, %v5776
    %v5849 = vpack.c.b16 %v5789, %v5783
    %v5850 = vpack.c.b16 %v5790, %v5784
    %v5851 = vpack.c.b16 %v5791, %v5785
    %v5852 = vpack.c.b16 %v5792, %v5786
    %v5853 = vpack.c.b16 %v5793, %v5787
    %v5854 = vpack.c.b16 %v5794, %v5788
    %v5855 = vpack.c.b16 %v5801, %v5795
    %v5856 = vpack.c.b16 %v5802, %v5796
    %v5857 = vpack.c.b16 %v5803, %v5797
    %v5858 = vpack.c.b16 %v5804, %v5798
    %v5859 = vpack.c.b16 %v5805, %v5799
    %v5860 = vpack.c.b16 %v5806, %v5800
    %v5861 = vpack.c.b16 %v5813, %v5807
    %v5862 = vpack.c.b16 %v5814, %v5808
    %v5863 = vpack.c.b16 %v5815, %v5809
    %v5864 = vpack.c.b16 %v5816, %v5810
    %v5865 = vpack.c.b16 %v5817, %v5811
    %v5866 = vpack.c.b16 %v5818, %v5812
    %5915 = vmatprep.subr.bf16.mxu0 %v5820
    %5916 = vmatpush1.bf16.msra.mxu0 %v5819
    %5917 = vmatprep.subr.bf16.mxu0 %v5826
    %5918 = vmatpush1.bf16.msra.mxu0 %v5825
    %5919 = vmatprep.subr.bf16.mxu0 %v5832
    %5920 = vmatpush1.bf16.msra.mxu0 %v5831
    %5921 = vmatprep.subr.bf16.mxu0 %v5838
    %5922 = vmatpush1.bf16.msra.mxu0 %v5837
    %5923 = vmatprep.subr.bf16.mxu0 %v5844
    %5924 = vmatpush1.bf16.msra.mxu0 %v5843
    %5925 = vmatprep.subr.bf16.mxu0 %v5850
    %5926 = vmatpush1.bf16.msra.mxu0 %v5849
    %5927 = vmatprep.subr.bf16.mxu0 %v5856
    %5928 = vmatpush1.bf16.msra.mxu0 %v5855
    %5929 = vmatprep.subr.bf16.mxu0 %v5862
    %5930 = vmatpush1.bf16.msra.mxu0 %v5861
    %5931 = vmatprep.subr.bf16.mxu0 0
    %5932 = vmatpush1.bf16.msra.mxu0 0
    %5933 = vmatprep.subr.bf16.mxu0 0
    %5934 = vmatpush1.bf16.msra.mxu0 0
    %5935 = vmatprep.subr.bf16.mxu0 0
    %5936 = vmatpush1.bf16.msra.mxu0 0
    %5937 = vmatprep.subr.bf16.mxu0 0
    %5938 = vmatpush1.bf16.msra.mxu0 0
    %5939 = vmatprep.subr.bf16.mxu0 0
    %5940 = vmatpush1.bf16.msra.mxu0 0
    %5941 = vmatprep.subr.bf16.mxu0 0
    %5942 = vmatpush1.bf16.msra.mxu0 0
    %5943 = vmatprep.subr.bf16.mxu0 0
    %5944 = vmatpush1.bf16.msra.mxu0 0
    %5945 = vmatprep.subr.bf16.mxu0 0
    %5946 = vmatpush1.bf16.msra.mxu0 0
    %5947 = vmatprep.mubr.bf16.mxu0 0
    %5948 = vmatmul.mubr.bf16.gmra.mrb[0].mxu0 %v5638
    %v5949 = vpop.f32.mrb[0].mxu0
    %v5950 = vadd.f32 %v5648, %v5949
    %v5951 = vpop.f32.mrb[0].mxu0
    %v5952 = vadd.f32 %v5652, %v5951
    %v5953 = vpop.f32.mrb[0].mxu0
    %v5954 = vadd.f32 %v5648, %v5953
    %v5955 = vpop.f32.mrb[0].mxu0
    %v5956 = vadd.f32 %v5652, %v5955
    %5957 = vmatprep.mubr.bf16.mxu0 0
    %5958 = vmatmul.mubr.bf16.gmra.mrb[0].mxu0 %v5639
    %v5959 = vpop.f32.mrb[0].mxu0
    %v5960 = vadd.f32 %v5648, %v5959
    %v5961 = vpop.f32.mrb[0].mxu0
    %v5962 = vadd.f32 %v5652, %v5961
    %v5963 = vpop.f32.mrb[0].mxu0
    %v5964 = vadd.f32 %v5648, %v5963
    %v5965 = vpop.f32.mrb[0].mxu0
    %v5966 = vadd.f32 %v5652, %v5965
    %5967 = vmatprep.mubr.bf16.mxu0 0
    %5968 = vmatmul.mubr.bf16.gmra.mrb[0].mxu0 %v5640
    %v5969 = vpop.f32.mrb[0].mxu0
    %v5970 = vadd.f32 %v5648, %v5969
    %v5971 = vpop.f32.mrb[0].mxu0
    %v5972 = vadd.f32 %v5652, %v5971
    %v5973 = vpop.f32.mrb[0].mxu0
    %v5974 = vadd.f32 %v5648, %v5973
    %v5975 = vpop.f32.mrb[0].mxu0
    %v5976 = vadd.f32 %v5652, %v5975
    %5977 = vmatprep.mubr.bf16.mxu0 0
    %5978 = vmatmul.mubr.bf16.gmra.mrb[0].mxu0 %v5641
    %v5979 = vpop.f32.mrb[0].mxu0
    %v5980 = vadd.f32 %v5648, %v5979
    %v5981 = vpop.f32.mrb[0].mxu0
    %v5982 = vadd.f32 %v5652, %v5981
    %v5983 = vpop.f32.mrb[0].mxu0
    %v5984 = vadd.f32 %v5648, %v5983
    %v5985 = vpop.f32.mrb[0].mxu0
    %v5986 = vadd.f32 %v5652, %v5985
    %5987 = vdwg.mxu0
    %5988 = vmatprep.subr.bf16.mxu0 %v5822
    %5989 = vmatpush1.bf16.msra.mxu0 %v5821
    %5990 = vmatprep.subr.bf16.mxu0 %v5828
    %5991 = vmatpush1.bf16.msra.mxu0 %v5827
    %5992 = vmatprep.subr.bf16.mxu0 %v5834
    %5993 = vmatpush1.bf16.msra.mxu0 %v5833
    %5994 = vmatprep.subr.bf16.mxu0 %v5840
    %5995 = vmatpush1.bf16.msra.mxu0 %v5839
    %5996 = vmatprep.subr.bf16.mxu0 %v5846
    %5997 = vmatpush1.bf16.msra.mxu0 %v5845
    %5998 = vmatprep.subr.bf16.mxu0 %v5852
    %5999 = vmatpush1.bf16.msra.mxu0 %v5851
    %6000 = vmatprep.subr.bf16.mxu0 %v5858
    %6001 = vmatpush1.bf16.msra.mxu0 %v5857
    %6002 = vmatprep.subr.bf16.mxu0 %v5864
    %6003 = vmatpush1.bf16.msra.mxu0 %v5863
    %6004 = vmatprep.subr.bf16.mxu0 0
    %6005 = vmatpush1.bf16.msra.mxu0 0
    %6006 = vmatprep.subr.bf16.mxu0 0
    %6007 = vmatpush1.bf16.msra.mxu0 0
    %6008 = vmatprep.subr.bf16.mxu0 0
    %6009 = vmatpush1.bf16.msra.mxu0 0
    %6010 = vmatprep.subr.bf16.mxu0 0
    %6011 = vmatpush1.bf16.msra.mxu0 0
    %6012 = vmatprep.subr.bf16.mxu0 0
    %6013 = vmatpush1.bf16.msra.mxu0 0
    %6014 = vmatprep.subr.bf16.mxu0 0
    %6015 = vmatpush1.bf16.msra.mxu0 0
    %6016 = vmatprep.subr.bf16.mxu0 0
    %6017 = vmatpush1.bf16.msra.mxu0 0
    %6018 = vmatprep.subr.bf16.mxu0 0
    %6019 = vmatpush1.bf16.msra.mxu0 0
    %6020 = vmatprep.mubr.bf16.mxu0 0
    %6021 = vmatmul.mubr.bf16.gmra.mrb[0].mxu0 %v5638
    %v6022 = vpop.f32.mrb[0].mxu0
    %v6023 = vadd.f32 %v5656, %v6022
    %v6024 = vpop.f32.mrb[0].mxu0
    %v6025 = vadd.f32 %v5660, %v6024
    %v6026 = vpop.f32.mrb[0].mxu0
    %v6027 = vadd.f32 %v5656, %v6026
    %v6028 = vpop.f32.mrb[0].mxu0
    %v6029 = vadd.f32 %v5660, %v6028
    %6030 = vmatprep.mubr.bf16.mxu0 0
    %6031 = vmatmul.mubr.bf16.gmra.mrb[0].mxu0 %v5639
    %v6032 = vpop.f32.mrb[0].mxu0
    %v6033 = vadd.f32 %v5656, %v6032
    %v6034 = vpop.f32.mrb[0].mxu0
    %v6035 = vadd.f32 %v5660, %v6034
    %v6036 = vpop.f32.mrb[0].mxu0
    %v6037 = vadd.f32 %v5656, %v6036
    %v6038 = vpop.f32.mrb[0].mxu0
    %v6039 = vadd.f32 %v5660, %v6038
    %6040 = vmatprep.mubr.bf16.mxu0 0
    %6041 = vmatmul.mubr.bf16.gmra.mrb[0].mxu0 %v5640
    %v6042 = vpop.f32.mrb[0].mxu0
    %v6043 = vadd.f32 %v5656, %v6042
    %v6044 = vpop.f32.mrb[0].mxu0
    %v6045 = vadd.f32 %v5660, %v6044
    %v6046 = vpop.f32.mrb[0].mxu0
    %v6047 = vadd.f32 %v5656, %v6046
    %v6048 = vpop.f32.mrb[0].mxu0
    %v6049 = vadd.f32 %v5660, %v6048
    %6050 = vmatprep.mubr.bf16.mxu0 0
    %6051 = vmatmul.mubr.bf16.gmra.mrb[0].mxu0 %v5641
    %v6052 = vpop.f32.mrb[0].mxu0
    %v6053 = vadd.f32 %v5656, %v6052
    %v6054 = vpop.f32.mrb[0].mxu0
    %v6055 = vadd.f32 %v5660, %v6054
    %v6056 = vpop.f32.mrb[0].mxu0
    %v6057 = vadd.f32 %v5656, %v6056
    %v6058 = vpop.f32.mrb[0].mxu0
    %v6059 = vadd.f32 %v5660, %v6058
    %6060 = vdwg.mxu0
    %6061 = vmatprep.subr.bf16.mxu0 %v5824
    %6062 = vmatpush1.bf16.msra.mxu0 %v5823
    %6063 = vmatprep.subr.bf16.mxu0 %v5830
    %6064 = vmatpush1.bf16.msra.mxu0 %v5829
    %6065 = vmatprep.subr.bf16.mxu0 %v5836
    %6066 = vmatpush1.bf16.msra.mxu0 %v5835
    %6067 = vmatprep.subr.bf16.mxu0 %v5842
    %6068 = vmatpush1.bf16.msra.mxu0 %v5841
    %6069 = vmatprep.subr.bf16.mxu0 %v5848
    %6070 = vmatpush1.bf16.msra.mxu0 %v5847
    %6071 = vmatprep.subr.bf16.mxu0 %v5854
    %6072 = vmatpush1.bf16.msra.mxu0 %v5853
    %6073 = vmatprep.subr.bf16.mxu0 %v5860
    %6074 = vmatpush1.bf16.msra.mxu0 %v5859
    %6075 = vmatprep.subr.bf16.mxu0 %v5866
    %6076 = vmatpush1.bf16.msra.mxu0 %v5865
    %6077 = vmatprep.subr.bf16.mxu0 0
    %6078 = vmatpush1.bf16.msra.mxu0 0
    %6079 = vmatprep.subr.bf16.mxu0 0
    %6080 = vmatpush1.bf16.msra.mxu0 0
    %6081 = vmatprep.subr.bf16.mxu0 0
    %6082 = vmatpush1.bf16.msra.mxu0 0
    %6083 = vmatprep.subr.bf16.mxu0 0
    %6084 = vmatpush1.bf16.msra.mxu0 0
    %6085 = vmatprep.subr.bf16.mxu0 0
    %6086 = vmatpush1.bf16.msra.mxu0 0
    %6087 = vmatprep.subr.bf16.mxu0 0
    %6088 = vmatpush1.bf16.msra.mxu0 0
    %6089 = vmatprep.subr.bf16.mxu0 0
    %6090 = vmatpush1.bf16.msra.mxu0 0
    %6091 = vmatprep.subr.bf16.mxu0 0
    %6092 = vmatpush1.bf16.msra.mxu0 0
    %6093 = vmatprep.mubr.bf16.mxu0 0
    %6094 = vmatmul.mubr.bf16.gmra.mrb[0].mxu0 %v5638
    %v6095 = vpop.f32.mrb[0].mxu0
    %v6096 = vadd.f32 %v5664, %v6095
    %v6097 = vpop.f32.mrb[0].mxu0
    %v6098 = vadd.f32 %v5668, %v6097
    %v6099 = vpop.f32.mrb[0].mxu0
    %v6100 = vadd.f32 %v5664, %v6099
    %v6101 = vpop.f32.mrb[0].mxu0
    %v6102 = vadd.f32 %v5668, %v6101
    %6103 = vmatprep.mubr.bf16.mxu0 0
    %6104 = vmatmul.mubr.bf16.gmra.mrb[0].mxu0 %v5639
    %v6105 = vpop.f32.mrb[0].mxu0
    %v6106 = vadd.f32 %v5664, %v6105
    %v6107 = vpop.f32.mrb[0].mxu0
    %v6108 = vadd.f32 %v5668, %v6107
    %v6109 = vpop.f32.mrb[0].mxu0
    %v6110 = vadd.f32 %v5664, %v6109
    %v6111 = vpop.f32.mrb[0].mxu0
    %v6112 = vadd.f32 %v5668, %v6111
    %6113 = vmatprep.mubr.bf16.mxu0 0
    %6114 = vmatmul.mubr.bf16.gmra.mrb[0].mxu0 %v5640
    %v6115 = vpop.f32.mrb[0].mxu0
    %v6116 = vadd.f32 %v5664, %v6115
    %v6117 = vpop.f32.mrb[0].mxu0
    %v6118 = vadd.f32 %v5668, %v6117
    %v6119 = vpop.f32.mrb[0].mxu0
    %v6120 = vadd.f32 %v5664, %v6119
    %v6121 = vpop.f32.mrb[0].mxu0
    %v6122 = vadd.f32 %v5668, %v6121
    %6123 = vmatprep.mubr.bf16.mxu0 0
    %6124 = vmatmul.mubr.bf16.gmra.mrb[0].mxu0 %v5641
    %v6125 = vpop.f32.mrb[0].mxu0
    %v6126 = vadd.f32 %v5664, %v6125
    %v6127 = vpop.f32.mrb[0].mxu0
    %v6128 = vadd.f32 %v5668, %v6127
    %v6129 = vpop.f32.mrb[0].mxu0
    %v6130 = vadd.f32 %v5664, %v6129
    %v6131 = vpop.f32.mrb[0].mxu0
    %v6132 = vadd.f32 %v5668, %v6131
    %6133 = vdwg.mxu0
    %v6182 = vcombine.low %v5950, %v5952
    %v6183 = vcombine.high %v5950, %v5952
    %v6184 = vcombine.low %v6023, %v6025
    %v6185 = vcombine.high %v6023, %v6025
    %v6186 = vcombine.low %v6096, %v6098
    %v6187 = vcombine.high %v6096, %v6098
    %v6188 = vcombine.low %v5954, %v5956
    %v6189 = vcombine.high %v5954, %v5956
    %v6190 = vcombine.low %v6027, %v6029
    %v6191 = vcombine.high %v6027, %v6029
    %v6192 = vcombine.low %v6100, %v6102
    %v6193 = vcombine.high %v6100, %v6102
    %v6194 = vcombine.low %v5960, %v5962
    %v6195 = vcombine.high %v5960, %v5962
    %v6196 = vcombine.low %v6033, %v6035
    %v6197 = vcombine.high %v6033, %v6035
    %v6198 = vcombine.low %v6106, %v6108
    %v6199 = vcombine.high %v6106, %v6108
    %v6200 = vcombine.low %v5964, %v5966
    %v6201 = vcombine.high %v5964, %v5966
    %v6202 = vcombine.low %v6037, %v6039
    %v6203 = vcombine.high %v6037, %v6039
    %v6204 = vcombine.low %v6110, %v6112
    %v6205 = vcombine.high %v6110, %v6112
    %v6206 = vcombine.low %v5970, %v5972
    %v6207 = vcombine.high %v5970, %v5972
    %v6208 = vcombine.low %v6043, %v6045
    %v6209 = vcombine.high %v6043, %v6045
    %v6210 = vcombine.low %v6116, %v6118
    %v6211 = vcombine.high %v6116, %v6118
    %v6212 = vcombine.low %v5974, %v5976
    %v6213 = vcombine.high %v5974, %v5976
    %v6214 = vcombine.low %v6047, %v6049
    %v6215 = vcombine.high %v6047, %v6049
    %v6216 = vcombine.low %v6120, %v6122
    %v6217 = vcombine.high %v6120, %v6122
    %v6218 = vcombine.low %v5980, %v5982
    %v6219 = vcombine.high %v5980, %v5982
    %v6220 = vcombine.low %v6053, %v6055
    %v6221 = vcombine.high %v6053, %v6055
    %v6222 = vcombine.low %v6126, %v6128
    %v6223 = vcombine.high %v6126, %v6128
    %v6224 = vcombine.low %v5984, %v5986
    %v6225 = vcombine.high %v5984, %v5986
    %v6226 = vcombine.low %v6057, %v6059
    %v6227 = vcombine.high %v6057, %v6059
    %v6228 = vcombine.low %v6130, %v6132
    %v6229 = vcombine.high %v6130, %v6132
    %v6278 = vrot.slane %v6182, 4
    %v6279 = vrot.slane %v6183, 4
    %v6280 = vrot.slane %v6188, 4
    %v6281 = vrot.slane %v6189, 4
    %v6282 = vrot.slane %v6194, 4
    %v6283 = vrot.slane %v6195, 4
    %v6284 = vrot.slane %v6200, 4
    %v6285 = vrot.slane %v6201, 4
    %v6286 = vrot.slane %v6206, 4
    %v6287 = vrot.slane %v6207, 4
    %v6288 = vrot.slane %v6212, 4
    %v6289 = vrot.slane %v6213, 4
    %v6290 = vrot.slane %v6218, 4
    %v6291 = vrot.slane %v6219, 4
    %v6292 = vrot.slane %v6224, 4
    %v6293 = vrot.slane %v6225, 4
    %v6310 = vrot.slane %v6184, 4
    %v6311 = vrot.slane %v6185, 4
    %v6312 = vrot.slane %v6190, 4
    %v6313 = vrot.slane %v6191, 4
    %v6314 = vrot.slane %v6196, 4
    %v6315 = vrot.slane %v6197, 4
    %v6316 = vrot.slane %v6202, 4
    %v6317 = vrot.slane %v6203, 4
    %v6318 = vrot.slane %v6208, 4
    %v6319 = vrot.slane %v6209, 4
    %v6320 = vrot.slane %v6214, 4
    %v6321 = vrot.slane %v6215, 4
    %v6322 = vrot.slane %v6220, 4
    %v6323 = vrot.slane %v6221, 4
    %v6324 = vrot.slane %v6226, 4
    %v6325 = vrot.slane %v6227, 4
    %v6342 = vrot.slane %v6186, 4
    %v6343 = vrot.slane %v6187, 4
    %v6344 = vrot.slane %v6192, 4
    %v6345 = vrot.slane %v6193, 4
    %v6346 = vrot.slane %v6198, 4
    %v6347 = vrot.slane %v6199, 4
    %v6348 = vrot.slane %v6204, 4
    %v6349 = vrot.slane %v6205, 4
    %v6350 = vrot.slane %v6210, 4
    %v6351 = vrot.slane %v6211, 4
    %v6352 = vrot.slane %v6216, 4
    %v6353 = vrot.slane %v6217, 4
    %v6354 = vrot.slane %v6222, 4
    %v6355 = vrot.slane %v6223, 4
    %v6356 = vrot.slane %v6228, 4
    %v6357 = vrot.slane %v6229, 4
    %v6374 = vpack.c.bf16 %v6182, %v6182
    %v6375 = vpack.c.bf16 %v6183, %v6183
    %v6376 = vpack.c.bf16 %v6188, %v6188
    %v6377 = vpack.c.bf16 %v6189, %v6189
    %v6378 = vpack.c.bf16 %v6194, %v6194
    %v6379 = vpack.c.bf16 %v6195, %v6195
    %v6380 = vpack.c.bf16 %v6200, %v6200
    %v6381 = vpack.c.bf16 %v6201, %v6201
    %v6382 = vpack.c.bf16 %v6206, %v6206
    %v6383 = vpack.c.bf16 %v6207, %v6207
    %v6384 = vpack.c.bf16 %v6212, %v6212
    %v6385 = vpack.c.bf16 %v6213, %v6213
    %v6386 = vpack.c.bf16 %v6218, %v6218
    %v6387 = vpack.c.bf16 %v6219, %v6219
    %v6388 = vpack.c.bf16 %v6224, %v6224
    %v6389 = vpack.c.bf16 %v6225, %v6225
    %v6390 = vpack.c.bf16 %v6278, %v6278
    %v6391 = vpack.c.bf16 %v6279, %v6279
    %v6392 = vpack.c.bf16 %v6280, %v6280
    %v6393 = vpack.c.bf16 %v6281, %v6281
    %v6394 = vpack.c.bf16 %v6282, %v6282
    %v6395 = vpack.c.bf16 %v6283, %v6283
    %v6396 = vpack.c.bf16 %v6284, %v6284
    %v6397 = vpack.c.bf16 %v6285, %v6285
    %v6398 = vpack.c.bf16 %v6286, %v6286
    %v6399 = vpack.c.bf16 %v6287, %v6287
    %v6400 = vpack.c.bf16 %v6288, %v6288
    %v6401 = vpack.c.bf16 %v6289, %v6289
    %v6402 = vpack.c.bf16 %v6290, %v6290
    %v6403 = vpack.c.bf16 %v6291, %v6291
    %v6404 = vpack.c.bf16 %v6292, %v6292
    %v6405 = vpack.c.bf16 %v6293, %v6293
    %v6406 = vpack.c.bf16 %v6184, %v6184
    %v6407 = vpack.c.bf16 %v6185, %v6185
    %v6408 = vpack.c.bf16 %v6190, %v6190
    %v6409 = vpack.c.bf16 %v6191, %v6191
    %v6410 = vpack.c.bf16 %v6196, %v6196
    %v6411 = vpack.c.bf16 %v6197, %v6197
    %v6412 = vpack.c.bf16 %v6202, %v6202
    %v6413 = vpack.c.bf16 %v6203, %v6203
    %v6414 = vpack.c.bf16 %v6208, %v6208
    %v6415 = vpack.c.bf16 %v6209, %v6209
    %v6416 = vpack.c.bf16 %v6214, %v6214
    %v6417 = vpack.c.bf16 %v6215, %v6215
    %v6418 = vpack.c.bf16 %v6220, %v6220
    %v6419 = vpack.c.bf16 %v6221, %v6221
    %v6420 = vpack.c.bf16 %v6226, %v6226
    %v6421 = vpack.c.bf16 %v6227, %v6227
    %v6422 = vpack.c.bf16 %v6310, %v6310
    %v6423 = vpack.c.bf16 %v6311, %v6311
    %v6424 = vpack.c.bf16 %v6312, %v6312
    %v6425 = vpack.c.bf16 %v6313, %v6313
    %v6426 = vpack.c.bf16 %v6314, %v6314
    %v6427 = vpack.c.bf16 %v6315, %v6315
    %v6428 = vpack.c.bf16 %v6316, %v6316
    %v6429 = vpack.c.bf16 %v6317, %v6317
    %v6430 = vpack.c.bf16 %v6318, %v6318
    %v6431 = vpack.c.bf16 %v6319, %v6319
    %v6432 = vpack.c.bf16 %v6320, %v6320
    %v6433 = vpack.c.bf16 %v6321, %v6321
    %v6434 = vpack.c.bf16 %v6322, %v6322
    %v6435 = vpack.c.bf16 %v6323, %v6323
    %v6436 = vpack.c.bf16 %v6324, %v6324
    %v6437 = vpack.c.bf16 %v6325, %v6325
    %6438 = vmatprep.subr.bf16.mxu0 0
    %6439 = vmatpush1.bf16.xpose.msra.mxu0 %v6406
    %6440 = vmatprep.subr.bf16.mxu0 0
    %6441 = vmatpush1.bf16.xpose.msra.mxu0 0
    %6442 = vmatprep.subr.bf16.mxu0 0
    %6443 = vmatpush1.bf16.xpose.msra.mxu0 0
    %6444 = vmatprep.subr.bf16.mxu0 0
    %6445 = vmatpush1.bf16.xpose.msra.mxu0 0
    %6446 = vmatprep.subr.bf16.mxu0 0
    %6447 = vmatpush1.bf16.xpose.msra.mxu0 0
    %6448 = vmatprep.subr.bf16.mxu0 0
    %6449 = vmatpush1.bf16.xpose.msra.mxu0 0
    %6450 = vmatprep.subr.bf16.mxu0 0
    %6451 = vmatpush1.bf16.xpose.msra.mxu0 0
    %6452 = vmatprep.subr.bf16.mxu0 0
    %6453 = vmatpush1.bf16.xpose.msra.mxu0 0
    %6454 = vmatprep.subr.bf16.mxu0 0
    %6455 = vmatpush1.bf16.xpose.msra.mxu0 0
    %6456 = vmatprep.subr.bf16.mxu0 0
    %6457 = vmatpush1.bf16.xpose.msra.mxu0 0
    %6458 = vmatprep.subr.bf16.mxu0 0
    %6459 = vmatpush1.bf16.xpose.msra.mxu0 0
    %6460 = vmatprep.subr.bf16.mxu0 0
    %6461 = vmatpush1.bf16.xpose.msra.mxu0 0
    %6462 = vmatprep.subr.bf16.mxu0 0
    %6463 = vmatpush1.bf16.xpose.msra.mxu0 0
    %6464 = vmatprep.subr.bf16.mxu0 0
    %6465 = vmatpush1.bf16.xpose.msra.mxu0 0
    %6466 = vmatprep.subr.bf16.mxu0 0
    %6467 = vmatpush1.bf16.xpose.msra.mxu0 0
    %6468 = vmatprep.subr.bf16.mxu0 0
    %6469 = vmatpush1.bf16.xpose.msra.mxu0 0
    %6470 = vmatprep.mubr.bf16.mxu0 0
    %6471 = vmatmul.mubr.bf16.gmra.mrb[0].mxu0 %v6374
    %v6472 = vpop.f32.mrb[0].mxu0
    %v6473 = vadd.f32 0.0, %v6472
    %v6474 = vpop.f32.mrb[0].mxu0
    %v6475 = vpop.f32.mrb[0].mxu0
    %v6476 = vpop.f32.mrb[0].mxu0
    %6477 = vdwg.mxu0
    %6478 = vmatprep.subr.bf16.mxu0 0
    %6479 = vmatpush1.bf16.xpose.msra.mxu0 %v6407
    %6480 = vmatprep.subr.bf16.mxu0 0
    %6481 = vmatpush1.bf16.xpose.msra.mxu0 0
    %6482 = vmatprep.subr.bf16.mxu0 0
    %6483 = vmatpush1.bf16.xpose.msra.mxu0 0
    %6484 = vmatprep.subr.bf16.mxu0 0
    %6485 = vmatpush1.bf16.xpose.msra.mxu0 0
    %6486 = vmatprep.subr.bf16.mxu0 0
    %6487 = vmatpush1.bf16.xpose.msra.mxu0 0
    %6488 = vmatprep.subr.bf16.mxu0 0
    %6489 = vmatpush1.bf16.xpose.msra.mxu0 0
    %6490 = vmatprep.subr.bf16.mxu0 0
    %6491 = vmatpush1.bf16.xpose.msra.mxu0 0
    %6492 = vmatprep.subr.bf16.mxu0 0
    %6493 = vmatpush1.bf16.xpose.msra.mxu0 0
    %6494 = vmatprep.subr.bf16.mxu0 0
    %6495 = vmatpush1.bf16.xpose.msra.mxu0 0
    %6496 = vmatprep.subr.bf16.mxu0 0
    %6497 = vmatpush1.bf16.xpose.msra.mxu0 0
    %6498 = vmatprep.subr.bf16.mxu0 0
    %6499 = vmatpush1.bf16.xpose.msra.mxu0 0
    %6500 = vmatprep.subr.bf16.mxu0 0
    %6501 = vmatpush1.bf16.xpose.msra.mxu0 0
    %6502 = vmatprep.subr.bf16.mxu0 0
    %6503 = vmatpush1.bf16.xpose.msra.mxu0 0
    %6504 = vmatprep.subr.bf16.mxu0 0
    %6505 = vmatpush1.bf16.xpose.msra.mxu0 0
    %6506 = vmatprep.subr.bf16.mxu0 0
    %6507 = vmatpush1.bf16.xpose.msra.mxu0 0
    %6508 = vmatprep.subr.bf16.mxu0 0
    %6509 = vmatpush1.bf16.xpose.msra.mxu0 0
    %6510 = vmatprep.mubr.bf16.mxu0 0
    %6511 = vmatmul.mubr.bf16.gmra.mrb[0].mxu0 %v6375
    %v6512 = vpop.f32.mrb[0].mxu0
    %v6513 = vadd.f32 0.0, %v6512
    %v6514 = vpop.f32.mrb[0].mxu0
    %v6515 = vpop.f32.mrb[0].mxu0
    %v6516 = vpop.f32.mrb[0].mxu0
    %6517 = vdwg.mxu0
    %6518 = vmatprep.subr.bf16.mxu0 0
    %6519 = vmatpush1.bf16.xpose.msra.mxu0 %v6408
    %6520 = vmatprep.subr.bf16.mxu0 0
    %6521 = vmatpush1.bf16.xpose.msra.mxu0 0
    %6522 = vmatprep.subr.bf16.mxu0 0
    %6523 = vmatpush1.bf16.xpose.msra.mxu0 0
    %6524 = vmatprep.subr.bf16.mxu0 0
    %6525 = vmatpush1.bf16.xpose.msra.mxu0 0
    %6526 = vmatprep.subr.bf16.mxu0 0
    %6527 = vmatpush1.bf16.xpose.msra.mxu0 0
    %6528 = vmatprep.subr.bf16.mxu0 0
    %6529 = vmatpush1.bf16.xpose.msra.mxu0 0
    %6530 = vmatprep.subr.bf16.mxu0 0
    %6531 = vmatpush1.bf16.xpose.msra.mxu0 0
    %6532 = vmatprep.subr.bf16.mxu0 0
    %6533 = vmatpush1.bf16.xpose.msra.mxu0 0
    %6534 = vmatprep.subr.bf16.mxu0 0
    %6535 = vmatpush1.bf16.xpose.msra.mxu0 0
    %6536 = vmatprep.subr.bf16.mxu0 0
    %6537 = vmatpush1.bf16.xpose.msra.mxu0 0
    %6538 = vmatprep.subr.bf16.mxu0 0
    %6539 = vmatpush1.bf16.xpose.msra.mxu0 0
    %6540 = vmatprep.subr.bf16.mxu0 0
    %6541 = vmatpush1.bf16.xpose.msra.mxu0 0
    %6542 = vmatprep.subr.bf16.mxu0 0
    %6543 = vmatpush1.bf16.xpose.msra.mxu0 0
    %6544 = vmatprep.subr.bf16.mxu0 0
    %6545 = vmatpush1.bf16.xpose.msra.mxu0 0
    %6546 = vmatprep.subr.bf16.mxu0 0
    %6547 = vmatpush1.bf16.xpose.msra.mxu0 0
    %6548 = vmatprep.subr.bf16.mxu0 0
    %6549 = vmatpush1.bf16.xpose.msra.mxu0 0
    %6550 = vmatprep.mubr.bf16.mxu0 0
    %6551 = vmatmul.mubr.bf16.gmra.mrb[0].mxu0 %v6376
    %v6552 = vpop.f32.mrb[0].mxu0
    %v6553 = vadd.f32 0.0, %v6552
    %v6554 = vpop.f32.mrb[0].mxu0
    %v6555 = vpop.f32.mrb[0].mxu0
    %v6556 = vpop.f32.mrb[0].mxu0
    %6557 = vdwg.mxu0
    %6558 = vmatprep.subr.bf16.mxu0 0
    %6559 = vmatpush1.bf16.xpose.msra.mxu0 %v6409
    %6560 = vmatprep.subr.bf16.mxu0 0
    %6561 = vmatpush1.bf16.xpose.msra.mxu0 0
    %6562 = vmatprep.subr.bf16.mxu0 0
    %6563 = vmatpush1.bf16.xpose.msra.mxu0 0
    %6564 = vmatprep.subr.bf16.mxu0 0
    %6565 = vmatpush1.bf16.xpose.msra.mxu0 0
    %6566 = vmatprep.subr.bf16.mxu0 0
    %6567 = vmatpush1.bf16.xpose.msra.mxu0 0
    %6568 = vmatprep.subr.bf16.mxu0 0
    %6569 = vmatpush1.bf16.xpose.msra.mxu0 0
    %6570 = vmatprep.subr.bf16.mxu0 0
    %6571 = vmatpush1.bf16.xpose.msra.mxu0 0
    %6572 = vmatprep.subr.bf16.mxu0 0
    %6573 = vmatpush1.bf16.xpose.msra.mxu0 0
    %6574 = vmatprep.subr.bf16.mxu0 0
    %6575 = vmatpush1.bf16.xpose.msra.mxu0 0
    %6576 = vmatprep.subr.bf16.mxu0 0
    %6577 = vmatpush1.bf16.xpose.msra.mxu0 0
    %6578 = vmatprep.subr.bf16.mxu0 0
    %6579 = vmatpush1.bf16.xpose.msra.mxu0 0
    %6580 = vmatprep.subr.bf16.mxu0 0
    %6581 = vmatpush1.bf16.xpose.msra.mxu0 0
    %6582 = vmatprep.subr.bf16.mxu0 0
    %6583 = vmatpush1.bf16.xpose.msra.mxu0 0
    %6584 = vmatprep.subr.bf16.mxu0 0
    %6585 = vmatpush1.bf16.xpose.msra.mxu0 0
    %6586 = vmatprep.subr.bf16.mxu0 0
    %6587 = vmatpush1.bf16.xpose.msra.mxu0 0
    %6588 = vmatprep.subr.bf16.mxu0 0
    %6589 = vmatpush1.bf16.xpose.msra.mxu0 0
    %6590 = vmatprep.mubr.bf16.mxu0 0
    %6591 = vmatmul.mubr.bf16.gmra.mrb[0].mxu0 %v6377
    %v6592 = vpop.f32.mrb[0].mxu0
    %v6593 = vadd.f32 0.0, %v6592
    %v6594 = vpop.f32.mrb[0].mxu0
    %v6595 = vpop.f32.mrb[0].mxu0
    %v6596 = vpop.f32.mrb[0].mxu0
    %6597 = vdwg.mxu0
    %6598 = vmatprep.subr.bf16.mxu0 0
    %6599 = vmatpush1.bf16.xpose.msra.mxu0 %v6410
    %6600 = vmatprep.subr.bf16.mxu0 0
    %6601 = vmatpush1.bf16.xpose.msra.mxu0 0
    %6602 = vmatprep.subr.bf16.mxu0 0
    %6603 = vmatpush1.bf16.xpose.msra.mxu0 0
    %6604 = vmatprep.subr.bf16.mxu0 0
    %6605 = vmatpush1.bf16.xpose.msra.mxu0 0
    %6606 = vmatprep.subr.bf16.mxu0 0
    %6607 = vmatpush1.bf16.xpose.msra.mxu0 0
    %6608 = vmatprep.subr.bf16.mxu0 0
    %6609 = vmatpush1.bf16.xpose.msra.mxu0 0
    %6610 = vmatprep.subr.bf16.mxu0 0
    %6611 = vmatpush1.bf16.xpose.msra.mxu0 0
    %6612 = vmatprep.subr.bf16.mxu0 0
    %6613 = vmatpush1.bf16.xpose.msra.mxu0 0
    %6614 = vmatprep.subr.bf16.mxu0 0
    %6615 = vmatpush1.bf16.xpose.msra.mxu0 0
    %6616 = vmatprep.subr.bf16.mxu0 0
    %6617 = vmatpush1.bf16.xpose.msra.mxu0 0
    %6618 = vmatprep.subr.bf16.mxu0 0
    %6619 = vmatpush1.bf16.xpose.msra.mxu0 0
    %6620 = vmatprep.subr.bf16.mxu0 0
    %6621 = vmatpush1.bf16.xpose.msra.mxu0 0
    %6622 = vmatprep.subr.bf16.mxu0 0
    %6623 = vmatpush1.bf16.xpose.msra.mxu0 0
    %6624 = vmatprep.subr.bf16.mxu0 0
    %6625 = vmatpush1.bf16.xpose.msra.mxu0 0
    %6626 = vmatprep.subr.bf16.mxu0 0
    %6627 = vmatpush1.bf16.xpose.msra.mxu0 0
    %6628 = vmatprep.subr.bf16.mxu0 0
    %6629 = vmatpush1.bf16.xpose.msra.mxu0 0
    %6630 = vmatprep.mubr.bf16.mxu0 0
    %6631 = vmatmul.mubr.bf16.gmra.mrb[0].mxu0 %v6378
    %v6632 = vpop.f32.mrb[0].mxu0
    %v6633 = vadd.f32 0.0, %v6632
    %v6634 = vpop.f32.mrb[0].mxu0
    %v6635 = vpop.f32.mrb[0].mxu0
    %v6636 = vpop.f32.mrb[0].mxu0
    %6637 = vdwg.mxu0
    %6638 = vmatprep.subr.bf16.mxu0 0
    %6639 = vmatpush1.bf16.xpose.msra.mxu0 %v6411
    %6640 = vmatprep.subr.bf16.mxu0 0
    %6641 = vmatpush1.bf16.xpose.msra.mxu0 0
    %6642 = vmatprep.subr.bf16.mxu0 0
    %6643 = vmatpush1.bf16.xpose.msra.mxu0 0
    %6644 = vmatprep.subr.bf16.mxu0 0
    %6645 = vmatpush1.bf16.xpose.msra.mxu0 0
    %6646 = vmatprep.subr.bf16.mxu0 0
    %6647 = vmatpush1.bf16.xpose.msra.mxu0 0
    %6648 = vmatprep.subr.bf16.mxu0 0
    %6649 = vmatpush1.bf16.xpose.msra.mxu0 0
    %6650 = vmatprep.subr.bf16.mxu0 0
    %6651 = vmatpush1.bf16.xpose.msra.mxu0 0
    %6652 = vmatprep.subr.bf16.mxu0 0
    %6653 = vmatpush1.bf16.xpose.msra.mxu0 0
    %6654 = vmatprep.subr.bf16.mxu0 0
    %6655 = vmatpush1.bf16.xpose.msra.mxu0 0
    %6656 = vmatprep.subr.bf16.mxu0 0
    %6657 = vmatpush1.bf16.xpose.msra.mxu0 0
    %6658 = vmatprep.subr.bf16.mxu0 0
    %6659 = vmatpush1.bf16.xpose.msra.mxu0 0
    %6660 = vmatprep.subr.bf16.mxu0 0
    %6661 = vmatpush1.bf16.xpose.msra.mxu0 0
    %6662 = vmatprep.subr.bf16.mxu0 0
    %6663 = vmatpush1.bf16.xpose.msra.mxu0 0
    %6664 = vmatprep.subr.bf16.mxu0 0
    %6665 = vmatpush1.bf16.xpose.msra.mxu0 0
    %6666 = vmatprep.subr.bf16.mxu0 0
    %6667 = vmatpush1.bf16.xpose.msra.mxu0 0
    %6668 = vmatprep.subr.bf16.mxu0 0
    %6669 = vmatpush1.bf16.xpose.msra.mxu0 0
    %6670 = vmatprep.mubr.bf16.mxu0 0
    %6671 = vmatmul.mubr.bf16.gmra.mrb[0].mxu0 %v6379
    %v6672 = vpop.f32.mrb[0].mxu0
    %v6673 = vadd.f32 0.0, %v6672
    %v6674 = vpop.f32.mrb[0].mxu0
    %v6675 = vpop.f32.mrb[0].mxu0
    %v6676 = vpop.f32.mrb[0].mxu0
    %6677 = vdwg.mxu0
    %6678 = vmatprep.subr.bf16.mxu0 0
    %6679 = vmatpush1.bf16.xpose.msra.mxu0 %v6412
    %6680 = vmatprep.subr.bf16.mxu0 0
    %6681 = vmatpush1.bf16.xpose.msra.mxu0 0
    %6682 = vmatprep.subr.bf16.mxu0 0
    %6683 = vmatpush1.bf16.xpose.msra.mxu0 0
    %6684 = vmatprep.subr.bf16.mxu0 0
    %6685 = vmatpush1.bf16.xpose.msra.mxu0 0
    %6686 = vmatprep.subr.bf16.mxu0 0
    %6687 = vmatpush1.bf16.xpose.msra.mxu0 0
    %6688 = vmatprep.subr.bf16.mxu0 0
    %6689 = vmatpush1.bf16.xpose.msra.mxu0 0
    %6690 = vmatprep.subr.bf16.mxu0 0
    %6691 = vmatpush1.bf16.xpose.msra.mxu0 0
    %6692 = vmatprep.subr.bf16.mxu0 0
    %6693 = vmatpush1.bf16.xpose.msra.mxu0 0
    %6694 = vmatprep.subr.bf16.mxu0 0
    %6695 = vmatpush1.bf16.xpose.msra.mxu0 0
    %6696 = vmatprep.subr.bf16.mxu0 0
    %6697 = vmatpush1.bf16.xpose.msra.mxu0 0
    %6698 = vmatprep.subr.bf16.mxu0 0
    %6699 = vmatpush1.bf16.xpose.msra.mxu0 0
    %6700 = vmatprep.subr.bf16.mxu0 0
    %6701 = vmatpush1.bf16.xpose.msra.mxu0 0
    %6702 = vmatprep.subr.bf16.mxu0 0
    %6703 = vmatpush1.bf16.xpose.msra.mxu0 0
    %6704 = vmatprep.subr.bf16.mxu0 0
    %6705 = vmatpush1.bf16.xpose.msra.mxu0 0
    %6706 = vmatprep.subr.bf16.mxu0 0
    %6707 = vmatpush1.bf16.xpose.msra.mxu0 0
    %6708 = vmatprep.subr.bf16.mxu0 0
    %6709 = vmatpush1.bf16.xpose.msra.mxu0 0
    %6710 = vmatprep.mubr.bf16.mxu0 0
    %6711 = vmatmul.mubr.bf16.gmra.mrb[0].mxu0 %v6380
    %v6712 = vpop.f32.mrb[0].mxu0
    %v6713 = vadd.f32 0.0, %v6712
    %v6714 = vpop.f32.mrb[0].mxu0
    %v6715 = vpop.f32.mrb[0].mxu0
    %v6716 = vpop.f32.mrb[0].mxu0
    %6717 = vdwg.mxu0
    %6718 = vmatprep.subr.bf16.mxu0 0
    %6719 = vmatpush1.bf16.xpose.msra.mxu0 %v6413
    %6720 = vmatprep.subr.bf16.mxu0 0
    %6721 = vmatpush1.bf16.xpose.msra.mxu0 0
    %6722 = vmatprep.subr.bf16.mxu0 0
    %6723 = vmatpush1.bf16.xpose.msra.mxu0 0
    %6724 = vmatprep.subr.bf16.mxu0 0
    %6725 = vmatpush1.bf16.xpose.msra.mxu0 0
    %6726 = vmatprep.subr.bf16.mxu0 0
    %6727 = vmatpush1.bf16.xpose.msra.mxu0 0
    %6728 = vmatprep.subr.bf16.mxu0 0
    %6729 = vmatpush1.bf16.xpose.msra.mxu0 0
    %6730 = vmatprep.subr.bf16.mxu0 0
    %6731 = vmatpush1.bf16.xpose.msra.mxu0 0
    %6732 = vmatprep.subr.bf16.mxu0 0
    %6733 = vmatpush1.bf16.xpose.msra.mxu0 0
    %6734 = vmatprep.subr.bf16.mxu0 0
    %6735 = vmatpush1.bf16.xpose.msra.mxu0 0
    %6736 = vmatprep.subr.bf16.mxu0 0
    %6737 = vmatpush1.bf16.xpose.msra.mxu0 0
    %6738 = vmatprep.subr.bf16.mxu0 0
    %6739 = vmatpush1.bf16.xpose.msra.mxu0 0
    %6740 = vmatprep.subr.bf16.mxu0 0
    %6741 = vmatpush1.bf16.xpose.msra.mxu0 0
    %6742 = vmatprep.subr.bf16.mxu0 0
    %6743 = vmatpush1.bf16.xpose.msra.mxu0 0
    %6744 = vmatprep.subr.bf16.mxu0 0
    %6745 = vmatpush1.bf16.xpose.msra.mxu0 0
    %6746 = vmatprep.subr.bf16.mxu0 0
    %6747 = vmatpush1.bf16.xpose.msra.mxu0 0
    %6748 = vmatprep.subr.bf16.mxu0 0
    %6749 = vmatpush1.bf16.xpose.msra.mxu0 0
    %6750 = vmatprep.mubr.bf16.mxu0 0
    %6751 = vmatmul.mubr.bf16.gmra.mrb[0].mxu0 %v6381
    %v6752 = vpop.f32.mrb[0].mxu0
    %v6753 = vadd.f32 0.0, %v6752
    %v6754 = vpop.f32.mrb[0].mxu0
    %v6755 = vpop.f32.mrb[0].mxu0
    %v6756 = vpop.f32.mrb[0].mxu0
    %6757 = vdwg.mxu0
    %6758 = vmatprep.subr.bf16.mxu0 0
    %6759 = vmatpush1.bf16.xpose.msra.mxu0 %v6414
    %6760 = vmatprep.subr.bf16.mxu0 0
    %6761 = vmatpush1.bf16.xpose.msra.mxu0 0
    %6762 = vmatprep.subr.bf16.mxu0 0
    %6763 = vmatpush1.bf16.xpose.msra.mxu0 0
    %6764 = vmatprep.subr.bf16.mxu0 0
    %6765 = vmatpush1.bf16.xpose.msra.mxu0 0
    %6766 = vmatprep.subr.bf16.mxu0 0
    %6767 = vmatpush1.bf16.xpose.msra.mxu0 0
    %6768 = vmatprep.subr.bf16.mxu0 0
    %6769 = vmatpush1.bf16.xpose.msra.mxu0 0
    %6770 = vmatprep.subr.bf16.mxu0 0
    %6771 = vmatpush1.bf16.xpose.msra.mxu0 0
    %6772 = vmatprep.subr.bf16.mxu0 0
    %6773 = vmatpush1.bf16.xpose.msra.mxu0 0
    %6774 = vmatprep.subr.bf16.mxu0 0
    %6775 = vmatpush1.bf16.xpose.msra.mxu0 0
    %6776 = vmatprep.subr.bf16.mxu0 0
    %6777 = vmatpush1.bf16.xpose.msra.mxu0 0
    %6778 = vmatprep.subr.bf16.mxu0 0
    %6779 = vmatpush1.bf16.xpose.msra.mxu0 0
    %6780 = vmatprep.subr.bf16.mxu0 0
    %6781 = vmatpush1.bf16.xpose.msra.mxu0 0
    %6782 = vmatprep.subr.bf16.mxu0 0
    %6783 = vmatpush1.bf16.xpose.msra.mxu0 0
    %6784 = vmatprep.subr.bf16.mxu0 0
    %6785 = vmatpush1.bf16.xpose.msra.mxu0 0
    %6786 = vmatprep.subr.bf16.mxu0 0
    %6787 = vmatpush1.bf16.xpose.msra.mxu0 0
    %6788 = vmatprep.subr.bf16.mxu0 0
    %6789 = vmatpush1.bf16.xpose.msra.mxu0 0
    %6790 = vmatprep.mubr.bf16.mxu0 0
    %6791 = vmatmul.mubr.bf16.gmra.mrb[0].mxu0 %v6382
    %v6792 = vpop.f32.mrb[0].mxu0
    %v6793 = vadd.f32 0.0, %v6792
    %v6794 = vpop.f32.mrb[0].mxu0
    %v6795 = vpop.f32.mrb[0].mxu0
    %v6796 = vpop.f32.mrb[0].mxu0
    %6797 = vdwg.mxu0
    %6798 = vmatprep.subr.bf16.mxu0 0
    %6799 = vmatpush1.bf16.xpose.msra.mxu0 %v6415
    %6800 = vmatprep.subr.bf16.mxu0 0
    %6801 = vmatpush1.bf16.xpose.msra.mxu0 0
    %6802 = vmatprep.subr.bf16.mxu0 0
    %6803 = vmatpush1.bf16.xpose.msra.mxu0 0
    %6804 = vmatprep.subr.bf16.mxu0 0
    %6805 = vmatpush1.bf16.xpose.msra.mxu0 0
    %6806 = vmatprep.subr.bf16.mxu0 0
    %6807 = vmatpush1.bf16.xpose.msra.mxu0 0
    %6808 = vmatprep.subr.bf16.mxu0 0
    %6809 = vmatpush1.bf16.xpose.msra.mxu0 0
    %6810 = vmatprep.subr.bf16.mxu0 0
    %6811 = vmatpush1.bf16.xpose.msra.mxu0 0
    %6812 = vmatprep.subr.bf16.mxu0 0
    %6813 = vmatpush1.bf16.xpose.msra.mxu0 0
    %6814 = vmatprep.subr.bf16.mxu0 0
    %6815 = vmatpush1.bf16.xpose.msra.mxu0 0
    %6816 = vmatprep.subr.bf16.mxu0 0
    %6817 = vmatpush1.bf16.xpose.msra.mxu0 0
    %6818 = vmatprep.subr.bf16.mxu0 0
    %6819 = vmatpush1.bf16.xpose.msra.mxu0 0
    %6820 = vmatprep.subr.bf16.mxu0 0
    %6821 = vmatpush1.bf16.xpose.msra.mxu0 0
    %6822 = vmatprep.subr.bf16.mxu0 0
    %6823 = vmatpush1.bf16.xpose.msra.mxu0 0
    %6824 = vmatprep.subr.bf16.mxu0 0
    %6825 = vmatpush1.bf16.xpose.msra.mxu0 0
    %6826 = vmatprep.subr.bf16.mxu0 0
    %6827 = vmatpush1.bf16.xpose.msra.mxu0 0
    %6828 = vmatprep.subr.bf16.mxu0 0
    %6829 = vmatpush1.bf16.xpose.msra.mxu0 0
    %6830 = vmatprep.mubr.bf16.mxu0 0
    %6831 = vmatmul.mubr.bf16.gmra.mrb[0].mxu0 %v6383
    %v6832 = vpop.f32.mrb[0].mxu0
    %v6833 = vadd.f32 0.0, %v6832
    %v6834 = vpop.f32.mrb[0].mxu0
    %v6835 = vpop.f32.mrb[0].mxu0
    %v6836 = vpop.f32.mrb[0].mxu0
    %6837 = vdwg.mxu0
    %6838 = vmatprep.subr.bf16.mxu0 0
    %6839 = vmatpush1.bf16.xpose.msra.mxu0 %v6416
    %6840 = vmatprep.subr.bf16.mxu0 0
    %6841 = vmatpush1.bf16.xpose.msra.mxu0 0
    %6842 = vmatprep.subr.bf16.mxu0 0
    %6843 = vmatpush1.bf16.xpose.msra.mxu0 0
    %6844 = vmatprep.subr.bf16.mxu0 0
    %6845 = vmatpush1.bf16.xpose.msra.mxu0 0
    %6846 = vmatprep.subr.bf16.mxu0 0
    %6847 = vmatpush1.bf16.xpose.msra.mxu0 0
    %6848 = vmatprep.subr.bf16.mxu0 0
    %6849 = vmatpush1.bf16.xpose.msra.mxu0 0
    %6850 = vmatprep.subr.bf16.mxu0 0
    %6851 = vmatpush1.bf16.xpose.msra.mxu0 0
    %6852 = vmatprep.subr.bf16.mxu0 0
    %6853 = vmatpush1.bf16.xpose.msra.mxu0 0
    %6854 = vmatprep.subr.bf16.mxu0 0
    %6855 = vmatpush1.bf16.xpose.msra.mxu0 0
    %6856 = vmatprep.subr.bf16.mxu0 0
    %6857 = vmatpush1.bf16.xpose.msra.mxu0 0
    %6858 = vmatprep.subr.bf16.mxu0 0
    %6859 = vmatpush1.bf16.xpose.msra.mxu0 0
    %6860 = vmatprep.subr.bf16.mxu0 0
    %6861 = vmatpush1.bf16.xpose.msra.mxu0 0
    %6862 = vmatprep.subr.bf16.mxu0 0
    %6863 = vmatpush1.bf16.xpose.msra.mxu0 0
    %6864 = vmatprep.subr.bf16.mxu0 0
    %6865 = vmatpush1.bf16.xpose.msra.mxu0 0
    %6866 = vmatprep.subr.bf16.mxu0 0
    %6867 = vmatpush1.bf16.xpose.msra.mxu0 0
    %6868 = vmatprep.subr.bf16.mxu0 0
    %6869 = vmatpush1.bf16.xpose.msra.mxu0 0
    %6870 = vmatprep.mubr.bf16.mxu0 0
    %6871 = vmatmul.mubr.bf16.gmra.mrb[0].mxu0 %v6384
    %v6872 = vpop.f32.mrb[0].mxu0
    %v6873 = vadd.f32 0.0, %v6872
    %v6874 = vpop.f32.mrb[0].mxu0
    %v6875 = vpop.f32.mrb[0].mxu0
    %v6876 = vpop.f32.mrb[0].mxu0
    %6877 = vdwg.mxu0
    %6878 = vmatprep.subr.bf16.mxu0 0
    %6879 = vmatpush1.bf16.xpose.msra.mxu0 %v6417
    %6880 = vmatprep.subr.bf16.mxu0 0
    %6881 = vmatpush1.bf16.xpose.msra.mxu0 0
    %6882 = vmatprep.subr.bf16.mxu0 0
    %6883 = vmatpush1.bf16.xpose.msra.mxu0 0
    %6884 = vmatprep.subr.bf16.mxu0 0
    %6885 = vmatpush1.bf16.xpose.msra.mxu0 0
    %6886 = vmatprep.subr.bf16.mxu0 0
    %6887 = vmatpush1.bf16.xpose.msra.mxu0 0
    %6888 = vmatprep.subr.bf16.mxu0 0
    %6889 = vmatpush1.bf16.xpose.msra.mxu0 0
    %6890 = vmatprep.subr.bf16.mxu0 0
    %6891 = vmatpush1.bf16.xpose.msra.mxu0 0
    %6892 = vmatprep.subr.bf16.mxu0 0
    %6893 = vmatpush1.bf16.xpose.msra.mxu0 0
    %6894 = vmatprep.subr.bf16.mxu0 0
    %6895 = vmatpush1.bf16.xpose.msra.mxu0 0
    %6896 = vmatprep.subr.bf16.mxu0 0
    %6897 = vmatpush1.bf16.xpose.msra.mxu0 0
    %6898 = vmatprep.subr.bf16.mxu0 0
    %6899 = vmatpush1.bf16.xpose.msra.mxu0 0
    %6900 = vmatprep.subr.bf16.mxu0 0
    %6901 = vmatpush1.bf16.xpose.msra.mxu0 0
    %6902 = vmatprep.subr.bf16.mxu0 0
    %6903 = vmatpush1.bf16.xpose.msra.mxu0 0
    %6904 = vmatprep.subr.bf16.mxu0 0
    %6905 = vmatpush1.bf16.xpose.msra.mxu0 0
    %6906 = vmatprep.subr.bf16.mxu0 0
    %6907 = vmatpush1.bf16.xpose.msra.mxu0 0
    %6908 = vmatprep.subr.bf16.mxu0 0
    %6909 = vmatpush1.bf16.xpose.msra.mxu0 0
    %6910 = vmatprep.mubr.bf16.mxu0 0
    %6911 = vmatmul.mubr.bf16.gmra.mrb[0].mxu0 %v6385
    %v6912 = vpop.f32.mrb[0].mxu0
    %v6913 = vadd.f32 0.0, %v6912
    %v6914 = vpop.f32.mrb[0].mxu0
    %v6915 = vpop.f32.mrb[0].mxu0
    %v6916 = vpop.f32.mrb[0].mxu0
    %6917 = vdwg.mxu0
    %6918 = vmatprep.subr.bf16.mxu0 0
    %6919 = vmatpush1.bf16.xpose.msra.mxu0 %v6418
    %6920 = vmatprep.subr.bf16.mxu0 0
    %6921 = vmatpush1.bf16.xpose.msra.mxu0 0
    %6922 = vmatprep.subr.bf16.mxu0 0
    %6923 = vmatpush1.bf16.xpose.msra.mxu0 0
    %6924 = vmatprep.subr.bf16.mxu0 0
    %6925 = vmatpush1.bf16.xpose.msra.mxu0 0
    %6926 = vmatprep.subr.bf16.mxu0 0
    %6927 = vmatpush1.bf16.xpose.msra.mxu0 0
    %6928 = vmatprep.subr.bf16.mxu0 0
    %6929 = vmatpush1.bf16.xpose.msra.mxu0 0
    %6930 = vmatprep.subr.bf16.mxu0 0
    %6931 = vmatpush1.bf16.xpose.msra.mxu0 0
    %6932 = vmatprep.subr.bf16.mxu0 0
    %6933 = vmatpush1.bf16.xpose.msra.mxu0 0
    %6934 = vmatprep.subr.bf16.mxu0 0
    %6935 = vmatpush1.bf16.xpose.msra.mxu0 0
    %6936 = vmatprep.subr.bf16.mxu0 0
    %6937 = vmatpush1.bf16.xpose.msra.mxu0 0
    %6938 = vmatprep.subr.bf16.mxu0 0
    %6939 = vmatpush1.bf16.xpose.msra.mxu0 0
    %6940 = vmatprep.subr.bf16.mxu0 0
    %6941 = vmatpush1.bf16.xpose.msra.mxu0 0
    %6942 = vmatprep.subr.bf16.mxu0 0
    %6943 = vmatpush1.bf16.xpose.msra.mxu0 0
    %6944 = vmatprep.subr.bf16.mxu0 0
    %6945 = vmatpush1.bf16.xpose.msra.mxu0 0
    %6946 = vmatprep.subr.bf16.mxu0 0
    %6947 = vmatpush1.bf16.xpose.msra.mxu0 0
    %6948 = vmatprep.subr.bf16.mxu0 0
    %6949 = vmatpush1.bf16.xpose.msra.mxu0 0
    %6950 = vmatprep.mubr.bf16.mxu0 0
    %6951 = vmatmul.mubr.bf16.gmra.mrb[0].mxu0 %v6386
    %v6952 = vpop.f32.mrb[0].mxu0
    %v6953 = vadd.f32 0.0, %v6952
    %v6954 = vpop.f32.mrb[0].mxu0
    %v6955 = vpop.f32.mrb[0].mxu0
    %v6956 = vpop.f32.mrb[0].mxu0
    %6957 = vdwg.mxu0
    %6958 = vmatprep.subr.bf16.mxu0 0
    %6959 = vmatpush1.bf16.xpose.msra.mxu0 %v6419
    %6960 = vmatprep.subr.bf16.mxu0 0
    %6961 = vmatpush1.bf16.xpose.msra.mxu0 0
    %6962 = vmatprep.subr.bf16.mxu0 0
    %6963 = vmatpush1.bf16.xpose.msra.mxu0 0
    %6964 = vmatprep.subr.bf16.mxu0 0
    %6965 = vmatpush1.bf16.xpose.msra.mxu0 0
    %6966 = vmatprep.subr.bf16.mxu0 0
    %6967 = vmatpush1.bf16.xpose.msra.mxu0 0
    %6968 = vmatprep.subr.bf16.mxu0 0
    %6969 = vmatpush1.bf16.xpose.msra.mxu0 0
    %6970 = vmatprep.subr.bf16.mxu0 0
    %6971 = vmatpush1.bf16.xpose.msra.mxu0 0
    %6972 = vmatprep.subr.bf16.mxu0 0
    %6973 = vmatpush1.bf16.xpose.msra.mxu0 0
    %6974 = vmatprep.subr.bf16.mxu0 0
    %6975 = vmatpush1.bf16.xpose.msra.mxu0 0
    %6976 = vmatprep.subr.bf16.mxu0 0
    %6977 = vmatpush1.bf16.xpose.msra.mxu0 0
    %6978 = vmatprep.subr.bf16.mxu0 0
    %6979 = vmatpush1.bf16.xpose.msra.mxu0 0
    %6980 = vmatprep.subr.bf16.mxu0 0
    %6981 = vmatpush1.bf16.xpose.msra.mxu0 0
    %6982 = vmatprep.subr.bf16.mxu0 0
    %6983 = vmatpush1.bf16.xpose.msra.mxu0 0
    %6984 = vmatprep.subr.bf16.mxu0 0
    %6985 = vmatpush1.bf16.xpose.msra.mxu0 0
    %6986 = vmatprep.subr.bf16.mxu0 0
    %6987 = vmatpush1.bf16.xpose.msra.mxu0 0
    %6988 = vmatprep.subr.bf16.mxu0 0
    %6989 = vmatpush1.bf16.xpose.msra.mxu0 0
    %6990 = vmatprep.mubr.bf16.mxu0 0
    %6991 = vmatmul.mubr.bf16.gmra.mrb[0].mxu0 %v6387
    %v6992 = vpop.f32.mrb[0].mxu0
    %v6993 = vadd.f32 0.0, %v6992
    %v6994 = vpop.f32.mrb[0].mxu0
    %v6995 = vpop.f32.mrb[0].mxu0
    %v6996 = vpop.f32.mrb[0].mxu0
    %6997 = vdwg.mxu0
    %6998 = vmatprep.subr.bf16.mxu0 0
    %6999 = vmatpush1.bf16.xpose.msra.mxu0 %v6420
    %7000 = vmatprep.subr.bf16.mxu0 0
    %7001 = vmatpush1.bf16.xpose.msra.mxu0 0
    %7002 = vmatprep.subr.bf16.mxu0 0
    %7003 = vmatpush1.bf16.xpose.msra.mxu0 0
    %7004 = vmatprep.subr.bf16.mxu0 0
    %7005 = vmatpush1.bf16.xpose.msra.mxu0 0
    %7006 = vmatprep.subr.bf16.mxu0 0
    %7007 = vmatpush1.bf16.xpose.msra.mxu0 0
    %7008 = vmatprep.subr.bf16.mxu0 0
    %7009 = vmatpush1.bf16.xpose.msra.mxu0 0
    %7010 = vmatprep.subr.bf16.mxu0 0
    %7011 = vmatpush1.bf16.xpose.msra.mxu0 0
    %7012 = vmatprep.subr.bf16.mxu0 0
    %7013 = vmatpush1.bf16.xpose.msra.mxu0 0
    %7014 = vmatprep.subr.bf16.mxu0 0
    %7015 = vmatpush1.bf16.xpose.msra.mxu0 0
    %7016 = vmatprep.subr.bf16.mxu0 0
    %7017 = vmatpush1.bf16.xpose.msra.mxu0 0
    %7018 = vmatprep.subr.bf16.mxu0 0
    %7019 = vmatpush1.bf16.xpose.msra.mxu0 0
    %7020 = vmatprep.subr.bf16.mxu0 0
    %7021 = vmatpush1.bf16.xpose.msra.mxu0 0
    %7022 = vmatprep.subr.bf16.mxu0 0
    %7023 = vmatpush1.bf16.xpose.msra.mxu0 0
    %7024 = vmatprep.subr.bf16.mxu0 0
    %7025 = vmatpush1.bf16.xpose.msra.mxu0 0
    %7026 = vmatprep.subr.bf16.mxu0 0
    %7027 = vmatpush1.bf16.xpose.msra.mxu0 0
    %7028 = vmatprep.subr.bf16.mxu0 0
    %7029 = vmatpush1.bf16.xpose.msra.mxu0 0
    %7030 = vmatprep.mubr.bf16.mxu0 0
    %7031 = vmatmul.mubr.bf16.gmra.mrb[0].mxu0 %v6388
    %v7032 = vpop.f32.mrb[0].mxu0
    %v7033 = vadd.f32 0.0, %v7032
    %v7034 = vpop.f32.mrb[0].mxu0
    %v7035 = vpop.f32.mrb[0].mxu0
    %v7036 = vpop.f32.mrb[0].mxu0
    %7037 = vdwg.mxu0
    %7038 = vmatprep.subr.bf16.mxu0 0
    %7039 = vmatpush1.bf16.xpose.msra.mxu0 %v6421
    %7040 = vmatprep.subr.bf16.mxu0 0
    %7041 = vmatpush1.bf16.xpose.msra.mxu0 0
    %7042 = vmatprep.subr.bf16.mxu0 0
    %7043 = vmatpush1.bf16.xpose.msra.mxu0 0
    %7044 = vmatprep.subr.bf16.mxu0 0
    %7045 = vmatpush1.bf16.xpose.msra.mxu0 0
    %7046 = vmatprep.subr.bf16.mxu0 0
    %7047 = vmatpush1.bf16.xpose.msra.mxu0 0
    %7048 = vmatprep.subr.bf16.mxu0 0
    %7049 = vmatpush1.bf16.xpose.msra.mxu0 0
    %7050 = vmatprep.subr.bf16.mxu0 0
    %7051 = vmatpush1.bf16.xpose.msra.mxu0 0
    %7052 = vmatprep.subr.bf16.mxu0 0
    %7053 = vmatpush1.bf16.xpose.msra.mxu0 0
    %7054 = vmatprep.subr.bf16.mxu0 0
    %7055 = vmatpush1.bf16.xpose.msra.mxu0 0
    %7056 = vmatprep.subr.bf16.mxu0 0
    %7057 = vmatpush1.bf16.xpose.msra.mxu0 0
    %7058 = vmatprep.subr.bf16.mxu0 0
    %7059 = vmatpush1.bf16.xpose.msra.mxu0 0
    %7060 = vmatprep.subr.bf16.mxu0 0
    %7061 = vmatpush1.bf16.xpose.msra.mxu0 0
    %7062 = vmatprep.subr.bf16.mxu0 0
    %7063 = vmatpush1.bf16.xpose.msra.mxu0 0
    %7064 = vmatprep.subr.bf16.mxu0 0
    %7065 = vmatpush1.bf16.xpose.msra.mxu0 0
    %7066 = vmatprep.subr.bf16.mxu0 0
    %7067 = vmatpush1.bf16.xpose.msra.mxu0 0
    %7068 = vmatprep.subr.bf16.mxu0 0
    %7069 = vmatpush1.bf16.xpose.msra.mxu0 0
    %7070 = vmatprep.mubr.bf16.mxu0 0
    %7071 = vmatmul.mubr.bf16.gmra.mrb[0].mxu0 %v6389
    %v7072 = vpop.f32.mrb[0].mxu0
    %v7073 = vadd.f32 0.0, %v7072
    %v7074 = vpop.f32.mrb[0].mxu0
    %v7075 = vpop.f32.mrb[0].mxu0
    %v7076 = vpop.f32.mrb[0].mxu0
    %7077 = vdwg.mxu0
    %7078 = vmatprep.subr.bf16.mxu0 0
    %7079 = vmatpush1.bf16.xpose.msra.mxu0 %v6422
    %7080 = vmatprep.subr.bf16.mxu0 0
    %7081 = vmatpush1.bf16.xpose.msra.mxu0 0
    %7082 = vmatprep.subr.bf16.mxu0 0
    %7083 = vmatpush1.bf16.xpose.msra.mxu0 0
    %7084 = vmatprep.subr.bf16.mxu0 0
    %7085 = vmatpush1.bf16.xpose.msra.mxu0 0
    %7086 = vmatprep.subr.bf16.mxu0 0
    %7087 = vmatpush1.bf16.xpose.msra.mxu0 0
    %7088 = vmatprep.subr.bf16.mxu0 0
    %7089 = vmatpush1.bf16.xpose.msra.mxu0 0
    %7090 = vmatprep.subr.bf16.mxu0 0
    %7091 = vmatpush1.bf16.xpose.msra.mxu0 0
    %7092 = vmatprep.subr.bf16.mxu0 0
    %7093 = vmatpush1.bf16.xpose.msra.mxu0 0
    %7094 = vmatprep.subr.bf16.mxu0 0
    %7095 = vmatpush1.bf16.xpose.msra.mxu0 0
    %7096 = vmatprep.subr.bf16.mxu0 0
    %7097 = vmatpush1.bf16.xpose.msra.mxu0 0
    %7098 = vmatprep.subr.bf16.mxu0 0
    %7099 = vmatpush1.bf16.xpose.msra.mxu0 0
    %7100 = vmatprep.subr.bf16.mxu0 0
    %7101 = vmatpush1.bf16.xpose.msra.mxu0 0
    %7102 = vmatprep.subr.bf16.mxu0 0
    %7103 = vmatpush1.bf16.xpose.msra.mxu0 0
    %7104 = vmatprep.subr.bf16.mxu0 0
    %7105 = vmatpush1.bf16.xpose.msra.mxu0 0
    %7106 = vmatprep.subr.bf16.mxu0 0
    %7107 = vmatpush1.bf16.xpose.msra.mxu0 0
    %7108 = vmatprep.subr.bf16.mxu0 0
    %7109 = vmatpush1.bf16.xpose.msra.mxu0 0
    %7110 = vmatprep.mubr.bf16.mxu0 0
    %7111 = vmatmul.mubr.bf16.gmra.mrb[0].mxu0 %v6390
    %v7112 = vpop.f32.mrb[0].mxu0
    %v7113 = vadd.f32 0.0, %v7112
    %v7114 = vpop.f32.mrb[0].mxu0
    %v7115 = vpop.f32.mrb[0].mxu0
    %v7116 = vpop.f32.mrb[0].mxu0
    %7117 = vdwg.mxu0
    %7118 = vmatprep.subr.bf16.mxu0 0
    %7119 = vmatpush1.bf16.xpose.msra.mxu0 %v6423
    %7120 = vmatprep.subr.bf16.mxu0 0
    %7121 = vmatpush1.bf16.xpose.msra.mxu0 0
    %7122 = vmatprep.subr.bf16.mxu0 0
    %7123 = vmatpush1.bf16.xpose.msra.mxu0 0
    %7124 = vmatprep.subr.bf16.mxu0 0
    %7125 = vmatpush1.bf16.xpose.msra.mxu0 0
    %7126 = vmatprep.subr.bf16.mxu0 0
    %7127 = vmatpush1.bf16.xpose.msra.mxu0 0
    %7128 = vmatprep.subr.bf16.mxu0 0
    %7129 = vmatpush1.bf16.xpose.msra.mxu0 0
    %7130 = vmatprep.subr.bf16.mxu0 0
    %7131 = vmatpush1.bf16.xpose.msra.mxu0 0
    %7132 = vmatprep.subr.bf16.mxu0 0
    %7133 = vmatpush1.bf16.xpose.msra.mxu0 0
    %7134 = vmatprep.subr.bf16.mxu0 0
    %7135 = vmatpush1.bf16.xpose.msra.mxu0 0
    %7136 = vmatprep.subr.bf16.mxu0 0
    %7137 = vmatpush1.bf16.xpose.msra.mxu0 0
    %7138 = vmatprep.subr.bf16.mxu0 0
    %7139 = vmatpush1.bf16.xpose.msra.mxu0 0
    %7140 = vmatprep.subr.bf16.mxu0 0
    %7141 = vmatpush1.bf16.xpose.msra.mxu0 0
    %7142 = vmatprep.subr.bf16.mxu0 0
    %7143 = vmatpush1.bf16.xpose.msra.mxu0 0
    %7144 = vmatprep.subr.bf16.mxu0 0
    %7145 = vmatpush1.bf16.xpose.msra.mxu0 0
    %7146 = vmatprep.subr.bf16.mxu0 0
    %7147 = vmatpush1.bf16.xpose.msra.mxu0 0
    %7148 = vmatprep.subr.bf16.mxu0 0
    %7149 = vmatpush1.bf16.xpose.msra.mxu0 0
    %7150 = vmatprep.mubr.bf16.mxu0 0
    %7151 = vmatmul.mubr.bf16.gmra.mrb[0].mxu0 %v6391
    %v7152 = vpop.f32.mrb[0].mxu0
    %v7153 = vadd.f32 0.0, %v7152
    %v7154 = vpop.f32.mrb[0].mxu0
    %v7155 = vpop.f32.mrb[0].mxu0
    %v7156 = vpop.f32.mrb[0].mxu0
    %7157 = vdwg.mxu0
    %7158 = vmatprep.subr.bf16.mxu0 0
    %7159 = vmatpush1.bf16.xpose.msra.mxu0 %v6424
    %7160 = vmatprep.subr.bf16.mxu0 0
    %7161 = vmatpush1.bf16.xpose.msra.mxu0 0
    %7162 = vmatprep.subr.bf16.mxu0 0
    %7163 = vmatpush1.bf16.xpose.msra.mxu0 0
    %7164 = vmatprep.subr.bf16.mxu0 0
    %7165 = vmatpush1.bf16.xpose.msra.mxu0 0
    %7166 = vmatprep.subr.bf16.mxu0 0
    %7167 = vmatpush1.bf16.xpose.msra.mxu0 0
    %7168 = vmatprep.subr.bf16.mxu0 0
    %7169 = vmatpush1.bf16.xpose.msra.mxu0 0
    %7170 = vmatprep.subr.bf16.mxu0 0
    %7171 = vmatpush1.bf16.xpose.msra.mxu0 0
    %7172 = vmatprep.subr.bf16.mxu0 0
    %7173 = vmatpush1.bf16.xpose.msra.mxu0 0
    %7174 = vmatprep.subr.bf16.mxu0 0
    %7175 = vmatpush1.bf16.xpose.msra.mxu0 0
    %7176 = vmatprep.subr.bf16.mxu0 0
    %7177 = vmatpush1.bf16.xpose.msra.mxu0 0
    %7178 = vmatprep.subr.bf16.mxu0 0
    %7179 = vmatpush1.bf16.xpose.msra.mxu0 0
    %7180 = vmatprep.subr.bf16.mxu0 0
    %7181 = vmatpush1.bf16.xpose.msra.mxu0 0
    %7182 = vmatprep.subr.bf16.mxu0 0
    %7183 = vmatpush1.bf16.xpose.msra.mxu0 0
    %7184 = vmatprep.subr.bf16.mxu0 0
    %7185 = vmatpush1.bf16.xpose.msra.mxu0 0
    %7186 = vmatprep.subr.bf16.mxu0 0
    %7187 = vmatpush1.bf16.xpose.msra.mxu0 0
    %7188 = vmatprep.subr.bf16.mxu0 0
    %7189 = vmatpush1.bf16.xpose.msra.mxu0 0
    %7190 = vmatprep.mubr.bf16.mxu0 0
    %7191 = vmatmul.mubr.bf16.gmra.mrb[0].mxu0 %v6392
    %v7192 = vpop.f32.mrb[0].mxu0
    %v7193 = vadd.f32 0.0, %v7192
    %v7194 = vpop.f32.mrb[0].mxu0
    %v7195 = vpop.f32.mrb[0].mxu0
    %v7196 = vpop.f32.mrb[0].mxu0
    %7197 = vdwg.mxu0
    %7198 = vmatprep.subr.bf16.mxu0 0
    %7199 = vmatpush1.bf16.xpose.msra.mxu0 %v6425
    %7200 = vmatprep.subr.bf16.mxu0 0
    %7201 = vmatpush1.bf16.xpose.msra.mxu0 0
    %7202 = vmatprep.subr.bf16.mxu0 0
    %7203 = vmatpush1.bf16.xpose.msra.mxu0 0
    %7204 = vmatprep.subr.bf16.mxu0 0
    %7205 = vmatpush1.bf16.xpose.msra.mxu0 0
    %7206 = vmatprep.subr.bf16.mxu0 0
    %7207 = vmatpush1.bf16.xpose.msra.mxu0 0
    %7208 = vmatprep.subr.bf16.mxu0 0
    %7209 = vmatpush1.bf16.xpose.msra.mxu0 0
    %7210 = vmatprep.subr.bf16.mxu0 0
    %7211 = vmatpush1.bf16.xpose.msra.mxu0 0
    %7212 = vmatprep.subr.bf16.mxu0 0
    %7213 = vmatpush1.bf16.xpose.msra.mxu0 0
    %7214 = vmatprep.subr.bf16.mxu0 0
    %7215 = vmatpush1.bf16.xpose.msra.mxu0 0
    %7216 = vmatprep.subr.bf16.mxu0 0
    %7217 = vmatpush1.bf16.xpose.msra.mxu0 0
    %7218 = vmatprep.subr.bf16.mxu0 0
    %7219 = vmatpush1.bf16.xpose.msra.mxu0 0
    %7220 = vmatprep.subr.bf16.mxu0 0
    %7221 = vmatpush1.bf16.xpose.msra.mxu0 0
    %7222 = vmatprep.subr.bf16.mxu0 0
    %7223 = vmatpush1.bf16.xpose.msra.mxu0 0
    %7224 = vmatprep.subr.bf16.mxu0 0
    %7225 = vmatpush1.bf16.xpose.msra.mxu0 0
    %7226 = vmatprep.subr.bf16.mxu0 0
    %7227 = vmatpush1.bf16.xpose.msra.mxu0 0
    %7228 = vmatprep.subr.bf16.mxu0 0
    %7229 = vmatpush1.bf16.xpose.msra.mxu0 0
    %7230 = vmatprep.mubr.bf16.mxu0 0
    %7231 = vmatmul.mubr.bf16.gmra.mrb[0].mxu0 %v6393
    %v7232 = vpop.f32.mrb[0].mxu0
    %v7233 = vadd.f32 0.0, %v7232
    %v7234 = vpop.f32.mrb[0].mxu0
    %v7235 = vpop.f32.mrb[0].mxu0
    %v7236 = vpop.f32.mrb[0].mxu0
    %7237 = vdwg.mxu0
    %7238 = vmatprep.subr.bf16.mxu0 0
    %7239 = vmatpush1.bf16.xpose.msra.mxu0 %v6426
    %7240 = vmatprep.subr.bf16.mxu0 0
    %7241 = vmatpush1.bf16.xpose.msra.mxu0 0
    %7242 = vmatprep.subr.bf16.mxu0 0
    %7243 = vmatpush1.bf16.xpose.msra.mxu0 0
    %7244 = vmatprep.subr.bf16.mxu0 0
    %7245 = vmatpush1.bf16.xpose.msra.mxu0 0
    %7246 = vmatprep.subr.bf16.mxu0 0
    %7247 = vmatpush1.bf16.xpose.msra.mxu0 0
    %7248 = vmatprep.subr.bf16.mxu0 0
    %7249 = vmatpush1.bf16.xpose.msra.mxu0 0
    %7250 = vmatprep.subr.bf16.mxu0 0
    %7251 = vmatpush1.bf16.xpose.msra.mxu0 0
    %7252 = vmatprep.subr.bf16.mxu0 0
    %7253 = vmatpush1.bf16.xpose.msra.mxu0 0
    %7254 = vmatprep.subr.bf16.mxu0 0
    %7255 = vmatpush1.bf16.xpose.msra.mxu0 0
    %7256 = vmatprep.subr.bf16.mxu0 0
    %7257 = vmatpush1.bf16.xpose.msra.mxu0 0
    %7258 = vmatprep.subr.bf16.mxu0 0
    %7259 = vmatpush1.bf16.xpose.msra.mxu0 0
    %7260 = vmatprep.subr.bf16.mxu0 0
    %7261 = vmatpush1.bf16.xpose.msra.mxu0 0
    %7262 = vmatprep.subr.bf16.mxu0 0
    %7263 = vmatpush1.bf16.xpose.msra.mxu0 0
    %7264 = vmatprep.subr.bf16.mxu0 0
    %7265 = vmatpush1.bf16.xpose.msra.mxu0 0
    %7266 = vmatprep.subr.bf16.mxu0 0
    %7267 = vmatpush1.bf16.xpose.msra.mxu0 0
    %7268 = vmatprep.subr.bf16.mxu0 0
    %7269 = vmatpush1.bf16.xpose.msra.mxu0 0
    %7270 = vmatprep.mubr.bf16.mxu0 0
    %7271 = vmatmul.mubr.bf16.gmra.mrb[0].mxu0 %v6394
    %v7272 = vpop.f32.mrb[0].mxu0
    %v7273 = vadd.f32 0.0, %v7272
    %v7274 = vpop.f32.mrb[0].mxu0
    %v7275 = vpop.f32.mrb[0].mxu0
    %v7276 = vpop.f32.mrb[0].mxu0
    %7277 = vdwg.mxu0
    %7278 = vmatprep.subr.bf16.mxu0 0
    %7279 = vmatpush1.bf16.xpose.msra.mxu0 %v6427
    %7280 = vmatprep.subr.bf16.mxu0 0
    %7281 = vmatpush1.bf16.xpose.msra.mxu0 0
    %7282 = vmatprep.subr.bf16.mxu0 0
    %7283 = vmatpush1.bf16.xpose.msra.mxu0 0
    %7284 = vmatprep.subr.bf16.mxu0 0
    %7285 = vmatpush1.bf16.xpose.msra.mxu0 0
    %7286 = vmatprep.subr.bf16.mxu0 0
    %7287 = vmatpush1.bf16.xpose.msra.mxu0 0
    %7288 = vmatprep.subr.bf16.mxu0 0
    %7289 = vmatpush1.bf16.xpose.msra.mxu0 0
    %7290 = vmatprep.subr.bf16.mxu0 0
    %7291 = vmatpush1.bf16.xpose.msra.mxu0 0
    %7292 = vmatprep.subr.bf16.mxu0 0
    %7293 = vmatpush1.bf16.xpose.msra.mxu0 0
    %7294 = vmatprep.subr.bf16.mxu0 0
    %7295 = vmatpush1.bf16.xpose.msra.mxu0 0
    %7296 = vmatprep.subr.bf16.mxu0 0
    %7297 = vmatpush1.bf16.xpose.msra.mxu0 0
    %7298 = vmatprep.subr.bf16.mxu0 0
    %7299 = vmatpush1.bf16.xpose.msra.mxu0 0
    %7300 = vmatprep.subr.bf16.mxu0 0
    %7301 = vmatpush1.bf16.xpose.msra.mxu0 0
    %7302 = vmatprep.subr.bf16.mxu0 0
    %7303 = vmatpush1.bf16.xpose.msra.mxu0 0
    %7304 = vmatprep.subr.bf16.mxu0 0
    %7305 = vmatpush1.bf16.xpose.msra.mxu0 0
    %7306 = vmatprep.subr.bf16.mxu0 0
    %7307 = vmatpush1.bf16.xpose.msra.mxu0 0
    %7308 = vmatprep.subr.bf16.mxu0 0
    %7309 = vmatpush1.bf16.xpose.msra.mxu0 0
    %7310 = vmatprep.mubr.bf16.mxu0 0
    %7311 = vmatmul.mubr.bf16.gmra.mrb[0].mxu0 %v6395
    %v7312 = vpop.f32.mrb[0].mxu0
    %v7313 = vadd.f32 0.0, %v7312
    %v7314 = vpop.f32.mrb[0].mxu0
    %v7315 = vpop.f32.mrb[0].mxu0
    %v7316 = vpop.f32.mrb[0].mxu0
    %7317 = vdwg.mxu0
    %7318 = vmatprep.subr.bf16.mxu0 0
    %7319 = vmatpush1.bf16.xpose.msra.mxu0 %v6428
    %7320 = vmatprep.subr.bf16.mxu0 0
    %7321 = vmatpush1.bf16.xpose.msra.mxu0 0
    %7322 = vmatprep.subr.bf16.mxu0 0
    %7323 = vmatpush1.bf16.xpose.msra.mxu0 0
    %7324 = vmatprep.subr.bf16.mxu0 0
    %7325 = vmatpush1.bf16.xpose.msra.mxu0 0
    %7326 = vmatprep.subr.bf16.mxu0 0
    %7327 = vmatpush1.bf16.xpose.msra.mxu0 0
    %7328 = vmatprep.subr.bf16.mxu0 0
    %7329 = vmatpush1.bf16.xpose.msra.mxu0 0
    %7330 = vmatprep.subr.bf16.mxu0 0
    %7331 = vmatpush1.bf16.xpose.msra.mxu0 0
    %7332 = vmatprep.subr.bf16.mxu0 0
    %7333 = vmatpush1.bf16.xpose.msra.mxu0 0
    %7334 = vmatprep.subr.bf16.mxu0 0
    %7335 = vmatpush1.bf16.xpose.msra.mxu0 0
    %7336 = vmatprep.subr.bf16.mxu0 0
    %7337 = vmatpush1.bf16.xpose.msra.mxu0 0
    %7338 = vmatprep.subr.bf16.mxu0 0
    %7339 = vmatpush1.bf16.xpose.msra.mxu0 0
    %7340 = vmatprep.subr.bf16.mxu0 0
    %7341 = vmatpush1.bf16.xpose.msra.mxu0 0
    %7342 = vmatprep.subr.bf16.mxu0 0
    %7343 = vmatpush1.bf16.xpose.msra.mxu0 0
    %7344 = vmatprep.subr.bf16.mxu0 0
    %7345 = vmatpush1.bf16.xpose.msra.mxu0 0
    %7346 = vmatprep.subr.bf16.mxu0 0
    %7347 = vmatpush1.bf16.xpose.msra.mxu0 0
    %7348 = vmatprep.subr.bf16.mxu0 0
    %7349 = vmatpush1.bf16.xpose.msra.mxu0 0
    %7350 = vmatprep.mubr.bf16.mxu0 0
    %7351 = vmatmul.mubr.bf16.gmra.mrb[0].mxu0 %v6396
    %v7352 = vpop.f32.mrb[0].mxu0
    %v7353 = vadd.f32 0.0, %v7352
    %v7354 = vpop.f32.mrb[0].mxu0
    %v7355 = vpop.f32.mrb[0].mxu0
    %v7356 = vpop.f32.mrb[0].mxu0
    %7357 = vdwg.mxu0
    %7358 = vmatprep.subr.bf16.mxu0 0
    %7359 = vmatpush1.bf16.xpose.msra.mxu0 %v6429
    %7360 = vmatprep.subr.bf16.mxu0 0
    %7361 = vmatpush1.bf16.xpose.msra.mxu0 0
    %7362 = vmatprep.subr.bf16.mxu0 0
    %7363 = vmatpush1.bf16.xpose.msra.mxu0 0
    %7364 = vmatprep.subr.bf16.mxu0 0
    %7365 = vmatpush1.bf16.xpose.msra.mxu0 0
    %7366 = vmatprep.subr.bf16.mxu0 0
    %7367 = vmatpush1.bf16.xpose.msra.mxu0 0
    %7368 = vmatprep.subr.bf16.mxu0 0
    %7369 = vmatpush1.bf16.xpose.msra.mxu0 0
    %7370 = vmatprep.subr.bf16.mxu0 0
    %7371 = vmatpush1.bf16.xpose.msra.mxu0 0
    %7372 = vmatprep.subr.bf16.mxu0 0
    %7373 = vmatpush1.bf16.xpose.msra.mxu0 0
    %7374 = vmatprep.subr.bf16.mxu0 0
    %7375 = vmatpush1.bf16.xpose.msra.mxu0 0
    %7376 = vmatprep.subr.bf16.mxu0 0
    %7377 = vmatpush1.bf16.xpose.msra.mxu0 0
    %7378 = vmatprep.subr.bf16.mxu0 0
    %7379 = vmatpush1.bf16.xpose.msra.mxu0 0
    %7380 = vmatprep.subr.bf16.mxu0 0
    %7381 = vmatpush1.bf16.xpose.msra.mxu0 0
    %7382 = vmatprep.subr.bf16.mxu0 0
    %7383 = vmatpush1.bf16.xpose.msra.mxu0 0
    %7384 = vmatprep.subr.bf16.mxu0 0
    %7385 = vmatpush1.bf16.xpose.msra.mxu0 0
    %7386 = vmatprep.subr.bf16.mxu0 0
    %7387 = vmatpush1.bf16.xpose.msra.mxu0 0
    %7388 = vmatprep.subr.bf16.mxu0 0
    %7389 = vmatpush1.bf16.xpose.msra.mxu0 0
    %7390 = vmatprep.mubr.bf16.mxu0 0
    %7391 = vmatmul.mubr.bf16.gmra.mrb[0].mxu0 %v6397
    %v7392 = vpop.f32.mrb[0].mxu0
    %v7393 = vadd.f32 0.0, %v7392
    %v7394 = vpop.f32.mrb[0].mxu0
    %v7395 = vpop.f32.mrb[0].mxu0
    %v7396 = vpop.f32.mrb[0].mxu0
    %7397 = vdwg.mxu0
    %7398 = vmatprep.subr.bf16.mxu0 0
    %7399 = vmatpush1.bf16.xpose.msra.mxu0 %v6430
    %7400 = vmatprep.subr.bf16.mxu0 0
    %7401 = vmatpush1.bf16.xpose.msra.mxu0 0
    %7402 = vmatprep.subr.bf16.mxu0 0
    %7403 = vmatpush1.bf16.xpose.msra.mxu0 0
    %7404 = vmatprep.subr.bf16.mxu0 0
    %7405 = vmatpush1.bf16.xpose.msra.mxu0 0
    %7406 = vmatprep.subr.bf16.mxu0 0
    %7407 = vmatpush1.bf16.xpose.msra.mxu0 0
    %7408 = vmatprep.subr.bf16.mxu0 0
    %7409 = vmatpush1.bf16.xpose.msra.mxu0 0
    %7410 = vmatprep.subr.bf16.mxu0 0
    %7411 = vmatpush1.bf16.xpose.msra.mxu0 0
    %7412 = vmatprep.subr.bf16.mxu0 0
    %7413 = vmatpush1.bf16.xpose.msra.mxu0 0
    %7414 = vmatprep.subr.bf16.mxu0 0
    %7415 = vmatpush1.bf16.xpose.msra.mxu0 0
    %7416 = vmatprep.subr.bf16.mxu0 0
    %7417 = vmatpush1.bf16.xpose.msra.mxu0 0
    %7418 = vmatprep.subr.bf16.mxu0 0
    %7419 = vmatpush1.bf16.xpose.msra.mxu0 0
    %7420 = vmatprep.subr.bf16.mxu0 0
    %7421 = vmatpush1.bf16.xpose.msra.mxu0 0
    %7422 = vmatprep.subr.bf16.mxu0 0
    %7423 = vmatpush1.bf16.xpose.msra.mxu0 0
    %7424 = vmatprep.subr.bf16.mxu0 0
    %7425 = vmatpush1.bf16.xpose.msra.mxu0 0
    %7426 = vmatprep.subr.bf16.mxu0 0
    %7427 = vmatpush1.bf16.xpose.msra.mxu0 0
    %7428 = vmatprep.subr.bf16.mxu0 0
    %7429 = vmatpush1.bf16.xpose.msra.mxu0 0
    %7430 = vmatprep.mubr.bf16.mxu0 0
    %7431 = vmatmul.mubr.bf16.gmra.mrb[0].mxu0 %v6398
    %v7432 = vpop.f32.mrb[0].mxu0
    %v7433 = vadd.f32 0.0, %v7432
    %v7434 = vpop.f32.mrb[0].mxu0
    %v7435 = vpop.f32.mrb[0].mxu0
    %v7436 = vpop.f32.mrb[0].mxu0
    %7437 = vdwg.mxu0
    %7438 = vmatprep.subr.bf16.mxu0 0
    %7439 = vmatpush1.bf16.xpose.msra.mxu0 %v6431
    %7440 = vmatprep.subr.bf16.mxu0 0
    %7441 = vmatpush1.bf16.xpose.msra.mxu0 0
    %7442 = vmatprep.subr.bf16.mxu0 0
    %7443 = vmatpush1.bf16.xpose.msra.mxu0 0
    %7444 = vmatprep.subr.bf16.mxu0 0
    %7445 = vmatpush1.bf16.xpose.msra.mxu0 0
    %7446 = vmatprep.subr.bf16.mxu0 0
    %7447 = vmatpush1.bf16.xpose.msra.mxu0 0
    %7448 = vmatprep.subr.bf16.mxu0 0
    %7449 = vmatpush1.bf16.xpose.msra.mxu0 0
    %7450 = vmatprep.subr.bf16.mxu0 0
    %7451 = vmatpush1.bf16.xpose.msra.mxu0 0
    %7452 = vmatprep.subr.bf16.mxu0 0
    %7453 = vmatpush1.bf16.xpose.msra.mxu0 0
    %7454 = vmatprep.subr.bf16.mxu0 0
    %7455 = vmatpush1.bf16.xpose.msra.mxu0 0
    %7456 = vmatprep.subr.bf16.mxu0 0
    %7457 = vmatpush1.bf16.xpose.msra.mxu0 0
    %7458 = vmatprep.subr.bf16.mxu0 0
    %7459 = vmatpush1.bf16.xpose.msra.mxu0 0
    %7460 = vmatprep.subr.bf16.mxu0 0
    %7461 = vmatpush1.bf16.xpose.msra.mxu0 0
    %7462 = vmatprep.subr.bf16.mxu0 0
    %7463 = vmatpush1.bf16.xpose.msra.mxu0 0
    %7464 = vmatprep.subr.bf16.mxu0 0
    %7465 = vmatpush1.bf16.xpose.msra.mxu0 0
    %7466 = vmatprep.subr.bf16.mxu0 0
    %7467 = vmatpush1.bf16.xpose.msra.mxu0 0
    %7468 = vmatprep.subr.bf16.mxu0 0
    %7469 = vmatpush1.bf16.xpose.msra.mxu0 0
    %7470 = vmatprep.mubr.bf16.mxu0 0
    %7471 = vmatmul.mubr.bf16.gmra.mrb[0].mxu0 %v6399
    %v7472 = vpop.f32.mrb[0].mxu0
    %v7473 = vadd.f32 0.0, %v7472
    %v7474 = vpop.f32.mrb[0].mxu0
    %v7475 = vpop.f32.mrb[0].mxu0
    %v7476 = vpop.f32.mrb[0].mxu0
    %7477 = vdwg.mxu0
    %7478 = vmatprep.subr.bf16.mxu0 0
    %7479 = vmatpush1.bf16.xpose.msra.mxu0 %v6432
    %7480 = vmatprep.subr.bf16.mxu0 0
    %7481 = vmatpush1.bf16.xpose.msra.mxu0 0
    %7482 = vmatprep.subr.bf16.mxu0 0
    %7483 = vmatpush1.bf16.xpose.msra.mxu0 0
    %7484 = vmatprep.subr.bf16.mxu0 0
    %7485 = vmatpush1.bf16.xpose.msra.mxu0 0
    %7486 = vmatprep.subr.bf16.mxu0 0
    %7487 = vmatpush1.bf16.xpose.msra.mxu0 0
    %7488 = vmatprep.subr.bf16.mxu0 0
    %7489 = vmatpush1.bf16.xpose.msra.mxu0 0
    %7490 = vmatprep.subr.bf16.mxu0 0
    %7491 = vmatpush1.bf16.xpose.msra.mxu0 0
    %7492 = vmatprep.subr.bf16.mxu0 0
    %7493 = vmatpush1.bf16.xpose.msra.mxu0 0
    %7494 = vmatprep.subr.bf16.mxu0 0
    %7495 = vmatpush1.bf16.xpose.msra.mxu0 0
    %7496 = vmatprep.subr.bf16.mxu0 0
    %7497 = vmatpush1.bf16.xpose.msra.mxu0 0
    %7498 = vmatprep.subr.bf16.mxu0 0
    %7499 = vmatpush1.bf16.xpose.msra.mxu0 0
    %7500 = vmatprep.subr.bf16.mxu0 0
    %7501 = vmatpush1.bf16.xpose.msra.mxu0 0
    %7502 = vmatprep.subr.bf16.mxu0 0
    %7503 = vmatpush1.bf16.xpose.msra.mxu0 0
    %7504 = vmatprep.subr.bf16.mxu0 0
    %7505 = vmatpush1.bf16.xpose.msra.mxu0 0
    %7506 = vmatprep.subr.bf16.mxu0 0
    %7507 = vmatpush1.bf16.xpose.msra.mxu0 0
    %7508 = vmatprep.subr.bf16.mxu0 0
    %7509 = vmatpush1.bf16.xpose.msra.mxu0 0
    %7510 = vmatprep.mubr.bf16.mxu0 0
    %7511 = vmatmul.mubr.bf16.gmra.mrb[0].mxu0 %v6400
    %v7512 = vpop.f32.mrb[0].mxu0
    %v7513 = vadd.f32 0.0, %v7512
    %v7514 = vpop.f32.mrb[0].mxu0
    %v7515 = vpop.f32.mrb[0].mxu0
    %v7516 = vpop.f32.mrb[0].mxu0
    %7517 = vdwg.mxu0
    %7518 = vmatprep.subr.bf16.mxu0 0
    %7519 = vmatpush1.bf16.xpose.msra.mxu0 %v6433
    %7520 = vmatprep.subr.bf16.mxu0 0
    %7521 = vmatpush1.bf16.xpose.msra.mxu0 0
    %7522 = vmatprep.subr.bf16.mxu0 0
    %7523 = vmatpush1.bf16.xpose.msra.mxu0 0
    %7524 = vmatprep.subr.bf16.mxu0 0
    %7525 = vmatpush1.bf16.xpose.msra.mxu0 0
    %7526 = vmatprep.subr.bf16.mxu0 0
    %7527 = vmatpush1.bf16.xpose.msra.mxu0 0
    %7528 = vmatprep.subr.bf16.mxu0 0
    %7529 = vmatpush1.bf16.xpose.msra.mxu0 0
    %7530 = vmatprep.subr.bf16.mxu0 0
    %7531 = vmatpush1.bf16.xpose.msra.mxu0 0
    %7532 = vmatprep.subr.bf16.mxu0 0
    %7533 = vmatpush1.bf16.xpose.msra.mxu0 0
    %7534 = vmatprep.subr.bf16.mxu0 0
    %7535 = vmatpush1.bf16.xpose.msra.mxu0 0
    %7536 = vmatprep.subr.bf16.mxu0 0
    %7537 = vmatpush1.bf16.xpose.msra.mxu0 0
    %7538 = vmatprep.subr.bf16.mxu0 0
    %7539 = vmatpush1.bf16.xpose.msra.mxu0 0
    %7540 = vmatprep.subr.bf16.mxu0 0
    %7541 = vmatpush1.bf16.xpose.msra.mxu0 0
    %7542 = vmatprep.subr.bf16.mxu0 0
    %7543 = vmatpush1.bf16.xpose.msra.mxu0 0
    %7544 = vmatprep.subr.bf16.mxu0 0
    %7545 = vmatpush1.bf16.xpose.msra.mxu0 0
    %7546 = vmatprep.subr.bf16.mxu0 0
    %7547 = vmatpush1.bf16.xpose.msra.mxu0 0
    %7548 = vmatprep.subr.bf16.mxu0 0
    %7549 = vmatpush1.bf16.xpose.msra.mxu0 0
    %7550 = vmatprep.mubr.bf16.mxu0 0
    %7551 = vmatmul.mubr.bf16.gmra.mrb[0].mxu0 %v6401
    %v7552 = vpop.f32.mrb[0].mxu0
    %v7553 = vadd.f32 0.0, %v7552
    %v7554 = vpop.f32.mrb[0].mxu0
    %v7555 = vpop.f32.mrb[0].mxu0
    %v7556 = vpop.f32.mrb[0].mxu0
    %7557 = vdwg.mxu0
    %7558 = vmatprep.subr.bf16.mxu0 0
    %7559 = vmatpush1.bf16.xpose.msra.mxu0 %v6434
    %7560 = vmatprep.subr.bf16.mxu0 0
    %7561 = vmatpush1.bf16.xpose.msra.mxu0 0
    %7562 = vmatprep.subr.bf16.mxu0 0
    %7563 = vmatpush1.bf16.xpose.msra.mxu0 0
    %7564 = vmatprep.subr.bf16.mxu0 0
    %7565 = vmatpush1.bf16.xpose.msra.mxu0 0
    %7566 = vmatprep.subr.bf16.mxu0 0
    %7567 = vmatpush1.bf16.xpose.msra.mxu0 0
    %7568 = vmatprep.subr.bf16.mxu0 0
    %7569 = vmatpush1.bf16.xpose.msra.mxu0 0
    %7570 = vmatprep.subr.bf16.mxu0 0
    %7571 = vmatpush1.bf16.xpose.msra.mxu0 0
    %7572 = vmatprep.subr.bf16.mxu0 0
    %7573 = vmatpush1.bf16.xpose.msra.mxu0 0
    %7574 = vmatprep.subr.bf16.mxu0 0
    %7575 = vmatpush1.bf16.xpose.msra.mxu0 0
    %7576 = vmatprep.subr.bf16.mxu0 0
    %7577 = vmatpush1.bf16.xpose.msra.mxu0 0
    %7578 = vmatprep.subr.bf16.mxu0 0
    %7579 = vmatpush1.bf16.xpose.msra.mxu0 0
    %7580 = vmatprep.subr.bf16.mxu0 0
    %7581 = vmatpush1.bf16.xpose.msra.mxu0 0
    %7582 = vmatprep.subr.bf16.mxu0 0
    %7583 = vmatpush1.bf16.xpose.msra.mxu0 0
    %7584 = vmatprep.subr.bf16.mxu0 0
    %7585 = vmatpush1.bf16.xpose.msra.mxu0 0
    %7586 = vmatprep.subr.bf16.mxu0 0
    %7587 = vmatpush1.bf16.xpose.msra.mxu0 0
    %7588 = vmatprep.subr.bf16.mxu0 0
    %7589 = vmatpush1.bf16.xpose.msra.mxu0 0
    %7590 = vmatprep.mubr.bf16.mxu0 0
    %7591 = vmatmul.mubr.bf16.gmra.mrb[0].mxu0 %v6402
    %v7592 = vpop.f32.mrb[0].mxu0
    %v7593 = vadd.f32 0.0, %v7592
    %v7594 = vpop.f32.mrb[0].mxu0
    %v7595 = vpop.f32.mrb[0].mxu0
    %v7596 = vpop.f32.mrb[0].mxu0
    %7597 = vdwg.mxu0
    %7598 = vmatprep.subr.bf16.mxu0 0
    %7599 = vmatpush1.bf16.xpose.msra.mxu0 %v6435
    %7600 = vmatprep.subr.bf16.mxu0 0
    %7601 = vmatpush1.bf16.xpose.msra.mxu0 0
    %7602 = vmatprep.subr.bf16.mxu0 0
    %7603 = vmatpush1.bf16.xpose.msra.mxu0 0
    %7604 = vmatprep.subr.bf16.mxu0 0
    %7605 = vmatpush1.bf16.xpose.msra.mxu0 0
    %7606 = vmatprep.subr.bf16.mxu0 0
    %7607 = vmatpush1.bf16.xpose.msra.mxu0 0
    %7608 = vmatprep.subr.bf16.mxu0 0
    %7609 = vmatpush1.bf16.xpose.msra.mxu0 0
    %7610 = vmatprep.subr.bf16.mxu0 0
    %7611 = vmatpush1.bf16.xpose.msra.mxu0 0
    %7612 = vmatprep.subr.bf16.mxu0 0
    %7613 = vmatpush1.bf16.xpose.msra.mxu0 0
    %7614 = vmatprep.subr.bf16.mxu0 0
    %7615 = vmatpush1.bf16.xpose.msra.mxu0 0
    %7616 = vmatprep.subr.bf16.mxu0 0
    %7617 = vmatpush1.bf16.xpose.msra.mxu0 0
    %7618 = vmatprep.subr.bf16.mxu0 0
    %7619 = vmatpush1.bf16.xpose.msra.mxu0 0
    %7620 = vmatprep.subr.bf16.mxu0 0
    %7621 = vmatpush1.bf16.xpose.msra.mxu0 0
    %7622 = vmatprep.subr.bf16.mxu0 0
    %7623 = vmatpush1.bf16.xpose.msra.mxu0 0
    %7624 = vmatprep.subr.bf16.mxu0 0
    %7625 = vmatpush1.bf16.xpose.msra.mxu0 0
    %7626 = vmatprep.subr.bf16.mxu0 0
    %7627 = vmatpush1.bf16.xpose.msra.mxu0 0
    %7628 = vmatprep.subr.bf16.mxu0 0
    %7629 = vmatpush1.bf16.xpose.msra.mxu0 0
    %7630 = vmatprep.mubr.bf16.mxu0 0
    %7631 = vmatmul.mubr.bf16.gmra.mrb[0].mxu0 %v6403
    %v7632 = vpop.f32.mrb[0].mxu0
    %v7633 = vadd.f32 0.0, %v7632
    %v7634 = vpop.f32.mrb[0].mxu0
    %v7635 = vpop.f32.mrb[0].mxu0
    %v7636 = vpop.f32.mrb[0].mxu0
    %7637 = vdwg.mxu0
    %7638 = vmatprep.subr.bf16.mxu0 0
    %7639 = vmatpush1.bf16.xpose.msra.mxu0 %v6436
    %7640 = vmatprep.subr.bf16.mxu0 0
    %7641 = vmatpush1.bf16.xpose.msra.mxu0 0
    %7642 = vmatprep.subr.bf16.mxu0 0
    %7643 = vmatpush1.bf16.xpose.msra.mxu0 0
    %7644 = vmatprep.subr.bf16.mxu0 0
    %7645 = vmatpush1.bf16.xpose.msra.mxu0 0
    %7646 = vmatprep.subr.bf16.mxu0 0
    %7647 = vmatpush1.bf16.xpose.msra.mxu0 0
    %7648 = vmatprep.subr.bf16.mxu0 0
    %7649 = vmatpush1.bf16.xpose.msra.mxu0 0
    %7650 = vmatprep.subr.bf16.mxu0 0
    %7651 = vmatpush1.bf16.xpose.msra.mxu0 0
    %7652 = vmatprep.subr.bf16.mxu0 0
    %7653 = vmatpush1.bf16.xpose.msra.mxu0 0
    %7654 = vmatprep.subr.bf16.mxu0 0
    %7655 = vmatpush1.bf16.xpose.msra.mxu0 0
    %7656 = vmatprep.subr.bf16.mxu0 0
    %7657 = vmatpush1.bf16.xpose.msra.mxu0 0
    %7658 = vmatprep.subr.bf16.mxu0 0
    %7659 = vmatpush1.bf16.xpose.msra.mxu0 0
    %7660 = vmatprep.subr.bf16.mxu0 0
    %7661 = vmatpush1.bf16.xpose.msra.mxu0 0
    %7662 = vmatprep.subr.bf16.mxu0 0
    %7663 = vmatpush1.bf16.xpose.msra.mxu0 0
    %7664 = vmatprep.subr.bf16.mxu0 0
    %7665 = vmatpush1.bf16.xpose.msra.mxu0 0
    %7666 = vmatprep.subr.bf16.mxu0 0
    %7667 = vmatpush1.bf16.xpose.msra.mxu0 0
    %7668 = vmatprep.subr.bf16.mxu0 0
    %7669 = vmatpush1.bf16.xpose.msra.mxu0 0
    %7670 = vmatprep.mubr.bf16.mxu0 0
    %7671 = vmatmul.mubr.bf16.gmra.mrb[0].mxu0 %v6404
    %v7672 = vpop.f32.mrb[0].mxu0
    %v7673 = vadd.f32 0.0, %v7672
    %v7674 = vpop.f32.mrb[0].mxu0
    %v7675 = vpop.f32.mrb[0].mxu0
    %v7676 = vpop.f32.mrb[0].mxu0
    %7677 = vdwg.mxu0
    %7678 = vmatprep.subr.bf16.mxu0 0
    %7679 = vmatpush1.bf16.xpose.msra.mxu0 %v6437
    %7680 = vmatprep.subr.bf16.mxu0 0
    %7681 = vmatpush1.bf16.xpose.msra.mxu0 0
    %7682 = vmatprep.subr.bf16.mxu0 0
    %7683 = vmatpush1.bf16.xpose.msra.mxu0 0
    %7684 = vmatprep.subr.bf16.mxu0 0
    %7685 = vmatpush1.bf16.xpose.msra.mxu0 0
    %7686 = vmatprep.subr.bf16.mxu0 0
    %7687 = vmatpush1.bf16.xpose.msra.mxu0 0
    %7688 = vmatprep.subr.bf16.mxu0 0
    %7689 = vmatpush1.bf16.xpose.msra.mxu0 0
    %7690 = vmatprep.subr.bf16.mxu0 0
    %7691 = vmatpush1.bf16.xpose.msra.mxu0 0
    %7692 = vmatprep.subr.bf16.mxu0 0
    %7693 = vmatpush1.bf16.xpose.msra.mxu0 0
    %7694 = vmatprep.subr.bf16.mxu0 0
    %7695 = vmatpush1.bf16.xpose.msra.mxu0 0
    %7696 = vmatprep.subr.bf16.mxu0 0
    %7697 = vmatpush1.bf16.xpose.msra.mxu0 0
    %7698 = vmatprep.subr.bf16.mxu0 0
    %7699 = vmatpush1.bf16.xpose.msra.mxu0 0
    %7700 = vmatprep.subr.bf16.mxu0 0
    %7701 = vmatpush1.bf16.xpose.msra.mxu0 0
    %7702 = vmatprep.subr.bf16.mxu0 0
    %7703 = vmatpush1.bf16.xpose.msra.mxu0 0
    %7704 = vmatprep.subr.bf16.mxu0 0
    %7705 = vmatpush1.bf16.xpose.msra.mxu0 0
    %7706 = vmatprep.subr.bf16.mxu0 0
    %7707 = vmatpush1.bf16.xpose.msra.mxu0 0
    %7708 = vmatprep.subr.bf16.mxu0 0
    %7709 = vmatpush1.bf16.xpose.msra.mxu0 0
    %7710 = vmatprep.mubr.bf16.mxu0 0
    %7711 = vmatmul.mubr.bf16.gmra.mrb[0].mxu0 %v6405
    %v7712 = vpop.f32.mrb[0].mxu0
    %v7713 = vadd.f32 0.0, %v7712
    %v7714 = vpop.f32.mrb[0].mxu0
    %v7715 = vpop.f32.mrb[0].mxu0
    %v7716 = vpop.f32.mrb[0].mxu0
    %7717 = vdwg.mxu0
    %v7718 = vmul.f32 %v6473, 0.35355338
    %v7719 = vmul.f32 %v6513, 0.35355338
    %v7720 = vmul.f32 %v6553, 0.35355338
    %v7721 = vmul.f32 %v6593, 0.35355338
    %v7722 = vmul.f32 %v6633, 0.35355338
    %v7723 = vmul.f32 %v6673, 0.35355338
    %v7724 = vmul.f32 %v6713, 0.35355338
    %v7725 = vmul.f32 %v6753, 0.35355338
    %v7726 = vmul.f32 %v6793, 0.35355338
    %v7727 = vmul.f32 %v6833, 0.35355338
    %v7728 = vmul.f32 %v6873, 0.35355338
    %v7729 = vmul.f32 %v6913, 0.35355338
    %v7730 = vmul.f32 %v6953, 0.35355338
    %v7731 = vmul.f32 %v6993, 0.35355338
    %v7732 = vmul.f32 %v7033, 0.35355338
    %v7733 = vmul.f32 %v7073, 0.35355338
    %v7734 = vmul.f32 %v7113, 0.35355338
    %v7735 = vmul.f32 %v7153, 0.35355338
    %v7736 = vmul.f32 %v7193, 0.35355338
    %v7737 = vmul.f32 %v7233, 0.35355338
    %v7738 = vmul.f32 %v7273, 0.35355338
    %v7739 = vmul.f32 %v7313, 0.35355338
    %v7740 = vmul.f32 %v7353, 0.35355338
    %v7741 = vmul.f32 %v7393, 0.35355338
    %v7742 = vmul.f32 %v7433, 0.35355338
    %v7743 = vmul.f32 %v7473, 0.35355338
    %v7744 = vmul.f32 %v7513, 0.35355338
    %v7745 = vmul.f32 %v7553, 0.35355338
    %v7746 = vmul.f32 %v7593, 0.35355338
    %v7747 = vmul.f32 %v7633, 0.35355338
    %v7748 = vmul.f32 %v7673, 0.35355338
    %v7749 = vmul.f32 %v7713, 0.35355338
    %v7750 = vadd.f32 %v7718, %v2497
    %v7751 = vadd.f32 %v7719, %v2501
    %v7752 = vadd.f32 %v7720, %v2505
    %v7753 = vadd.f32 %v7721, %v2509
    %v7754 = vadd.f32 %v7722, %v2513
    %v7755 = vadd.f32 %v7723, %v2517
    %v7756 = vadd.f32 %v7724, %v2521
    %v7757 = vadd.f32 %v7725, %v2525
    %v7758 = vadd.f32 %v7726, %v2529
    %v7759 = vadd.f32 %v7727, %v2533
    %v7760 = vadd.f32 %v7728, %v2537
    %v7761 = vadd.f32 %v7729, %v2541
    %v7762 = vadd.f32 %v7730, %v2545
    %v7763 = vadd.f32 %v7731, %v2549
    %v7764 = vadd.f32 %v7732, %v2553
    %v7765 = vadd.f32 %v7733, %v2557
    %v7766 = vadd.f32 %v7734, %v2497
    %v7767 = vadd.f32 %v7735, %v2501
    %v7768 = vadd.f32 %v7736, %v2505
    %v7769 = vadd.f32 %v7737, %v2509
    %v7770 = vadd.f32 %v7738, %v2513
    %v7771 = vadd.f32 %v7739, %v2517
    %v7772 = vadd.f32 %v7740, %v2521
    %v7773 = vadd.f32 %v7741, %v2525
    %v7774 = vadd.f32 %v7742, %v2529
    %v7775 = vadd.f32 %v7743, %v2533
    %v7776 = vadd.f32 %v7744, %v2537
    %v7777 = vadd.f32 %v7745, %v2541
    %v7778 = vadd.f32 %v7746, %v2545
    %v7779 = vadd.f32 %v7747, %v2549
    %v7780 = vadd.f32 %v7748, %v2553
    %v7781 = vadd.f32 %v7749, %v2557
    %v7782 = vsel %vm2606, %v7750, -inf
    %7783 = vmax.xlane.f32.xlu0 %v7782
    %v7784 = vpop.xlane.xlu0 %7783
    %v7785 = vsel %vm2606, %v7751, -inf
    %7786 = vmax.xlane.f32.xlu0 %v7785
    %v7787 = vpop.xlane.xlu0 %7786
    %v7788 = vsel %vm2606, %v7752, -inf
    %7789 = vmax.xlane.f32.xlu0 %v7788
    %v7790 = vpop.xlane.xlu0 %7789
    %v7791 = vsel %vm2606, %v7753, -inf
    %7792 = vmax.xlane.f32.xlu0 %v7791
    %v7793 = vpop.xlane.xlu0 %7792
    %v7794 = vsel %vm2606, %v7754, -inf
    %7795 = vmax.xlane.f32.xlu0 %v7794
    %v7796 = vpop.xlane.xlu0 %7795
    %v7797 = vsel %vm2606, %v7755, -inf
    %7798 = vmax.xlane.f32.xlu0 %v7797
    %v7799 = vpop.xlane.xlu0 %7798
    %v7800 = vsel %vm2606, %v7756, -inf
    %7801 = vmax.xlane.f32.xlu0 %v7800
    %v7802 = vpop.xlane.xlu0 %7801
    %v7803 = vsel %vm2606, %v7757, -inf
    %7804 = vmax.xlane.f32.xlu0 %v7803
    %v7805 = vpop.xlane.xlu0 %7804
    %v7806 = vsel %vm2606, %v7758, -inf
    %7807 = vmax.xlane.f32.xlu0 %v7806
    %v7808 = vpop.xlane.xlu0 %7807
    %v7809 = vsel %vm2606, %v7759, -inf
    %7810 = vmax.xlane.f32.xlu0 %v7809
    %v7811 = vpop.xlane.xlu0 %7810
    %v7812 = vsel %vm2606, %v7760, -inf
    %7813 = vmax.xlane.f32.xlu0 %v7812
    %v7814 = vpop.xlane.xlu0 %7813
    %v7815 = vsel %vm2606, %v7761, -inf
    %7816 = vmax.xlane.f32.xlu0 %v7815
    %v7817 = vpop.xlane.xlu0 %7816
    %v7818 = vsel %vm2606, %v7762, -inf
    %7819 = vmax.xlane.f32.xlu0 %v7818
    %v7820 = vpop.xlane.xlu0 %7819
    %v7821 = vsel %vm2606, %v7763, -inf
    %7822 = vmax.xlane.f32.xlu0 %v7821
    %v7823 = vpop.xlane.xlu0 %7822
    %v7824 = vsel %vm2606, %v7764, -inf
    %7825 = vmax.xlane.f32.xlu0 %v7824
    %v7826 = vpop.xlane.xlu0 %7825
    %v7827 = vsel %vm2606, %v7765, -inf
    %7828 = vmax.xlane.f32.xlu0 %v7827
    %v7829 = vpop.xlane.xlu0 %7828
    %v7830 = vsel %vm2606, %v7766, -inf
    %7831 = vmax.xlane.f32.xlu0 %v7830
    %v7832 = vpop.xlane.xlu0 %7831
    %v7833 = vsel %vm2606, %v7767, -inf
    %7834 = vmax.xlane.f32.xlu0 %v7833
    %v7835 = vpop.xlane.xlu0 %7834
    %v7836 = vsel %vm2606, %v7768, -inf
    %7837 = vmax.xlane.f32.xlu0 %v7836
    %v7838 = vpop.xlane.xlu0 %7837
    %v7839 = vsel %vm2606, %v7769, -inf
    %7840 = vmax.xlane.f32.xlu0 %v7839
    %v7841 = vpop.xlane.xlu0 %7840
    %v7842 = vsel %vm2606, %v7770, -inf
    %7843 = vmax.xlane.f32.xlu0 %v7842
    %v7844 = vpop.xlane.xlu0 %7843
    %v7845 = vsel %vm2606, %v7771, -inf
    %7846 = vmax.xlane.f32.xlu0 %v7845
    %v7847 = vpop.xlane.xlu0 %7846
    %v7848 = vsel %vm2606, %v7772, -inf
    %7849 = vmax.xlane.f32.xlu0 %v7848
    %v7850 = vpop.xlane.xlu0 %7849
    %v7851 = vsel %vm2606, %v7773, -inf
    %7852 = vmax.xlane.f32.xlu0 %v7851
    %v7853 = vpop.xlane.xlu0 %7852
    %v7854 = vsel %vm2606, %v7774, -inf
    %7855 = vmax.xlane.f32.xlu0 %v7854
    %v7856 = vpop.xlane.xlu0 %7855
    %v7857 = vsel %vm2606, %v7775, -inf
    %7858 = vmax.xlane.f32.xlu0 %v7857
    %v7859 = vpop.xlane.xlu0 %7858
    %v7860 = vsel %vm2606, %v7776, -inf
    %7861 = vmax.xlane.f32.xlu0 %v7860
    %v7862 = vpop.xlane.xlu0 %7861
    %v7863 = vsel %vm2606, %v7777, -inf
    %7864 = vmax.xlane.f32.xlu0 %v7863
    %v7865 = vpop.xlane.xlu0 %7864
    %v7866 = vsel %vm2606, %v7778, -inf
    %7867 = vmax.xlane.f32.xlu0 %v7866
    %v7868 = vpop.xlane.xlu0 %7867
    %v7869 = vsel %vm2606, %v7779, -inf
    %7870 = vmax.xlane.f32.xlu0 %v7869
    %v7871 = vpop.xlane.xlu0 %7870
    %v7872 = vsel %vm2606, %v7780, -inf
    %7873 = vmax.xlane.f32.xlu0 %v7872
    %v7874 = vpop.xlane.xlu0 %7873
    %v7875 = vsel %vm2606, %v7781, -inf
    %7876 = vmax.xlane.f32.xlu0 %v7875
    %v7877 = vpop.xlane.xlu0 %7876
    %v7878 = vsub.f32 %v7750, %v7784
    %v7879 = vsub.f32 %v7751, %v7787
    %v7880 = vsub.f32 %v7752, %v7790
    %v7881 = vsub.f32 %v7753, %v7793
    %v7882 = vsub.f32 %v7754, %v7796
    %v7883 = vsub.f32 %v7755, %v7799
    %v7884 = vsub.f32 %v7756, %v7802
    %v7885 = vsub.f32 %v7757, %v7805
    %v7886 = vsub.f32 %v7758, %v7808
    %v7887 = vsub.f32 %v7759, %v7811
    %v7888 = vsub.f32 %v7760, %v7814
    %v7889 = vsub.f32 %v7761, %v7817
    %v7890 = vsub.f32 %v7762, %v7820
    %v7891 = vsub.f32 %v7763, %v7823
    %v7892 = vsub.f32 %v7764, %v7826
    %v7893 = vsub.f32 %v7765, %v7829
    %v7894 = vsub.f32 %v7766, %v7832
    %v7895 = vsub.f32 %v7767, %v7835
    %v7896 = vsub.f32 %v7768, %v7838
    %v7897 = vsub.f32 %v7769, %v7841
    %v7898 = vsub.f32 %v7770, %v7844
    %v7899 = vsub.f32 %v7771, %v7847
    %v7900 = vsub.f32 %v7772, %v7850
    %v7901 = vsub.f32 %v7773, %v7853
    %v7902 = vsub.f32 %v7774, %v7856
    %v7903 = vsub.f32 %v7775, %v7859
    %v7904 = vsub.f32 %v7776, %v7862
    %v7905 = vsub.f32 %v7777, %v7865
    %v7906 = vsub.f32 %v7778, %v7868
    %v7907 = vsub.f32 %v7779, %v7871
    %v7908 = vsub.f32 %v7780, %v7874
    %v7909 = vsub.f32 %v7781, %v7877
    %v7910 = vmul.f32 %v7878, 1.442695
    %v7911 = vpow.pop %v7910
    %v7912 = vmul.f32 %v7879, 1.442695
    %v7913 = vpow.pop %v7912
    %v7914 = vmul.f32 %v7880, 1.442695
    %v7915 = vpow.pop %v7914
    %v7916 = vmul.f32 %v7881, 1.442695
    %v7917 = vpow.pop %v7916
    %v7918 = vmul.f32 %v7882, 1.442695
    %v7919 = vpow.pop %v7918
    %v7920 = vmul.f32 %v7883, 1.442695
    %v7921 = vpow.pop %v7920
    %v7922 = vmul.f32 %v7884, 1.442695
    %v7923 = vpow.pop %v7922
    %v7924 = vmul.f32 %v7885, 1.442695
    %v7925 = vpow.pop %v7924
    %v7926 = vmul.f32 %v7886, 1.442695
    %v7927 = vpow.pop %v7926
    %v7928 = vmul.f32 %v7887, 1.442695
    %v7929 = vpow.pop %v7928
    %v7930 = vmul.f32 %v7888, 1.442695
    %v7931 = vpow.pop %v7930
    %v7932 = vmul.f32 %v7889, 1.442695
    %v7933 = vpow.pop %v7932
    %v7934 = vmul.f32 %v7890, 1.442695
    %v7935 = vpow.pop %v7934
    %v7936 = vmul.f32 %v7891, 1.442695
    %v7937 = vpow.pop %v7936
    %v7938 = vmul.f32 %v7892, 1.442695
    %v7939 = vpow.pop %v7938
    %v7940 = vmul.f32 %v7893, 1.442695
    %v7941 = vpow.pop %v7940
    %v7942 = vmul.f32 %v7894, 1.442695
    %v7943 = vpow.pop %v7942
    %v7944 = vmul.f32 %v7895, 1.442695
    %v7945 = vpow.pop %v7944
    %v7946 = vmul.f32 %v7896, 1.442695
    %v7947 = vpow.pop %v7946
    %v7948 = vmul.f32 %v7897, 1.442695
    %v7949 = vpow.pop %v7948
    %v7950 = vmul.f32 %v7898, 1.442695
    %v7951 = vpow.pop %v7950
    %v7952 = vmul.f32 %v7899, 1.442695
    %v7953 = vpow.pop %v7952
    %v7954 = vmul.f32 %v7900, 1.442695
    %v7955 = vpow.pop %v7954
    %v7956 = vmul.f32 %v7901, 1.442695
    %v7957 = vpow.pop %v7956
    %v7958 = vmul.f32 %v7902, 1.442695
    %v7959 = vpow.pop %v7958
    %v7960 = vmul.f32 %v7903, 1.442695
    %v7961 = vpow.pop %v7960
    %v7962 = vmul.f32 %v7904, 1.442695
    %v7963 = vpow.pop %v7962
    %v7964 = vmul.f32 %v7905, 1.442695
    %v7965 = vpow.pop %v7964
    %v7966 = vmul.f32 %v7906, 1.442695
    %v7967 = vpow.pop %v7966
    %v7968 = vmul.f32 %v7907, 1.442695
    %v7969 = vpow.pop %v7968
    %v7970 = vmul.f32 %v7908, 1.442695
    %v7971 = vpow.pop %v7970
    %v7972 = vmul.f32 %v7909, 1.442695
    %v7973 = vpow.pop %v7972
    %v7974 = vsel %vm2606, %v7911, 0.0
    %7975 = vadd.xlane.f32.xlu0 %v7974
    %v7976 = vpop.xlane.xlu0 %7975
    %v7977 = vsel %vm2606, %v7913, 0.0
    %7978 = vadd.xlane.f32.xlu0 %v7977
    %v7979 = vpop.xlane.xlu0 %7978
    %v7980 = vsel %vm2606, %v7915, 0.0
    %7981 = vadd.xlane.f32.xlu0 %v7980
    %v7982 = vpop.xlane.xlu0 %7981
    %v7983 = vsel %vm2606, %v7917, 0.0
    %7984 = vadd.xlane.f32.xlu0 %v7983
    %v7985 = vpop.xlane.xlu0 %7984
    %v7986 = vsel %vm2606, %v7919, 0.0
    %7987 = vadd.xlane.f32.xlu0 %v7986
    %v7988 = vpop.xlane.xlu0 %7987
    %v7989 = vsel %vm2606, %v7921, 0.0
    %7990 = vadd.xlane.f32.xlu0 %v7989
    %v7991 = vpop.xlane.xlu0 %7990
    %v7992 = vsel %vm2606, %v7923, 0.0
    %7993 = vadd.xlane.f32.xlu0 %v7992
    %v7994 = vpop.xlane.xlu0 %7993
    %v7995 = vsel %vm2606, %v7925, 0.0
    %7996 = vadd.xlane.f32.xlu0 %v7995
    %v7997 = vpop.xlane.xlu0 %7996
    %v7998 = vsel %vm2606, %v7927, 0.0
    %7999 = vadd.xlane.f32.xlu0 %v7998
    %v8000 = vpop.xlane.xlu0 %7999
    %v8001 = vsel %vm2606, %v7929, 0.0
    %8002 = vadd.xlane.f32.xlu0 %v8001
    %v8003 = vpop.xlane.xlu0 %8002
    %v8004 = vsel %vm2606, %v7931, 0.0
    %8005 = vadd.xlane.f32.xlu0 %v8004
    %v8006 = vpop.xlane.xlu0 %8005
    %v8007 = vsel %vm2606, %v7933, 0.0
    %8008 = vadd.xlane.f32.xlu0 %v8007
    %v8009 = vpop.xlane.xlu0 %8008
    %v8010 = vsel %vm2606, %v7935, 0.0
    %8011 = vadd.xlane.f32.xlu0 %v8010
    %v8012 = vpop.xlane.xlu0 %8011
    %v8013 = vsel %vm2606, %v7937, 0.0
    %8014 = vadd.xlane.f32.xlu0 %v8013
    %v8015 = vpop.xlane.xlu0 %8014
    %v8016 = vsel %vm2606, %v7939, 0.0
    %8017 = vadd.xlane.f32.xlu0 %v8016
    %v8018 = vpop.xlane.xlu0 %8017
    %v8019 = vsel %vm2606, %v7941, 0.0
    %8020 = vadd.xlane.f32.xlu0 %v8019
    %v8021 = vpop.xlane.xlu0 %8020
    %v8022 = vsel %vm2606, %v7943, 0.0
    %8023 = vadd.xlane.f32.xlu0 %v8022
    %v8024 = vpop.xlane.xlu0 %8023
    %v8025 = vsel %vm2606, %v7945, 0.0
    %8026 = vadd.xlane.f32.xlu0 %v8025
    %v8027 = vpop.xlane.xlu0 %8026
    %v8028 = vsel %vm2606, %v7947, 0.0
    %8029 = vadd.xlane.f32.xlu0 %v8028
    %v8030 = vpop.xlane.xlu0 %8029
    %v8031 = vsel %vm2606, %v7949, 0.0
    %8032 = vadd.xlane.f32.xlu0 %v8031
    %v8033 = vpop.xlane.xlu0 %8032
    %v8034 = vsel %vm2606, %v7951, 0.0
    %8035 = vadd.xlane.f32.xlu0 %v8034
    %v8036 = vpop.xlane.xlu0 %8035
    %v8037 = vsel %vm2606, %v7953, 0.0
    %8038 = vadd.xlane.f32.xlu0 %v8037
    %v8039 = vpop.xlane.xlu0 %8038
    %v8040 = vsel %vm2606, %v7955, 0.0
    %8041 = vadd.xlane.f32.xlu0 %v8040
    %v8042 = vpop.xlane.xlu0 %8041
    %v8043 = vsel %vm2606, %v7957, 0.0
    %8044 = vadd.xlane.f32.xlu0 %v8043
    %v8045 = vpop.xlane.xlu0 %8044
    %v8046 = vsel %vm2606, %v7959, 0.0
    %8047 = vadd.xlane.f32.xlu0 %v8046
    %v8048 = vpop.xlane.xlu0 %8047
    %v8049 = vsel %vm2606, %v7961, 0.0
    %8050 = vadd.xlane.f32.xlu0 %v8049
    %v8051 = vpop.xlane.xlu0 %8050
    %v8052 = vsel %vm2606, %v7963, 0.0
    %8053 = vadd.xlane.f32.xlu0 %v8052
    %v8054 = vpop.xlane.xlu0 %8053
    %v8055 = vsel %vm2606, %v7965, 0.0
    %8056 = vadd.xlane.f32.xlu0 %v8055
    %v8057 = vpop.xlane.xlu0 %8056
    %v8058 = vsel %vm2606, %v7967, 0.0
    %8059 = vadd.xlane.f32.xlu0 %v8058
    %v8060 = vpop.xlane.xlu0 %8059
    %v8061 = vsel %vm2606, %v7969, 0.0
    %8062 = vadd.xlane.f32.xlu0 %v8061
    %v8063 = vpop.xlane.xlu0 %8062
    %v8064 = vsel %vm2606, %v7971, 0.0
    %8065 = vadd.xlane.f32.xlu0 %v8064
    %v8066 = vpop.xlane.xlu0 %8065
    %v8067 = vsel %vm2606, %v7973, 0.0
    %8068 = vadd.xlane.f32.xlu0 %v8067
    %v8069 = vpop.xlane.xlu0 %8068
    %v8070 = vrcp.pop %v7976
    %v8071 = vrcp.pop %v7979
    %v8072 = vrcp.pop %v7982
    %v8073 = vrcp.pop %v7985
    %v8074 = vrcp.pop %v7988
    %v8075 = vrcp.pop %v7991
    %v8076 = vrcp.pop %v7994
    %v8077 = vrcp.pop %v7997
    %v8078 = vrcp.pop %v8000
    %v8079 = vrcp.pop %v8003
    %v8080 = vrcp.pop %v8006
    %v8081 = vrcp.pop %v8009
    %v8082 = vrcp.pop %v8012
    %v8083 = vrcp.pop %v8015
    %v8084 = vrcp.pop %v8018
    %v8085 = vrcp.pop %v8021
    %v8086 = vrcp.pop %v8024
    %v8087 = vrcp.pop %v8027
    %v8088 = vrcp.pop %v8030
    %v8089 = vrcp.pop %v8033
    %v8090 = vrcp.pop %v8036
    %v8091 = vrcp.pop %v8039
    %v8092 = vrcp.pop %v8042
    %v8093 = vrcp.pop %v8045
    %v8094 = vrcp.pop %v8048
    %v8095 = vrcp.pop %v8051
    %v8096 = vrcp.pop %v8054
    %v8097 = vrcp.pop %v8057
    %v8098 = vrcp.pop %v8060
    %v8099 = vrcp.pop %v8063
    %v8100 = vrcp.pop %v8066
    %v8101 = vrcp.pop %v8069
    %v8102 = vmul.f32 %v7911, %v8070
    %v8103 = vmul.f32 %v7913, %v8071
    %v8104 = vmul.f32 %v7915, %v8072
    %v8105 = vmul.f32 %v7917, %v8073
    %v8106 = vmul.f32 %v7919, %v8074
    %v8107 = vmul.f32 %v7921, %v8075
    %v8108 = vmul.f32 %v7923, %v8076
    %v8109 = vmul.f32 %v7925, %v8077
    %v8110 = vmul.f32 %v7927, %v8078
    %v8111 = vmul.f32 %v7929, %v8079
    %v8112 = vmul.f32 %v7931, %v8080
    %v8113 = vmul.f32 %v7933, %v8081
    %v8114 = vmul.f32 %v7935, %v8082
    %v8115 = vmul.f32 %v7937, %v8083
    %v8116 = vmul.f32 %v7939, %v8084
    %v8117 = vmul.f32 %v7941, %v8085
    %v8118 = vmul.f32 %v7943, %v8086
    %v8119 = vmul.f32 %v7945, %v8087
    %v8120 = vmul.f32 %v7947, %v8088
    %v8121 = vmul.f32 %v7949, %v8089
    %v8122 = vmul.f32 %v7951, %v8090
    %v8123 = vmul.f32 %v7953, %v8091
    %v8124 = vmul.f32 %v7955, %v8092
    %v8125 = vmul.f32 %v7957, %v8093
    %v8126 = vmul.f32 %v7959, %v8094
    %v8127 = vmul.f32 %v7961, %v8095
    %v8128 = vmul.f32 %v7963, %v8096
    %v8129 = vmul.f32 %v7965, %v8097
    %v8130 = vmul.f32 %v7967, %v8098
    %v8131 = vmul.f32 %v7969, %v8099
    %v8132 = vmul.f32 %v7971, %v8100
    %v8133 = vmul.f32 %v7973, %v8101
    %v8134 = vpack.c.bf16 %v8102, %v8102
    %v8135 = vpack.c.bf16 %v8103, %v8103
    %v8136 = vpack.c.bf16 %v8104, %v8104
    %v8137 = vpack.c.bf16 %v8105, %v8105
    %v8138 = vpack.c.bf16 %v8106, %v8106
    %v8139 = vpack.c.bf16 %v8107, %v8107
    %v8140 = vpack.c.bf16 %v8108, %v8108
    %v8141 = vpack.c.bf16 %v8109, %v8109
    %v8142 = vpack.c.bf16 %v8110, %v8110
    %v8143 = vpack.c.bf16 %v8111, %v8111
    %v8144 = vpack.c.bf16 %v8112, %v8112
    %v8145 = vpack.c.bf16 %v8113, %v8113
    %v8146 = vpack.c.bf16 %v8114, %v8114
    %v8147 = vpack.c.bf16 %v8115, %v8115
    %v8148 = vpack.c.bf16 %v8116, %v8116
    %v8149 = vpack.c.bf16 %v8117, %v8117
    %v8150 = vpack.c.bf16 %v8118, %v8118
    %v8151 = vpack.c.bf16 %v8119, %v8119
    %v8152 = vpack.c.bf16 %v8120, %v8120
    %v8153 = vpack.c.bf16 %v8121, %v8121
    %v8154 = vpack.c.bf16 %v8122, %v8122
    %v8155 = vpack.c.bf16 %v8123, %v8123
    %v8156 = vpack.c.bf16 %v8124, %v8124
    %v8157 = vpack.c.bf16 %v8125, %v8125
    %v8158 = vpack.c.bf16 %v8126, %v8126
    %v8159 = vpack.c.bf16 %v8127, %v8127
    %v8160 = vpack.c.bf16 %v8128, %v8128
    %v8161 = vpack.c.bf16 %v8129, %v8129
    %v8162 = vpack.c.bf16 %v8130, %v8130
    %v8163 = vpack.c.bf16 %v8131, %v8131
    %v8164 = vpack.c.bf16 %v8132, %v8132
    %v8165 = vpack.c.bf16 %v8133, %v8133
    %v8166 = vpack.c.bf16 %v6186, %v6186
    %v8167 = vpack.c.bf16 %v6187, %v6187
    %v8168 = vpack.c.bf16 %v6192, %v6192
    %v8169 = vpack.c.bf16 %v6193, %v6193
    %v8170 = vpack.c.bf16 %v6198, %v6198
    %v8171 = vpack.c.bf16 %v6199, %v6199
    %v8172 = vpack.c.bf16 %v6204, %v6204
    %v8173 = vpack.c.bf16 %v6205, %v6205
    %v8174 = vpack.c.bf16 %v6210, %v6210
    %v8175 = vpack.c.bf16 %v6211, %v6211
    %v8176 = vpack.c.bf16 %v6216, %v6216
    %v8177 = vpack.c.bf16 %v6217, %v6217
    %v8178 = vpack.c.bf16 %v6222, %v6222
    %v8179 = vpack.c.bf16 %v6223, %v6223
    %v8180 = vpack.c.bf16 %v6228, %v6228
    %v8181 = vpack.c.bf16 %v6229, %v6229
    %v8182 = vpack.c.bf16 %v6342, %v6342
    %v8183 = vpack.c.bf16 %v6343, %v6343
    %v8184 = vpack.c.bf16 %v6344, %v6344
    %v8185 = vpack.c.bf16 %v6345, %v6345
    %v8186 = vpack.c.bf16 %v6346, %v6346
    %v8187 = vpack.c.bf16 %v6347, %v6347
    %v8188 = vpack.c.bf16 %v6348, %v6348
    %v8189 = vpack.c.bf16 %v6349, %v6349
    %v8190 = vpack.c.bf16 %v6350, %v6350
    %v8191 = vpack.c.bf16 %v6351, %v6351
    %v8192 = vpack.c.bf16 %v6352, %v6352
    %v8193 = vpack.c.bf16 %v6353, %v6353
    %v8194 = vpack.c.bf16 %v6354, %v6354
    %v8195 = vpack.c.bf16 %v6355, %v6355
    %v8196 = vpack.c.bf16 %v6356, %v6356
    %v8197 = vpack.c.bf16 %v6357, %v6357
    %v8199 = vsel %vm3023, %v8134, 0
    %v8202 = vsel %vm3027, %v8166, 0
    %8204 = vmatprep.subr.bf16.mxu0 0
    %8205 = vmatpush1.bf16.msra.mxu0 %v8202
    %8206 = vmatprep.subr.bf16.mxu0 0
    %8207 = vmatpush1.bf16.msra.mxu0 0
    %8208 = vmatprep.subr.bf16.mxu0 0
    %8209 = vmatpush1.bf16.msra.mxu0 0
    %8210 = vmatprep.subr.bf16.mxu0 0
    %8211 = vmatpush1.bf16.msra.mxu0 0
    %8212 = vmatprep.subr.bf16.mxu0 0
    %8213 = vmatpush1.bf16.msra.mxu0 0
    %8214 = vmatprep.subr.bf16.mxu0 0
    %8215 = vmatpush1.bf16.msra.mxu0 0
    %8216 = vmatprep.subr.bf16.mxu0 0
    %8217 = vmatpush1.bf16.msra.mxu0 0
    %8218 = vmatprep.subr.bf16.mxu0 0
    %8219 = vmatpush1.bf16.msra.mxu0 0
    %8220 = vmatprep.subr.bf16.mxu0 0
    %8221 = vmatpush1.bf16.msra.mxu0 0
    %8222 = vmatprep.subr.bf16.mxu0 0
    %8223 = vmatpush1.bf16.msra.mxu0 0
    %8224 = vmatprep.subr.bf16.mxu0 0
    %8225 = vmatpush1.bf16.msra.mxu0 0
    %8226 = vmatprep.subr.bf16.mxu0 0
    %8227 = vmatpush1.bf16.msra.mxu0 0
    %8228 = vmatprep.subr.bf16.mxu0 0
    %8229 = vmatpush1.bf16.msra.mxu0 0
    %8230 = vmatprep.subr.bf16.mxu0 0
    %8231 = vmatpush1.bf16.msra.mxu0 0
    %8232 = vmatprep.subr.bf16.mxu0 0
    %8233 = vmatpush1.bf16.msra.mxu0 0
    %8234 = vmatprep.subr.bf16.mxu0 0
    %8235 = vmatpush1.bf16.msra.mxu0 0
    %8236 = vmatprep.mubr.bf16.mxu0 0
    %8237 = vmatmul.mubr.bf16.gmra.mrb[0].mxu0 %v8199
    %v8238 = vpop.f32.mrb[0].mxu0
    %v8239 = vadd.f32 0.0, %v8238
    %v8240 = vpop.f32.mrb[0].mxu0
    %v8241 = vpop.f32.mrb[0].mxu0
    %v8242 = vpop.f32.mrb[0].mxu0
    %8243 = vdwg.mxu0
    %v8245 = vsel %vm3023, %v8135, 0
    %v8248 = vsel %vm3027, %v8167, 0
    %8250 = vmatprep.subr.bf16.mxu0 0
    %8251 = vmatpush1.bf16.msra.mxu0 %v8248
    %8252 = vmatprep.subr.bf16.mxu0 0
    %8253 = vmatpush1.bf16.msra.mxu0 0
    %8254 = vmatprep.subr.bf16.mxu0 0
    %8255 = vmatpush1.bf16.msra.mxu0 0
    %8256 = vmatprep.subr.bf16.mxu0 0
    %8257 = vmatpush1.bf16.msra.mxu0 0
    %8258 = vmatprep.subr.bf16.mxu0 0
    %8259 = vmatpush1.bf16.msra.mxu0 0
    %8260 = vmatprep.subr.bf16.mxu0 0
    %8261 = vmatpush1.bf16.msra.mxu0 0
    %8262 = vmatprep.subr.bf16.mxu0 0
    %8263 = vmatpush1.bf16.msra.mxu0 0
    %8264 = vmatprep.subr.bf16.mxu0 0
    %8265 = vmatpush1.bf16.msra.mxu0 0
    %8266 = vmatprep.subr.bf16.mxu0 0
    %8267 = vmatpush1.bf16.msra.mxu0 0
    %8268 = vmatprep.subr.bf16.mxu0 0
    %8269 = vmatpush1.bf16.msra.mxu0 0
    %8270 = vmatprep.subr.bf16.mxu0 0
    %8271 = vmatpush1.bf16.msra.mxu0 0
    %8272 = vmatprep.subr.bf16.mxu0 0
    %8273 = vmatpush1.bf16.msra.mxu0 0
    %8274 = vmatprep.subr.bf16.mxu0 0
    %8275 = vmatpush1.bf16.msra.mxu0 0
    %8276 = vmatprep.subr.bf16.mxu0 0
    %8277 = vmatpush1.bf16.msra.mxu0 0
    %8278 = vmatprep.subr.bf16.mxu0 0
    %8279 = vmatpush1.bf16.msra.mxu0 0
    %8280 = vmatprep.subr.bf16.mxu0 0
    %8281 = vmatpush1.bf16.msra.mxu0 0
    %8282 = vmatprep.mubr.bf16.mxu0 0
    %8283 = vmatmul.mubr.bf16.gmra.mrb[0].mxu0 %v8245
    %v8284 = vpop.f32.mrb[0].mxu0
    %v8285 = vadd.f32 0.0, %v8284
    %v8286 = vpop.f32.mrb[0].mxu0
    %v8287 = vpop.f32.mrb[0].mxu0
    %v8288 = vpop.f32.mrb[0].mxu0
    %8289 = vdwg.mxu0
    %v8291 = vsel %vm3023, %v8136, 0
    %v8294 = vsel %vm3027, %v8168, 0
    %8296 = vmatprep.subr.bf16.mxu0 0
    %8297 = vmatpush1.bf16.msra.mxu0 %v8294
    %8298 = vmatprep.subr.bf16.mxu0 0
    %8299 = vmatpush1.bf16.msra.mxu0 0
    %8300 = vmatprep.subr.bf16.mxu0 0
    %8301 = vmatpush1.bf16.msra.mxu0 0
    %8302 = vmatprep.subr.bf16.mxu0 0
    %8303 = vmatpush1.bf16.msra.mxu0 0
    %8304 = vmatprep.subr.bf16.mxu0 0
    %8305 = vmatpush1.bf16.msra.mxu0 0
    %8306 = vmatprep.subr.bf16.mxu0 0
    %8307 = vmatpush1.bf16.msra.mxu0 0
    %8308 = vmatprep.subr.bf16.mxu0 0
    %8309 = vmatpush1.bf16.msra.mxu0 0
    %8310 = vmatprep.subr.bf16.mxu0 0
    %8311 = vmatpush1.bf16.msra.mxu0 0
    %8312 = vmatprep.subr.bf16.mxu0 0
    %8313 = vmatpush1.bf16.msra.mxu0 0
    %8314 = vmatprep.subr.bf16.mxu0 0
    %8315 = vmatpush1.bf16.msra.mxu0 0
    %8316 = vmatprep.subr.bf16.mxu0 0
    %8317 = vmatpush1.bf16.msra.mxu0 0
    %8318 = vmatprep.subr.bf16.mxu0 0
    %8319 = vmatpush1.bf16.msra.mxu0 0
    %8320 = vmatprep.subr.bf16.mxu0 0
    %8321 = vmatpush1.bf16.msra.mxu0 0
    %8322 = vmatprep.subr.bf16.mxu0 0
    %8323 = vmatpush1.bf16.msra.mxu0 0
    %8324 = vmatprep.subr.bf16.mxu0 0
    %8325 = vmatpush1.bf16.msra.mxu0 0
    %8326 = vmatprep.subr.bf16.mxu0 0
    %8327 = vmatpush1.bf16.msra.mxu0 0
    %8328 = vmatprep.mubr.bf16.mxu0 0
    %8329 = vmatmul.mubr.bf16.gmra.mrb[0].mxu0 %v8291
    %v8330 = vpop.f32.mrb[0].mxu0
    %v8331 = vadd.f32 0.0, %v8330
    %v8332 = vpop.f32.mrb[0].mxu0
    %v8333 = vpop.f32.mrb[0].mxu0
    %v8334 = vpop.f32.mrb[0].mxu0
    %8335 = vdwg.mxu0
    %v8337 = vsel %vm3023, %v8137, 0
    %v8340 = vsel %vm3027, %v8169, 0
    %8342 = vmatprep.subr.bf16.mxu0 0
    %8343 = vmatpush1.bf16.msra.mxu0 %v8340
    %8344 = vmatprep.subr.bf16.mxu0 0
    %8345 = vmatpush1.bf16.msra.mxu0 0
    %8346 = vmatprep.subr.bf16.mxu0 0
    %8347 = vmatpush1.bf16.msra.mxu0 0
    %8348 = vmatprep.subr.bf16.mxu0 0
    %8349 = vmatpush1.bf16.msra.mxu0 0
    %8350 = vmatprep.subr.bf16.mxu0 0
    %8351 = vmatpush1.bf16.msra.mxu0 0
    %8352 = vmatprep.subr.bf16.mxu0 0
    %8353 = vmatpush1.bf16.msra.mxu0 0
    %8354 = vmatprep.subr.bf16.mxu0 0
    %8355 = vmatpush1.bf16.msra.mxu0 0
    %8356 = vmatprep.subr.bf16.mxu0 0
    %8357 = vmatpush1.bf16.msra.mxu0 0
    %8358 = vmatprep.subr.bf16.mxu0 0
    %8359 = vmatpush1.bf16.msra.mxu0 0
    %8360 = vmatprep.subr.bf16.mxu0 0
    %8361 = vmatpush1.bf16.msra.mxu0 0
    %8362 = vmatprep.subr.bf16.mxu0 0
    %8363 = vmatpush1.bf16.msra.mxu0 0
    %8364 = vmatprep.subr.bf16.mxu0 0
    %8365 = vmatpush1.bf16.msra.mxu0 0
    %8366 = vmatprep.subr.bf16.mxu0 0
    %8367 = vmatpush1.bf16.msra.mxu0 0
    %8368 = vmatprep.subr.bf16.mxu0 0
    %8369 = vmatpush1.bf16.msra.mxu0 0
    %8370 = vmatprep.subr.bf16.mxu0 0
    %8371 = vmatpush1.bf16.msra.mxu0 0
    %8372 = vmatprep.subr.bf16.mxu0 0
    %8373 = vmatpush1.bf16.msra.mxu0 0
    %8374 = vmatprep.mubr.bf16.mxu0 0
    %8375 = vmatmul.mubr.bf16.gmra.mrb[0].mxu0 %v8337
    %v8376 = vpop.f32.mrb[0].mxu0
    %v8377 = vadd.f32 0.0, %v8376
    %v8378 = vpop.f32.mrb[0].mxu0
    %v8379 = vpop.f32.mrb[0].mxu0
    %v8380 = vpop.f32.mrb[0].mxu0
    %8381 = vdwg.mxu0
    %v8383 = vsel %vm3023, %v8138, 0
    %v8386 = vsel %vm3027, %v8170, 0
    %8388 = vmatprep.subr.bf16.mxu0 0
    %8389 = vmatpush1.bf16.msra.mxu0 %v8386
    %8390 = vmatprep.subr.bf16.mxu0 0
    %8391 = vmatpush1.bf16.msra.mxu0 0
    %8392 = vmatprep.subr.bf16.mxu0 0
    %8393 = vmatpush1.bf16.msra.mxu0 0
    %8394 = vmatprep.subr.bf16.mxu0 0
    %8395 = vmatpush1.bf16.msra.mxu0 0
    %8396 = vmatprep.subr.bf16.mxu0 0
    %8397 = vmatpush1.bf16.msra.mxu0 0
    %8398 = vmatprep.subr.bf16.mxu0 0
    %8399 = vmatpush1.bf16.msra.mxu0 0
    %8400 = vmatprep.subr.bf16.mxu0 0
    %8401 = vmatpush1.bf16.msra.mxu0 0
    %8402 = vmatprep.subr.bf16.mxu0 0
    %8403 = vmatpush1.bf16.msra.mxu0 0
    %8404 = vmatprep.subr.bf16.mxu0 0
    %8405 = vmatpush1.bf16.msra.mxu0 0
    %8406 = vmatprep.subr.bf16.mxu0 0
    %8407 = vmatpush1.bf16.msra.mxu0 0
    %8408 = vmatprep.subr.bf16.mxu0 0
    %8409 = vmatpush1.bf16.msra.mxu0 0
    %8410 = vmatprep.subr.bf16.mxu0 0
    %8411 = vmatpush1.bf16.msra.mxu0 0
    %8412 = vmatprep.subr.bf16.mxu0 0
    %8413 = vmatpush1.bf16.msra.mxu0 0
    %8414 = vmatprep.subr.bf16.mxu0 0
    %8415 = vmatpush1.bf16.msra.mxu0 0
    %8416 = vmatprep.subr.bf16.mxu0 0
    %8417 = vmatpush1.bf16.msra.mxu0 0
    %8418 = vmatprep.subr.bf16.mxu0 0
    %8419 = vmatpush1.bf16.msra.mxu0 0
    %8420 = vmatprep.mubr.bf16.mxu0 0
    %8421 = vmatmul.mubr.bf16.gmra.mrb[0].mxu0 %v8383
    %v8422 = vpop.f32.mrb[0].mxu0
    %v8423 = vadd.f32 0.0, %v8422
    %v8424 = vpop.f32.mrb[0].mxu0
    %v8425 = vpop.f32.mrb[0].mxu0
    %v8426 = vpop.f32.mrb[0].mxu0
    %8427 = vdwg.mxu0
    %v8429 = vsel %vm3023, %v8139, 0
    %v8432 = vsel %vm3027, %v8171, 0
    %8434 = vmatprep.subr.bf16.mxu0 0
    %8435 = vmatpush1.bf16.msra.mxu0 %v8432
    %8436 = vmatprep.subr.bf16.mxu0 0
    %8437 = vmatpush1.bf16.msra.mxu0 0
    %8438 = vmatprep.subr.bf16.mxu0 0
    %8439 = vmatpush1.bf16.msra.mxu0 0
    %8440 = vmatprep.subr.bf16.mxu0 0
    %8441 = vmatpush1.bf16.msra.mxu0 0
    %8442 = vmatprep.subr.bf16.mxu0 0
    %8443 = vmatpush1.bf16.msra.mxu0 0
    %8444 = vmatprep.subr.bf16.mxu0 0
    %8445 = vmatpush1.bf16.msra.mxu0 0
    %8446 = vmatprep.subr.bf16.mxu0 0
    %8447 = vmatpush1.bf16.msra.mxu0 0
    %8448 = vmatprep.subr.bf16.mxu0 0
    %8449 = vmatpush1.bf16.msra.mxu0 0
    %8450 = vmatprep.subr.bf16.mxu0 0
    %8451 = vmatpush1.bf16.msra.mxu0 0
    %8452 = vmatprep.subr.bf16.mxu0 0
    %8453 = vmatpush1.bf16.msra.mxu0 0
    %8454 = vmatprep.subr.bf16.mxu0 0
    %8455 = vmatpush1.bf16.msra.mxu0 0
    %8456 = vmatprep.subr.bf16.mxu0 0
    %8457 = vmatpush1.bf16.msra.mxu0 0
    %8458 = vmatprep.subr.bf16.mxu0 0
    %8459 = vmatpush1.bf16.msra.mxu0 0
    %8460 = vmatprep.subr.bf16.mxu0 0
    %8461 = vmatpush1.bf16.msra.mxu0 0
    %8462 = vmatprep.subr.bf16.mxu0 0
    %8463 = vmatpush1.bf16.msra.mxu0 0
    %8464 = vmatprep.subr.bf16.mxu0 0
    %8465 = vmatpush1.bf16.msra.mxu0 0
    %8466 = vmatprep.mubr.bf16.mxu0 0
    %8467 = vmatmul.mubr.bf16.gmra.mrb[0].mxu0 %v8429
    %v8468 = vpop.f32.mrb[0].mxu0
    %v8469 = vadd.f32 0.0, %v8468
    %v8470 = vpop.f32.mrb[0].mxu0
    %v8471 = vpop.f32.mrb[0].mxu0
    %v8472 = vpop.f32.mrb[0].mxu0
    %8473 = vdwg.mxu0
    %v8475 = vsel %vm3023, %v8140, 0
    %v8478 = vsel %vm3027, %v8172, 0
    %8480 = vmatprep.subr.bf16.mxu0 0
    %8481 = vmatpush1.bf16.msra.mxu0 %v8478
    %8482 = vmatprep.subr.bf16.mxu0 0
    %8483 = vmatpush1.bf16.msra.mxu0 0
    %8484 = vmatprep.subr.bf16.mxu0 0
    %8485 = vmatpush1.bf16.msra.mxu0 0
    %8486 = vmatprep.subr.bf16.mxu0 0
    %8487 = vmatpush1.bf16.msra.mxu0 0
    %8488 = vmatprep.subr.bf16.mxu0 0
    %8489 = vmatpush1.bf16.msra.mxu0 0
    %8490 = vmatprep.subr.bf16.mxu0 0
    %8491 = vmatpush1.bf16.msra.mxu0 0
    %8492 = vmatprep.subr.bf16.mxu0 0
    %8493 = vmatpush1.bf16.msra.mxu0 0
    %8494 = vmatprep.subr.bf16.mxu0 0
    %8495 = vmatpush1.bf16.msra.mxu0 0
    %8496 = vmatprep.subr.bf16.mxu0 0
    %8497 = vmatpush1.bf16.msra.mxu0 0
    %8498 = vmatprep.subr.bf16.mxu0 0
    %8499 = vmatpush1.bf16.msra.mxu0 0
    %8500 = vmatprep.subr.bf16.mxu0 0
    %8501 = vmatpush1.bf16.msra.mxu0 0
    %8502 = vmatprep.subr.bf16.mxu0 0
    %8503 = vmatpush1.bf16.msra.mxu0 0
    %8504 = vmatprep.subr.bf16.mxu0 0
    %8505 = vmatpush1.bf16.msra.mxu0 0
    %8506 = vmatprep.subr.bf16.mxu0 0
    %8507 = vmatpush1.bf16.msra.mxu0 0
    %8508 = vmatprep.subr.bf16.mxu0 0
    %8509 = vmatpush1.bf16.msra.mxu0 0
    %8510 = vmatprep.subr.bf16.mxu0 0
    %8511 = vmatpush1.bf16.msra.mxu0 0
    %8512 = vmatprep.mubr.bf16.mxu0 0
    %8513 = vmatmul.mubr.bf16.gmra.mrb[0].mxu0 %v8475
    %v8514 = vpop.f32.mrb[0].mxu0
    %v8515 = vadd.f32 0.0, %v8514
    %v8516 = vpop.f32.mrb[0].mxu0
    %v8517 = vpop.f32.mrb[0].mxu0
    %v8518 = vpop.f32.mrb[0].mxu0
    %8519 = vdwg.mxu0
    %v8521 = vsel %vm3023, %v8141, 0
    %v8524 = vsel %vm3027, %v8173, 0
    %8526 = vmatprep.subr.bf16.mxu0 0
    %8527 = vmatpush1.bf16.msra.mxu0 %v8524
    %8528 = vmatprep.subr.bf16.mxu0 0
    %8529 = vmatpush1.bf16.msra.mxu0 0
    %8530 = vmatprep.subr.bf16.mxu0 0
    %8531 = vmatpush1.bf16.msra.mxu0 0
    %8532 = vmatprep.subr.bf16.mxu0 0
    %8533 = vmatpush1.bf16.msra.mxu0 0
    %8534 = vmatprep.subr.bf16.mxu0 0
    %8535 = vmatpush1.bf16.msra.mxu0 0
    %8536 = vmatprep.subr.bf16.mxu0 0
    %8537 = vmatpush1.bf16.msra.mxu0 0
    %8538 = vmatprep.subr.bf16.mxu0 0
    %8539 = vmatpush1.bf16.msra.mxu0 0
    %8540 = vmatprep.subr.bf16.mxu0 0
    %8541 = vmatpush1.bf16.msra.mxu0 0
    %8542 = vmatprep.subr.bf16.mxu0 0
    %8543 = vmatpush1.bf16.msra.mxu0 0
    %8544 = vmatprep.subr.bf16.mxu0 0
    %8545 = vmatpush1.bf16.msra.mxu0 0
    %8546 = vmatprep.subr.bf16.mxu0 0
    %8547 = vmatpush1.bf16.msra.mxu0 0
    %8548 = vmatprep.subr.bf16.mxu0 0
    %8549 = vmatpush1.bf16.msra.mxu0 0
    %8550 = vmatprep.subr.bf16.mxu0 0
    %8551 = vmatpush1.bf16.msra.mxu0 0
    %8552 = vmatprep.subr.bf16.mxu0 0
    %8553 = vmatpush1.bf16.msra.mxu0 0
    %8554 = vmatprep.subr.bf16.mxu0 0
    %8555 = vmatpush1.bf16.msra.mxu0 0
    %8556 = vmatprep.subr.bf16.mxu0 0
    %8557 = vmatpush1.bf16.msra.mxu0 0
    %8558 = vmatprep.mubr.bf16.mxu0 0
    %8559 = vmatmul.mubr.bf16.gmra.mrb[0].mxu0 %v8521
    %v8560 = vpop.f32.mrb[0].mxu0
    %v8561 = vadd.f32 0.0, %v8560
    %v8562 = vpop.f32.mrb[0].mxu0
    %v8563 = vpop.f32.mrb[0].mxu0
    %v8564 = vpop.f32.mrb[0].mxu0
    %8565 = vdwg.mxu0
    %v8567 = vsel %vm3023, %v8142, 0
    %v8570 = vsel %vm3027, %v8174, 0
    %8572 = vmatprep.subr.bf16.mxu0 0
    %8573 = vmatpush1.bf16.msra.mxu0 %v8570
    %8574 = vmatprep.subr.bf16.mxu0 0
    %8575 = vmatpush1.bf16.msra.mxu0 0
    %8576 = vmatprep.subr.bf16.mxu0 0
    %8577 = vmatpush1.bf16.msra.mxu0 0
    %8578 = vmatprep.subr.bf16.mxu0 0
    %8579 = vmatpush1.bf16.msra.mxu0 0
    %8580 = vmatprep.subr.bf16.mxu0 0
    %8581 = vmatpush1.bf16.msra.mxu0 0
    %8582 = vmatprep.subr.bf16.mxu0 0
    %8583 = vmatpush1.bf16.msra.mxu0 0
    %8584 = vmatprep.subr.bf16.mxu0 0
    %8585 = vmatpush1.bf16.msra.mxu0 0
    %8586 = vmatprep.subr.bf16.mxu0 0
    %8587 = vmatpush1.bf16.msra.mxu0 0
    %8588 = vmatprep.subr.bf16.mxu0 0
    %8589 = vmatpush1.bf16.msra.mxu0 0
    %8590 = vmatprep.subr.bf16.mxu0 0
    %8591 = vmatpush1.bf16.msra.mxu0 0
    %8592 = vmatprep.subr.bf16.mxu0 0
    %8593 = vmatpush1.bf16.msra.mxu0 0
    %8594 = vmatprep.subr.bf16.mxu0 0
    %8595 = vmatpush1.bf16.msra.mxu0 0
    %8596 = vmatprep.subr.bf16.mxu0 0
    %8597 = vmatpush1.bf16.msra.mxu0 0
    %8598 = vmatprep.subr.bf16.mxu0 0
    %8599 = vmatpush1.bf16.msra.mxu0 0
    %8600 = vmatprep.subr.bf16.mxu0 0
    %8601 = vmatpush1.bf16.msra.mxu0 0
    %8602 = vmatprep.subr.bf16.mxu0 0
    %8603 = vmatpush1.bf16.msra.mxu0 0
    %8604 = vmatprep.mubr.bf16.mxu0 0
    %8605 = vmatmul.mubr.bf16.gmra.mrb[0].mxu0 %v8567
    %v8606 = vpop.f32.mrb[0].mxu0
    %v8607 = vadd.f32 0.0, %v8606
    %v8608 = vpop.f32.mrb[0].mxu0
    %v8609 = vpop.f32.mrb[0].mxu0
    %v8610 = vpop.f32.mrb[0].mxu0
    %8611 = vdwg.mxu0
    %v8613 = vsel %vm3023, %v8143, 0
    %v8616 = vsel %vm3027, %v8175, 0
    %8618 = vmatprep.subr.bf16.mxu0 0
    %8619 = vmatpush1.bf16.msra.mxu0 %v8616
    %8620 = vmatprep.subr.bf16.mxu0 0
    %8621 = vmatpush1.bf16.msra.mxu0 0
    %8622 = vmatprep.subr.bf16.mxu0 0
    %8623 = vmatpush1.bf16.msra.mxu0 0
    %8624 = vmatprep.subr.bf16.mxu0 0
    %8625 = vmatpush1.bf16.msra.mxu0 0
    %8626 = vmatprep.subr.bf16.mxu0 0
    %8627 = vmatpush1.bf16.msra.mxu0 0
    %8628 = vmatprep.subr.bf16.mxu0 0
    %8629 = vmatpush1.bf16.msra.mxu0 0
    %8630 = vmatprep.subr.bf16.mxu0 0
    %8631 = vmatpush1.bf16.msra.mxu0 0
    %8632 = vmatprep.subr.bf16.mxu0 0
    %8633 = vmatpush1.bf16.msra.mxu0 0
    %8634 = vmatprep.subr.bf16.mxu0 0
    %8635 = vmatpush1.bf16.msra.mxu0 0
    %8636 = vmatprep.subr.bf16.mxu0 0
    %8637 = vmatpush1.bf16.msra.mxu0 0
    %8638 = vmatprep.subr.bf16.mxu0 0
    %8639 = vmatpush1.bf16.msra.mxu0 0
    %8640 = vmatprep.subr.bf16.mxu0 0
    %8641 = vmatpush1.bf16.msra.mxu0 0
    %8642 = vmatprep.subr.bf16.mxu0 0
    %8643 = vmatpush1.bf16.msra.mxu0 0
    %8644 = vmatprep.subr.bf16.mxu0 0
    %8645 = vmatpush1.bf16.msra.mxu0 0
    %8646 = vmatprep.subr.bf16.mxu0 0
    %8647 = vmatpush1.bf16.msra.mxu0 0
    %8648 = vmatprep.subr.bf16.mxu0 0
    %8649 = vmatpush1.bf16.msra.mxu0 0
    %8650 = vmatprep.mubr.bf16.mxu0 0
    %8651 = vmatmul.mubr.bf16.gmra.mrb[0].mxu0 %v8613
    %v8652 = vpop.f32.mrb[0].mxu0
    %v8653 = vadd.f32 0.0, %v8652
    %v8654 = vpop.f32.mrb[0].mxu0
    %v8655 = vpop.f32.mrb[0].mxu0
    %v8656 = vpop.f32.mrb[0].mxu0
    %8657 = vdwg.mxu0
    %v8659 = vsel %vm3023, %v8144, 0
    %v8662 = vsel %vm3027, %v8176, 0
    %8664 = vmatprep.subr.bf16.mxu0 0
    %8665 = vmatpush1.bf16.msra.mxu0 %v8662
    %8666 = vmatprep.subr.bf16.mxu0 0
    %8667 = vmatpush1.bf16.msra.mxu0 0
    %8668 = vmatprep.subr.bf16.mxu0 0
    %8669 = vmatpush1.bf16.msra.mxu0 0
    %8670 = vmatprep.subr.bf16.mxu0 0
    %8671 = vmatpush1.bf16.msra.mxu0 0
    %8672 = vmatprep.subr.bf16.mxu0 0
    %8673 = vmatpush1.bf16.msra.mxu0 0
    %8674 = vmatprep.subr.bf16.mxu0 0
    %8675 = vmatpush1.bf16.msra.mxu0 0
    %8676 = vmatprep.subr.bf16.mxu0 0
    %8677 = vmatpush1.bf16.msra.mxu0 0
    %8678 = vmatprep.subr.bf16.mxu0 0
    %8679 = vmatpush1.bf16.msra.mxu0 0
    %8680 = vmatprep.subr.bf16.mxu0 0
    %8681 = vmatpush1.bf16.msra.mxu0 0
    %8682 = vmatprep.subr.bf16.mxu0 0
    %8683 = vmatpush1.bf16.msra.mxu0 0
    %8684 = vmatprep.subr.bf16.mxu0 0
    %8685 = vmatpush1.bf16.msra.mxu0 0
    %8686 = vmatprep.subr.bf16.mxu0 0
    %8687 = vmatpush1.bf16.msra.mxu0 0
    %8688 = vmatprep.subr.bf16.mxu0 0
    %8689 = vmatpush1.bf16.msra.mxu0 0
    %8690 = vmatprep.subr.bf16.mxu0 0
    %8691 = vmatpush1.bf16.msra.mxu0 0
    %8692 = vmatprep.subr.bf16.mxu0 0
    %8693 = vmatpush1.bf16.msra.mxu0 0
    %8694 = vmatprep.subr.bf16.mxu0 0
    %8695 = vmatpush1.bf16.msra.mxu0 0
    %8696 = vmatprep.mubr.bf16.mxu0 0
    %8697 = vmatmul.mubr.bf16.gmra.mrb[0].mxu0 %v8659
    %v8698 = vpop.f32.mrb[0].mxu0
    %v8699 = vadd.f32 0.0, %v8698
    %v8700 = vpop.f32.mrb[0].mxu0
    %v8701 = vpop.f32.mrb[0].mxu0
    %v8702 = vpop.f32.mrb[0].mxu0
    %8703 = vdwg.mxu0
    %v8705 = vsel %vm3023, %v8145, 0
    %v8708 = vsel %vm3027, %v8177, 0
    %8710 = vmatprep.subr.bf16.mxu0 0
    %8711 = vmatpush1.bf16.msra.mxu0 %v8708
    %8712 = vmatprep.subr.bf16.mxu0 0
    %8713 = vmatpush1.bf16.msra.mxu0 0
    %8714 = vmatprep.subr.bf16.mxu0 0
    %8715 = vmatpush1.bf16.msra.mxu0 0
    %8716 = vmatprep.subr.bf16.mxu0 0
    %8717 = vmatpush1.bf16.msra.mxu0 0
    %8718 = vmatprep.subr.bf16.mxu0 0
    %8719 = vmatpush1.bf16.msra.mxu0 0
    %8720 = vmatprep.subr.bf16.mxu0 0
    %8721 = vmatpush1.bf16.msra.mxu0 0
    %8722 = vmatprep.subr.bf16.mxu0 0
    %8723 = vmatpush1.bf16.msra.mxu0 0
    %8724 = vmatprep.subr.bf16.mxu0 0
    %8725 = vmatpush1.bf16.msra.mxu0 0
    %8726 = vmatprep.subr.bf16.mxu0 0
    %8727 = vmatpush1.bf16.msra.mxu0 0
    %8728 = vmatprep.subr.bf16.mxu0 0
    %8729 = vmatpush1.bf16.msra.mxu0 0
    %8730 = vmatprep.subr.bf16.mxu0 0
    %8731 = vmatpush1.bf16.msra.mxu0 0
    %8732 = vmatprep.subr.bf16.mxu0 0
    %8733 = vmatpush1.bf16.msra.mxu0 0
    %8734 = vmatprep.subr.bf16.mxu0 0
    %8735 = vmatpush1.bf16.msra.mxu0 0
    %8736 = vmatprep.subr.bf16.mxu0 0
    %8737 = vmatpush1.bf16.msra.mxu0 0
    %8738 = vmatprep.subr.bf16.mxu0 0
    %8739 = vmatpush1.bf16.msra.mxu0 0
    %8740 = vmatprep.subr.bf16.mxu0 0
    %8741 = vmatpush1.bf16.msra.mxu0 0
    %8742 = vmatprep.mubr.bf16.mxu0 0
    %8743 = vmatmul.mubr.bf16.gmra.mrb[0].mxu0 %v8705
    %v8744 = vpop.f32.mrb[0].mxu0
    %v8745 = vadd.f32 0.0, %v8744
    %v8746 = vpop.f32.mrb[0].mxu0
    %v8747 = vpop.f32.mrb[0].mxu0
    %v8748 = vpop.f32.mrb[0].mxu0
    %8749 = vdwg.mxu0
    %v8751 = vsel %vm3023, %v8146, 0
    %v8754 = vsel %vm3027, %v8178, 0
    %8756 = vmatprep.subr.bf16.mxu0 0
    %8757 = vmatpush1.bf16.msra.mxu0 %v8754
    %8758 = vmatprep.subr.bf16.mxu0 0
    %8759 = vmatpush1.bf16.msra.mxu0 0
    %8760 = vmatprep.subr.bf16.mxu0 0
    %8761 = vmatpush1.bf16.msra.mxu0 0
    %8762 = vmatprep.subr.bf16.mxu0 0
    %8763 = vmatpush1.bf16.msra.mxu0 0
    %8764 = vmatprep.subr.bf16.mxu0 0
    %8765 = vmatpush1.bf16.msra.mxu0 0
    %8766 = vmatprep.subr.bf16.mxu0 0
    %8767 = vmatpush1.bf16.msra.mxu0 0
    %8768 = vmatprep.subr.bf16.mxu0 0
    %8769 = vmatpush1.bf16.msra.mxu0 0
    %8770 = vmatprep.subr.bf16.mxu0 0
    %8771 = vmatpush1.bf16.msra.mxu0 0
    %8772 = vmatprep.subr.bf16.mxu0 0
    %8773 = vmatpush1.bf16.msra.mxu0 0
    %8774 = vmatprep.subr.bf16.mxu0 0
    %8775 = vmatpush1.bf16.msra.mxu0 0
    %8776 = vmatprep.subr.bf16.mxu0 0
    %8777 = vmatpush1.bf16.msra.mxu0 0
    %8778 = vmatprep.subr.bf16.mxu0 0
    %8779 = vmatpush1.bf16.msra.mxu0 0
    %8780 = vmatprep.subr.bf16.mxu0 0
    %8781 = vmatpush1.bf16.msra.mxu0 0
    %8782 = vmatprep.subr.bf16.mxu0 0
    %8783 = vmatpush1.bf16.msra.mxu0 0
    %8784 = vmatprep.subr.bf16.mxu0 0
    %8785 = vmatpush1.bf16.msra.mxu0 0
    %8786 = vmatprep.subr.bf16.mxu0 0
    %8787 = vmatpush1.bf16.msra.mxu0 0
    %8788 = vmatprep.mubr.bf16.mxu0 0
    %8789 = vmatmul.mubr.bf16.gmra.mrb[0].mxu0 %v8751
    %v8790 = vpop.f32.mrb[0].mxu0
    %v8791 = vadd.f32 0.0, %v8790
    %v8792 = vpop.f32.mrb[0].mxu0
    %v8793 = vpop.f32.mrb[0].mxu0
    %v8794 = vpop.f32.mrb[0].mxu0
    %8795 = vdwg.mxu0
    %v8797 = vsel %vm3023, %v8147, 0
    %v8800 = vsel %vm3027, %v8179, 0
    %8802 = vmatprep.subr.bf16.mxu0 0
    %8803 = vmatpush1.bf16.msra.mxu0 %v8800
    %8804 = vmatprep.subr.bf16.mxu0 0
    %8805 = vmatpush1.bf16.msra.mxu0 0
    %8806 = vmatprep.subr.bf16.mxu0 0
    %8807 = vmatpush1.bf16.msra.mxu0 0
    %8808 = vmatprep.subr.bf16.mxu0 0
    %8809 = vmatpush1.bf16.msra.mxu0 0
    %8810 = vmatprep.subr.bf16.mxu0 0
    %8811 = vmatpush1.bf16.msra.mxu0 0
    %8812 = vmatprep.subr.bf16.mxu0 0
    %8813 = vmatpush1.bf16.msra.mxu0 0
    %8814 = vmatprep.subr.bf16.mxu0 0
    %8815 = vmatpush1.bf16.msra.mxu0 0
    %8816 = vmatprep.subr.bf16.mxu0 0
    %8817 = vmatpush1.bf16.msra.mxu0 0
    %8818 = vmatprep.subr.bf16.mxu0 0
    %8819 = vmatpush1.bf16.msra.mxu0 0
    %8820 = vmatprep.subr.bf16.mxu0 0
    %8821 = vmatpush1.bf16.msra.mxu0 0
    %8822 = vmatprep.subr.bf16.mxu0 0
    %8823 = vmatpush1.bf16.msra.mxu0 0
    %8824 = vmatprep.subr.bf16.mxu0 0
    %8825 = vmatpush1.bf16.msra.mxu0 0
    %8826 = vmatprep.subr.bf16.mxu0 0
    %8827 = vmatpush1.bf16.msra.mxu0 0
    %8828 = vmatprep.subr.bf16.mxu0 0
    %8829 = vmatpush1.bf16.msra.mxu0 0
    %8830 = vmatprep.subr.bf16.mxu0 0
    %8831 = vmatpush1.bf16.msra.mxu0 0
    %8832 = vmatprep.subr.bf16.mxu0 0
    %8833 = vmatpush1.bf16.msra.mxu0 0
    %8834 = vmatprep.mubr.bf16.mxu0 0
    %8835 = vmatmul.mubr.bf16.gmra.mrb[0].mxu0 %v8797
    %v8836 = vpop.f32.mrb[0].mxu0
    %v8837 = vadd.f32 0.0, %v8836
    %v8838 = vpop.f32.mrb[0].mxu0
    %v8839 = vpop.f32.mrb[0].mxu0
    %v8840 = vpop.f32.mrb[0].mxu0
    %8841 = vdwg.mxu0
    %v8843 = vsel %vm3023, %v8148, 0
    %v8846 = vsel %vm3027, %v8180, 0
    %8848 = vmatprep.subr.bf16.mxu0 0
    %8849 = vmatpush1.bf16.msra.mxu0 %v8846
    %8850 = vmatprep.subr.bf16.mxu0 0
    %8851 = vmatpush1.bf16.msra.mxu0 0
    %8852 = vmatprep.subr.bf16.mxu0 0
    %8853 = vmatpush1.bf16.msra.mxu0 0
    %8854 = vmatprep.subr.bf16.mxu0 0
    %8855 = vmatpush1.bf16.msra.mxu0 0
    %8856 = vmatprep.subr.bf16.mxu0 0
    %8857 = vmatpush1.bf16.msra.mxu0 0
    %8858 = vmatprep.subr.bf16.mxu0 0
    %8859 = vmatpush1.bf16.msra.mxu0 0
    %8860 = vmatprep.subr.bf16.mxu0 0
    %8861 = vmatpush1.bf16.msra.mxu0 0
    %8862 = vmatprep.subr.bf16.mxu0 0
    %8863 = vmatpush1.bf16.msra.mxu0 0
    %8864 = vmatprep.subr.bf16.mxu0 0
    %8865 = vmatpush1.bf16.msra.mxu0 0
    %8866 = vmatprep.subr.bf16.mxu0 0
    %8867 = vmatpush1.bf16.msra.mxu0 0
    %8868 = vmatprep.subr.bf16.mxu0 0
    %8869 = vmatpush1.bf16.msra.mxu0 0
    %8870 = vmatprep.subr.bf16.mxu0 0
    %8871 = vmatpush1.bf16.msra.mxu0 0
    %8872 = vmatprep.subr.bf16.mxu0 0
    %8873 = vmatpush1.bf16.msra.mxu0 0
    %8874 = vmatprep.subr.bf16.mxu0 0
    %8875 = vmatpush1.bf16.msra.mxu0 0
    %8876 = vmatprep.subr.bf16.mxu0 0
    %8877 = vmatpush1.bf16.msra.mxu0 0
    %8878 = vmatprep.subr.bf16.mxu0 0
    %8879 = vmatpush1.bf16.msra.mxu0 0
    %8880 = vmatprep.mubr.bf16.mxu0 0
    %8881 = vmatmul.mubr.bf16.gmra.mrb[0].mxu0 %v8843
    %v8882 = vpop.f32.mrb[0].mxu0
    %v8883 = vadd.f32 0.0, %v8882
    %v8884 = vpop.f32.mrb[0].mxu0
    %v8885 = vpop.f32.mrb[0].mxu0
    %v8886 = vpop.f32.mrb[0].mxu0
    %8887 = vdwg.mxu0
    %v8889 = vsel %vm3023, %v8149, 0
    %v8892 = vsel %vm3027, %v8181, 0
    %8894 = vmatprep.subr.bf16.mxu0 0
    %8895 = vmatpush1.bf16.msra.mxu0 %v8892
    %8896 = vmatprep.subr.bf16.mxu0 0
    %8897 = vmatpush1.bf16.msra.mxu0 0
    %8898 = vmatprep.subr.bf16.mxu0 0
    %8899 = vmatpush1.bf16.msra.mxu0 0
    %8900 = vmatprep.subr.bf16.mxu0 0
    %8901 = vmatpush1.bf16.msra.mxu0 0
    %8902 = vmatprep.subr.bf16.mxu0 0
    %8903 = vmatpush1.bf16.msra.mxu0 0
    %8904 = vmatprep.subr.bf16.mxu0 0
    %8905 = vmatpush1.bf16.msra.mxu0 0
    %8906 = vmatprep.subr.bf16.mxu0 0
    %8907 = vmatpush1.bf16.msra.mxu0 0
    %8908 = vmatprep.subr.bf16.mxu0 0
    %8909 = vmatpush1.bf16.msra.mxu0 0
    %8910 = vmatprep.subr.bf16.mxu0 0
    %8911 = vmatpush1.bf16.msra.mxu0 0
    %8912 = vmatprep.subr.bf16.mxu0 0
    %8913 = vmatpush1.bf16.msra.mxu0 0
    %8914 = vmatprep.subr.bf16.mxu0 0
    %8915 = vmatpush1.bf16.msra.mxu0 0
    %8916 = vmatprep.subr.bf16.mxu0 0
    %8917 = vmatpush1.bf16.msra.mxu0 0
    %8918 = vmatprep.subr.bf16.mxu0 0
    %8919 = vmatpush1.bf16.msra.mxu0 0
    %8920 = vmatprep.subr.bf16.mxu0 0
    %8921 = vmatpush1.bf16.msra.mxu0 0
    %8922 = vmatprep.subr.bf16.mxu0 0
    %8923 = vmatpush1.bf16.msra.mxu0 0
    %8924 = vmatprep.subr.bf16.mxu0 0
    %8925 = vmatpush1.bf16.msra.mxu0 0
    %8926 = vmatprep.mubr.bf16.mxu0 0
    %8927 = vmatmul.mubr.bf16.gmra.mrb[0].mxu0 %v8889
    %v8928 = vpop.f32.mrb[0].mxu0
    %v8929 = vadd.f32 0.0, %v8928
    %v8930 = vpop.f32.mrb[0].mxu0
    %v8931 = vpop.f32.mrb[0].mxu0
    %v8932 = vpop.f32.mrb[0].mxu0
    %8933 = vdwg.mxu0
    %v8935 = vsel %vm3023, %v8150, 0
    %v8938 = vsel %vm3027, %v8182, 0
    %8940 = vmatprep.subr.bf16.mxu0 0
    %8941 = vmatpush1.bf16.msra.mxu0 %v8938
    %8942 = vmatprep.subr.bf16.mxu0 0
    %8943 = vmatpush1.bf16.msra.mxu0 0
    %8944 = vmatprep.subr.bf16.mxu0 0
    %8945 = vmatpush1.bf16.msra.mxu0 0
    %8946 = vmatprep.subr.bf16.mxu0 0
    %8947 = vmatpush1.bf16.msra.mxu0 0
    %8948 = vmatprep.subr.bf16.mxu0 0
    %8949 = vmatpush1.bf16.msra.mxu0 0
    %8950 = vmatprep.subr.bf16.mxu0 0
    %8951 = vmatpush1.bf16.msra.mxu0 0
    %8952 = vmatprep.subr.bf16.mxu0 0
    %8953 = vmatpush1.bf16.msra.mxu0 0
    %8954 = vmatprep.subr.bf16.mxu0 0
    %8955 = vmatpush1.bf16.msra.mxu0 0
    %8956 = vmatprep.subr.bf16.mxu0 0
    %8957 = vmatpush1.bf16.msra.mxu0 0
    %8958 = vmatprep.subr.bf16.mxu0 0
    %8959 = vmatpush1.bf16.msra.mxu0 0
    %8960 = vmatprep.subr.bf16.mxu0 0
    %8961 = vmatpush1.bf16.msra.mxu0 0
    %8962 = vmatprep.subr.bf16.mxu0 0
    %8963 = vmatpush1.bf16.msra.mxu0 0
    %8964 = vmatprep.subr.bf16.mxu0 0
    %8965 = vmatpush1.bf16.msra.mxu0 0
    %8966 = vmatprep.subr.bf16.mxu0 0
    %8967 = vmatpush1.bf16.msra.mxu0 0
    %8968 = vmatprep.subr.bf16.mxu0 0
    %8969 = vmatpush1.bf16.msra.mxu0 0
    %8970 = vmatprep.subr.bf16.mxu0 0
    %8971 = vmatpush1.bf16.msra.mxu0 0
    %8972 = vmatprep.mubr.bf16.mxu0 0
    %8973 = vmatmul.mubr.bf16.gmra.mrb[0].mxu0 %v8935
    %v8974 = vpop.f32.mrb[0].mxu0
    %v8975 = vadd.f32 0.0, %v8974
    %v8976 = vpop.f32.mrb[0].mxu0
    %v8977 = vpop.f32.mrb[0].mxu0
    %v8978 = vpop.f32.mrb[0].mxu0
    %8979 = vdwg.mxu0
    %v8981 = vsel %vm3023, %v8151, 0
    %v8984 = vsel %vm3027, %v8183, 0
    %8986 = vmatprep.subr.bf16.mxu0 0
    %8987 = vmatpush1.bf16.msra.mxu0 %v8984
    %8988 = vmatprep.subr.bf16.mxu0 0
    %8989 = vmatpush1.bf16.msra.mxu0 0
    %8990 = vmatprep.subr.bf16.mxu0 0
    %8991 = vmatpush1.bf16.msra.mxu0 0
    %8992 = vmatprep.subr.bf16.mxu0 0
    %8993 = vmatpush1.bf16.msra.mxu0 0
    %8994 = vmatprep.subr.bf16.mxu0 0
    %8995 = vmatpush1.bf16.msra.mxu0 0
    %8996 = vmatprep.subr.bf16.mxu0 0
    %8997 = vmatpush1.bf16.msra.mxu0 0
    %8998 = vmatprep.subr.bf16.mxu0 0
    %8999 = vmatpush1.bf16.msra.mxu0 0
    %9000 = vmatprep.subr.bf16.mxu0 0
    %9001 = vmatpush1.bf16.msra.mxu0 0
    %9002 = vmatprep.subr.bf16.mxu0 0
    %9003 = vmatpush1.bf16.msra.mxu0 0
    %9004 = vmatprep.subr.bf16.mxu0 0
    %9005 = vmatpush1.bf16.msra.mxu0 0
    %9006 = vmatprep.subr.bf16.mxu0 0
    %9007 = vmatpush1.bf16.msra.mxu0 0
    %9008 = vmatprep.subr.bf16.mxu0 0
    %9009 = vmatpush1.bf16.msra.mxu0 0
    %9010 = vmatprep.subr.bf16.mxu0 0
    %9011 = vmatpush1.bf16.msra.mxu0 0
    %9012 = vmatprep.subr.bf16.mxu0 0
    %9013 = vmatpush1.bf16.msra.mxu0 0
    %9014 = vmatprep.subr.bf16.mxu0 0
    %9015 = vmatpush1.bf16.msra.mxu0 0
    %9016 = vmatprep.subr.bf16.mxu0 0
    %9017 = vmatpush1.bf16.msra.mxu0 0
    %9018 = vmatprep.mubr.bf16.mxu0 0
    %9019 = vmatmul.mubr.bf16.gmra.mrb[0].mxu0 %v8981
    %v9020 = vpop.f32.mrb[0].mxu0
    %v9021 = vadd.f32 0.0, %v9020
    %v9022 = vpop.f32.mrb[0].mxu0
    %v9023 = vpop.f32.mrb[0].mxu0
    %v9024 = vpop.f32.mrb[0].mxu0
    %9025 = vdwg.mxu0
    %v9027 = vsel %vm3023, %v8152, 0
    %v9030 = vsel %vm3027, %v8184, 0
    %9032 = vmatprep.subr.bf16.mxu0 0
    %9033 = vmatpush1.bf16.msra.mxu0 %v9030
    %9034 = vmatprep.subr.bf16.mxu0 0
    %9035 = vmatpush1.bf16.msra.mxu0 0
    %9036 = vmatprep.subr.bf16.mxu0 0
    %9037 = vmatpush1.bf16.msra.mxu0 0
    %9038 = vmatprep.subr.bf16.mxu0 0
    %9039 = vmatpush1.bf16.msra.mxu0 0
    %9040 = vmatprep.subr.bf16.mxu0 0
    %9041 = vmatpush1.bf16.msra.mxu0 0
    %9042 = vmatprep.subr.bf16.mxu0 0
    %9043 = vmatpush1.bf16.msra.mxu0 0
    %9044 = vmatprep.subr.bf16.mxu0 0
    %9045 = vmatpush1.bf16.msra.mxu0 0
    %9046 = vmatprep.subr.bf16.mxu0 0
    %9047 = vmatpush1.bf16.msra.mxu0 0
    %9048 = vmatprep.subr.bf16.mxu0 0
    %9049 = vmatpush1.bf16.msra.mxu0 0
    %9050 = vmatprep.subr.bf16.mxu0 0
    %9051 = vmatpush1.bf16.msra.mxu0 0
    %9052 = vmatprep.subr.bf16.mxu0 0
    %9053 = vmatpush1.bf16.msra.mxu0 0
    %9054 = vmatprep.subr.bf16.mxu0 0
    %9055 = vmatpush1.bf16.msra.mxu0 0
    %9056 = vmatprep.subr.bf16.mxu0 0
    %9057 = vmatpush1.bf16.msra.mxu0 0
    %9058 = vmatprep.subr.bf16.mxu0 0
    %9059 = vmatpush1.bf16.msra.mxu0 0
    %9060 = vmatprep.subr.bf16.mxu0 0
    %9061 = vmatpush1.bf16.msra.mxu0 0
    %9062 = vmatprep.subr.bf16.mxu0 0
    %9063 = vmatpush1.bf16.msra.mxu0 0
    %9064 = vmatprep.mubr.bf16.mxu0 0
    %9065 = vmatmul.mubr.bf16.gmra.mrb[0].mxu0 %v9027
    %v9066 = vpop.f32.mrb[0].mxu0
    %v9067 = vadd.f32 0.0, %v9066
    %v9068 = vpop.f32.mrb[0].mxu0
    %v9069 = vpop.f32.mrb[0].mxu0
    %v9070 = vpop.f32.mrb[0].mxu0
    %9071 = vdwg.mxu0
    %v9073 = vsel %vm3023, %v8153, 0
    %v9076 = vsel %vm3027, %v8185, 0
    %9078 = vmatprep.subr.bf16.mxu0 0
    %9079 = vmatpush1.bf16.msra.mxu0 %v9076
    %9080 = vmatprep.subr.bf16.mxu0 0
    %9081 = vmatpush1.bf16.msra.mxu0 0
    %9082 = vmatprep.subr.bf16.mxu0 0
    %9083 = vmatpush1.bf16.msra.mxu0 0
    %9084 = vmatprep.subr.bf16.mxu0 0
    %9085 = vmatpush1.bf16.msra.mxu0 0
    %9086 = vmatprep.subr.bf16.mxu0 0
    %9087 = vmatpush1.bf16.msra.mxu0 0
    %9088 = vmatprep.subr.bf16.mxu0 0
    %9089 = vmatpush1.bf16.msra.mxu0 0
    %9090 = vmatprep.subr.bf16.mxu0 0
    %9091 = vmatpush1.bf16.msra.mxu0 0
    %9092 = vmatprep.subr.bf16.mxu0 0
    %9093 = vmatpush1.bf16.msra.mxu0 0
    %9094 = vmatprep.subr.bf16.mxu0 0
    %9095 = vmatpush1.bf16.msra.mxu0 0
    %9096 = vmatprep.subr.bf16.mxu0 0
    %9097 = vmatpush1.bf16.msra.mxu0 0
    %9098 = vmatprep.subr.bf16.mxu0 0
    %9099 = vmatpush1.bf16.msra.mxu0 0
    %9100 = vmatprep.subr.bf16.mxu0 0
    %9101 = vmatpush1.bf16.msra.mxu0 0
    %9102 = vmatprep.subr.bf16.mxu0 0
    %9103 = vmatpush1.bf16.msra.mxu0 0
    %9104 = vmatprep.subr.bf16.mxu0 0
    %9105 = vmatpush1.bf16.msra.mxu0 0
    %9106 = vmatprep.subr.bf16.mxu0 0
    %9107 = vmatpush1.bf16.msra.mxu0 0
    %9108 = vmatprep.subr.bf16.mxu0 0
    %9109 = vmatpush1.bf16.msra.mxu0 0
    %9110 = vmatprep.mubr.bf16.mxu0 0
    %9111 = vmatmul.mubr.bf16.gmra.mrb[0].mxu0 %v9073
    %v9112 = vpop.f32.mrb[0].mxu0
    %v9113 = vadd.f32 0.0, %v9112
    %v9114 = vpop.f32.mrb[0].mxu0
    %v9115 = vpop.f32.mrb[0].mxu0
    %v9116 = vpop.f32.mrb[0].mxu0
    %9117 = vdwg.mxu0
    %v9119 = vsel %vm3023, %v8154, 0
    %v9122 = vsel %vm3027, %v8186, 0
    %9124 = vmatprep.subr.bf16.mxu0 0
    %9125 = vmatpush1.bf16.msra.mxu0 %v9122
    %9126 = vmatprep.subr.bf16.mxu0 0
    %9127 = vmatpush1.bf16.msra.mxu0 0
    %9128 = vmatprep.subr.bf16.mxu0 0
    %9129 = vmatpush1.bf16.msra.mxu0 0
    %9130 = vmatprep.subr.bf16.mxu0 0
    %9131 = vmatpush1.bf16.msra.mxu0 0
    %9132 = vmatprep.subr.bf16.mxu0 0
    %9133 = vmatpush1.bf16.msra.mxu0 0
    %9134 = vmatprep.subr.bf16.mxu0 0
    %9135 = vmatpush1.bf16.msra.mxu0 0
    %9136 = vmatprep.subr.bf16.mxu0 0
    %9137 = vmatpush1.bf16.msra.mxu0 0
    %9138 = vmatprep.subr.bf16.mxu0 0
    %9139 = vmatpush1.bf16.msra.mxu0 0
    %9140 = vmatprep.subr.bf16.mxu0 0
    %9141 = vmatpush1.bf16.msra.mxu0 0
    %9142 = vmatprep.subr.bf16.mxu0 0
    %9143 = vmatpush1.bf16.msra.mxu0 0
    %9144 = vmatprep.subr.bf16.mxu0 0
    %9145 = vmatpush1.bf16.msra.mxu0 0
    %9146 = vmatprep.subr.bf16.mxu0 0
    %9147 = vmatpush1.bf16.msra.mxu0 0
    %9148 = vmatprep.subr.bf16.mxu0 0
    %9149 = vmatpush1.bf16.msra.mxu0 0
    %9150 = vmatprep.subr.bf16.mxu0 0
    %9151 = vmatpush1.bf16.msra.mxu0 0
    %9152 = vmatprep.subr.bf16.mxu0 0
    %9153 = vmatpush1.bf16.msra.mxu0 0
    %9154 = vmatprep.subr.bf16.mxu0 0
    %9155 = vmatpush1.bf16.msra.mxu0 0
    %9156 = vmatprep.mubr.bf16.mxu0 0
    %9157 = vmatmul.mubr.bf16.gmra.mrb[0].mxu0 %v9119
    %v9158 = vpop.f32.mrb[0].mxu0
    %v9159 = vadd.f32 0.0, %v9158
    %v9160 = vpop.f32.mrb[0].mxu0
    %v9161 = vpop.f32.mrb[0].mxu0
    %v9162 = vpop.f32.mrb[0].mxu0
    %9163 = vdwg.mxu0
    %v9165 = vsel %vm3023, %v8155, 0
    %v9168 = vsel %vm3027, %v8187, 0
    %9170 = vmatprep.subr.bf16.mxu0 0
    %9171 = vmatpush1.bf16.msra.mxu0 %v9168
    %9172 = vmatprep.subr.bf16.mxu0 0
    %9173 = vmatpush1.bf16.msra.mxu0 0
    %9174 = vmatprep.subr.bf16.mxu0 0
    %9175 = vmatpush1.bf16.msra.mxu0 0
    %9176 = vmatprep.subr.bf16.mxu0 0
    %9177 = vmatpush1.bf16.msra.mxu0 0
    %9178 = vmatprep.subr.bf16.mxu0 0
    %9179 = vmatpush1.bf16.msra.mxu0 0
    %9180 = vmatprep.subr.bf16.mxu0 0
    %9181 = vmatpush1.bf16.msra.mxu0 0
    %9182 = vmatprep.subr.bf16.mxu0 0
    %9183 = vmatpush1.bf16.msra.mxu0 0
    %9184 = vmatprep.subr.bf16.mxu0 0
    %9185 = vmatpush1.bf16.msra.mxu0 0
    %9186 = vmatprep.subr.bf16.mxu0 0
    %9187 = vmatpush1.bf16.msra.mxu0 0
    %9188 = vmatprep.subr.bf16.mxu0 0
    %9189 = vmatpush1.bf16.msra.mxu0 0
    %9190 = vmatprep.subr.bf16.mxu0 0
    %9191 = vmatpush1.bf16.msra.mxu0 0
    %9192 = vmatprep.subr.bf16.mxu0 0
    %9193 = vmatpush1.bf16.msra.mxu0 0
    %9194 = vmatprep.subr.bf16.mxu0 0
    %9195 = vmatpush1.bf16.msra.mxu0 0
    %9196 = vmatprep.subr.bf16.mxu0 0
    %9197 = vmatpush1.bf16.msra.mxu0 0
    %9198 = vmatprep.subr.bf16.mxu0 0
    %9199 = vmatpush1.bf16.msra.mxu0 0
    %9200 = vmatprep.subr.bf16.mxu0 0
    %9201 = vmatpush1.bf16.msra.mxu0 0
    %9202 = vmatprep.mubr.bf16.mxu0 0
    %9203 = vmatmul.mubr.bf16.gmra.mrb[0].mxu0 %v9165
    %v9204 = vpop.f32.mrb[0].mxu0
    %v9205 = vadd.f32 0.0, %v9204
    %v9206 = vpop.f32.mrb[0].mxu0
    %v9207 = vpop.f32.mrb[0].mxu0
    %v9208 = vpop.f32.mrb[0].mxu0
    %9209 = vdwg.mxu0
    %v9211 = vsel %vm3023, %v8156, 0
    %v9214 = vsel %vm3027, %v8188, 0
    %9216 = vmatprep.subr.bf16.mxu0 0
    %9217 = vmatpush1.bf16.msra.mxu0 %v9214
    %9218 = vmatprep.subr.bf16.mxu0 0
    %9219 = vmatpush1.bf16.msra.mxu0 0
    %9220 = vmatprep.subr.bf16.mxu0 0
    %9221 = vmatpush1.bf16.msra.mxu0 0
    %9222 = vmatprep.subr.bf16.mxu0 0
    %9223 = vmatpush1.bf16.msra.mxu0 0
    %9224 = vmatprep.subr.bf16.mxu0 0
    %9225 = vmatpush1.bf16.msra.mxu0 0
    %9226 = vmatprep.subr.bf16.mxu0 0
    %9227 = vmatpush1.bf16.msra.mxu0 0
    %9228 = vmatprep.subr.bf16.mxu0 0
    %9229 = vmatpush1.bf16.msra.mxu0 0
    %9230 = vmatprep.subr.bf16.mxu0 0
    %9231 = vmatpush1.bf16.msra.mxu0 0
    %9232 = vmatprep.subr.bf16.mxu0 0
    %9233 = vmatpush1.bf16.msra.mxu0 0
    %9234 = vmatprep.subr.bf16.mxu0 0
    %9235 = vmatpush1.bf16.msra.mxu0 0
    %9236 = vmatprep.subr.bf16.mxu0 0
    %9237 = vmatpush1.bf16.msra.mxu0 0
    %9238 = vmatprep.subr.bf16.mxu0 0
    %9239 = vmatpush1.bf16.msra.mxu0 0
    %9240 = vmatprep.subr.bf16.mxu0 0
    %9241 = vmatpush1.bf16.msra.mxu0 0
    %9242 = vmatprep.subr.bf16.mxu0 0
    %9243 = vmatpush1.bf16.msra.mxu0 0
    %9244 = vmatprep.subr.bf16.mxu0 0
    %9245 = vmatpush1.bf16.msra.mxu0 0
    %9246 = vmatprep.subr.bf16.mxu0 0
    %9247 = vmatpush1.bf16.msra.mxu0 0
    %9248 = vmatprep.mubr.bf16.mxu0 0
    %9249 = vmatmul.mubr.bf16.gmra.mrb[0].mxu0 %v9211
    %v9250 = vpop.f32.mrb[0].mxu0
    %v9251 = vadd.f32 0.0, %v9250
    %v9252 = vpop.f32.mrb[0].mxu0
    %v9253 = vpop.f32.mrb[0].mxu0
    %v9254 = vpop.f32.mrb[0].mxu0
    %9255 = vdwg.mxu0
    %v9257 = vsel %vm3023, %v8157, 0
    %v9260 = vsel %vm3027, %v8189, 0
    %9262 = vmatprep.subr.bf16.mxu0 0
    %9263 = vmatpush1.bf16.msra.mxu0 %v9260
    %9264 = vmatprep.subr.bf16.mxu0 0
    %9265 = vmatpush1.bf16.msra.mxu0 0
    %9266 = vmatprep.subr.bf16.mxu0 0
    %9267 = vmatpush1.bf16.msra.mxu0 0
    %9268 = vmatprep.subr.bf16.mxu0 0
    %9269 = vmatpush1.bf16.msra.mxu0 0
    %9270 = vmatprep.subr.bf16.mxu0 0
    %9271 = vmatpush1.bf16.msra.mxu0 0
    %9272 = vmatprep.subr.bf16.mxu0 0
    %9273 = vmatpush1.bf16.msra.mxu0 0
    %9274 = vmatprep.subr.bf16.mxu0 0
    %9275 = vmatpush1.bf16.msra.mxu0 0
    %9276 = vmatprep.subr.bf16.mxu0 0
    %9277 = vmatpush1.bf16.msra.mxu0 0
    %9278 = vmatprep.subr.bf16.mxu0 0
    %9279 = vmatpush1.bf16.msra.mxu0 0
    %9280 = vmatprep.subr.bf16.mxu0 0
    %9281 = vmatpush1.bf16.msra.mxu0 0
    %9282 = vmatprep.subr.bf16.mxu0 0
    %9283 = vmatpush1.bf16.msra.mxu0 0
    %9284 = vmatprep.subr.bf16.mxu0 0
    %9285 = vmatpush1.bf16.msra.mxu0 0
    %9286 = vmatprep.subr.bf16.mxu0 0
    %9287 = vmatpush1.bf16.msra.mxu0 0
    %9288 = vmatprep.subr.bf16.mxu0 0
    %9289 = vmatpush1.bf16.msra.mxu0 0
    %9290 = vmatprep.subr.bf16.mxu0 0
    %9291 = vmatpush1.bf16.msra.mxu0 0
    %9292 = vmatprep.subr.bf16.mxu0 0
    %9293 = vmatpush1.bf16.msra.mxu0 0
    %9294 = vmatprep.mubr.bf16.mxu0 0
    %9295 = vmatmul.mubr.bf16.gmra.mrb[0].mxu0 %v9257
    %v9296 = vpop.f32.mrb[0].mxu0
    %v9297 = vadd.f32 0.0, %v9296
    %v9298 = vpop.f32.mrb[0].mxu0
    %v9299 = vpop.f32.mrb[0].mxu0
    %v9300 = vpop.f32.mrb[0].mxu0
    %9301 = vdwg.mxu0
    %v9303 = vsel %vm3023, %v8158, 0
    %v9306 = vsel %vm3027, %v8190, 0
    %9308 = vmatprep.subr.bf16.mxu0 0
    %9309 = vmatpush1.bf16.msra.mxu0 %v9306
    %9310 = vmatprep.subr.bf16.mxu0 0
    %9311 = vmatpush1.bf16.msra.mxu0 0
    %9312 = vmatprep.subr.bf16.mxu0 0
    %9313 = vmatpush1.bf16.msra.mxu0 0
    %9314 = vmatprep.subr.bf16.mxu0 0
    %9315 = vmatpush1.bf16.msra.mxu0 0
    %9316 = vmatprep.subr.bf16.mxu0 0
    %9317 = vmatpush1.bf16.msra.mxu0 0
    %9318 = vmatprep.subr.bf16.mxu0 0
    %9319 = vmatpush1.bf16.msra.mxu0 0
    %9320 = vmatprep.subr.bf16.mxu0 0
    %9321 = vmatpush1.bf16.msra.mxu0 0
    %9322 = vmatprep.subr.bf16.mxu0 0
    %9323 = vmatpush1.bf16.msra.mxu0 0
    %9324 = vmatprep.subr.bf16.mxu0 0
    %9325 = vmatpush1.bf16.msra.mxu0 0
    %9326 = vmatprep.subr.bf16.mxu0 0
    %9327 = vmatpush1.bf16.msra.mxu0 0
    %9328 = vmatprep.subr.bf16.mxu0 0
    %9329 = vmatpush1.bf16.msra.mxu0 0
    %9330 = vmatprep.subr.bf16.mxu0 0
    %9331 = vmatpush1.bf16.msra.mxu0 0
    %9332 = vmatprep.subr.bf16.mxu0 0
    %9333 = vmatpush1.bf16.msra.mxu0 0
    %9334 = vmatprep.subr.bf16.mxu0 0
    %9335 = vmatpush1.bf16.msra.mxu0 0
    %9336 = vmatprep.subr.bf16.mxu0 0
    %9337 = vmatpush1.bf16.msra.mxu0 0
    %9338 = vmatprep.subr.bf16.mxu0 0
    %9339 = vmatpush1.bf16.msra.mxu0 0
    %9340 = vmatprep.mubr.bf16.mxu0 0
    %9341 = vmatmul.mubr.bf16.gmra.mrb[0].mxu0 %v9303
    %v9342 = vpop.f32.mrb[0].mxu0
    %v9343 = vadd.f32 0.0, %v9342
    %v9344 = vpop.f32.mrb[0].mxu0
    %v9345 = vpop.f32.mrb[0].mxu0
    %v9346 = vpop.f32.mrb[0].mxu0
    %9347 = vdwg.mxu0
    %v9349 = vsel %vm3023, %v8159, 0
    %v9352 = vsel %vm3027, %v8191, 0
    %9354 = vmatprep.subr.bf16.mxu0 0
    %9355 = vmatpush1.bf16.msra.mxu0 %v9352
    %9356 = vmatprep.subr.bf16.mxu0 0
    %9357 = vmatpush1.bf16.msra.mxu0 0
    %9358 = vmatprep.subr.bf16.mxu0 0
    %9359 = vmatpush1.bf16.msra.mxu0 0
    %9360 = vmatprep.subr.bf16.mxu0 0
    %9361 = vmatpush1.bf16.msra.mxu0 0
    %9362 = vmatprep.subr.bf16.mxu0 0
    %9363 = vmatpush1.bf16.msra.mxu0 0
    %9364 = vmatprep.subr.bf16.mxu0 0
    %9365 = vmatpush1.bf16.msra.mxu0 0
    %9366 = vmatprep.subr.bf16.mxu0 0
    %9367 = vmatpush1.bf16.msra.mxu0 0
    %9368 = vmatprep.subr.bf16.mxu0 0
    %9369 = vmatpush1.bf16.msra.mxu0 0
    %9370 = vmatprep.subr.bf16.mxu0 0
    %9371 = vmatpush1.bf16.msra.mxu0 0
    %9372 = vmatprep.subr.bf16.mxu0 0
    %9373 = vmatpush1.bf16.msra.mxu0 0
    %9374 = vmatprep.subr.bf16.mxu0 0
    %9375 = vmatpush1.bf16.msra.mxu0 0
    %9376 = vmatprep.subr.bf16.mxu0 0
    %9377 = vmatpush1.bf16.msra.mxu0 0
    %9378 = vmatprep.subr.bf16.mxu0 0
    %9379 = vmatpush1.bf16.msra.mxu0 0
    %9380 = vmatprep.subr.bf16.mxu0 0
    %9381 = vmatpush1.bf16.msra.mxu0 0
    %9382 = vmatprep.subr.bf16.mxu0 0
    %9383 = vmatpush1.bf16.msra.mxu0 0
    %9384 = vmatprep.subr.bf16.mxu0 0
    %9385 = vmatpush1.bf16.msra.mxu0 0
    %9386 = vmatprep.mubr.bf16.mxu0 0
    %9387 = vmatmul.mubr.bf16.gmra.mrb[0].mxu0 %v9349
    %v9388 = vpop.f32.mrb[0].mxu0
    %v9389 = vadd.f32 0.0, %v9388
    %v9390 = vpop.f32.mrb[0].mxu0
    %v9391 = vpop.f32.mrb[0].mxu0
    %v9392 = vpop.f32.mrb[0].mxu0
    %9393 = vdwg.mxu0
    %v9395 = vsel %vm3023, %v8160, 0
    %v9398 = vsel %vm3027, %v8192, 0
    %9400 = vmatprep.subr.bf16.mxu0 0
    %9401 = vmatpush1.bf16.msra.mxu0 %v9398
    %9402 = vmatprep.subr.bf16.mxu0 0
    %9403 = vmatpush1.bf16.msra.mxu0 0
    %9404 = vmatprep.subr.bf16.mxu0 0
    %9405 = vmatpush1.bf16.msra.mxu0 0
    %9406 = vmatprep.subr.bf16.mxu0 0
    %9407 = vmatpush1.bf16.msra.mxu0 0
    %9408 = vmatprep.subr.bf16.mxu0 0
    %9409 = vmatpush1.bf16.msra.mxu0 0
    %9410 = vmatprep.subr.bf16.mxu0 0
    %9411 = vmatpush1.bf16.msra.mxu0 0
    %9412 = vmatprep.subr.bf16.mxu0 0
    %9413 = vmatpush1.bf16.msra.mxu0 0
    %9414 = vmatprep.subr.bf16.mxu0 0
    %9415 = vmatpush1.bf16.msra.mxu0 0
    %9416 = vmatprep.subr.bf16.mxu0 0
    %9417 = vmatpush1.bf16.msra.mxu0 0
    %9418 = vmatprep.subr.bf16.mxu0 0
    %9419 = vmatpush1.bf16.msra.mxu0 0
    %9420 = vmatprep.subr.bf16.mxu0 0
    %9421 = vmatpush1.bf16.msra.mxu0 0
    %9422 = vmatprep.subr.bf16.mxu0 0
    %9423 = vmatpush1.bf16.msra.mxu0 0
    %9424 = vmatprep.subr.bf16.mxu0 0
    %9425 = vmatpush1.bf16.msra.mxu0 0
    %9426 = vmatprep.subr.bf16.mxu0 0
    %9427 = vmatpush1.bf16.msra.mxu0 0
    %9428 = vmatprep.subr.bf16.mxu0 0
    %9429 = vmatpush1.bf16.msra.mxu0 0
    %9430 = vmatprep.subr.bf16.mxu0 0
    %9431 = vmatpush1.bf16.msra.mxu0 0
    %9432 = vmatprep.mubr.bf16.mxu0 0
    %9433 = vmatmul.mubr.bf16.gmra.mrb[0].mxu0 %v9395
    %v9434 = vpop.f32.mrb[0].mxu0
    %v9435 = vadd.f32 0.0, %v9434
    %v9436 = vpop.f32.mrb[0].mxu0
    %v9437 = vpop.f32.mrb[0].mxu0
    %v9438 = vpop.f32.mrb[0].mxu0
    %9439 = vdwg.mxu0
    %v9441 = vsel %vm3023, %v8161, 0
    %v9444 = vsel %vm3027, %v8193, 0
    %9446 = vmatprep.subr.bf16.mxu0 0
    %9447 = vmatpush1.bf16.msra.mxu0 %v9444
    %9448 = vmatprep.subr.bf16.mxu0 0
    %9449 = vmatpush1.bf16.msra.mxu0 0
    %9450 = vmatprep.subr.bf16.mxu0 0
    %9451 = vmatpush1.bf16.msra.mxu0 0
    %9452 = vmatprep.subr.bf16.mxu0 0
    %9453 = vmatpush1.bf16.msra.mxu0 0
    %9454 = vmatprep.subr.bf16.mxu0 0
    %9455 = vmatpush1.bf16.msra.mxu0 0
    %9456 = vmatprep.subr.bf16.mxu0 0
    %9457 = vmatpush1.bf16.msra.mxu0 0
    %9458 = vmatprep.subr.bf16.mxu0 0
    %9459 = vmatpush1.bf16.msra.mxu0 0
    %9460 = vmatprep.subr.bf16.mxu0 0
    %9461 = vmatpush1.bf16.msra.mxu0 0
    %9462 = vmatprep.subr.bf16.mxu0 0
    %9463 = vmatpush1.bf16.msra.mxu0 0
    %9464 = vmatprep.subr.bf16.mxu0 0
    %9465 = vmatpush1.bf16.msra.mxu0 0
    %9466 = vmatprep.subr.bf16.mxu0 0
    %9467 = vmatpush1.bf16.msra.mxu0 0
    %9468 = vmatprep.subr.bf16.mxu0 0
    %9469 = vmatpush1.bf16.msra.mxu0 0
    %9470 = vmatprep.subr.bf16.mxu0 0
    %9471 = vmatpush1.bf16.msra.mxu0 0
    %9472 = vmatprep.subr.bf16.mxu0 0
    %9473 = vmatpush1.bf16.msra.mxu0 0
    %9474 = vmatprep.subr.bf16.mxu0 0
    %9475 = vmatpush1.bf16.msra.mxu0 0
    %9476 = vmatprep.subr.bf16.mxu0 0
    %9477 = vmatpush1.bf16.msra.mxu0 0
    %9478 = vmatprep.mubr.bf16.mxu0 0
    %9479 = vmatmul.mubr.bf16.gmra.mrb[0].mxu0 %v9441
    %v9480 = vpop.f32.mrb[0].mxu0
    %v9481 = vadd.f32 0.0, %v9480
    %v9482 = vpop.f32.mrb[0].mxu0
    %v9483 = vpop.f32.mrb[0].mxu0
    %v9484 = vpop.f32.mrb[0].mxu0
    %9485 = vdwg.mxu0
    %v9487 = vsel %vm3023, %v8162, 0
    %v9490 = vsel %vm3027, %v8194, 0
    %9492 = vmatprep.subr.bf16.mxu0 0
    %9493 = vmatpush1.bf16.msra.mxu0 %v9490
    %9494 = vmatprep.subr.bf16.mxu0 0
    %9495 = vmatpush1.bf16.msra.mxu0 0
    %9496 = vmatprep.subr.bf16.mxu0 0
    %9497 = vmatpush1.bf16.msra.mxu0 0
    %9498 = vmatprep.subr.bf16.mxu0 0
    %9499 = vmatpush1.bf16.msra.mxu0 0
    %9500 = vmatprep.subr.bf16.mxu0 0
    %9501 = vmatpush1.bf16.msra.mxu0 0
    %9502 = vmatprep.subr.bf16.mxu0 0
    %9503 = vmatpush1.bf16.msra.mxu0 0
    %9504 = vmatprep.subr.bf16.mxu0 0
    %9505 = vmatpush1.bf16.msra.mxu0 0
    %9506 = vmatprep.subr.bf16.mxu0 0
    %9507 = vmatpush1.bf16.msra.mxu0 0
    %9508 = vmatprep.subr.bf16.mxu0 0
    %9509 = vmatpush1.bf16.msra.mxu0 0
    %9510 = vmatprep.subr.bf16.mxu0 0
    %9511 = vmatpush1.bf16.msra.mxu0 0
    %9512 = vmatprep.subr.bf16.mxu0 0
    %9513 = vmatpush1.bf16.msra.mxu0 0
    %9514 = vmatprep.subr.bf16.mxu0 0
    %9515 = vmatpush1.bf16.msra.mxu0 0
    %9516 = vmatprep.subr.bf16.mxu0 0
    %9517 = vmatpush1.bf16.msra.mxu0 0
    %9518 = vmatprep.subr.bf16.mxu0 0
    %9519 = vmatpush1.bf16.msra.mxu0 0
    %9520 = vmatprep.subr.bf16.mxu0 0
    %9521 = vmatpush1.bf16.msra.mxu0 0
    %9522 = vmatprep.subr.bf16.mxu0 0
    %9523 = vmatpush1.bf16.msra.mxu0 0
    %9524 = vmatprep.mubr.bf16.mxu0 0
    %9525 = vmatmul.mubr.bf16.gmra.mrb[0].mxu0 %v9487
    %v9526 = vpop.f32.mrb[0].mxu0
    %v9527 = vadd.f32 0.0, %v9526
    %v9528 = vpop.f32.mrb[0].mxu0
    %v9529 = vpop.f32.mrb[0].mxu0
    %v9530 = vpop.f32.mrb[0].mxu0
    %9531 = vdwg.mxu0
    %v9533 = vsel %vm3023, %v8163, 0
    %v9536 = vsel %vm3027, %v8195, 0
    %9538 = vmatprep.subr.bf16.mxu0 0
    %9539 = vmatpush1.bf16.msra.mxu0 %v9536
    %9540 = vmatprep.subr.bf16.mxu0 0
    %9541 = vmatpush1.bf16.msra.mxu0 0
    %9542 = vmatprep.subr.bf16.mxu0 0
    %9543 = vmatpush1.bf16.msra.mxu0 0
    %9544 = vmatprep.subr.bf16.mxu0 0
    %9545 = vmatpush1.bf16.msra.mxu0 0
    %9546 = vmatprep.subr.bf16.mxu0 0
    %9547 = vmatpush1.bf16.msra.mxu0 0
    %9548 = vmatprep.subr.bf16.mxu0 0
    %9549 = vmatpush1.bf16.msra.mxu0 0
    %9550 = vmatprep.subr.bf16.mxu0 0
    %9551 = vmatpush1.bf16.msra.mxu0 0
    %9552 = vmatprep.subr.bf16.mxu0 0
    %9553 = vmatpush1.bf16.msra.mxu0 0
    %9554 = vmatprep.subr.bf16.mxu0 0
    %9555 = vmatpush1.bf16.msra.mxu0 0
    %9556 = vmatprep.subr.bf16.mxu0 0
    %9557 = vmatpush1.bf16.msra.mxu0 0
    %9558 = vmatprep.subr.bf16.mxu0 0
    %9559 = vmatpush1.bf16.msra.mxu0 0
    %9560 = vmatprep.subr.bf16.mxu0 0
    %9561 = vmatpush1.bf16.msra.mxu0 0
    %9562 = vmatprep.subr.bf16.mxu0 0
    %9563 = vmatpush1.bf16.msra.mxu0 0
    %9564 = vmatprep.subr.bf16.mxu0 0
    %9565 = vmatpush1.bf16.msra.mxu0 0
    %9566 = vmatprep.subr.bf16.mxu0 0
    %9567 = vmatpush1.bf16.msra.mxu0 0
    %9568 = vmatprep.subr.bf16.mxu0 0
    %9569 = vmatpush1.bf16.msra.mxu0 0
    %9570 = vmatprep.mubr.bf16.mxu0 0
    %9571 = vmatmul.mubr.bf16.gmra.mrb[0].mxu0 %v9533
    %v9572 = vpop.f32.mrb[0].mxu0
    %v9573 = vadd.f32 0.0, %v9572
    %v9574 = vpop.f32.mrb[0].mxu0
    %v9575 = vpop.f32.mrb[0].mxu0
    %v9576 = vpop.f32.mrb[0].mxu0
    %9577 = vdwg.mxu0
    %v9579 = vsel %vm3023, %v8164, 0
    %v9582 = vsel %vm3027, %v8196, 0
    %9584 = vmatprep.subr.bf16.mxu0 0
    %9585 = vmatpush1.bf16.msra.mxu0 %v9582
    %9586 = vmatprep.subr.bf16.mxu0 0
    %9587 = vmatpush1.bf16.msra.mxu0 0
    %9588 = vmatprep.subr.bf16.mxu0 0
    %9589 = vmatpush1.bf16.msra.mxu0 0
    %9590 = vmatprep.subr.bf16.mxu0 0
    %9591 = vmatpush1.bf16.msra.mxu0 0
    %9592 = vmatprep.subr.bf16.mxu0 0
    %9593 = vmatpush1.bf16.msra.mxu0 0
    %9594 = vmatprep.subr.bf16.mxu0 0
    %9595 = vmatpush1.bf16.msra.mxu0 0
    %9596 = vmatprep.subr.bf16.mxu0 0
    %9597 = vmatpush1.bf16.msra.mxu0 0
    %9598 = vmatprep.subr.bf16.mxu0 0
    %9599 = vmatpush1.bf16.msra.mxu0 0
    %9600 = vmatprep.subr.bf16.mxu0 0
    %9601 = vmatpush1.bf16.msra.mxu0 0
    %9602 = vmatprep.subr.bf16.mxu0 0
    %9603 = vmatpush1.bf16.msra.mxu0 0
    %9604 = vmatprep.subr.bf16.mxu0 0
    %9605 = vmatpush1.bf16.msra.mxu0 0
    %9606 = vmatprep.subr.bf16.mxu0 0
    %9607 = vmatpush1.bf16.msra.mxu0 0
    %9608 = vmatprep.subr.bf16.mxu0 0
    %9609 = vmatpush1.bf16.msra.mxu0 0
    %9610 = vmatprep.subr.bf16.mxu0 0
    %9611 = vmatpush1.bf16.msra.mxu0 0
    %9612 = vmatprep.subr.bf16.mxu0 0
    %9613 = vmatpush1.bf16.msra.mxu0 0
    %9614 = vmatprep.subr.bf16.mxu0 0
    %9615 = vmatpush1.bf16.msra.mxu0 0
    %9616 = vmatprep.mubr.bf16.mxu0 0
    %9617 = vmatmul.mubr.bf16.gmra.mrb[0].mxu0 %v9579
    %v9618 = vpop.f32.mrb[0].mxu0
    %v9619 = vadd.f32 0.0, %v9618
    %v9620 = vpop.f32.mrb[0].mxu0
    %v9621 = vpop.f32.mrb[0].mxu0
    %v9622 = vpop.f32.mrb[0].mxu0
    %9623 = vdwg.mxu0
    %v9625 = vsel %vm3023, %v8165, 0
    %v9628 = vsel %vm3027, %v8197, 0
    %9630 = vmatprep.subr.bf16.mxu0 0
    %9631 = vmatpush1.bf16.msra.mxu0 %v9628
    %9632 = vmatprep.subr.bf16.mxu0 0
    %9633 = vmatpush1.bf16.msra.mxu0 0
    %9634 = vmatprep.subr.bf16.mxu0 0
    %9635 = vmatpush1.bf16.msra.mxu0 0
    %9636 = vmatprep.subr.bf16.mxu0 0
    %9637 = vmatpush1.bf16.msra.mxu0 0
    %9638 = vmatprep.subr.bf16.mxu0 0
    %9639 = vmatpush1.bf16.msra.mxu0 0
    %9640 = vmatprep.subr.bf16.mxu0 0
    %9641 = vmatpush1.bf16.msra.mxu0 0
    %9642 = vmatprep.subr.bf16.mxu0 0
    %9643 = vmatpush1.bf16.msra.mxu0 0
    %9644 = vmatprep.subr.bf16.mxu0 0
    %9645 = vmatpush1.bf16.msra.mxu0 0
    %9646 = vmatprep.subr.bf16.mxu0 0
    %9647 = vmatpush1.bf16.msra.mxu0 0
    %9648 = vmatprep.subr.bf16.mxu0 0
    %9649 = vmatpush1.bf16.msra.mxu0 0
    %9650 = vmatprep.subr.bf16.mxu0 0
    %9651 = vmatpush1.bf16.msra.mxu0 0
    %9652 = vmatprep.subr.bf16.mxu0 0
    %9653 = vmatpush1.bf16.msra.mxu0 0
    %9654 = vmatprep.subr.bf16.mxu0 0
    %9655 = vmatpush1.bf16.msra.mxu0 0
    %9656 = vmatprep.subr.bf16.mxu0 0
    %9657 = vmatpush1.bf16.msra.mxu0 0
    %9658 = vmatprep.subr.bf16.mxu0 0
    %9659 = vmatpush1.bf16.msra.mxu0 0
    %9660 = vmatprep.subr.bf16.mxu0 0
    %9661 = vmatpush1.bf16.msra.mxu0 0
    %9662 = vmatprep.mubr.bf16.mxu0 0
    %9663 = vmatmul.mubr.bf16.gmra.mrb[0].mxu0 %v9625
    %v9664 = vpop.f32.mrb[0].mxu0
    %v9665 = vadd.f32 0.0, %v9664
    %v9666 = vpop.f32.mrb[0].mxu0
    %v9667 = vpop.f32.mrb[0].mxu0
    %v9668 = vpop.f32.mrb[0].mxu0
    %9669 = vdwg.mxu0
    %v9702 = vcombine.low %v8239, %v8975
    %v9703 = vcombine.low %v8285, %v9021
    %v9704 = vcombine.low %v8331, %v9067
    %v9705 = vcombine.low %v8377, %v9113
    %v9706 = vcombine.low %v8423, %v9159
    %v9707 = vcombine.low %v8469, %v9205
    %v9708 = vcombine.low %v8515, %v9251
    %v9709 = vcombine.low %v8561, %v9297
    %v9710 = vcombine.low %v8607, %v9343
    %v9711 = vcombine.low %v8653, %v9389
    %v9712 = vcombine.low %v8699, %v9435
    %v9713 = vcombine.low %v8745, %v9481
    %v9714 = vcombine.low %v8791, %v9527
    %v9715 = vcombine.low %v8837, %v9573
    %v9716 = vcombine.low %v8883, %v9619
    %v9717 = vcombine.low %v8929, %v9665
    %v9718 = vcombine.low %v9702, %v9703
    %v9719 = vcombine.high %v9702, %v9703
    %v9720 = vcombine.low %v9704, %v9705
    %v9721 = vcombine.high %v9704, %v9705
    %v9722 = vcombine.low %v9706, %v9707
    %v9723 = vcombine.high %v9706, %v9707
    %v9724 = vcombine.low %v9708, %v9709
    %v9725 = vcombine.high %v9708, %v9709
    %v9726 = vcombine.low %v9710, %v9711
    %v9727 = vcombine.high %v9710, %v9711
    %v9728 = vcombine.low %v9712, %v9713
    %v9729 = vcombine.high %v9712, %v9713
    %v9730 = vcombine.low %v9714, %v9715
    %v9731 = vcombine.high %v9714, %v9715
    %v9732 = vcombine.low %v9716, %v9717
    %v9733 = vcombine.high %v9716, %v9717
    %v9750 = vpack.c.bf16 %v9720, %v9718
    %v9751 = vpack.c.bf16 %v9721, %v9719
    %v9752 = vpack.c.bf16 %v9724, %v9722
    %v9753 = vpack.c.bf16 %v9725, %v9723
    %v9754 = vpack.c.bf16 %v9728, %v9726
    %v9755 = vpack.c.bf16 %v9729, %v9727
    %v9756 = vpack.c.bf16 %v9732, %v9730
    %v9757 = vpack.c.bf16 %v9733, %v9731
    %s9758 = scalar_lea.vmem %s5, 1
    %v9759 = vld [vmem:[%s9758] sm:$0x1]
    %v9761 = vlaneseq
    %v9762 = vshrl.u32 %v9761, 7
    %v9763 = vsub.s32 0, %v9762
    %v9764 = vrot.slane %v9759, %v9763
    %v9798 = vunpack.c.l.b16 %v5572
    %v9799 = vunpack.c.l.b16 %v5573
    %v9800 = vunpack.c.l.b16 %v5574
    %v9801 = vunpack.c.l.b16 %v5575
    %v9802 = vunpack.c.l.b16 %v5576
    %v9803 = vunpack.c.l.b16 %v5577
    %v9804 = vunpack.c.l.b16 %v5578
    %v9805 = vunpack.c.l.b16 %v5579
    %v9806 = vunpack.c.l.b16 %v5580
    %v9807 = vunpack.c.l.b16 %v5581
    %v9808 = vunpack.c.l.b16 %v5582
    %v9809 = vunpack.c.l.b16 %v5583
    %v9810 = vunpack.c.l.b16 %v5584
    %v9811 = vunpack.c.l.b16 %v5585
    %v9812 = vunpack.c.l.b16 %v5586
    %v9813 = vunpack.c.l.b16 %v5587
    %v9814 = vunpack.c.l.b16 %v5588
    %v9815 = vunpack.c.l.b16 %v5589
    %v9816 = vunpack.c.l.b16 %v5590
    %v9817 = vunpack.c.l.b16 %v5591
    %v9818 = vunpack.c.l.b16 %v5592
    %v9819 = vunpack.c.l.b16 %v5593
    %v9820 = vunpack.c.l.b16 %v5594
    %v9821 = vunpack.c.l.b16 %v5595
    %v9822 = vunpack.c.l.b16 %v5596
    %v9823 = vunpack.c.l.b16 %v5597
    %v9824 = vunpack.c.l.b16 %v5598
    %v9825 = vunpack.c.l.b16 %v5599
    %v9826 = vunpack.c.l.b16 %v5600
    %v9827 = vunpack.c.l.b16 %v5601
    %v9828 = vunpack.c.l.b16 %v5602
    %v9829 = vunpack.c.l.b16 %v5603
    %v9830 = vpack.c.b16 %v9799, %v9798
    %v9831 = vpack.c.b16 %v9801, %v9800
    %v9832 = vpack.c.b16 %v9803, %v9802
    %v9833 = vpack.c.b16 %v9805, %v9804
    %v9834 = vpack.c.b16 %v9807, %v9806
    %v9835 = vpack.c.b16 %v9809, %v9808
    %v9836 = vpack.c.b16 %v9811, %v9810
    %v9837 = vpack.c.b16 %v9813, %v9812
    %v9838 = vpack.c.b16 %v9815, %v9814
    %v9839 = vpack.c.b16 %v9817, %v9816
    %v9840 = vpack.c.b16 %v9819, %v9818
    %v9841 = vpack.c.b16 %v9821, %v9820
    %v9842 = vpack.c.b16 %v9823, %v9822
    %v9843 = vpack.c.b16 %v9825, %v9824
    %v9844 = vpack.c.b16 %v9827, %v9826
    %v9845 = vpack.c.b16 %v9829, %v9828
    %9862 = vmatprep.subr.bf16.mxu0 0
    %9863 = vmatpush1.bf16.msra.mxu0 %v9830
    %9864 = vmatprep.subr.bf16.mxu0 0
    %9865 = vmatpush1.bf16.msra.mxu0 %v9831
    %9866 = vmatprep.subr.bf16.mxu0 0
    %9867 = vmatpush1.bf16.msra.mxu0 %v9832
    %9868 = vmatprep.subr.bf16.mxu0 0
    %9869 = vmatpush1.bf16.msra.mxu0 %v9833
    %9870 = vmatprep.subr.bf16.mxu0 0
    %9871 = vmatpush1.bf16.msra.mxu0 %v9834
    %9872 = vmatprep.subr.bf16.mxu0 0
    %9873 = vmatpush1.bf16.msra.mxu0 %v9835
    %9874 = vmatprep.subr.bf16.mxu0 0
    %9875 = vmatpush1.bf16.msra.mxu0 %v9836
    %9876 = vmatprep.subr.bf16.mxu0 0
    %9877 = vmatpush1.bf16.msra.mxu0 %v9837
    %9878 = vmatprep.subr.bf16.mxu0 0
    %9879 = vmatpush1.bf16.msra.mxu0 %v9838
    %9880 = vmatprep.subr.bf16.mxu0 0
    %9881 = vmatpush1.bf16.msra.mxu0 %v9839
    %9882 = vmatprep.subr.bf16.mxu0 0
    %9883 = vmatpush1.bf16.msra.mxu0 %v9840
    %9884 = vmatprep.subr.bf16.mxu0 0
    %9885 = vmatpush1.bf16.msra.mxu0 %v9841
    %9886 = vmatprep.subr.bf16.mxu0 0
    %9887 = vmatpush1.bf16.msra.mxu0 %v9842
    %9888 = vmatprep.subr.bf16.mxu0 0
    %9889 = vmatpush1.bf16.msra.mxu0 %v9843
    %9890 = vmatprep.subr.bf16.mxu0 0
    %9891 = vmatpush1.bf16.msra.mxu0 %v9844
    %9892 = vmatprep.subr.bf16.mxu0 0
    %9893 = vmatpush1.bf16.msra.mxu0 %v9845
    %9894 = vmatprep.mubr.bf16.mxu0 %v9751
    %9895 = vmatmul.mubr.bf16.gmra.mrb[0].mxu0 %v9750
    %v9896 = vpop.f32.mrb[0].mxu0
    %v9897 = vadd.f32 %v9764, %v9896
    %v9898 = vpop.f32.mrb[0].mxu0
    %v9899 = vpop.f32.mrb[0].mxu0
    %v9900 = vadd.f32 %v9764, %v9899
    %v9901 = vpop.f32.mrb[0].mxu0
    %9902 = vmatprep.mubr.bf16.mxu0 %v9753
    %9903 = vmatmul.mubr.bf16.gmra.mrb[0].mxu0 %v9752
    %v9904 = vpop.f32.mrb[0].mxu0
    %v9905 = vadd.f32 %v9764, %v9904
    %v9906 = vpop.f32.mrb[0].mxu0
    %v9907 = vpop.f32.mrb[0].mxu0
    %v9908 = vadd.f32 %v9764, %v9907
    %v9909 = vpop.f32.mrb[0].mxu0
    %9910 = vmatprep.mubr.bf16.mxu0 %v9755
    %9911 = vmatmul.mubr.bf16.gmra.mrb[0].mxu0 %v9754
    %v9912 = vpop.f32.mrb[0].mxu0
    %v9913 = vadd.f32 %v9764, %v9912
    %v9914 = vpop.f32.mrb[0].mxu0
    %v9915 = vpop.f32.mrb[0].mxu0
    %v9916 = vadd.f32 %v9764, %v9915
    %v9917 = vpop.f32.mrb[0].mxu0
    %9918 = vmatprep.mubr.bf16.mxu0 %v9757
    %9919 = vmatmul.mubr.bf16.gmra.mrb[0].mxu0 %v9756
    %v9920 = vpop.f32.mrb[0].mxu0
    %v9921 = vadd.f32 %v9764, %v9920
    %v9922 = vpop.f32.mrb[0].mxu0
    %v9923 = vpop.f32.mrb[0].mxu0
    %v9924 = vadd.f32 %v9764, %v9923
    %v9925 = vpop.f32.mrb[0].mxu0
    %9926 = vdwg.mxu0
    %v9927 = vadd.f32 %v5514, %v9897
    %v9928 = vadd.f32 %v5515, %v9900
    %v9929 = vadd.f32 %v5516, %v9905
    %v9930 = vadd.f32 %v5517, %v9908
    %v9931 = vadd.f32 %v5518, %v9913
    %v9932 = vadd.f32 %v5519, %v9916
    %v9933 = vadd.f32 %v5520, %v9921
    %v9934 = vadd.f32 %v5521, %v9924
    %s9935 = scalar_lea.vmem %s10, 1
    %v9936 = vld [vmem:[%s9935] sm:$0x1]
    %s9937 = scalar_lea.vmem %s11, 1
    %v9938 = vld [vmem:[%s9937] sm:$0x1]
    %9939 = vadd.xlane.f32.xlu0 %v9927
    %v9940 = vpop.xlane.xlu0 %9939
    %9941 = vadd.xlane.f32.xlu0 %v9928
    %v9942 = vpop.xlane.xlu0 %9941
    %9943 = vadd.xlane.f32.xlu0 %v9929
    %v9944 = vpop.xlane.xlu0 %9943
    %9945 = vadd.xlane.f32.xlu0 %v9930
    %v9946 = vpop.xlane.xlu0 %9945
    %9947 = vadd.xlane.f32.xlu0 %v9931
    %v9948 = vpop.xlane.xlu0 %9947
    %9949 = vadd.xlane.f32.xlu0 %v9932
    %v9950 = vpop.xlane.xlu0 %9949
    %9951 = vadd.xlane.f32.xlu0 %v9933
    %v9952 = vpop.xlane.xlu0 %9951
    %9953 = vadd.xlane.f32.xlu0 %v9934
    %v9954 = vpop.xlane.xlu0 %9953
    %v9955 = vmul.f32 %v9940, 0.0625
    %v9956 = vmul.f32 %v9942, 0.0625
    %v9957 = vmul.f32 %v9944, 0.0625
    %v9958 = vmul.f32 %v9946, 0.0625
    %v9959 = vmul.f32 %v9948, 0.0625
    %v9960 = vmul.f32 %v9950, 0.0625
    %v9961 = vmul.f32 %v9952, 0.0625
    %v9962 = vmul.f32 %v9954, 0.0625
    %v9963 = vsub.f32 %v9927, %v9955
    %v9964 = vsub.f32 %v9928, %v9956
    %v9965 = vsub.f32 %v9929, %v9957
    %v9966 = vsub.f32 %v9930, %v9958
    %v9967 = vsub.f32 %v9931, %v9959
    %v9968 = vsub.f32 %v9932, %v9960
    %v9969 = vsub.f32 %v9933, %v9961
    %v9970 = vsub.f32 %v9934, %v9962
    %v9971 = vsel %vm5007, %v9963, 0.0
    %v9972 = vsel %vm5007, %v9964, 0.0
    %v9973 = vsel %vm5007, %v9965, 0.0
    %v9974 = vsel %vm5007, %v9966, 0.0
    %v9975 = vsel %vm5007, %v9967, 0.0
    %v9976 = vsel %vm5007, %v9968, 0.0
    %v9977 = vsel %vm5007, %v9969, 0.0
    %v9978 = vsel %vm5007, %v9970, 0.0
    %v9979 = vmul.f32 %v9971, %v9971
    %v9980 = vmul.f32 %v9972, %v9972
    %v9981 = vmul.f32 %v9973, %v9973
    %v9982 = vmul.f32 %v9974, %v9974
    %v9983 = vmul.f32 %v9975, %v9975
    %v9984 = vmul.f32 %v9976, %v9976
    %v9985 = vmul.f32 %v9977, %v9977
    %v9986 = vmul.f32 %v9978, %v9978
    %9987 = vadd.xlane.f32.xlu0 %v9979
    %v9988 = vpop.xlane.xlu0 %9987
    %9989 = vadd.xlane.f32.xlu0 %v9980
    %v9990 = vpop.xlane.xlu0 %9989
    %9991 = vadd.xlane.f32.xlu0 %v9981
    %v9992 = vpop.xlane.xlu0 %9991
    %9993 = vadd.xlane.f32.xlu0 %v9982
    %v9994 = vpop.xlane.xlu0 %9993
    %9995 = vadd.xlane.f32.xlu0 %v9983
    %v9996 = vpop.xlane.xlu0 %9995
    %9997 = vadd.xlane.f32.xlu0 %v9984
    %v9998 = vpop.xlane.xlu0 %9997
    %9999 = vadd.xlane.f32.xlu0 %v9985
    %v10000 = vpop.xlane.xlu0 %9999
    %10001 = vadd.xlane.f32.xlu0 %v9986
    %v10002 = vpop.xlane.xlu0 %10001
    %v10003 = vmul.f32 %v9988, 0.0625
    %v10004 = vmul.f32 %v9990, 0.0625
    %v10005 = vmul.f32 %v9992, 0.0625
    %v10006 = vmul.f32 %v9994, 0.0625
    %v10007 = vmul.f32 %v9996, 0.0625
    %v10008 = vmul.f32 %v9998, 0.0625
    %v10009 = vmul.f32 %v10000, 0.0625
    %v10010 = vmul.f32 %v10002, 0.0625
    %v10011 = vadd.f32 %v10003, 1e-05
    %v10012 = vadd.f32 %v10004, 1e-05
    %v10013 = vadd.f32 %v10005, 1e-05
    %v10014 = vadd.f32 %v10006, 1e-05
    %v10015 = vadd.f32 %v10007, 1e-05
    %v10016 = vadd.f32 %v10008, 1e-05
    %v10017 = vadd.f32 %v10009, 1e-05
    %v10018 = vadd.f32 %v10010, 1e-05
    %v10019 = vrsqrt.pop %v10011
    %v10020 = vrsqrt.pop %v10012
    %v10021 = vrsqrt.pop %v10013
    %v10022 = vrsqrt.pop %v10014
    %v10023 = vrsqrt.pop %v10015
    %v10024 = vrsqrt.pop %v10016
    %v10025 = vrsqrt.pop %v10017
    %v10026 = vrsqrt.pop %v10018
    %v10027 = vmul.f32 %v9971, %v10019
    %v10028 = vmul.f32 %v9972, %v10020
    %v10029 = vmul.f32 %v9973, %v10021
    %v10030 = vmul.f32 %v9974, %v10022
    %v10031 = vmul.f32 %v9975, %v10023
    %v10032 = vmul.f32 %v9976, %v10024
    %v10033 = vmul.f32 %v9977, %v10025
    %v10034 = vmul.f32 %v9978, %v10026
    %v10036 = vlaneseq
    %v10037 = vshrl.u32 %v10036, 7
    %v10038 = vsub.s32 0, %v10037
    %v10039 = vrot.slane %v9936, %v10038
    %v10041 = vmul.f32 %v10027, %v10039
    %v10042 = vmul.f32 %v10028, %v10039
    %v10043 = vmul.f32 %v10029, %v10039
    %v10044 = vmul.f32 %v10030, %v10039
    %v10045 = vmul.f32 %v10031, %v10039
    %v10046 = vmul.f32 %v10032, %v10039
    %v10047 = vmul.f32 %v10033, %v10039
    %v10048 = vmul.f32 %v10034, %v10039
    %v10050 = vlaneseq
    %v10051 = vshrl.u32 %v10050, 7
    %v10052 = vsub.s32 0, %v10051
    %v10053 = vrot.slane %v9938, %v10052
    %v10055 = vadd.f32 %v10041, %v10053
    %v10056 = vadd.f32 %v10042, %v10053
    %v10057 = vadd.f32 %v10043, %v10053
    %v10058 = vadd.f32 %v10044, %v10053
    %v10059 = vadd.f32 %v10045, %v10053
    %v10060 = vadd.f32 %v10046, %v10053
    %v10061 = vadd.f32 %v10047, %v10053
    %v10062 = vadd.f32 %v10048, %v10053
    %v10063 = vpack.c.bf16 %v10056, %v10055
    %v10064 = vpack.c.bf16 %v10058, %v10057
    %v10065 = vpack.c.bf16 %v10060, %v10059
    %v10066 = vpack.c.bf16 %v10062, %v10061
    %s10067 = scalar_lea.vmem %s7, 1
    %v10068 = vld [vmem:[%s10067] sm:$0x1]
    %v10070 = vlaneseq
    %v10071 = vshrl.u32 %v10070, 7
    %v10072 = vsub.s32 0, %v10071
    %v10073 = vrot.slane %v10068, %v10072
    %v10091 = vunpack.c.l.b16 %v5605
    %v10092 = vunpack.c.l.b16 %v5606
    %v10093 = vunpack.c.l.b16 %v5607
    %v10094 = vunpack.c.l.b16 %v5608
    %v10095 = vunpack.c.l.b16 %v5609
    %v10096 = vunpack.c.l.b16 %v5610
    %v10097 = vunpack.c.l.b16 %v5611
    %v10098 = vunpack.c.l.b16 %v5612
    %v10099 = vunpack.c.l.b16 %v5613
    %v10100 = vunpack.c.l.b16 %v5614
    %v10101 = vunpack.c.l.b16 %v5615
    %v10102 = vunpack.c.l.b16 %v5616
    %v10103 = vunpack.c.l.b16 %v5617
    %v10104 = vunpack.c.l.b16 %v5618
    %v10105 = vunpack.c.l.b16 %v5619
    %v10106 = vunpack.c.l.b16 %v5620
    %v10107 = vpack.c.b16 %v10092, %v10091
    %v10108 = vpack.c.b16 %v10094, %v10093
    %v10109 = vpack.c.b16 %v10096, %v10095
    %v10110 = vpack.c.b16 %v10098, %v10097
    %v10111 = vpack.c.b16 %v10100, %v10099
    %v10112 = vpack.c.b16 %v10102, %v10101
    %v10113 = vpack.c.b16 %v10104, %v10103
    %v10114 = vpack.c.b16 %v10106, %v10105
    %10123 = vmatprep.subr.bf16.mxu0 0
    %10124 = vmatpush1.bf16.msra.mxu0 %v10107
    %10125 = vmatprep.subr.bf16.mxu0 0
    %10126 = vmatpush1.bf16.msra.mxu0 %v10108
    %10127 = vmatprep.subr.bf16.mxu0 0
    %10128 = vmatpush1.bf16.msra.mxu0 %v10109
    %10129 = vmatprep.subr.bf16.mxu0 0
    %10130 = vmatpush1.bf16.msra.mxu0 %v10110
    %10131 = vmatprep.subr.bf16.mxu0 0
    %10132 = vmatpush1.bf16.msra.mxu0 %v10111
    %10133 = vmatprep.subr.bf16.mxu0 0
    %10134 = vmatpush1.bf16.msra.mxu0 %v10112
    %10135 = vmatprep.subr.bf16.mxu0 0
    %10136 = vmatpush1.bf16.msra.mxu0 %v10113
    %10137 = vmatprep.subr.bf16.mxu0 0
    %10138 = vmatpush1.bf16.msra.mxu0 %v10114
    %10139 = vmatprep.subr.bf16.mxu0 0
    %10140 = vmatpush1.bf16.msra.mxu0 0
    %10141 = vmatprep.subr.bf16.mxu0 0
    %10142 = vmatpush1.bf16.msra.mxu0 0
    %10143 = vmatprep.subr.bf16.mxu0 0
    %10144 = vmatpush1.bf16.msra.mxu0 0
    %10145 = vmatprep.subr.bf16.mxu0 0
    %10146 = vmatpush1.bf16.msra.mxu0 0
    %10147 = vmatprep.subr.bf16.mxu0 0
    %10148 = vmatpush1.bf16.msra.mxu0 0
    %10149 = vmatprep.subr.bf16.mxu0 0
    %10150 = vmatpush1.bf16.msra.mxu0 0
    %10151 = vmatprep.subr.bf16.mxu0 0
    %10152 = vmatpush1.bf16.msra.mxu0 0
    %10153 = vmatprep.subr.bf16.mxu0 0
    %10154 = vmatpush1.bf16.msra.mxu0 0
    %10155 = vmatprep.mubr.bf16.mxu0 0
    %10156 = vmatmul.mubr.bf16.gmra.mrb[0].mxu0 %v10063
    %v10157 = vpop.f32.mrb[0].mxu0
    %v10158 = vadd.f32 %v10073, %v10157
    %v10159 = vpop.f32.mrb[0].mxu0
    %v10160 = vpop.f32.mrb[0].mxu0
    %v10161 = vadd.f32 %v10073, %v10160
    %v10162 = vpop.f32.mrb[0].mxu0
    %10163 = vmatprep.mubr.bf16.mxu0 0
    %10164 = vmatmul.mubr.bf16.gmra.mrb[0].mxu0 %v10064
    %v10165 = vpop.f32.mrb[0].mxu0
    %v10166 = vadd.f32 %v10073, %v10165
    %v10167 = vpop.f32.mrb[0].mxu0
    %v10168 = vpop.f32.mrb[0].mxu0
    %v10169 = vadd.f32 %v10073, %v10168
    %v10170 = vpop.f32.mrb[0].mxu0
    %10171 = vmatprep.mubr.bf16.mxu0 0
    %10172 = vmatmul.mubr.bf16.gmra.mrb[0].mxu0 %v10065
    %v10173 = vpop.f32.mrb[0].mxu0
    %v10174 = vadd.f32 %v10073, %v10173
    %v10175 = vpop.f32.mrb[0].mxu0
    %v10176 = vpop.f32.mrb[0].mxu0
    %v10177 = vadd.f32 %v10073, %v10176
    %v10178 = vpop.f32.mrb[0].mxu0
    %10179 = vmatprep.mubr.bf16.mxu0 0
    %10180 = vmatmul.mubr.bf16.gmra.mrb[0].mxu0 %v10066
    %v10181 = vpop.f32.mrb[0].mxu0
    %v10182 = vadd.f32 %v10073, %v10181
    %v10183 = vpop.f32.mrb[0].mxu0
    %v10184 = vpop.f32.mrb[0].mxu0
    %v10185 = vadd.f32 %v10073, %v10184
    %v10186 = vpop.f32.mrb[0].mxu0
    %10187 = vdwg.mxu0
    %v10188 = vmax.f32 %v10158, 0.0
    %v10189 = vmax.f32 %v10161, 0.0
    %v10190 = vmax.f32 %v10166, 0.0
    %v10191 = vmax.f32 %v10169, 0.0
    %v10192 = vmax.f32 %v10174, 0.0
    %v10193 = vmax.f32 %v10177, 0.0
    %v10194 = vmax.f32 %v10182, 0.0
    %v10195 = vmax.f32 %v10185, 0.0
    %v10196 = vpack.c.bf16 %v10189, %v10188
    %v10197 = vpack.c.bf16 %v10191, %v10190
    %v10198 = vpack.c.bf16 %v10193, %v10192
    %v10199 = vpack.c.bf16 %v10195, %v10194
    %s10200 = scalar_lea.vmem %s9, 1
    %v10201 = vld [vmem:[%s10200] sm:$0x1]
    %v10203 = vlaneseq
    %v10204 = vshrl.u32 %v10203, 7
    %v10205 = vsub.s32 0, %v10204
    %v10206 = vrot.slane %v10201, %v10205
    %v10224 = vunpack.c.l.b16 %v5622
    %v10225 = vunpack.c.l.b16 %v5623
    %v10226 = vunpack.c.l.b16 %v5624
    %v10227 = vunpack.c.l.b16 %v5625
    %v10228 = vunpack.c.l.b16 %v5626
    %v10229 = vunpack.c.l.b16 %v5627
    %v10230 = vunpack.c.l.b16 %v5628
    %v10231 = vunpack.c.l.b16 %v5629
    %v10232 = vunpack.c.l.b16 %v5630
    %v10233 = vunpack.c.l.b16 %v5631
    %v10234 = vunpack.c.l.b16 %v5632
    %v10235 = vunpack.c.l.b16 %v5633
    %v10236 = vunpack.c.l.b16 %v5634
    %v10237 = vunpack.c.l.b16 %v5635
    %v10238 = vunpack.c.l.b16 %v5636
    %v10239 = vunpack.c.l.b16 %v5637
    %v10240 = vpack.c.b16 %v10225, %v10224
    %v10241 = vpack.c.b16 %v10227, %v10226
    %v10242 = vpack.c.b16 %v10229, %v10228
    %v10243 = vpack.c.b16 %v10231, %v10230
    %v10244 = vpack.c.b16 %v10233, %v10232
    %v10245 = vpack.c.b16 %v10235, %v10234
    %v10246 = vpack.c.b16 %v10237, %v10236
    %v10247 = vpack.c.b16 %v10239, %v10238
    %10256 = vmatprep.subr.bf16.mxu0 0
    %10257 = vmatpush1.bf16.msra.mxu0 %v10240
    %10258 = vmatprep.subr.bf16.mxu0 0
    %10259 = vmatpush1.bf16.msra.mxu0 %v10241
    %10260 = vmatprep.subr.bf16.mxu0 0
    %10261 = vmatpush1.bf16.msra.mxu0 %v10242
    %10262 = vmatprep.subr.bf16.mxu0 0
    %10263 = vmatpush1.bf16.msra.mxu0 %v10243
    %10264 = vmatprep.subr.bf16.mxu0 0
    %10265 = vmatpush1.bf16.msra.mxu0 %v10244
    %10266 = vmatprep.subr.bf16.mxu0 0
    %10267 = vmatpush1.bf16.msra.mxu0 %v10245
    %10268 = vmatprep.subr.bf16.mxu0 0
    %10269 = vmatpush1.bf16.msra.mxu0 %v10246
    %10270 = vmatprep.subr.bf16.mxu0 0
    %10271 = vmatpush1.bf16.msra.mxu0 %v10247
    %10272 = vmatprep.subr.bf16.mxu0 0
    %10273 = vmatpush1.bf16.msra.mxu0 0
    %10274 = vmatprep.subr.bf16.mxu0 0
    %10275 = vmatpush1.bf16.msra.mxu0 0
    %10276 = vmatprep.subr.bf16.mxu0 0
    %10277 = vmatpush1.bf16.msra.mxu0 0
    %10278 = vmatprep.subr.bf16.mxu0 0
    %10279 = vmatpush1.bf16.msra.mxu0 0
    %10280 = vmatprep.subr.bf16.mxu0 0
    %10281 = vmatpush1.bf16.msra.mxu0 0
    %10282 = vmatprep.subr.bf16.mxu0 0
    %10283 = vmatpush1.bf16.msra.mxu0 0
    %10284 = vmatprep.subr.bf16.mxu0 0
    %10285 = vmatpush1.bf16.msra.mxu0 0
    %10286 = vmatprep.subr.bf16.mxu0 0
    %10287 = vmatpush1.bf16.msra.mxu0 0
    %10288 = vmatprep.mubr.bf16.mxu0 0
    %10289 = vmatmul.mubr.bf16.gmra.mrb[0].mxu0 %v10196
    %v10290 = vpop.f32.mrb[0].mxu0
    %v10291 = vadd.f32 %v10206, %v10290
    %v10292 = vpop.f32.mrb[0].mxu0
    %v10293 = vpop.f32.mrb[0].mxu0
    %v10294 = vadd.f32 %v10206, %v10293
    %v10295 = vpop.f32.mrb[0].mxu0
    %10296 = vmatprep.mubr.bf16.mxu0 0
    %10297 = vmatmul.mubr.bf16.gmra.mrb[0].mxu0 %v10197
    %v10298 = vpop.f32.mrb[0].mxu0
    %v10299 = vadd.f32 %v10206, %v10298
    %v10300 = vpop.f32.mrb[0].mxu0
    %v10301 = vpop.f32.mrb[0].mxu0
    %v10302 = vadd.f32 %v10206, %v10301
    %v10303 = vpop.f32.mrb[0].mxu0
    %10304 = vmatprep.mubr.bf16.mxu0 0
    %10305 = vmatmul.mubr.bf16.gmra.mrb[0].mxu0 %v10198
    %v10306 = vpop.f32.mrb[0].mxu0
    %v10307 = vadd.f32 %v10206, %v10306
    %v10308 = vpop.f32.mrb[0].mxu0
    %v10309 = vpop.f32.mrb[0].mxu0
    %v10310 = vadd.f32 %v10206, %v10309
    %v10311 = vpop.f32.mrb[0].mxu0
    %10312 = vmatprep.mubr.bf16.mxu0 0
    %10313 = vmatmul.mubr.bf16.gmra.mrb[0].mxu0 %v10199
    %v10314 = vpop.f32.mrb[0].mxu0
    %v10315 = vadd.f32 %v10206, %v10314
    %v10316 = vpop.f32.mrb[0].mxu0
    %v10317 = vpop.f32.mrb[0].mxu0
    %v10318 = vadd.f32 %v10206, %v10317
    %v10319 = vpop.f32.mrb[0].mxu0
    %10320 = vdwg.mxu0
    %v10321 = vadd.f32 %v10055, %v10291
    %v10322 = vadd.f32 %v10056, %v10294
    %v10323 = vadd.f32 %v10057, %v10299
    %v10324 = vadd.f32 %v10058, %v10302
    %v10325 = vadd.f32 %v10059, %v10307
    %v10326 = vadd.f32 %v10060, %v10310
    %v10327 = vadd.f32 %v10061, %v10315
    %v10328 = vadd.f32 %v10062, %v10318
    %s10329 = scalar_lea.vmem %s12, 1
    %v10330 = vld [vmem:[%s10329] sm:$0x1]
    %s10331 = scalar_lea.vmem %s13, 1
    %v10332 = vld [vmem:[%s10331] sm:$0x1]
    %10333 = vadd.xlane.f32.xlu0 %v10321
    %v10334 = vpop.xlane.xlu0 %10333
    %10335 = vadd.xlane.f32.xlu0 %v10322
    %v10336 = vpop.xlane.xlu0 %10335
    %10337 = vadd.xlane.f32.xlu0 %v10323
    %v10338 = vpop.xlane.xlu0 %10337
    %10339 = vadd.xlane.f32.xlu0 %v10324
    %v10340 = vpop.xlane.xlu0 %10339
    %10341 = vadd.xlane.f32.xlu0 %v10325
    %v10342 = vpop.xlane.xlu0 %10341
    %10343 = vadd.xlane.f32.xlu0 %v10326
    %v10344 = vpop.xlane.xlu0 %10343
    %10345 = vadd.xlane.f32.xlu0 %v10327
    %v10346 = vpop.xlane.xlu0 %10345
    %10347 = vadd.xlane.f32.xlu0 %v10328
    %v10348 = vpop.xlane.xlu0 %10347
    %v10349 = vmul.f32 %v10334, 0.0625
    %v10350 = vmul.f32 %v10336, 0.0625
    %v10351 = vmul.f32 %v10338, 0.0625
    %v10352 = vmul.f32 %v10340, 0.0625
    %v10353 = vmul.f32 %v10342, 0.0625
    %v10354 = vmul.f32 %v10344, 0.0625
    %v10355 = vmul.f32 %v10346, 0.0625
    %v10356 = vmul.f32 %v10348, 0.0625
    %v10357 = vsub.f32 %v10321, %v10349
    %v10358 = vsub.f32 %v10322, %v10350
    %v10359 = vsub.f32 %v10323, %v10351
    %v10360 = vsub.f32 %v10324, %v10352
    %v10361 = vsub.f32 %v10325, %v10353
    %v10362 = vsub.f32 %v10326, %v10354
    %v10363 = vsub.f32 %v10327, %v10355
    %v10364 = vsub.f32 %v10328, %v10356
    %v10365 = vsel %vm5007, %v10357, 0.0
    %v10366 = vsel %vm5007, %v10358, 0.0
    %v10367 = vsel %vm5007, %v10359, 0.0
    %v10368 = vsel %vm5007, %v10360, 0.0
    %v10369 = vsel %vm5007, %v10361, 0.0
    %v10370 = vsel %vm5007, %v10362, 0.0
    %v10371 = vsel %vm5007, %v10363, 0.0
    %v10372 = vsel %vm5007, %v10364, 0.0
    %v10373 = vmul.f32 %v10365, %v10365
    %v10374 = vmul.f32 %v10366, %v10366
    %v10375 = vmul.f32 %v10367, %v10367
    %v10376 = vmul.f32 %v10368, %v10368
    %v10377 = vmul.f32 %v10369, %v10369
    %v10378 = vmul.f32 %v10370, %v10370
    %v10379 = vmul.f32 %v10371, %v10371
    %v10380 = vmul.f32 %v10372, %v10372
    %10381 = vadd.xlane.f32.xlu0 %v10373
    %v10382 = vpop.xlane.xlu0 %10381
    %10383 = vadd.xlane.f32.xlu0 %v10374
    %v10384 = vpop.xlane.xlu0 %10383
    %10385 = vadd.xlane.f32.xlu0 %v10375
    %v10386 = vpop.xlane.xlu0 %10385
    %10387 = vadd.xlane.f32.xlu0 %v10376
    %v10388 = vpop.xlane.xlu0 %10387
    %10389 = vadd.xlane.f32.xlu0 %v10377
    %v10390 = vpop.xlane.xlu0 %10389
    %10391 = vadd.xlane.f32.xlu0 %v10378
    %v10392 = vpop.xlane.xlu0 %10391
    %10393 = vadd.xlane.f32.xlu0 %v10379
    %v10394 = vpop.xlane.xlu0 %10393
    %10395 = vadd.xlane.f32.xlu0 %v10380
    %v10396 = vpop.xlane.xlu0 %10395
    %v10397 = vmul.f32 %v10382, 0.0625
    %v10398 = vmul.f32 %v10384, 0.0625
    %v10399 = vmul.f32 %v10386, 0.0625
    %v10400 = vmul.f32 %v10388, 0.0625
    %v10401 = vmul.f32 %v10390, 0.0625
    %v10402 = vmul.f32 %v10392, 0.0625
    %v10403 = vmul.f32 %v10394, 0.0625
    %v10404 = vmul.f32 %v10396, 0.0625
    %v10405 = vadd.f32 %v10397, 1e-05
    %v10406 = vadd.f32 %v10398, 1e-05
    %v10407 = vadd.f32 %v10399, 1e-05
    %v10408 = vadd.f32 %v10400, 1e-05
    %v10409 = vadd.f32 %v10401, 1e-05
    %v10410 = vadd.f32 %v10402, 1e-05
    %v10411 = vadd.f32 %v10403, 1e-05
    %v10412 = vadd.f32 %v10404, 1e-05
    %v10413 = vrsqrt.pop %v10405
    %v10414 = vrsqrt.pop %v10406
    %v10415 = vrsqrt.pop %v10407
    %v10416 = vrsqrt.pop %v10408
    %v10417 = vrsqrt.pop %v10409
    %v10418 = vrsqrt.pop %v10410
    %v10419 = vrsqrt.pop %v10411
    %v10420 = vrsqrt.pop %v10412
    %v10421 = vmul.f32 %v10365, %v10413
    %v10422 = vmul.f32 %v10366, %v10414
    %v10423 = vmul.f32 %v10367, %v10415
    %v10424 = vmul.f32 %v10368, %v10416
    %v10425 = vmul.f32 %v10369, %v10417
    %v10426 = vmul.f32 %v10370, %v10418
    %v10427 = vmul.f32 %v10371, %v10419
    %v10428 = vmul.f32 %v10372, %v10420
    %v10430 = vlaneseq
    %v10431 = vshrl.u32 %v10430, 7
    %v10432 = vsub.s32 0, %v10431
    %v10433 = vrot.slane %v10330, %v10432
    %v10435 = vmul.f32 %v10421, %v10433
    %v10436 = vmul.f32 %v10422, %v10433
    %v10437 = vmul.f32 %v10423, %v10433
    %v10438 = vmul.f32 %v10424, %v10433
    %v10439 = vmul.f32 %v10425, %v10433
    %v10440 = vmul.f32 %v10426, %v10433
    %v10441 = vmul.f32 %v10427, %v10433
    %v10442 = vmul.f32 %v10428, %v10433
    %v10444 = vlaneseq
    %v10445 = vshrl.u32 %v10444, 7
    %v10446 = vsub.s32 0, %v10445
    %v10447 = vrot.slane %v10332, %v10446
    %v10449 = vadd.f32 %v10435, %v10447
    %v10450 = vadd.f32 %v10436, %v10447
    %v10451 = vadd.f32 %v10437, %v10447
    %v10452 = vadd.f32 %v10438, %v10447
    %v10453 = vadd.f32 %v10439, %v10447
    %v10454 = vadd.f32 %v10440, %v10447
    %v10455 = vadd.f32 %v10441, %v10447
    %v10456 = vadd.f32 %v10442, %v10447
    %v10465 = vcombine.high %v10449, %v10449
    %v10466 = vcombine.high %v10450, %v10450
    %v10467 = vcombine.high %v10451, %v10451
    %v10468 = vcombine.high %v10452, %v10452
    %v10469 = vcombine.high %v10453, %v10453
    %v10470 = vcombine.high %v10454, %v10454
    %v10471 = vcombine.high %v10455, %v10455
    %v10472 = vcombine.high %v10456, %v10456
    %v10481 = vsel %vm119, 1, 0
    %v10482 = vsel %vm120, 1, 0
    %v10483 = vcvt.s32.f32 %v10481
    %v10484 = vcvt.s32.f32 %v10482
    %v10485 = vlaneseq
    %v10486 = vshrl.u32 %v10485, 7
    %v10487 = vsub.s32 0, %v10486
    %v10488 = vrot.slane %v10483, %v10487
    %10490 = vbcast.lane.b32.xlu0 %v10488, 256
    %v10491 = vpop.permute.xlu0 %10490
    %v10492 = vlaneseq
    %v10493 = vshrl.u32 %v10492, 7
    %v10494 = vsub.s32 1, %v10493
    %v10495 = vrot.slane %v10483, %v10494
    %10497 = vbcast.lane.b32.xlu0 %v10495, 256
    %v10498 = vpop.permute.xlu0 %10497
    %v10499 = vlaneseq
    %v10500 = vshrl.u32 %v10499, 7
    %v10501 = vsub.s32 2, %v10500
    %v10502 = vrot.slane %v10483, %v10501
    %10504 = vbcast.lane.b32.xlu0 %v10502, 256
    %v10505 = vpop.permute.xlu0 %10504
    %v10506 = vlaneseq
    %v10507 = vshrl.u32 %v10506, 7
    %v10508 = vsub.s32 3, %v10507
    %v10509 = vrot.slane %v10483, %v10508
    %10511 = vbcast.lane.b32.xlu0 %v10509, 256
    %v10512 = vpop.permute.xlu0 %10511
    %v10513 = vlaneseq
    %v10514 = vshrl.u32 %v10513, 7
    %v10515 = vsub.s32 4, %v10514
    %v10516 = vrot.slane %v10483, %v10515
    %10518 = vbcast.lane.b32.xlu0 %v10516, 256
    %v10519 = vpop.permute.xlu0 %10518
    %v10520 = vlaneseq
    %v10521 = vshrl.u32 %v10520, 7
    %v10522 = vsub.s32 5, %v10521
    %v10523 = vrot.slane %v10483, %v10522
    %10525 = vbcast.lane.b32.xlu0 %v10523, 256
    %v10526 = vpop.permute.xlu0 %10525
    %v10527 = vlaneseq
    %v10528 = vshrl.u32 %v10527, 7
    %v10529 = vsub.s32 6, %v10528
    %v10530 = vrot.slane %v10483, %v10529
    %10532 = vbcast.lane.b32.xlu0 %v10530, 256
    %v10533 = vpop.permute.xlu0 %10532
    %v10534 = vlaneseq
    %v10535 = vshrl.u32 %v10534, 7
    %v10536 = vsub.s32 7, %v10535
    %v10537 = vrot.slane %v10483, %v10536
    %10539 = vbcast.lane.b32.xlu0 %v10537, 256
    %v10540 = vpop.permute.xlu0 %10539
    %v10541 = vlaneseq
    %v10542 = vshrl.u32 %v10541, 7
    %v10543 = vsub.s32 0, %v10542
    %v10544 = vrot.slane %v10484, %v10543
    %10546 = vbcast.lane.b32.xlu0 %v10544, 256
    %v10547 = vpop.permute.xlu0 %10546
    %v10548 = vlaneseq
    %v10549 = vshrl.u32 %v10548, 7
    %v10550 = vsub.s32 1, %v10549
    %v10551 = vrot.slane %v10484, %v10550
    %10553 = vbcast.lane.b32.xlu0 %v10551, 256
    %v10554 = vpop.permute.xlu0 %10553
    %v10555 = vlaneseq
    %v10556 = vshrl.u32 %v10555, 7
    %v10557 = vsub.s32 2, %v10556
    %v10558 = vrot.slane %v10484, %v10557
    %10560 = vbcast.lane.b32.xlu0 %v10558, 256
    %v10561 = vpop.permute.xlu0 %10560
    %v10562 = vlaneseq
    %v10563 = vshrl.u32 %v10562, 7
    %v10564 = vsub.s32 3, %v10563
    %v10565 = vrot.slane %v10484, %v10564
    %10567 = vbcast.lane.b32.xlu0 %v10565, 256
    %v10568 = vpop.permute.xlu0 %10567
    %v10569 = vlaneseq
    %v10570 = vshrl.u32 %v10569, 7
    %v10571 = vsub.s32 4, %v10570
    %v10572 = vrot.slane %v10484, %v10571
    %10574 = vbcast.lane.b32.xlu0 %v10572, 256
    %v10575 = vpop.permute.xlu0 %10574
    %v10576 = vlaneseq
    %v10577 = vshrl.u32 %v10576, 7
    %v10578 = vsub.s32 5, %v10577
    %v10579 = vrot.slane %v10484, %v10578
    %10581 = vbcast.lane.b32.xlu0 %v10579, 256
    %v10582 = vpop.permute.xlu0 %10581
    %v10583 = vlaneseq
    %v10584 = vshrl.u32 %v10583, 7
    %v10585 = vsub.s32 6, %v10584
    %v10586 = vrot.slane %v10484, %v10585
    %10588 = vbcast.lane.b32.xlu0 %v10586, 256
    %v10589 = vpop.permute.xlu0 %10588
    %v10590 = vlaneseq
    %v10591 = vshrl.u32 %v10590, 7
    %v10592 = vsub.s32 7, %v10591
    %v10593 = vrot.slane %v10484, %v10592
    %10595 = vbcast.lane.b32.xlu0 %v10593, 256
    %v10596 = vpop.permute.xlu0 %10595
    %v10597 = vmul.f32 %v10449, %v10491
    %v10598 = vmul.f32 %v10465, %v10498
    %v10599 = vmul.f32 %v10450, %v10505
    %v10600 = vmul.f32 %v10466, %v10512
    %v10601 = vmul.f32 %v10451, %v10519
    %v10602 = vmul.f32 %v10467, %v10526
    %v10603 = vmul.f32 %v10452, %v10533
    %v10604 = vmul.f32 %v10468, %v10540
    %v10605 = vmul.f32 %v10453, %v10547
    %v10606 = vmul.f32 %v10469, %v10554
    %v10607 = vmul.f32 %v10454, %v10561
    %v10608 = vmul.f32 %v10470, %v10568
    %v10609 = vmul.f32 %v10455, %v10575
    %v10610 = vmul.f32 %v10471, %v10582
    %v10611 = vmul.f32 %v10456, %v10589
    %v10612 = vmul.f32 %v10472, %v10596
    %vm10613 = vcmask 1043456
    %v10614 = vsel %vm10613, %v10597, 0.0
    %v10615 = vrot.slane %v10614, 4
    %v10616 = vadd.f32 %v10614, %v10615
    %v10617 = vrot.slane %v10616, 2
    %v10618 = vadd.f32 %v10616, %v10617
    %v10619 = vrot.slane %v10618, 1
    %v10620 = vadd.f32 %v10618, %v10619
    %v10621 = vsel %vm10613, %v10598, 0.0
    %v10622 = vrot.slane %v10621, 4
    %v10623 = vadd.f32 %v10621, %v10622
    %v10624 = vrot.slane %v10623, 2
    %v10625 = vadd.f32 %v10623, %v10624
    %v10626 = vrot.slane %v10625, 1
    %v10627 = vadd.f32 %v10625, %v10626
    %v10628 = vsel %vm10613, %v10599, 0.0
    %v10629 = vrot.slane %v10628, 4
    %v10630 = vadd.f32 %v10628, %v10629
    %v10631 = vrot.slane %v10630, 2
    %v10632 = vadd.f32 %v10630, %v10631
    %v10633 = vrot.slane %v10632, 1
    %v10634 = vadd.f32 %v10632, %v10633
    %v10635 = vsel %vm10613, %v10600, 0.0
    %v10636 = vrot.slane %v10635, 4
    %v10637 = vadd.f32 %v10635, %v10636
    %v10638 = vrot.slane %v10637, 2
    %v10639 = vadd.f32 %v10637, %v10638
    %v10640 = vrot.slane %v10639, 1
    %v10641 = vadd.f32 %v10639, %v10640
    %v10642 = vsel %vm10613, %v10601, 0.0
    %v10643 = vrot.slane %v10642, 4
    %v10644 = vadd.f32 %v10642, %v10643
    %v10645 = vrot.slane %v10644, 2
    %v10646 = vadd.f32 %v10644, %v10645
    %v10647 = vrot.slane %v10646, 1
    %v10648 = vadd.f32 %v10646, %v10647
    %v10649 = vsel %vm10613, %v10602, 0.0
    %v10650 = vrot.slane %v10649, 4
    %v10651 = vadd.f32 %v10649, %v10650
    %v10652 = vrot.slane %v10651, 2
    %v10653 = vadd.f32 %v10651, %v10652
    %v10654 = vrot.slane %v10653, 1
    %v10655 = vadd.f32 %v10653, %v10654
    %v10656 = vsel %vm10613, %v10603, 0.0
    %v10657 = vrot.slane %v10656, 4
    %v10658 = vadd.f32 %v10656, %v10657
    %v10659 = vrot.slane %v10658, 2
    %v10660 = vadd.f32 %v10658, %v10659
    %v10661 = vrot.slane %v10660, 1
    %v10662 = vadd.f32 %v10660, %v10661
    %v10663 = vsel %vm10613, %v10604, 0.0
    %v10664 = vrot.slane %v10663, 4
    %v10665 = vadd.f32 %v10663, %v10664
    %v10666 = vrot.slane %v10665, 2
    %v10667 = vadd.f32 %v10665, %v10666
    %v10668 = vrot.slane %v10667, 1
    %v10669 = vadd.f32 %v10667, %v10668
    %v10670 = vsel %vm10613, %v10605, 0.0
    %v10671 = vrot.slane %v10670, 4
    %v10672 = vadd.f32 %v10670, %v10671
    %v10673 = vrot.slane %v10672, 2
    %v10674 = vadd.f32 %v10672, %v10673
    %v10675 = vrot.slane %v10674, 1
    %v10676 = vadd.f32 %v10674, %v10675
    %v10677 = vsel %vm10613, %v10606, 0.0
    %v10678 = vrot.slane %v10677, 4
    %v10679 = vadd.f32 %v10677, %v10678
    %v10680 = vrot.slane %v10679, 2
    %v10681 = vadd.f32 %v10679, %v10680
    %v10682 = vrot.slane %v10681, 1
    %v10683 = vadd.f32 %v10681, %v10682
    %v10684 = vsel %vm10613, %v10607, 0.0
    %v10685 = vrot.slane %v10684, 4
    %v10686 = vadd.f32 %v10684, %v10685
    %v10687 = vrot.slane %v10686, 2
    %v10688 = vadd.f32 %v10686, %v10687
    %v10689 = vrot.slane %v10688, 1
    %v10690 = vadd.f32 %v10688, %v10689
    %v10691 = vsel %vm10613, %v10608, 0.0
    %v10692 = vrot.slane %v10691, 4
    %v10693 = vadd.f32 %v10691, %v10692
    %v10694 = vrot.slane %v10693, 2
    %v10695 = vadd.f32 %v10693, %v10694
    %v10696 = vrot.slane %v10695, 1
    %v10697 = vadd.f32 %v10695, %v10696
    %v10698 = vsel %vm10613, %v10609, 0.0
    %v10699 = vrot.slane %v10698, 4
    %v10700 = vadd.f32 %v10698, %v10699
    %v10701 = vrot.slane %v10700, 2
    %v10702 = vadd.f32 %v10700, %v10701
    %v10703 = vrot.slane %v10702, 1
    %v10704 = vadd.f32 %v10702, %v10703
    %v10705 = vsel %vm10613, %v10610, 0.0
    %v10706 = vrot.slane %v10705, 4
    %v10707 = vadd.f32 %v10705, %v10706
    %v10708 = vrot.slane %v10707, 2
    %v10709 = vadd.f32 %v10707, %v10708
    %v10710 = vrot.slane %v10709, 1
    %v10711 = vadd.f32 %v10709, %v10710
    %v10712 = vsel %vm10613, %v10611, 0.0
    %v10713 = vrot.slane %v10712, 4
    %v10714 = vadd.f32 %v10712, %v10713
    %v10715 = vrot.slane %v10714, 2
    %v10716 = vadd.f32 %v10714, %v10715
    %v10717 = vrot.slane %v10716, 1
    %v10718 = vadd.f32 %v10716, %v10717
    %v10719 = vsel %vm10613, %v10612, 0.0
    %v10720 = vrot.slane %v10719, 4
    %v10721 = vadd.f32 %v10719, %v10720
    %v10722 = vrot.slane %v10721, 2
    %v10723 = vadd.f32 %v10721, %v10722
    %v10724 = vrot.slane %v10723, 1
    %v10725 = vadd.f32 %v10723, %v10724
    %v10726 = vsel %vm10613, %v10491, 0.0
    %v10727 = vrot.slane %v10726, 4
    %v10728 = vadd.f32 %v10726, %v10727
    %v10729 = vrot.slane %v10728, 2
    %v10730 = vadd.f32 %v10728, %v10729
    %v10731 = vrot.slane %v10730, 1
    %v10732 = vadd.f32 %v10730, %v10731
    %v10733 = vsel %vm10613, %v10498, 0.0
    %v10734 = vrot.slane %v10733, 4
    %v10735 = vadd.f32 %v10733, %v10734
    %v10736 = vrot.slane %v10735, 2
    %v10737 = vadd.f32 %v10735, %v10736
    %v10738 = vrot.slane %v10737, 1
    %v10739 = vadd.f32 %v10737, %v10738
    %v10740 = vsel %vm10613, %v10505, 0.0
    %v10741 = vrot.slane %v10740, 4
    %v10742 = vadd.f32 %v10740, %v10741
    %v10743 = vrot.slane %v10742, 2
    %v10744 = vadd.f32 %v10742, %v10743
    %v10745 = vrot.slane %v10744, 1
    %v10746 = vadd.f32 %v10744, %v10745
    %v10747 = vsel %vm10613, %v10512, 0.0
    %v10748 = vrot.slane %v10747, 4
    %v10749 = vadd.f32 %v10747, %v10748
    %v10750 = vrot.slane %v10749, 2
    %v10751 = vadd.f32 %v10749, %v10750
    %v10752 = vrot.slane %v10751, 1
    %v10753 = vadd.f32 %v10751, %v10752
    %v10754 = vsel %vm10613, %v10519, 0.0
    %v10755 = vrot.slane %v10754, 4
    %v10756 = vadd.f32 %v10754, %v10755
    %v10757 = vrot.slane %v10756, 2
    %v10758 = vadd.f32 %v10756, %v10757
    %v10759 = vrot.slane %v10758, 1
    %v10760 = vadd.f32 %v10758, %v10759
    %v10761 = vsel %vm10613, %v10526, 0.0
    %v10762 = vrot.slane %v10761, 4
    %v10763 = vadd.f32 %v10761, %v10762
    %v10764 = vrot.slane %v10763, 2
    %v10765 = vadd.f32 %v10763, %v10764
    %v10766 = vrot.slane %v10765, 1
    %v10767 = vadd.f32 %v10765, %v10766
    %v10768 = vsel %vm10613, %v10533, 0.0
    %v10769 = vrot.slane %v10768, 4
    %v10770 = vadd.f32 %v10768, %v10769
    %v10771 = vrot.slane %v10770, 2
    %v10772 = vadd.f32 %v10770, %v10771
    %v10773 = vrot.slane %v10772, 1
    %v10774 = vadd.f32 %v10772, %v10773
    %v10775 = vsel %vm10613, %v10540, 0.0
    %v10776 = vrot.slane %v10775, 4
    %v10777 = vadd.f32 %v10775, %v10776
    %v10778 = vrot.slane %v10777, 2
    %v10779 = vadd.f32 %v10777, %v10778
    %v10780 = vrot.slane %v10779, 1
    %v10781 = vadd.f32 %v10779, %v10780
    %v10782 = vsel %vm10613, %v10547, 0.0
    %v10783 = vrot.slane %v10782, 4
    %v10784 = vadd.f32 %v10782, %v10783
    %v10785 = vrot.slane %v10784, 2
    %v10786 = vadd.f32 %v10784, %v10785
    %v10787 = vrot.slane %v10786, 1
    %v10788 = vadd.f32 %v10786, %v10787
    %v10789 = vsel %vm10613, %v10554, 0.0
    %v10790 = vrot.slane %v10789, 4
    %v10791 = vadd.f32 %v10789, %v10790
    %v10792 = vrot.slane %v10791, 2
    %v10793 = vadd.f32 %v10791, %v10792
    %v10794 = vrot.slane %v10793, 1
    %v10795 = vadd.f32 %v10793, %v10794
    %v10796 = vsel %vm10613, %v10561, 0.0
    %v10797 = vrot.slane %v10796, 4
    %v10798 = vadd.f32 %v10796, %v10797
    %v10799 = vrot.slane %v10798, 2
    %v10800 = vadd.f32 %v10798, %v10799
    %v10801 = vrot.slane %v10800, 1
    %v10802 = vadd.f32 %v10800, %v10801
    %v10803 = vsel %vm10613, %v10568, 0.0
    %v10804 = vrot.slane %v10803, 4
    %v10805 = vadd.f32 %v10803, %v10804
    %v10806 = vrot.slane %v10805, 2
    %v10807 = vadd.f32 %v10805, %v10806
    %v10808 = vrot.slane %v10807, 1
    %v10809 = vadd.f32 %v10807, %v10808
    %v10810 = vsel %vm10613, %v10575, 0.0
    %v10811 = vrot.slane %v10810, 4
    %v10812 = vadd.f32 %v10810, %v10811
    %v10813 = vrot.slane %v10812, 2
    %v10814 = vadd.f32 %v10812, %v10813
    %v10815 = vrot.slane %v10814, 1
    %v10816 = vadd.f32 %v10814, %v10815
    %v10817 = vsel %vm10613, %v10582, 0.0
    %v10818 = vrot.slane %v10817, 4
    %v10819 = vadd.f32 %v10817, %v10818
    %v10820 = vrot.slane %v10819, 2
    %v10821 = vadd.f32 %v10819, %v10820
    %v10822 = vrot.slane %v10821, 1
    %v10823 = vadd.f32 %v10821, %v10822
    %v10824 = vsel %vm10613, %v10589, 0.0
    %v10825 = vrot.slane %v10824, 4
    %v10826 = vadd.f32 %v10824, %v10825
    %v10827 = vrot.slane %v10826, 2
    %v10828 = vadd.f32 %v10826, %v10827
    %v10829 = vrot.slane %v10828, 1
    %v10830 = vadd.f32 %v10828, %v10829
    %v10831 = vsel %vm10613, %v10596, 0.0
    %v10832 = vrot.slane %v10831, 4
    %v10833 = vadd.f32 %v10831, %v10832
    %v10834 = vrot.slane %v10833, 2
    %v10835 = vadd.f32 %v10833, %v10834
    %v10836 = vrot.slane %v10835, 1
    %v10837 = vadd.f32 %v10835, %v10836
    %v10838 = vmax.f32 %v10732, 1.0
    %v10839 = vmax.f32 %v10739, 1.0
    %v10840 = vmax.f32 %v10746, 1.0
    %v10841 = vmax.f32 %v10753, 1.0
    %v10842 = vmax.f32 %v10760, 1.0
    %v10843 = vmax.f32 %v10767, 1.0
    %v10844 = vmax.f32 %v10774, 1.0
    %v10845 = vmax.f32 %v10781, 1.0
    %v10846 = vmax.f32 %v10788, 1.0
    %v10847 = vmax.f32 %v10795, 1.0
    %v10848 = vmax.f32 %v10802, 1.0
    %v10849 = vmax.f32 %v10809, 1.0
    %v10850 = vmax.f32 %v10816, 1.0
    %v10851 = vmax.f32 %v10823, 1.0
    %v10852 = vmax.f32 %v10830, 1.0
    %v10853 = vmax.f32 %v10837, 1.0
    %v10854 = vrcp.pop %v10838
    %v10855 = vmul.f32 %v10620, %v10854
    %v10856 = vrcp.pop %v10839
    %v10857 = vmul.f32 %v10627, %v10856
    %v10858 = vrcp.pop %v10840
    %v10859 = vmul.f32 %v10634, %v10858
    %v10860 = vrcp.pop %v10841
    %v10861 = vmul.f32 %v10641, %v10860
    %v10862 = vrcp.pop %v10842
    %v10863 = vmul.f32 %v10648, %v10862
    %v10864 = vrcp.pop %v10843
    %v10865 = vmul.f32 %v10655, %v10864
    %v10866 = vrcp.pop %v10844
    %v10867 = vmul.f32 %v10662, %v10866
    %v10868 = vrcp.pop %v10845
    %v10869 = vmul.f32 %v10669, %v10868
    %v10870 = vrcp.pop %v10846
    %v10871 = vmul.f32 %v10676, %v10870
    %v10872 = vrcp.pop %v10847
    %v10873 = vmul.f32 %v10683, %v10872
    %v10874 = vrcp.pop %v10848
    %v10875 = vmul.f32 %v10690, %v10874
    %v10876 = vrcp.pop %v10849
    %v10877 = vmul.f32 %v10697, %v10876
    %v10878 = vrcp.pop %v10850
    %v10879 = vmul.f32 %v10704, %v10878
    %v10880 = vrcp.pop %v10851
    %v10881 = vmul.f32 %v10711, %v10880
    %v10882 = vrcp.pop %v10852
    %v10883 = vmul.f32 %v10718, %v10882
    %v10884 = vrcp.pop %v10853
    %v10885 = vmul.f32 %v10725, %v10884
    %vm10902 = vcmask 1041409
    %v10903 = vsel %vm10902, %v10857, %v10855
    %vm10904 = vcmask 1042434
    %v10905 = vsel %vm10904, %v10859, %v10903
    %vm10906 = vcmask 1043459
    %v10907 = vsel %vm10906, %v10861, %v10905
    %vm10908 = vcmask 1044484
    %v10909 = vsel %vm10908, %v10863, %v10907
    %vm10910 = vcmask 1045509
    %v10911 = vsel %vm10910, %v10865, %v10909
    %vm10912 = vcmask 1046534
    %v10913 = vsel %vm10912, %v10867, %v10911
    %vm10914 = vcmask 1047559
    %v10915 = vsel %vm10914, %v10869, %v10913
    %v10916 = vsel %vm10902, %v10873, %v10871
    %v10917 = vsel %vm10904, %v10875, %v10916
    %v10918 = vsel %vm10906, %v10877, %v10917
    %v10919 = vsel %vm10908, %v10879, %v10918
    %v10920 = vsel %vm10910, %v10881, %v10919
    %v10921 = vsel %vm10912, %v10883, %v10920
    %v10922 = vsel %vm10914, %v10885, %v10921
    %10925 = vst [vmem:[#allocation11] sm:$0xff] %v10915
    %10926 = vst [vmem:[#allocation11 + $0x8] sm:$0xff] %v10922
    // Predicated region
    $region78: #{tpu_custom_call.1} parent=1 // pred_check
      _
    $region79: #{tpu_custom_call.1} parent=1 // pred_check_branch
      %10928 = sbr.rel (0) target = $region81
    $region80: #{tpu_custom_call.1} parent=1 // pred_region
      %s10930 = ssub.s32 256, 256
      %10931 = vsyncadd [#allocation4], %s10930
      %s10932 = sshll.u32 [#allocation11], 4
      %s10933 = int_to_ptr.vmem [resolvable:$true] %s10932
      %10938 = dma.vmem_to_hbm [thread:$0]  %s10933, 256, %s14, [#allocation4], 128, 128, 8
    $region81: #{tpu_custom_call.1} parent=1 // pred_fallthru
      _
    // Predicated region
    $region82: #{tpu_custom_call.1} parent=1 // pred_check
      _
    $region83: #{tpu_custom_call.1} parent=1 // pred_check_branch
      %10940 = sbr.rel (0) target = $region85
    $region84: #{tpu_custom_call.1} parent=1 // pred_region
      %10941 = dma.done [#allocation4], 256
    $region85: #{tpu_custom_call.1} parent=1 // pred_fallthru
      _
    %10942 = vsyncpa [#allocation3], 1
    %10943 = vsyncpa [#allocation6], 1
    %10944 = vsyncpa [#allocation9], 1
    %10945 = vsyncpa [#allocation4], 1

</llo_original>
